<compile_context>
chip_gen: v6e
topology: v6e:2x2x1
jax: 0.10.0
libtpu: 0.0.40
codegen_flags: <defaults>
</compile_context>

<pallas_src>
from dataclasses import dataclass

import jax
import jax.numpy as jnp
from jax import lax
from jax.experimental import pallas as pl
from jax.experimental.pallas import tpu as pltpu


@dataclass
class Config:
    hidden_size: int = 96
    intermediate_size: int = 192
    layer_norm_eps: float = 1e-5
    attention_dropout: float = 0.0
    hidden_dropout: float = 0.0


def _round_up(x, m):
    return (x + m - 1) // m * m


# ---------------------------------------------------------------------------
# Fused full-encoder kernel factory (one grid step == one batch element)
# ---------------------------------------------------------------------------
def _make_encoder_kernel(*, S, H, HP, AP, IP, heads_per_layer, head_dim, eps, has_mask):
    inv_h = 1.0 / float(H)

    def kernel(*refs):
        if has_mask:
            (x_ref, mask_ref, wqkv_ref, bqkv_ref, wo_ref, bo_ref,
             lnw_ref, lnb_ref, w1_ref, b1_ref, w2_ref, b2_ref,
             flnw_ref, flnb_ref, out_ref) = refs
        else:
            (x_ref, wqkv_ref, bqkv_ref, wo_ref, bo_ref,
             lnw_ref, lnb_ref, w1_ref, b1_ref, w2_ref, b2_ref,
             flnw_ref, flnb_ref, out_ref) = refs
            mask_ref = None

        # Lane mask over the padded hidden dim: lanes [H:HP) are always zero and must be
        # excluded from LayerNorm statistics.
        lane = lax.broadcasted_iota(jnp.int32, (1, HP), 1)
        lane_mask = (lane < H).astype(jnp.float32)

        def layer_norm(v, w, b):
            # v: (S, HP) f32 with padded lanes == 0; w/b zero-padded.
            mu = jnp.sum(v, axis=-1, keepdims=True) * inv_h
            d = (v - mu) * lane_mask
            var = jnp.sum(d * d, axis=-1, keepdims=True) * inv_h
            return d * lax.rsqrt(var + eps) * w + b

        def gelu(v):
            # TODO(synk): PyTorch nn.GELU() default is the exact erf-based GELU; erf has
            # no guaranteed Mosaic lowering, so the tanh approximation is used (~1e-3).
            c = 0.7978845608028654  # sqrt(2/pi)
            return 0.5 * v * (1.0 + jnp.tanh(c * (v + 0.044715 * v * v * v)))

        h = x_ref[...]                                   # (S, HP) f32, padded lanes zero
        mb = mask_ref[...] if has_mask else None         # (S, S) — loaded ONCE per program

        for li, nh in enumerate(heads_per_layer):
            # ---- fused Q|K|V projection: one (S,HP)@(HP,3*AP) bf16 matmul ----
            qkv = jnp.dot(h.astype(jnp.bfloat16), wqkv_ref[li],
                          preferred_element_type=jnp.float32) + bqkv_ref[li]

            # ---- scaled dot-product attention, per head (scaling folded into wq/bq) ----
            ctxs = []
            for hh in range(nh):
                lo = hh * head_dim
                qh = qkv[:, lo:lo + head_dim]                          # (S, hd)
                kh = qkv[:, AP + lo:AP + lo + head_dim]                # (S, hd)
                vh = qkv[:, 2 * AP + lo:2 * AP + lo + head_dim]        # (S, hd)
                # contract last dims of q and k -> (S, S); no explicit transpose
                s = lax.dot_general(qh, kh, (((1,), (1,)), ((), ())),
                                    preferred_element_type=jnp.float32)
                if has_mask:
                    s = s + mb
                s = s - jnp.max(s, axis=-1, keepdims=True)
                p = jnp.exp(s)
                denom = jnp.sum(p, axis=-1, keepdims=True)
                ctx = jnp.dot(p, vh, preferred_element_type=jnp.float32)
                ctxs.append(ctx * pl.reciprocal(denom, approx=True))   # (S, hd)
            A = nh * head_dim
            if A < AP:
                ctxs.append(jnp.zeros((S, AP - A), jnp.float32))
            ctx_full = jnp.concatenate(ctxs, axis=-1)                  # (S, AP), registers

            # ---- single (S,AP)@(AP,HP) out-projection ----
            attn = jnp.dot(ctx_full.astype(jnp.bfloat16), wo_ref[li],
                           preferred_element_type=jnp.float32) + bo_ref[li]

            # residual + LayerNorm (shared weights within the layer, as in the spec)
            h = layer_norm(h + attn, lnw_ref[li], lnb_ref[li])

            # ---- feed-forward ----
            ff = jnp.dot(h.astype(jnp.bfloat16), w1_ref[li],
                         preferred_element_type=jnp.float32) + b1_ref[li]
            ff = gelu(ff)
            ff = jnp.dot(ff.astype(jnp.bfloat16), w2_ref[li],
                         preferred_element_type=jnp.float32) + b2_ref[li]

            h = layer_norm(h + ff, lnw_ref[li], lnb_ref[li])

        # final encoder LayerNorm, lane-dense (S, HP) store
        out_ref[...] = layer_norm(h, flnw_ref[...], flnb_ref[...])

    return kernel


# ---------------------------------------------------------------------------
# Host-side weight packing: stack layers, pad to 128-lane multiples, fuse QKV,
# fold the attention scaling into Q, cast matmul weights to bf16.
# ---------------------------------------------------------------------------
def pack_params(params, cfg, heads_per_layer, H, HP, AP, IP, head_dim):
    L = len(heads_per_layer)
    I = cfg.intermediate_size
    scaling = float(head_dim) ** -0.5

    wqkv = jnp.zeros((L, HP, 3 * AP), jnp.float32)
    bqkv = jnp.zeros((L, 1, 3 * AP), jnp.float32)
    wo = jnp.zeros((L, AP, HP), jnp.float32)
    bo = jnp.zeros((L, 1, HP), jnp.float32)
    lnw = jnp.zeros((L, 1, HP), jnp.float32)
    lnb = jnp.zeros((L, 1, HP), jnp.float32)
    w1 = jnp.zeros((L, HP, IP), jnp.float32)
    b1 = jnp.zeros((L, 1, IP), jnp.float32)
    w2 = jnp.zeros((L, IP, HP), jnp.float32)
    b2 = jnp.zeros((L, 1, HP), jnp.float32)

    for li, (lp, nh) in enumerate(zip(params["layers"], heads_per_layer)):
        A = nh * head_dim
        # fold 1/sqrt(head_dim) into the Q projection
        wqkv = wqkv.at[li, :H, 0 * AP:0 * AP + A].set(lp["wq"] * scaling)
        wqkv = wqkv.at[li, :H, 1 * AP:1 * AP + A].set(lp["wk"])
        wqkv = wqkv.at[li, :H, 2 * AP:2 * AP + A].set(lp["wv"])
        bqkv = bqkv.at[li, :, 0 * AP:0 * AP + A].set(lp["bq"] * scaling)
        bqkv = bqkv.at[li, :, 1 * AP:1 * AP + A].set(lp["bk"])
        bqkv = bqkv.at[li, :, 2 * AP:2 * AP + A].set(lp["bv"])
        wo = wo.at[li, :A, :H].set(lp["wo"])
        bo = bo.at[li, :, :H].set(lp["bo"])
        lnw = lnw.at[li, :, :H].set(lp["ln_w"])
        lnb = lnb.at[li, :, :H].set(lp["ln_b"])
        w1 = w1.at[li, :H, :I].set(lp["w1"])
        b1 = b1.at[li, :, :I].set(lp["b1"])
        w2 = w2.at[li, :I, :H].set(lp["w2"])
        b2 = b2.at[li, :, :H].set(lp["b2"])

    flnw = jnp.zeros((1, HP), jnp.float32).at[:, :H].set(params["final"]["ln_w"])
    flnb = jnp.zeros((1, HP), jnp.float32).at[:, :H].set(params["final"]["ln_b"])

    return dict(
        wqkv=wqkv.astype(jnp.bfloat16), bqkv=bqkv,
        wo=wo.astype(jnp.bfloat16), bo=bo,
        lnw=lnw, lnb=lnb,
        w1=w1.astype(jnp.bfloat16), b1=b1,
        w2=w2.astype(jnp.bfloat16), b2=b2,
        flnw=flnw, flnb=flnb,
    )


# ---------------------------------------------------------------------------
# Full encoder forward (single pallas_call, grid over batch)
# ---------------------------------------------------------------------------
def encoder_forward(x, params, cfg, pruned_num_heads_list, attention_mask=None):
    B, S, H = x.shape
    assert H == cfg.hidden_size
    head_dim = cfg.hidden_size // 12
    HP = _round_up(H, 128)
    AP = _round_up(max(nh * head_dim for nh in pruned_num_heads_list), 128)
    IP = _round_up(cfg.intermediate_size, 128)

    packed = pack_params(params, cfg, pruned_num_heads_list, H, HP, AP, IP, head_dim)

    # Zero-pad the hidden dim to 128 lanes; keep batch as the (parallel) grid axis.
    x_p = jnp.zeros((B, S, HP), jnp.float32).at[:, :, :H].set(x.astype(jnp.float32))

    has_mask = attention_mask is not None
    inputs = [x_p]
    in_specs = [pl.BlockSpec((None, S, HP), lambda b: (b, 0, 0))]
    if has_mask:
        m = jnp.asarray(attention_mask, jnp.float32)
        if m.ndim == 4:          # (B, 1|num_heads, S, S) -> (B, S, S)
            m = m[:, 0]
        m = jnp.broadcast_to(m, (B, S, S))
        inputs.append(m)
        in_specs.append(pl.BlockSpec((None, S, S), lambda b: (b, 0, 0)))

    # Stacked per-layer weights: one ref each, full-extent blocks, DMA'd once.
    for key in ("wqkv", "bqkv", "wo", "bo", "lnw", "lnb",
                "w1", "b1", "w2", "b2", "flnw", "flnb"):
        w = packed[key]
        inputs.append(w)
        in_specs.append(pl.BlockSpec(w.shape, lambda b, n=w.ndim: (0,) * n))

    kernel = _make_encoder_kernel(
        S=S, H=H, HP=HP, AP=AP, IP=IP,
        heads_per_layer=tuple(pruned_num_heads_list), head_dim=head_dim,
        eps=cfg.layer_norm_eps, has_mask=has_mask)

    out = pl.pallas_call(
        kernel,
        out_shape=jax.ShapeDtypeStruct((B, S, HP), jnp.float32),
        grid=(B,),
        in_specs=in_specs,
        out_specs=pl.BlockSpec((None, S, HP), lambda b: (b, 0, 0)),
        compiler_params=pltpu.CompilerParams(dimension_semantics=("parallel",)),
    )(*inputs)

    return out[:, :, :H]


# ---------------------------------------------------------------------------
# Deterministic parameter initialization (synthetic weights, no checkpoint)
# ---------------------------------------------------------------------------
def init_params(key, cfg, pruned_num_heads_list):
    H, I = cfg.hidden_size, cfg.intermediate_size
    hd = H // 12

    def nrm(k, shape, scale=0.02):
        return (scale * jax.random.normal(k, shape)).astype(jnp.float32)

    layers = []
    for li, nh in enumerate(pruned_num_heads_list):
        A = nh * hd
        ks = jax.random.split(jax.random.fold_in(key, li), 14)
        layers.append(dict(
            wq=nrm(ks[0], (H, A)), bq=nrm(ks[1], (1, A)),
            wk=nrm(ks[2], (H, A)), bk=nrm(ks[3], (1, A)),
            wv=nrm(ks[4], (H, A)), bv=nrm(ks[5], (1, A)),
            wo=nrm(ks[6], (A, H)), bo=nrm(ks[7], (1, H)),
            ln_w=jnp.ones((1, H), jnp.float32) + nrm(ks[8], (1, H)),
            ln_b=nrm(ks[9], (1, H)),
            w1=nrm(ks[10], (H, I)), b1=nrm(ks[11], (1, I)),
            w2=nrm(ks[12], (I, H)), b2=nrm(ks[13], (1, H)),
        ))
    kf = jax.random.split(jax.random.fold_in(key, 9999), 2)
    final = dict(ln_w=jnp.ones((1, H), jnp.float32) + nrm(kf[0], (1, H)),
                 ln_b=nrm(kf[1], (1, H)))
    return dict(layers=layers, final=final)


if __name__ == "__main__":
    cfg = Config(hidden_size=96, intermediate_size=192, layer_norm_eps=1e-5,
                 attention_dropout=0.0, hidden_dropout=0.0)
    pruned_num_heads_list = [12, 6]   # per-layer pruned head counts (head_dim = 96 // 12 = 8)

    key = jax.random.PRNGKey(0)
    pkey, xkey = jax.random.split(key)
    params = init_params(pkey, cfg, pruned_num_heads_list)

    B, S = 2, 16
    x = jax.random.normal(xkey, (B, S, cfg.hidden_size), dtype=jnp.float32)

    fwd = jax.jit(lambda inp: encoder_forward(inp, params, cfg, pruned_num_heads_list,
                                              attention_mask=None))
    out = jax.block_until_ready(fwd(x))

    assert out.shape == (B, S, cfg.hidden_size)
    assert bool(jnp.isfinite(out).all())
    print("KERNEL_OK")
</pallas_src>

<mosaic_0001>
module attributes {stable_mosaic.version = 11 : i64} {
  func.func @kernel(%arg0: i32, %arg1: memref<1x16x128xf32, #tpu.memory_space<vmem>>, %arg2: memref<2x128x384xbf16, #tpu.memory_space<vmem>>, %arg3: memref<2x1x384xf32, #tpu.memory_space<vmem>>, %arg4: memref<2x128x128xbf16, #tpu.memory_space<vmem>>, %arg5: memref<2x1x128xf32, #tpu.memory_space<vmem>>, %arg6: memref<2x1x128xf32, #tpu.memory_space<vmem>>, %arg7: memref<2x1x128xf32, #tpu.memory_space<vmem>>, %arg8: memref<2x128x256xbf16, #tpu.memory_space<vmem>>, %arg9: memref<2x1x256xf32, #tpu.memory_space<vmem>>, %arg10: memref<2x256x128xbf16, #tpu.memory_space<vmem>>, %arg11: memref<2x1x128xf32, #tpu.memory_space<vmem>>, %arg12: memref<1x128xf32, #tpu.memory_space<vmem>>, %arg13: memref<1x128xf32, #tpu.memory_space<vmem>>, %arg14: memref<1x16x128xf32, #tpu.memory_space<vmem>>) attributes {dimension_semantics = [#tpu.dimension_semantics<parallel>], iteration_bounds = array<i64: 2>, scalar_prefetch = 0 : i64, scratch_operands = 0 : i64, tpu.core_type = #tpu.core_type<tc>, window_params = [{transform_indices = @transform_0, window_bounds = array<i64: 1, 16, 128>}, {pipeline_mode = #tpu.pipeline_mode<synchronous>, transform_indices = @transform_1, window_bounds = array<i64: 2, 128, 384>}, {pipeline_mode = #tpu.pipeline_mode<synchronous>, transform_indices = @transform_2, window_bounds = array<i64: 2, 1, 384>}, {pipeline_mode = #tpu.pipeline_mode<synchronous>, transform_indices = @transform_3, window_bounds = array<i64: 2, 128, 128>}, {pipeline_mode = #tpu.pipeline_mode<synchronous>, transform_indices = @transform_4, window_bounds = array<i64: 2, 1, 128>}, {pipeline_mode = #tpu.pipeline_mode<synchronous>, transform_indices = @transform_5, window_bounds = array<i64: 2, 1, 128>}, {pipeline_mode = #tpu.pipeline_mode<synchronous>, transform_indices = @transform_6, window_bounds = array<i64: 2, 1, 128>}, {pipeline_mode = #tpu.pipeline_mode<synchronous>, transform_indices = @transform_7, window_bounds = array<i64: 2, 128, 256>}, {pipeline_mode = #tpu.pipeline_mode<synchronous>, transform_indices = @transform_8, window_bounds = array<i64: 2, 1, 256>}, {pipeline_mode = #tpu.pipeline_mode<synchronous>, transform_indices = @transform_9, window_bounds = array<i64: 2, 256, 128>}, {pipeline_mode = #tpu.pipeline_mode<synchronous>, transform_indices = @transform_10, window_bounds = array<i64: 2, 1, 128>}, {pipeline_mode = #tpu.pipeline_mode<synchronous>, transform_indices = @transform_11, window_bounds = array<i64: 1, 128>}, {pipeline_mode = #tpu.pipeline_mode<synchronous>, transform_indices = @transform_12, window_bounds = array<i64: 1, 128>}, {transform_indices = @transform_13, window_bounds = array<i64: 1, 16, 128>}]} {
    %0 = tpu.iota {dimensions = array<i32: 1>} : vector<1x128xi32>
    %c96_i32 = arith.constant 96 : i32
    %1 = vector.broadcast %c96_i32 : i32 to vector<1x128xi32>
    %2 = arith.cmpi slt, %0, %1 : vector<1x128xi32>
    %3 = arith.extui %2 : vector<1x128xi1> to vector<1x128xi32>
    %4 = arith.sitofp %3 : vector<1x128xi32> to vector<1x128xf32>
    %c0 = arith.constant 0 : index
    %c0_0 = arith.constant 0 : index
    %c0_1 = arith.constant 0 : index
    %5 = vector.load %arg1[%c0, %c0_0, %c0_1] : memref<1x16x128xf32, #tpu.memory_space<vmem>>, vector<1x16x128xf32>
    %6 = vector.shape_cast %5 : vector<1x16x128xf32> to vector<16x128xf32>
    %7 = arith.truncf %6 : vector<16x128xf32> to vector<16x128xbf16>
    %c0_2 = arith.constant 0 : index
    %c0_3 = arith.constant 0 : index
    %c0_4 = arith.constant 0 : index
    %8 = vector.load %arg2[%c0_2, %c0_3, %c0_4] : memref<2x128x384xbf16, #tpu.memory_space<vmem>>, vector<1x128x384xbf16>
    %9 = vector.shape_cast %8 : vector<1x128x384xbf16> to vector<128x384xbf16>
    %cst = arith.constant dense<0.000000e+00> : vector<16x384xf32>
    %10 = tpu.matmul %7, %9, %cst {dimension_numbers = #tpu.dot_dimension_numbers<[1], [0], [0], [1], [0, 0, 1, 1], [], []>} : vector<16x128xbf16>, vector<128x384xbf16>, vector<16x384xf32> -> vector<16x384xf32>
    %c0_5 = arith.constant 0 : index
    %c0_6 = arith.constant 0 : index
    %c0_7 = arith.constant 0 : index
    %11 = vector.load %arg3[%c0_5, %c0_6, %c0_7] : memref<2x1x384xf32, #tpu.memory_space<vmem>>, vector<1x1x384xf32>
    %12 = vector.shape_cast %11 : vector<1x1x384xf32> to vector<1x384xf32>
    %13 = vector.broadcast %12 : vector<1x384xf32> to vector<16x384xf32>
    %14 = arith.addf %10, %13 : vector<16x384xf32>
    %15 = vector.extract_strided_slice %14 {offsets = [0, 0], sizes = [16, 8], strides = [1, 1]} : vector<16x384xf32> to vector<16x8xf32>
    %16 = vector.extract_strided_slice %14 {offsets = [0, 128], sizes = [16, 8], strides = [1, 1]} : vector<16x384xf32> to vector<16x8xf32>
    %17 = vector.extract_strided_slice %14 {offsets = [0, 256], sizes = [16, 8], strides = [1, 1]} : vector<16x384xf32> to vector<16x8xf32>
    %cst_8 = arith.constant dense<0.000000e+00> : vector<16x16xf32>
    %18 = tpu.matmul %15, %16, %cst_8 {dimension_numbers = #tpu.dot_dimension_numbers<[1], [1], [0], [0], [0, 0, 1, 0], [], []>} : vector<16x8xf32>, vector<16x8xf32>, vector<16x16xf32> -> vector<16x16xf32>
    %cst_9 = arith.constant dense<0xFF800000> : vector<16xf32>
    %19 = vector.multi_reduction <maximumf>, %18, %cst_9 [1] : vector<16x16xf32> to vector<16xf32>
    %20 = vector.shape_cast %19 : vector<16xf32> to vector<16x1xf32>
    %21 = vector.broadcast %20 : vector<16x1xf32> to vector<16x16xf32>
    %22 = arith.subf %18, %21 : vector<16x16xf32>
    %23 = math.exp %22 : vector<16x16xf32>
    %cst_10 = arith.constant dense<0.000000e+00> : vector<16xf32>
    %24 = vector.multi_reduction <add>, %23, %cst_10 [1] : vector<16x16xf32> to vector<16xf32>
    %25 = vector.shape_cast %24 : vector<16xf32> to vector<16x1xf32>
    %cst_11 = arith.constant dense<0.000000e+00> : vector<16x8xf32>
    %26 = tpu.matmul %23, %17, %cst_11 {dimension_numbers = #tpu.dot_dimension_numbers<[1], [0], [0], [1], [0, 0, 1, 1], [], []>} : vector<16x16xf32>, vector<16x8xf32>, vector<16x8xf32> -> vector<16x8xf32>
    %27 = tpu.reciprocal %25 {approx = true} : vector<16x1xf32> -> vector<16x1xf32>
    %28 = vector.broadcast %27 : vector<16x1xf32> to vector<16x8xf32>
    %29 = arith.mulf %26, %28 : vector<16x8xf32>
    %30 = vector.extract_strided_slice %14 {offsets = [0, 8], sizes = [16, 8], strides = [1, 1]} : vector<16x384xf32> to vector<16x8xf32>
    %31 = vector.extract_strided_slice %14 {offsets = [0, 136], sizes = [16, 8], strides = [1, 1]} : vector<16x384xf32> to vector<16x8xf32>
    %32 = vector.extract_strided_slice %14 {offsets = [0, 264], sizes = [16, 8], strides = [1, 1]} : vector<16x384xf32> to vector<16x8xf32>
    %cst_12 = arith.constant dense<0.000000e+00> : vector<16x16xf32>
    %33 = tpu.matmul %30, %31, %cst_12 {dimension_numbers = #tpu.dot_dimension_numbers<[1], [1], [0], [0], [0, 0, 1, 0], [], []>} : vector<16x8xf32>, vector<16x8xf32>, vector<16x16xf32> -> vector<16x16xf32>
    %cst_13 = arith.constant dense<0xFF800000> : vector<16xf32>
    %34 = vector.multi_reduction <maximumf>, %33, %cst_13 [1] : vector<16x16xf32> to vector<16xf32>
    %35 = vector.shape_cast %34 : vector<16xf32> to vector<16x1xf32>
    %36 = vector.broadcast %35 : vector<16x1xf32> to vector<16x16xf32>
    %37 = arith.subf %33, %36 : vector<16x16xf32>
    %38 = math.exp %37 : vector<16x16xf32>
    %cst_14 = arith.constant dense<0.000000e+00> : vector<16xf32>
    %39 = vector.multi_reduction <add>, %38, %cst_14 [1] : vector<16x16xf32> to vector<16xf32>
    %40 = vector.shape_cast %39 : vector<16xf32> to vector<16x1xf32>
    %cst_15 = arith.constant dense<0.000000e+00> : vector<16x8xf32>
    %41 = tpu.matmul %38, %32, %cst_15 {dimension_numbers = #tpu.dot_dimension_numbers<[1], [0], [0], [1], [0, 0, 1, 1], [], []>} : vector<16x16xf32>, vector<16x8xf32>, vector<16x8xf32> -> vector<16x8xf32>
    %42 = tpu.reciprocal %40 {approx = true} : vector<16x1xf32> -> vector<16x1xf32>
    %43 = vector.broadcast %42 : vector<16x1xf32> to vector<16x8xf32>
    %44 = arith.mulf %41, %43 : vector<16x8xf32>
    %45 = vector.extract_strided_slice %14 {offsets = [0, 16], sizes = [16, 8], strides = [1, 1]} : vector<16x384xf32> to vector<16x8xf32>
    %46 = vector.extract_strided_slice %14 {offsets = [0, 144], sizes = [16, 8], strides = [1, 1]} : vector<16x384xf32> to vector<16x8xf32>
    %47 = vector.extract_strided_slice %14 {offsets = [0, 272], sizes = [16, 8], strides = [1, 1]} : vector<16x384xf32> to vector<16x8xf32>
    %cst_16 = arith.constant dense<0.000000e+00> : vector<16x16xf32>
    %48 = tpu.matmul %45, %46, %cst_16 {dimension_numbers = #tpu.dot_dimension_numbers<[1], [1], [0], [0], [0, 0, 1, 0], [], []>} : vector<16x8xf32>, vector<16x8xf32>, vector<16x16xf32> -> vector<16x16xf32>
    %cst_17 = arith.constant dense<0xFF800000> : vector<16xf32>
    %49 = vector.multi_reduction <maximumf>, %48, %cst_17 [1] : vector<16x16xf32> to vector<16xf32>
    %50 = vector.shape_cast %49 : vector<16xf32> to vector<16x1xf32>
    %51 = vector.broadcast %50 : vector<16x1xf32> to vector<16x16xf32>
    %52 = arith.subf %48, %51 : vector<16x16xf32>
    %53 = math.exp %52 : vector<16x16xf32>
    %cst_18 = arith.constant dense<0.000000e+00> : vector<16xf32>
    %54 = vector.multi_reduction <add>, %53, %cst_18 [1] : vector<16x16xf32> to vector<16xf32>
    %55 = vector.shape_cast %54 : vector<16xf32> to vector<16x1xf32>
    %cst_19 = arith.constant dense<0.000000e+00> : vector<16x8xf32>
    %56 = tpu.matmul %53, %47, %cst_19 {dimension_numbers = #tpu.dot_dimension_numbers<[1], [0], [0], [1], [0, 0, 1, 1], [], []>} : vector<16x16xf32>, vector<16x8xf32>, vector<16x8xf32> -> vector<16x8xf32>
    %57 = tpu.reciprocal %55 {approx = true} : vector<16x1xf32> -> vector<16x1xf32>
    %58 = vector.broadcast %57 : vector<16x1xf32> to vector<16x8xf32>
    %59 = arith.mulf %56, %58 : vector<16x8xf32>
    %60 = vector.extract_strided_slice %14 {offsets = [0, 24], sizes = [16, 8], strides = [1, 1]} : vector<16x384xf32> to vector<16x8xf32>
    %61 = vector.extract_strided_slice %14 {offsets = [0, 152], sizes = [16, 8], strides = [1, 1]} : vector<16x384xf32> to vector<16x8xf32>
    %62 = vector.extract_strided_slice %14 {offsets = [0, 280], sizes = [16, 8], strides = [1, 1]} : vector<16x384xf32> to vector<16x8xf32>
    %cst_20 = arith.constant dense<0.000000e+00> : vector<16x16xf32>
    %63 = tpu.matmul %60, %61, %cst_20 {dimension_numbers = #tpu.dot_dimension_numbers<[1], [1], [0], [0], [0, 0, 1, 0], [], []>} : vector<16x8xf32>, vector<16x8xf32>, vector<16x16xf32> -> vector<16x16xf32>
    %cst_21 = arith.constant dense<0xFF800000> : vector<16xf32>
    %64 = vector.multi_reduction <maximumf>, %63, %cst_21 [1] : vector<16x16xf32> to vector<16xf32>
    %65 = vector.shape_cast %64 : vector<16xf32> to vector<16x1xf32>
    %66 = vector.broadcast %65 : vector<16x1xf32> to vector<16x16xf32>
    %67 = arith.subf %63, %66 : vector<16x16xf32>
    %68 = math.exp %67 : vector<16x16xf32>
    %cst_22 = arith.constant dense<0.000000e+00> : vector<16xf32>
    %69 = vector.multi_reduction <add>, %68, %cst_22 [1] : vector<16x16xf32> to vector<16xf32>
    %70 = vector.shape_cast %69 : vector<16xf32> to vector<16x1xf32>
    %cst_23 = arith.constant dense<0.000000e+00> : vector<16x8xf32>
    %71 = tpu.matmul %68, %62, %cst_23 {dimension_numbers = #tpu.dot_dimension_numbers<[1], [0], [0], [1], [0, 0, 1, 1], [], []>} : vector<16x16xf32>, vector<16x8xf32>, vector<16x8xf32> -> vector<16x8xf32>
    %72 = tpu.reciprocal %70 {approx = true} : vector<16x1xf32> -> vector<16x1xf32>
    %73 = vector.broadcast %72 : vector<16x1xf32> to vector<16x8xf32>
    %74 = arith.mulf %71, %73 : vector<16x8xf32>
    %75 = vector.extract_strided_slice %14 {offsets = [0, 32], sizes = [16, 8], strides = [1, 1]} : vector<16x384xf32> to vector<16x8xf32>
    %76 = vector.extract_strided_slice %14 {offsets = [0, 160], sizes = [16, 8], strides = [1, 1]} : vector<16x384xf32> to vector<16x8xf32>
    %77 = vector.extract_strided_slice %14 {offsets = [0, 288], sizes = [16, 8], strides = [1, 1]} : vector<16x384xf32> to vector<16x8xf32>
    %cst_24 = arith.constant dense<0.000000e+00> : vector<16x16xf32>
    %78 = tpu.matmul %75, %76, %cst_24 {dimension_numbers = #tpu.dot_dimension_numbers<[1], [1], [0], [0], [0, 0, 1, 0], [], []>} : vector<16x8xf32>, vector<16x8xf32>, vector<16x16xf32> -> vector<16x16xf32>
    %cst_25 = arith.constant dense<0xFF800000> : vector<16xf32>
    %79 = vector.multi_reduction <maximumf>, %78, %cst_25 [1] : vector<16x16xf32> to vector<16xf32>
    %80 = vector.shape_cast %79 : vector<16xf32> to vector<16x1xf32>
    %81 = vector.broadcast %80 : vector<16x1xf32> to vector<16x16xf32>
    %82 = arith.subf %78, %81 : vector<16x16xf32>
    %83 = math.exp %82 : vector<16x16xf32>
    %cst_26 = arith.constant dense<0.000000e+00> : vector<16xf32>
    %84 = vector.multi_reduction <add>, %83, %cst_26 [1] : vector<16x16xf32> to vector<16xf32>
    %85 = vector.shape_cast %84 : vector<16xf32> to vector<16x1xf32>
    %cst_27 = arith.constant dense<0.000000e+00> : vector<16x8xf32>
    %86 = tpu.matmul %83, %77, %cst_27 {dimension_numbers = #tpu.dot_dimension_numbers<[1], [0], [0], [1], [0, 0, 1, 1], [], []>} : vector<16x16xf32>, vector<16x8xf32>, vector<16x8xf32> -> vector<16x8xf32>
    %87 = tpu.reciprocal %85 {approx = true} : vector<16x1xf32> -> vector<16x1xf32>
    %88 = vector.broadcast %87 : vector<16x1xf32> to vector<16x8xf32>
    %89 = arith.mulf %86, %88 : vector<16x8xf32>
    %90 = vector.extract_strided_slice %14 {offsets = [0, 40], sizes = [16, 8], strides = [1, 1]} : vector<16x384xf32> to vector<16x8xf32>
    %91 = vector.extract_strided_slice %14 {offsets = [0, 168], sizes = [16, 8], strides = [1, 1]} : vector<16x384xf32> to vector<16x8xf32>
    %92 = vector.extract_strided_slice %14 {offsets = [0, 296], sizes = [16, 8], strides = [1, 1]} : vector<16x384xf32> to vector<16x8xf32>
    %cst_28 = arith.constant dense<0.000000e+00> : vector<16x16xf32>
    %93 = tpu.matmul %90, %91, %cst_28 {dimension_numbers = #tpu.dot_dimension_numbers<[1], [1], [0], [0], [0, 0, 1, 0], [], []>} : vector<16x8xf32>, vector<16x8xf32>, vector<16x16xf32> -> vector<16x16xf32>
    %cst_29 = arith.constant dense<0xFF800000> : vector<16xf32>
    %94 = vector.multi_reduction <maximumf>, %93, %cst_29 [1] : vector<16x16xf32> to vector<16xf32>
    %95 = vector.shape_cast %94 : vector<16xf32> to vector<16x1xf32>
    %96 = vector.broadcast %95 : vector<16x1xf32> to vector<16x16xf32>
    %97 = arith.subf %93, %96 : vector<16x16xf32>
    %98 = math.exp %97 : vector<16x16xf32>
    %cst_30 = arith.constant dense<0.000000e+00> : vector<16xf32>
    %99 = vector.multi_reduction <add>, %98, %cst_30 [1] : vector<16x16xf32> to vector<16xf32>
    %100 = vector.shape_cast %99 : vector<16xf32> to vector<16x1xf32>
    %cst_31 = arith.constant dense<0.000000e+00> : vector<16x8xf32>
    %101 = tpu.matmul %98, %92, %cst_31 {dimension_numbers = #tpu.dot_dimension_numbers<[1], [0], [0], [1], [0, 0, 1, 1], [], []>} : vector<16x16xf32>, vector<16x8xf32>, vector<16x8xf32> -> vector<16x8xf32>
    %102 = tpu.reciprocal %100 {approx = true} : vector<16x1xf32> -> vector<16x1xf32>
    %103 = vector.broadcast %102 : vector<16x1xf32> to vector<16x8xf32>
    %104 = arith.mulf %101, %103 : vector<16x8xf32>
    %105 = vector.extract_strided_slice %14 {offsets = [0, 48], sizes = [16, 8], strides = [1, 1]} : vector<16x384xf32> to vector<16x8xf32>
    %106 = vector.extract_strided_slice %14 {offsets = [0, 176], sizes = [16, 8], strides = [1, 1]} : vector<16x384xf32> to vector<16x8xf32>
    %107 = vector.extract_strided_slice %14 {offsets = [0, 304], sizes = [16, 8], strides = [1, 1]} : vector<16x384xf32> to vector<16x8xf32>
    %cst_32 = arith.constant dense<0.000000e+00> : vector<16x16xf32>
    %108 = tpu.matmul %105, %106, %cst_32 {dimension_numbers = #tpu.dot_dimension_numbers<[1], [1], [0], [0], [0, 0, 1, 0], [], []>} : vector<16x8xf32>, vector<16x8xf32>, vector<16x16xf32> -> vector<16x16xf32>
    %cst_33 = arith.constant dense<0xFF800000> : vector<16xf32>
    %109 = vector.multi_reduction <maximumf>, %108, %cst_33 [1] : vector<16x16xf32> to vector<16xf32>
    %110 = vector.shape_cast %109 : vector<16xf32> to vector<16x1xf32>
    %111 = vector.broadcast %110 : vector<16x1xf32> to vector<16x16xf32>
    %112 = arith.subf %108, %111 : vector<16x16xf32>
    %113 = math.exp %112 : vector<16x16xf32>
    %cst_34 = arith.constant dense<0.000000e+00> : vector<16xf32>
    %114 = vector.multi_reduction <add>, %113, %cst_34 [1] : vector<16x16xf32> to vector<16xf32>
    %115 = vector.shape_cast %114 : vector<16xf32> to vector<16x1xf32>
    %cst_35 = arith.constant dense<0.000000e+00> : vector<16x8xf32>
    %116 = tpu.matmul %113, %107, %cst_35 {dimension_numbers = #tpu.dot_dimension_numbers<[1], [0], [0], [1], [0, 0, 1, 1], [], []>} : vector<16x16xf32>, vector<16x8xf32>, vector<16x8xf32> -> vector<16x8xf32>
    %117 = tpu.reciprocal %115 {approx = true} : vector<16x1xf32> -> vector<16x1xf32>
    %118 = vector.broadcast %117 : vector<16x1xf32> to vector<16x8xf32>
    %119 = arith.mulf %116, %118 : vector<16x8xf32>
    %120 = vector.extract_strided_slice %14 {offsets = [0, 56], sizes = [16, 8], strides = [1, 1]} : vector<16x384xf32> to vector<16x8xf32>
    %121 = vector.extract_strided_slice %14 {offsets = [0, 184], sizes = [16, 8], strides = [1, 1]} : vector<16x384xf32> to vector<16x8xf32>
    %122 = vector.extract_strided_slice %14 {offsets = [0, 312], sizes = [16, 8], strides = [1, 1]} : vector<16x384xf32> to vector<16x8xf32>
    %cst_36 = arith.constant dense<0.000000e+00> : vector<16x16xf32>
    %123 = tpu.matmul %120, %121, %cst_36 {dimension_numbers = #tpu.dot_dimension_numbers<[1], [1], [0], [0], [0, 0, 1, 0], [], []>} : vector<16x8xf32>, vector<16x8xf32>, vector<16x16xf32> -> vector<16x16xf32>
    %cst_37 = arith.constant dense<0xFF800000> : vector<16xf32>
    %124 = vector.multi_reduction <maximumf>, %123, %cst_37 [1] : vector<16x16xf32> to vector<16xf32>
    %125 = vector.shape_cast %124 : vector<16xf32> to vector<16x1xf32>
    %126 = vector.broadcast %125 : vector<16x1xf32> to vector<16x16xf32>
    %127 = arith.subf %123, %126 : vector<16x16xf32>
    %128 = math.exp %127 : vector<16x16xf32>
    %cst_38 = arith.constant dense<0.000000e+00> : vector<16xf32>
    %129 = vector.multi_reduction <add>, %128, %cst_38 [1] : vector<16x16xf32> to vector<16xf32>
    %130 = vector.shape_cast %129 : vector<16xf32> to vector<16x1xf32>
    %cst_39 = arith.constant dense<0.000000e+00> : vector<16x8xf32>
    %131 = tpu.matmul %128, %122, %cst_39 {dimension_numbers = #tpu.dot_dimension_numbers<[1], [0], [0], [1], [0, 0, 1, 1], [], []>} : vector<16x16xf32>, vector<16x8xf32>, vector<16x8xf32> -> vector<16x8xf32>
    %132 = tpu.reciprocal %130 {approx = true} : vector<16x1xf32> -> vector<16x1xf32>
    %133 = vector.broadcast %132 : vector<16x1xf32> to vector<16x8xf32>
    %134 = arith.mulf %131, %133 : vector<16x8xf32>
    %135 = vector.extract_strided_slice %14 {offsets = [0, 64], sizes = [16, 8], strides = [1, 1]} : vector<16x384xf32> to vector<16x8xf32>
    %136 = vector.extract_strided_slice %14 {offsets = [0, 192], sizes = [16, 8], strides = [1, 1]} : vector<16x384xf32> to vector<16x8xf32>
    %137 = vector.extract_strided_slice %14 {offsets = [0, 320], sizes = [16, 8], strides = [1, 1]} : vector<16x384xf32> to vector<16x8xf32>
    %cst_40 = arith.constant dense<0.000000e+00> : vector<16x16xf32>
    %138 = tpu.matmul %135, %136, %cst_40 {dimension_numbers = #tpu.dot_dimension_numbers<[1], [1], [0], [0], [0, 0, 1, 0], [], []>} : vector<16x8xf32>, vector<16x8xf32>, vector<16x16xf32> -> vector<16x16xf32>
    %cst_41 = arith.constant dense<0xFF800000> : vector<16xf32>
    %139 = vector.multi_reduction <maximumf>, %138, %cst_41 [1] : vector<16x16xf32> to vector<16xf32>
    %140 = vector.shape_cast %139 : vector<16xf32> to vector<16x1xf32>
    %141 = vector.broadcast %140 : vector<16x1xf32> to vector<16x16xf32>
    %142 = arith.subf %138, %141 : vector<16x16xf32>
    %143 = math.exp %142 : vector<16x16xf32>
    %cst_42 = arith.constant dense<0.000000e+00> : vector<16xf32>
    %144 = vector.multi_reduction <add>, %143, %cst_42 [1] : vector<16x16xf32> to vector<16xf32>
    %145 = vector.shape_cast %144 : vector<16xf32> to vector<16x1xf32>
    %cst_43 = arith.constant dense<0.000000e+00> : vector<16x8xf32>
    %146 = tpu.matmul %143, %137, %cst_43 {dimension_numbers = #tpu.dot_dimension_numbers<[1], [0], [0], [1], [0, 0, 1, 1], [], []>} : vector<16x16xf32>, vector<16x8xf32>, vector<16x8xf32> -> vector<16x8xf32>
    %147 = tpu.reciprocal %145 {approx = true} : vector<16x1xf32> -> vector<16x1xf32>
    %148 = vector.broadcast %147 : vector<16x1xf32> to vector<16x8xf32>
    %149 = arith.mulf %146, %148 : vector<16x8xf32>
    %150 = vector.extract_strided_slice %14 {offsets = [0, 72], sizes = [16, 8], strides = [1, 1]} : vector<16x384xf32> to vector<16x8xf32>
    %151 = vector.extract_strided_slice %14 {offsets = [0, 200], sizes = [16, 8], strides = [1, 1]} : vector<16x384xf32> to vector<16x8xf32>
    %152 = vector.extract_strided_slice %14 {offsets = [0, 328], sizes = [16, 8], strides = [1, 1]} : vector<16x384xf32> to vector<16x8xf32>
    %cst_44 = arith.constant dense<0.000000e+00> : vector<16x16xf32>
    %153 = tpu.matmul %150, %151, %cst_44 {dimension_numbers = #tpu.dot_dimension_numbers<[1], [1], [0], [0], [0, 0, 1, 0], [], []>} : vector<16x8xf32>, vector<16x8xf32>, vector<16x16xf32> -> vector<16x16xf32>
    %cst_45 = arith.constant dense<0xFF800000> : vector<16xf32>
    %154 = vector.multi_reduction <maximumf>, %153, %cst_45 [1] : vector<16x16xf32> to vector<16xf32>
    %155 = vector.shape_cast %154 : vector<16xf32> to vector<16x1xf32>
    %156 = vector.broadcast %155 : vector<16x1xf32> to vector<16x16xf32>
    %157 = arith.subf %153, %156 : vector<16x16xf32>
    %158 = math.exp %157 : vector<16x16xf32>
    %cst_46 = arith.constant dense<0.000000e+00> : vector<16xf32>
    %159 = vector.multi_reduction <add>, %158, %cst_46 [1] : vector<16x16xf32> to vector<16xf32>
    %160 = vector.shape_cast %159 : vector<16xf32> to vector<16x1xf32>
    %cst_47 = arith.constant dense<0.000000e+00> : vector<16x8xf32>
    %161 = tpu.matmul %158, %152, %cst_47 {dimension_numbers = #tpu.dot_dimension_numbers<[1], [0], [0], [1], [0, 0, 1, 1], [], []>} : vector<16x16xf32>, vector<16x8xf32>, vector<16x8xf32> -> vector<16x8xf32>
    %162 = tpu.reciprocal %160 {approx = true} : vector<16x1xf32> -> vector<16x1xf32>
    %163 = vector.broadcast %162 : vector<16x1xf32> to vector<16x8xf32>
    %164 = arith.mulf %161, %163 : vector<16x8xf32>
    %165 = vector.extract_strided_slice %14 {offsets = [0, 80], sizes = [16, 8], strides = [1, 1]} : vector<16x384xf32> to vector<16x8xf32>
    %166 = vector.extract_strided_slice %14 {offsets = [0, 208], sizes = [16, 8], strides = [1, 1]} : vector<16x384xf32> to vector<16x8xf32>
    %167 = vector.extract_strided_slice %14 {offsets = [0, 336], sizes = [16, 8], strides = [1, 1]} : vector<16x384xf32> to vector<16x8xf32>
    %cst_48 = arith.constant dense<0.000000e+00> : vector<16x16xf32>
    %168 = tpu.matmul %165, %166, %cst_48 {dimension_numbers = #tpu.dot_dimension_numbers<[1], [1], [0], [0], [0, 0, 1, 0], [], []>} : vector<16x8xf32>, vector<16x8xf32>, vector<16x16xf32> -> vector<16x16xf32>
    %cst_49 = arith.constant dense<0xFF800000> : vector<16xf32>
    %169 = vector.multi_reduction <maximumf>, %168, %cst_49 [1] : vector<16x16xf32> to vector<16xf32>
    %170 = vector.shape_cast %169 : vector<16xf32> to vector<16x1xf32>
    %171 = vector.broadcast %170 : vector<16x1xf32> to vector<16x16xf32>
    %172 = arith.subf %168, %171 : vector<16x16xf32>
    %173 = math.exp %172 : vector<16x16xf32>
    %cst_50 = arith.constant dense<0.000000e+00> : vector<16xf32>
    %174 = vector.multi_reduction <add>, %173, %cst_50 [1] : vector<16x16xf32> to vector<16xf32>
    %175 = vector.shape_cast %174 : vector<16xf32> to vector<16x1xf32>
    %cst_51 = arith.constant dense<0.000000e+00> : vector<16x8xf32>
    %176 = tpu.matmul %173, %167, %cst_51 {dimension_numbers = #tpu.dot_dimension_numbers<[1], [0], [0], [1], [0, 0, 1, 1], [], []>} : vector<16x16xf32>, vector<16x8xf32>, vector<16x8xf32> -> vector<16x8xf32>
    %177 = tpu.reciprocal %175 {approx = true} : vector<16x1xf32> -> vector<16x1xf32>
    %178 = vector.broadcast %177 : vector<16x1xf32> to vector<16x8xf32>
    %179 = arith.mulf %176, %178 : vector<16x8xf32>
    %180 = vector.extract_strided_slice %14 {offsets = [0, 88], sizes = [16, 8], strides = [1, 1]} : vector<16x384xf32> to vector<16x8xf32>
    %181 = vector.extract_strided_slice %14 {offsets = [0, 216], sizes = [16, 8], strides = [1, 1]} : vector<16x384xf32> to vector<16x8xf32>
    %182 = vector.extract_strided_slice %14 {offsets = [0, 344], sizes = [16, 8], strides = [1, 1]} : vector<16x384xf32> to vector<16x8xf32>
    %cst_52 = arith.constant dense<0.000000e+00> : vector<16x16xf32>
    %183 = tpu.matmul %180, %181, %cst_52 {dimension_numbers = #tpu.dot_dimension_numbers<[1], [1], [0], [0], [0, 0, 1, 0], [], []>} : vector<16x8xf32>, vector<16x8xf32>, vector<16x16xf32> -> vector<16x16xf32>
    %cst_53 = arith.constant dense<0xFF800000> : vector<16xf32>
    %184 = vector.multi_reduction <maximumf>, %183, %cst_53 [1] : vector<16x16xf32> to vector<16xf32>
    %185 = vector.shape_cast %184 : vector<16xf32> to vector<16x1xf32>
    %186 = vector.broadcast %185 : vector<16x1xf32> to vector<16x16xf32>
    %187 = arith.subf %183, %186 : vector<16x16xf32>
    %188 = math.exp %187 : vector<16x16xf32>
    %cst_54 = arith.constant dense<0.000000e+00> : vector<16xf32>
    %189 = vector.multi_reduction <add>, %188, %cst_54 [1] : vector<16x16xf32> to vector<16xf32>
    %190 = vector.shape_cast %189 : vector<16xf32> to vector<16x1xf32>
    %cst_55 = arith.constant dense<0.000000e+00> : vector<16x8xf32>
    %191 = tpu.matmul %188, %182, %cst_55 {dimension_numbers = #tpu.dot_dimension_numbers<[1], [0], [0], [1], [0, 0, 1, 1], [], []>} : vector<16x16xf32>, vector<16x8xf32>, vector<16x8xf32> -> vector<16x8xf32>
    %192 = tpu.reciprocal %190 {approx = true} : vector<16x1xf32> -> vector<16x1xf32>
    %193 = vector.broadcast %192 : vector<16x1xf32> to vector<16x8xf32>
    %194 = arith.mulf %191, %193 : vector<16x8xf32>
    %cst_56 = arith.constant 0.000000e+00 : f32
    %195 = vector.broadcast %cst_56 : f32 to vector<16x32xf32>
    %196 = tpu.concatenate %29, %44, %59, %74, %89, %104, %119, %134, %149, %164, %179, %194, %195 in 1 : vector<16x8xf32>, vector<16x8xf32>, vector<16x8xf32>, vector<16x8xf32>, vector<16x8xf32>, vector<16x8xf32>, vector<16x8xf32>, vector<16x8xf32>, vector<16x8xf32>, vector<16x8xf32>, vector<16x8xf32>, vector<16x8xf32>, vector<16x32xf32> -> vector<16x128xf32>
    %197 = arith.truncf %196 : vector<16x128xf32> to vector<16x128xbf16>
    %c0_57 = arith.constant 0 : index
    %c0_58 = arith.constant 0 : index
    %c0_59 = arith.constant 0 : index
    %198 = vector.load %arg4[%c0_57, %c0_58, %c0_59] : memref<2x128x128xbf16, #tpu.memory_space<vmem>>, vector<1x128x128xbf16>
    %199 = vector.shape_cast %198 : vector<1x128x128xbf16> to vector<128x128xbf16>
    %cst_60 = arith.constant dense<0.000000e+00> : vector<16x128xf32>
    %200 = tpu.matmul %197, %199, %cst_60 {dimension_numbers = #tpu.dot_dimension_numbers<[1], [0], [0], [1], [0, 0, 1, 1], [], []>} : vector<16x128xbf16>, vector<128x128xbf16>, vector<16x128xf32> -> vector<16x128xf32>
    %c0_61 = arith.constant 0 : index
    %c0_62 = arith.constant 0 : index
    %c0_63 = arith.constant 0 : index
    %201 = vector.load %arg5[%c0_61, %c0_62, %c0_63] : memref<2x1x128xf32, #tpu.memory_space<vmem>>, vector<1x1x128xf32>
    %202 = vector.shape_cast %201 : vector<1x1x128xf32> to vector<1x128xf32>
    %203 = vector.broadcast %202 : vector<1x128xf32> to vector<16x128xf32>
    %204 = arith.addf %200, %203 : vector<16x128xf32>
    %205 = arith.addf %6, %204 : vector<16x128xf32>
    %c0_64 = arith.constant 0 : index
    %c0_65 = arith.constant 0 : index
    %c0_66 = arith.constant 0 : index
    %206 = vector.load %arg6[%c0_64, %c0_65, %c0_66] : memref<2x1x128xf32, #tpu.memory_space<vmem>>, vector<1x1x128xf32>
    %207 = vector.shape_cast %206 : vector<1x1x128xf32> to vector<1x128xf32>
    %c0_67 = arith.constant 0 : index
    %c0_68 = arith.constant 0 : index
    %c0_69 = arith.constant 0 : index
    %208 = vector.load %arg7[%c0_67, %c0_68, %c0_69] : memref<2x1x128xf32, #tpu.memory_space<vmem>>, vector<1x1x128xf32>
    %209 = vector.shape_cast %208 : vector<1x1x128xf32> to vector<1x128xf32>
    %cst_70 = arith.constant dense<0.000000e+00> : vector<16xf32>
    %210 = vector.multi_reduction <add>, %205, %cst_70 [1] : vector<16x128xf32> to vector<16xf32>
    %211 = vector.shape_cast %210 : vector<16xf32> to vector<16x1xf32>
    %cst_71 = arith.constant 0.010416667 : f32
    %212 = vector.broadcast %cst_71 : f32 to vector<16x1xf32>
    %213 = arith.mulf %211, %212 : vector<16x1xf32>
    %214 = vector.broadcast %213 : vector<16x1xf32> to vector<16x128xf32>
    %215 = arith.subf %205, %214 : vector<16x128xf32>
    %216 = vector.broadcast %4 : vector<1x128xf32> to vector<16x128xf32>
    %217 = arith.mulf %215, %216 : vector<16x128xf32>
    %218 = arith.mulf %217, %217 : vector<16x128xf32>
    %cst_72 = arith.constant dense<0.000000e+00> : vector<16xf32>
    %219 = vector.multi_reduction <add>, %218, %cst_72 [1] : vector<16x128xf32> to vector<16xf32>
    %220 = vector.shape_cast %219 : vector<16xf32> to vector<16x1xf32>
    %cst_73 = arith.constant 0.010416667 : f32
    %221 = vector.broadcast %cst_73 : f32 to vector<16x1xf32>
    %222 = arith.mulf %220, %221 : vector<16x1xf32>
    %cst_74 = arith.constant 9.99999974E-6 : f32
    %223 = vector.broadcast %cst_74 : f32 to vector<16x1xf32>
    %224 = arith.addf %222, %223 : vector<16x1xf32>
    %225 = math.rsqrt %224 : vector<16x1xf32>
    %226 = vector.broadcast %225 : vector<16x1xf32> to vector<16x128xf32>
    %227 = arith.mulf %217, %226 : vector<16x128xf32>
    %228 = vector.broadcast %207 : vector<1x128xf32> to vector<16x128xf32>
    %229 = arith.mulf %227, %228 : vector<16x128xf32>
    %230 = vector.broadcast %209 : vector<1x128xf32> to vector<16x128xf32>
    %231 = arith.addf %229, %230 : vector<16x128xf32>
    %232 = arith.truncf %231 : vector<16x128xf32> to vector<16x128xbf16>
    %c0_75 = arith.constant 0 : index
    %c0_76 = arith.constant 0 : index
    %c0_77 = arith.constant 0 : index
    %233 = vector.load %arg8[%c0_75, %c0_76, %c0_77] : memref<2x128x256xbf16, #tpu.memory_space<vmem>>, vector<1x128x256xbf16>
    %234 = vector.shape_cast %233 : vector<1x128x256xbf16> to vector<128x256xbf16>
    %cst_78 = arith.constant dense<0.000000e+00> : vector<16x256xf32>
    %235 = tpu.matmul %232, %234, %cst_78 {dimension_numbers = #tpu.dot_dimension_numbers<[1], [0], [0], [1], [0, 0, 1, 1], [], []>} : vector<16x128xbf16>, vector<128x256xbf16>, vector<16x256xf32> -> vector<16x256xf32>
    %c0_79 = arith.constant 0 : index
    %c0_80 = arith.constant 0 : index
    %c0_81 = arith.constant 0 : index
    %236 = vector.load %arg9[%c0_79, %c0_80, %c0_81] : memref<2x1x256xf32, #tpu.memory_space<vmem>>, vector<1x1x256xf32>
    %237 = vector.shape_cast %236 : vector<1x1x256xf32> to vector<1x256xf32>
    %238 = vector.broadcast %237 : vector<1x256xf32> to vector<16x256xf32>
    %239 = arith.addf %235, %238 : vector<16x256xf32>
    %cst_82 = arith.constant 5.000000e-01 : f32
    %240 = vector.broadcast %cst_82 : f32 to vector<16x256xf32>
    %241 = arith.mulf %240, %239 : vector<16x256xf32>
    %cst_83 = arith.constant 4.471500e-02 : f32
    %242 = vector.broadcast %cst_83 : f32 to vector<16x256xf32>
    %243 = arith.mulf %242, %239 : vector<16x256xf32>
    %244 = arith.mulf %243, %239 : vector<16x256xf32>
    %245 = arith.mulf %244, %239 : vector<16x256xf32>
    %246 = arith.addf %239, %245 : vector<16x256xf32>
    %cst_84 = arith.constant 0.797884583 : f32
    %247 = vector.broadcast %cst_84 : f32 to vector<16x256xf32>
    %248 = arith.mulf %247, %246 : vector<16x256xf32>
    %249 = math.tanh %248 : vector<16x256xf32>
    %cst_85 = arith.constant 1.000000e+00 : f32
    %250 = vector.broadcast %cst_85 : f32 to vector<16x256xf32>
    %251 = arith.addf %250, %249 : vector<16x256xf32>
    %252 = arith.mulf %241, %251 : vector<16x256xf32>
    %253 = arith.truncf %252 : vector<16x256xf32> to vector<16x256xbf16>
    %c0_86 = arith.constant 0 : index
    %c0_87 = arith.constant 0 : index
    %c0_88 = arith.constant 0 : index
    %254 = vector.load %arg10[%c0_86, %c0_87, %c0_88] : memref<2x256x128xbf16, #tpu.memory_space<vmem>>, vector<1x256x128xbf16>
    %255 = vector.shape_cast %254 : vector<1x256x128xbf16> to vector<256x128xbf16>
    %cst_89 = arith.constant dense<0.000000e+00> : vector<16x128xf32>
    %256 = tpu.matmul %253, %255, %cst_89 {dimension_numbers = #tpu.dot_dimension_numbers<[1], [0], [0], [1], [0, 0, 1, 1], [], []>} : vector<16x256xbf16>, vector<256x128xbf16>, vector<16x128xf32> -> vector<16x128xf32>
    %c0_90 = arith.constant 0 : index
    %c0_91 = arith.constant 0 : index
    %c0_92 = arith.constant 0 : index
    %257 = vector.load %arg11[%c0_90, %c0_91, %c0_92] : memref<2x1x128xf32, #tpu.memory_space<vmem>>, vector<1x1x128xf32>
    %258 = vector.shape_cast %257 : vector<1x1x128xf32> to vector<1x128xf32>
    %259 = vector.broadcast %258 : vector<1x128xf32> to vector<16x128xf32>
    %260 = arith.addf %256, %259 : vector<16x128xf32>
    %261 = arith.addf %231, %260 : vector<16x128xf32>
    %c0_93 = arith.constant 0 : index
    %c0_94 = arith.constant 0 : index
    %c0_95 = arith.constant 0 : index
    %262 = vector.load %arg6[%c0_93, %c0_94, %c0_95] : memref<2x1x128xf32, #tpu.memory_space<vmem>>, vector<1x1x128xf32>
    %263 = vector.shape_cast %262 : vector<1x1x128xf32> to vector<1x128xf32>
    %c0_96 = arith.constant 0 : index
    %c0_97 = arith.constant 0 : index
    %c0_98 = arith.constant 0 : index
    %264 = vector.load %arg7[%c0_96, %c0_97, %c0_98] : memref<2x1x128xf32, #tpu.memory_space<vmem>>, vector<1x1x128xf32>
    %265 = vector.shape_cast %264 : vector<1x1x128xf32> to vector<1x128xf32>
    %cst_99 = arith.constant dense<0.000000e+00> : vector<16xf32>
    %266 = vector.multi_reduction <add>, %261, %cst_99 [1] : vector<16x128xf32> to vector<16xf32>
    %267 = vector.shape_cast %266 : vector<16xf32> to vector<16x1xf32>
    %cst_100 = arith.constant 0.010416667 : f32
    %268 = vector.broadcast %cst_100 : f32 to vector<16x1xf32>
    %269 = arith.mulf %267, %268 : vector<16x1xf32>
    %270 = vector.broadcast %269 : vector<16x1xf32> to vector<16x128xf32>
    %271 = arith.subf %261, %270 : vector<16x128xf32>
    %272 = vector.broadcast %4 : vector<1x128xf32> to vector<16x128xf32>
    %273 = arith.mulf %271, %272 : vector<16x128xf32>
    %274 = arith.mulf %273, %273 : vector<16x128xf32>
    %cst_101 = arith.constant dense<0.000000e+00> : vector<16xf32>
    %275 = vector.multi_reduction <add>, %274, %cst_101 [1] : vector<16x128xf32> to vector<16xf32>
    %276 = vector.shape_cast %275 : vector<16xf32> to vector<16x1xf32>
    %cst_102 = arith.constant 0.010416667 : f32
    %277 = vector.broadcast %cst_102 : f32 to vector<16x1xf32>
    %278 = arith.mulf %276, %277 : vector<16x1xf32>
    %cst_103 = arith.constant 9.99999974E-6 : f32
    %279 = vector.broadcast %cst_103 : f32 to vector<16x1xf32>
    %280 = arith.addf %278, %279 : vector<16x1xf32>
    %281 = math.rsqrt %280 : vector<16x1xf32>
    %282 = vector.broadcast %281 : vector<16x1xf32> to vector<16x128xf32>
    %283 = arith.mulf %273, %282 : vector<16x128xf32>
    %284 = vector.broadcast %263 : vector<1x128xf32> to vector<16x128xf32>
    %285 = arith.mulf %283, %284 : vector<16x128xf32>
    %286 = vector.broadcast %265 : vector<1x128xf32> to vector<16x128xf32>
    %287 = arith.addf %285, %286 : vector<16x128xf32>
    %288 = arith.truncf %287 : vector<16x128xf32> to vector<16x128xbf16>
    %c1 = arith.constant 1 : index
    %c0_104 = arith.constant 0 : index
    %c0_105 = arith.constant 0 : index
    %289 = vector.load %arg2[%c1, %c0_104, %c0_105] : memref<2x128x384xbf16, #tpu.memory_space<vmem>>, vector<1x128x384xbf16>
    %290 = vector.shape_cast %289 : vector<1x128x384xbf16> to vector<128x384xbf16>
    %cst_106 = arith.constant dense<0.000000e+00> : vector<16x384xf32>
    %291 = tpu.matmul %288, %290, %cst_106 {dimension_numbers = #tpu.dot_dimension_numbers<[1], [0], [0], [1], [0, 0, 1, 1], [], []>} : vector<16x128xbf16>, vector<128x384xbf16>, vector<16x384xf32> -> vector<16x384xf32>
    %c1_107 = arith.constant 1 : index
    %c0_108 = arith.constant 0 : index
    %c0_109 = arith.constant 0 : index
    %292 = vector.load %arg3[%c1_107, %c0_108, %c0_109] : memref<2x1x384xf32, #tpu.memory_space<vmem>>, vector<1x1x384xf32>
    %293 = vector.shape_cast %292 : vector<1x1x384xf32> to vector<1x384xf32>
    %294 = vector.broadcast %293 : vector<1x384xf32> to vector<16x384xf32>
    %295 = arith.addf %291, %294 : vector<16x384xf32>
    %296 = vector.extract_strided_slice %295 {offsets = [0, 0], sizes = [16, 8], strides = [1, 1]} : vector<16x384xf32> to vector<16x8xf32>
    %297 = vector.extract_strided_slice %295 {offsets = [0, 128], sizes = [16, 8], strides = [1, 1]} : vector<16x384xf32> to vector<16x8xf32>
    %298 = vector.extract_strided_slice %295 {offsets = [0, 256], sizes = [16, 8], strides = [1, 1]} : vector<16x384xf32> to vector<16x8xf32>
    %cst_110 = arith.constant dense<0.000000e+00> : vector<16x16xf32>
    %299 = tpu.matmul %296, %297, %cst_110 {dimension_numbers = #tpu.dot_dimension_numbers<[1], [1], [0], [0], [0, 0, 1, 0], [], []>} : vector<16x8xf32>, vector<16x8xf32>, vector<16x16xf32> -> vector<16x16xf32>
    %cst_111 = arith.constant dense<0xFF800000> : vector<16xf32>
    %300 = vector.multi_reduction <maximumf>, %299, %cst_111 [1] : vector<16x16xf32> to vector<16xf32>
    %301 = vector.shape_cast %300 : vector<16xf32> to vector<16x1xf32>
    %302 = vector.broadcast %301 : vector<16x1xf32> to vector<16x16xf32>
    %303 = arith.subf %299, %302 : vector<16x16xf32>
    %304 = math.exp %303 : vector<16x16xf32>
    %cst_112 = arith.constant dense<0.000000e+00> : vector<16xf32>
    %305 = vector.multi_reduction <add>, %304, %cst_112 [1] : vector<16x16xf32> to vector<16xf32>
    %306 = vector.shape_cast %305 : vector<16xf32> to vector<16x1xf32>
    %cst_113 = arith.constant dense<0.000000e+00> : vector<16x8xf32>
    %307 = tpu.matmul %304, %298, %cst_113 {dimension_numbers = #tpu.dot_dimension_numbers<[1], [0], [0], [1], [0, 0, 1, 1], [], []>} : vector<16x16xf32>, vector<16x8xf32>, vector<16x8xf32> -> vector<16x8xf32>
    %308 = tpu.reciprocal %306 {approx = true} : vector<16x1xf32> -> vector<16x1xf32>
    %309 = vector.broadcast %308 : vector<16x1xf32> to vector<16x8xf32>
    %310 = arith.mulf %307, %309 : vector<16x8xf32>
    %311 = vector.extract_strided_slice %295 {offsets = [0, 8], sizes = [16, 8], strides = [1, 1]} : vector<16x384xf32> to vector<16x8xf32>
    %312 = vector.extract_strided_slice %295 {offsets = [0, 136], sizes = [16, 8], strides = [1, 1]} : vector<16x384xf32> to vector<16x8xf32>
    %313 = vector.extract_strided_slice %295 {offsets = [0, 264], sizes = [16, 8], strides = [1, 1]} : vector<16x384xf32> to vector<16x8xf32>
    %cst_114 = arith.constant dense<0.000000e+00> : vector<16x16xf32>
    %314 = tpu.matmul %311, %312, %cst_114 {dimension_numbers = #tpu.dot_dimension_numbers<[1], [1], [0], [0], [0, 0, 1, 0], [], []>} : vector<16x8xf32>, vector<16x8xf32>, vector<16x16xf32> -> vector<16x16xf32>
    %cst_115 = arith.constant dense<0xFF800000> : vector<16xf32>
    %315 = vector.multi_reduction <maximumf>, %314, %cst_115 [1] : vector<16x16xf32> to vector<16xf32>
    %316 = vector.shape_cast %315 : vector<16xf32> to vector<16x1xf32>
    %317 = vector.broadcast %316 : vector<16x1xf32> to vector<16x16xf32>
    %318 = arith.subf %314, %317 : vector<16x16xf32>
    %319 = math.exp %318 : vector<16x16xf32>
    %cst_116 = arith.constant dense<0.000000e+00> : vector<16xf32>
    %320 = vector.multi_reduction <add>, %319, %cst_116 [1] : vector<16x16xf32> to vector<16xf32>
    %321 = vector.shape_cast %320 : vector<16xf32> to vector<16x1xf32>
    %cst_117 = arith.constant dense<0.000000e+00> : vector<16x8xf32>
    %322 = tpu.matmul %319, %313, %cst_117 {dimension_numbers = #tpu.dot_dimension_numbers<[1], [0], [0], [1], [0, 0, 1, 1], [], []>} : vector<16x16xf32>, vector<16x8xf32>, vector<16x8xf32> -> vector<16x8xf32>
    %323 = tpu.reciprocal %321 {approx = true} : vector<16x1xf32> -> vector<16x1xf32>
    %324 = vector.broadcast %323 : vector<16x1xf32> to vector<16x8xf32>
    %325 = arith.mulf %322, %324 : vector<16x8xf32>
    %326 = vector.extract_strided_slice %295 {offsets = [0, 16], sizes = [16, 8], strides = [1, 1]} : vector<16x384xf32> to vector<16x8xf32>
    %327 = vector.extract_strided_slice %295 {offsets = [0, 144], sizes = [16, 8], strides = [1, 1]} : vector<16x384xf32> to vector<16x8xf32>
    %328 = vector.extract_strided_slice %295 {offsets = [0, 272], sizes = [16, 8], strides = [1, 1]} : vector<16x384xf32> to vector<16x8xf32>
    %cst_118 = arith.constant dense<0.000000e+00> : vector<16x16xf32>
    %329 = tpu.matmul %326, %327, %cst_118 {dimension_numbers = #tpu.dot_dimension_numbers<[1], [1], [0], [0], [0, 0, 1, 0], [], []>} : vector<16x8xf32>, vector<16x8xf32>, vector<16x16xf32> -> vector<16x16xf32>
    %cst_119 = arith.constant dense<0xFF800000> : vector<16xf32>
    %330 = vector.multi_reduction <maximumf>, %329, %cst_119 [1] : vector<16x16xf32> to vector<16xf32>
    %331 = vector.shape_cast %330 : vector<16xf32> to vector<16x1xf32>
    %332 = vector.broadcast %331 : vector<16x1xf32> to vector<16x16xf32>
    %333 = arith.subf %329, %332 : vector<16x16xf32>
    %334 = math.exp %333 : vector<16x16xf32>
    %cst_120 = arith.constant dense<0.000000e+00> : vector<16xf32>
    %335 = vector.multi_reduction <add>, %334, %cst_120 [1] : vector<16x16xf32> to vector<16xf32>
    %336 = vector.shape_cast %335 : vector<16xf32> to vector<16x1xf32>
    %cst_121 = arith.constant dense<0.000000e+00> : vector<16x8xf32>
    %337 = tpu.matmul %334, %328, %cst_121 {dimension_numbers = #tpu.dot_dimension_numbers<[1], [0], [0], [1], [0, 0, 1, 1], [], []>} : vector<16x16xf32>, vector<16x8xf32>, vector<16x8xf32> -> vector<16x8xf32>
    %338 = tpu.reciprocal %336 {approx = true} : vector<16x1xf32> -> vector<16x1xf32>
    %339 = vector.broadcast %338 : vector<16x1xf32> to vector<16x8xf32>
    %340 = arith.mulf %337, %339 : vector<16x8xf32>
    %341 = vector.extract_strided_slice %295 {offsets = [0, 24], sizes = [16, 8], strides = [1, 1]} : vector<16x384xf32> to vector<16x8xf32>
    %342 = vector.extract_strided_slice %295 {offsets = [0, 152], sizes = [16, 8], strides = [1, 1]} : vector<16x384xf32> to vector<16x8xf32>
    %343 = vector.extract_strided_slice %295 {offsets = [0, 280], sizes = [16, 8], strides = [1, 1]} : vector<16x384xf32> to vector<16x8xf32>
    %cst_122 = arith.constant dense<0.000000e+00> : vector<16x16xf32>
    %344 = tpu.matmul %341, %342, %cst_122 {dimension_numbers = #tpu.dot_dimension_numbers<[1], [1], [0], [0], [0, 0, 1, 0], [], []>} : vector<16x8xf32>, vector<16x8xf32>, vector<16x16xf32> -> vector<16x16xf32>
    %cst_123 = arith.constant dense<0xFF800000> : vector<16xf32>
    %345 = vector.multi_reduction <maximumf>, %344, %cst_123 [1] : vector<16x16xf32> to vector<16xf32>
    %346 = vector.shape_cast %345 : vector<16xf32> to vector<16x1xf32>
    %347 = vector.broadcast %346 : vector<16x1xf32> to vector<16x16xf32>
    %348 = arith.subf %344, %347 : vector<16x16xf32>
    %349 = math.exp %348 : vector<16x16xf32>
    %cst_124 = arith.constant dense<0.000000e+00> : vector<16xf32>
    %350 = vector.multi_reduction <add>, %349, %cst_124 [1] : vector<16x16xf32> to vector<16xf32>
    %351 = vector.shape_cast %350 : vector<16xf32> to vector<16x1xf32>
    %cst_125 = arith.constant dense<0.000000e+00> : vector<16x8xf32>
    %352 = tpu.matmul %349, %343, %cst_125 {dimension_numbers = #tpu.dot_dimension_numbers<[1], [0], [0], [1], [0, 0, 1, 1], [], []>} : vector<16x16xf32>, vector<16x8xf32>, vector<16x8xf32> -> vector<16x8xf32>
    %353 = tpu.reciprocal %351 {approx = true} : vector<16x1xf32> -> vector<16x1xf32>
    %354 = vector.broadcast %353 : vector<16x1xf32> to vector<16x8xf32>
    %355 = arith.mulf %352, %354 : vector<16x8xf32>
    %356 = vector.extract_strided_slice %295 {offsets = [0, 32], sizes = [16, 8], strides = [1, 1]} : vector<16x384xf32> to vector<16x8xf32>
    %357 = vector.extract_strided_slice %295 {offsets = [0, 160], sizes = [16, 8], strides = [1, 1]} : vector<16x384xf32> to vector<16x8xf32>
    %358 = vector.extract_strided_slice %295 {offsets = [0, 288], sizes = [16, 8], strides = [1, 1]} : vector<16x384xf32> to vector<16x8xf32>
    %cst_126 = arith.constant dense<0.000000e+00> : vector<16x16xf32>
    %359 = tpu.matmul %356, %357, %cst_126 {dimension_numbers = #tpu.dot_dimension_numbers<[1], [1], [0], [0], [0, 0, 1, 0], [], []>} : vector<16x8xf32>, vector<16x8xf32>, vector<16x16xf32> -> vector<16x16xf32>
    %cst_127 = arith.constant dense<0xFF800000> : vector<16xf32>
    %360 = vector.multi_reduction <maximumf>, %359, %cst_127 [1] : vector<16x16xf32> to vector<16xf32>
    %361 = vector.shape_cast %360 : vector<16xf32> to vector<16x1xf32>
    %362 = vector.broadcast %361 : vector<16x1xf32> to vector<16x16xf32>
    %363 = arith.subf %359, %362 : vector<16x16xf32>
    %364 = math.exp %363 : vector<16x16xf32>
    %cst_128 = arith.constant dense<0.000000e+00> : vector<16xf32>
    %365 = vector.multi_reduction <add>, %364, %cst_128 [1] : vector<16x16xf32> to vector<16xf32>
    %366 = vector.shape_cast %365 : vector<16xf32> to vector<16x1xf32>
    %cst_129 = arith.constant dense<0.000000e+00> : vector<16x8xf32>
    %367 = tpu.matmul %364, %358, %cst_129 {dimension_numbers = #tpu.dot_dimension_numbers<[1], [0], [0], [1], [0, 0, 1, 1], [], []>} : vector<16x16xf32>, vector<16x8xf32>, vector<16x8xf32> -> vector<16x8xf32>
    %368 = tpu.reciprocal %366 {approx = true} : vector<16x1xf32> -> vector<16x1xf32>
    %369 = vector.broadcast %368 : vector<16x1xf32> to vector<16x8xf32>
    %370 = arith.mulf %367, %369 : vector<16x8xf32>
    %371 = vector.extract_strided_slice %295 {offsets = [0, 40], sizes = [16, 8], strides = [1, 1]} : vector<16x384xf32> to vector<16x8xf32>
    %372 = vector.extract_strided_slice %295 {offsets = [0, 168], sizes = [16, 8], strides = [1, 1]} : vector<16x384xf32> to vector<16x8xf32>
    %373 = vector.extract_strided_slice %295 {offsets = [0, 296], sizes = [16, 8], strides = [1, 1]} : vector<16x384xf32> to vector<16x8xf32>
    %cst_130 = arith.constant dense<0.000000e+00> : vector<16x16xf32>
    %374 = tpu.matmul %371, %372, %cst_130 {dimension_numbers = #tpu.dot_dimension_numbers<[1], [1], [0], [0], [0, 0, 1, 0], [], []>} : vector<16x8xf32>, vector<16x8xf32>, vector<16x16xf32> -> vector<16x16xf32>
    %cst_131 = arith.constant dense<0xFF800000> : vector<16xf32>
    %375 = vector.multi_reduction <maximumf>, %374, %cst_131 [1] : vector<16x16xf32> to vector<16xf32>
    %376 = vector.shape_cast %375 : vector<16xf32> to vector<16x1xf32>
    %377 = vector.broadcast %376 : vector<16x1xf32> to vector<16x16xf32>
    %378 = arith.subf %374, %377 : vector<16x16xf32>
    %379 = math.exp %378 : vector<16x16xf32>
    %cst_132 = arith.constant dense<0.000000e+00> : vector<16xf32>
    %380 = vector.multi_reduction <add>, %379, %cst_132 [1] : vector<16x16xf32> to vector<16xf32>
    %381 = vector.shape_cast %380 : vector<16xf32> to vector<16x1xf32>
    %cst_133 = arith.constant dense<0.000000e+00> : vector<16x8xf32>
    %382 = tpu.matmul %379, %373, %cst_133 {dimension_numbers = #tpu.dot_dimension_numbers<[1], [0], [0], [1], [0, 0, 1, 1], [], []>} : vector<16x16xf32>, vector<16x8xf32>, vector<16x8xf32> -> vector<16x8xf32>
    %383 = tpu.reciprocal %381 {approx = true} : vector<16x1xf32> -> vector<16x1xf32>
    %384 = vector.broadcast %383 : vector<16x1xf32> to vector<16x8xf32>
    %385 = arith.mulf %382, %384 : vector<16x8xf32>
    %cst_134 = arith.constant 0.000000e+00 : f32
    %386 = vector.broadcast %cst_134 : f32 to vector<16x80xf32>
    %387 = tpu.concatenate %310, %325, %340, %355, %370, %385, %386 in 1 : vector<16x8xf32>, vector<16x8xf32>, vector<16x8xf32>, vector<16x8xf32>, vector<16x8xf32>, vector<16x8xf32>, vector<16x80xf32> -> vector<16x128xf32>
    %388 = arith.truncf %387 : vector<16x128xf32> to vector<16x128xbf16>
    %c1_135 = arith.constant 1 : index
    %c0_136 = arith.constant 0 : index
    %c0_137 = arith.constant 0 : index
    %389 = vector.load %arg4[%c1_135, %c0_136, %c0_137] : memref<2x128x128xbf16, #tpu.memory_space<vmem>>, vector<1x128x128xbf16>
    %390 = vector.shape_cast %389 : vector<1x128x128xbf16> to vector<128x128xbf16>
    %cst_138 = arith.constant dense<0.000000e+00> : vector<16x128xf32>
    %391 = tpu.matmul %388, %390, %cst_138 {dimension_numbers = #tpu.dot_dimension_numbers<[1], [0], [0], [1], [0, 0, 1, 1], [], []>} : vector<16x128xbf16>, vector<128x128xbf16>, vector<16x128xf32> -> vector<16x128xf32>
    %c1_139 = arith.constant 1 : index
    %c0_140 = arith.constant 0 : index
    %c0_141 = arith.constant 0 : index
    %392 = vector.load %arg5[%c1_139, %c0_140, %c0_141] : memref<2x1x128xf32, #tpu.memory_space<vmem>>, vector<1x1x128xf32>
    %393 = vector.shape_cast %392 : vector<1x1x128xf32> to vector<1x128xf32>
    %394 = vector.broadcast %393 : vector<1x128xf32> to vector<16x128xf32>
    %395 = arith.addf %391, %394 : vector<16x128xf32>
    %396 = arith.addf %287, %395 : vector<16x128xf32>
    %c1_142 = arith.constant 1 : index
    %c0_143 = arith.constant 0 : index
    %c0_144 = arith.constant 0 : index
    %397 = vector.load %arg6[%c1_142, %c0_143, %c0_144] : memref<2x1x128xf32, #tpu.memory_space<vmem>>, vector<1x1x128xf32>
    %398 = vector.shape_cast %397 : vector<1x1x128xf32> to vector<1x128xf32>
    %c1_145 = arith.constant 1 : index
    %c0_146 = arith.constant 0 : index
    %c0_147 = arith.constant 0 : index
    %399 = vector.load %arg7[%c1_145, %c0_146, %c0_147] : memref<2x1x128xf32, #tpu.memory_space<vmem>>, vector<1x1x128xf32>
    %400 = vector.shape_cast %399 : vector<1x1x128xf32> to vector<1x128xf32>
    %cst_148 = arith.constant dense<0.000000e+00> : vector<16xf32>
    %401 = vector.multi_reduction <add>, %396, %cst_148 [1] : vector<16x128xf32> to vector<16xf32>
    %402 = vector.shape_cast %401 : vector<16xf32> to vector<16x1xf32>
    %cst_149 = arith.constant 0.010416667 : f32
    %403 = vector.broadcast %cst_149 : f32 to vector<16x1xf32>
    %404 = arith.mulf %402, %403 : vector<16x1xf32>
    %405 = vector.broadcast %404 : vector<16x1xf32> to vector<16x128xf32>
    %406 = arith.subf %396, %405 : vector<16x128xf32>
    %407 = vector.broadcast %4 : vector<1x128xf32> to vector<16x128xf32>
    %408 = arith.mulf %406, %407 : vector<16x128xf32>
    %409 = arith.mulf %408, %408 : vector<16x128xf32>
    %cst_150 = arith.constant dense<0.000000e+00> : vector<16xf32>
    %410 = vector.multi_reduction <add>, %409, %cst_150 [1] : vector<16x128xf32> to vector<16xf32>
    %411 = vector.shape_cast %410 : vector<16xf32> to vector<16x1xf32>
    %cst_151 = arith.constant 0.010416667 : f32
    %412 = vector.broadcast %cst_151 : f32 to vector<16x1xf32>
    %413 = arith.mulf %411, %412 : vector<16x1xf32>
    %cst_152 = arith.constant 9.99999974E-6 : f32
    %414 = vector.broadcast %cst_152 : f32 to vector<16x1xf32>
    %415 = arith.addf %413, %414 : vector<16x1xf32>
    %416 = math.rsqrt %415 : vector<16x1xf32>
    %417 = vector.broadcast %416 : vector<16x1xf32> to vector<16x128xf32>
    %418 = arith.mulf %408, %417 : vector<16x128xf32>
    %419 = vector.broadcast %398 : vector<1x128xf32> to vector<16x128xf32>
    %420 = arith.mulf %418, %419 : vector<16x128xf32>
    %421 = vector.broadcast %400 : vector<1x128xf32> to vector<16x128xf32>
    %422 = arith.addf %420, %421 : vector<16x128xf32>
    %423 = arith.truncf %422 : vector<16x128xf32> to vector<16x128xbf16>
    %c1_153 = arith.constant 1 : index
    %c0_154 = arith.constant 0 : index
    %c0_155 = arith.constant 0 : index
    %424 = vector.load %arg8[%c1_153, %c0_154, %c0_155] : memref<2x128x256xbf16, #tpu.memory_space<vmem>>, vector<1x128x256xbf16>
    %425 = vector.shape_cast %424 : vector<1x128x256xbf16> to vector<128x256xbf16>
    %cst_156 = arith.constant dense<0.000000e+00> : vector<16x256xf32>
    %426 = tpu.matmul %423, %425, %cst_156 {dimension_numbers = #tpu.dot_dimension_numbers<[1], [0], [0], [1], [0, 0, 1, 1], [], []>} : vector<16x128xbf16>, vector<128x256xbf16>, vector<16x256xf32> -> vector<16x256xf32>
    %c1_157 = arith.constant 1 : index
    %c0_158 = arith.constant 0 : index
    %c0_159 = arith.constant 0 : index
    %427 = vector.load %arg9[%c1_157, %c0_158, %c0_159] : memref<2x1x256xf32, #tpu.memory_space<vmem>>, vector<1x1x256xf32>
    %428 = vector.shape_cast %427 : vector<1x1x256xf32> to vector<1x256xf32>
    %429 = vector.broadcast %428 : vector<1x256xf32> to vector<16x256xf32>
    %430 = arith.addf %426, %429 : vector<16x256xf32>
    %cst_160 = arith.constant 5.000000e-01 : f32
    %431 = vector.broadcast %cst_160 : f32 to vector<16x256xf32>
    %432 = arith.mulf %431, %430 : vector<16x256xf32>
    %cst_161 = arith.constant 4.471500e-02 : f32
    %433 = vector.broadcast %cst_161 : f32 to vector<16x256xf32>
    %434 = arith.mulf %433, %430 : vector<16x256xf32>
    %435 = arith.mulf %434, %430 : vector<16x256xf32>
    %436 = arith.mulf %435, %430 : vector<16x256xf32>
    %437 = arith.addf %430, %436 : vector<16x256xf32>
    %cst_162 = arith.constant 0.797884583 : f32
    %438 = vector.broadcast %cst_162 : f32 to vector<16x256xf32>
    %439 = arith.mulf %438, %437 : vector<16x256xf32>
    %440 = math.tanh %439 : vector<16x256xf32>
    %cst_163 = arith.constant 1.000000e+00 : f32
    %441 = vector.broadcast %cst_163 : f32 to vector<16x256xf32>
    %442 = arith.addf %441, %440 : vector<16x256xf32>
    %443 = arith.mulf %432, %442 : vector<16x256xf32>
    %444 = arith.truncf %443 : vector<16x256xf32> to vector<16x256xbf16>
    %c1_164 = arith.constant 1 : index
    %c0_165 = arith.constant 0 : index
    %c0_166 = arith.constant 0 : index
    %445 = vector.load %arg10[%c1_164, %c0_165, %c0_166] : memref<2x256x128xbf16, #tpu.memory_space<vmem>>, vector<1x256x128xbf16>
    %446 = vector.shape_cast %445 : vector<1x256x128xbf16> to vector<256x128xbf16>
    %cst_167 = arith.constant dense<0.000000e+00> : vector<16x128xf32>
    %447 = tpu.matmul %444, %446, %cst_167 {dimension_numbers = #tpu.dot_dimension_numbers<[1], [0], [0], [1], [0, 0, 1, 1], [], []>} : vector<16x256xbf16>, vector<256x128xbf16>, vector<16x128xf32> -> vector<16x128xf32>
    %c1_168 = arith.constant 1 : index
    %c0_169 = arith.constant 0 : index
    %c0_170 = arith.constant 0 : index
    %448 = vector.load %arg11[%c1_168, %c0_169, %c0_170] : memref<2x1x128xf32, #tpu.memory_space<vmem>>, vector<1x1x128xf32>
    %449 = vector.shape_cast %448 : vector<1x1x128xf32> to vector<1x128xf32>
    %450 = vector.broadcast %449 : vector<1x128xf32> to vector<16x128xf32>
    %451 = arith.addf %447, %450 : vector<16x128xf32>
    %452 = arith.addf %422, %451 : vector<16x128xf32>
    %c1_171 = arith.constant 1 : index
    %c0_172 = arith.constant 0 : index
    %c0_173 = arith.constant 0 : index
    %453 = vector.load %arg6[%c1_171, %c0_172, %c0_173] : memref<2x1x128xf32, #tpu.memory_space<vmem>>, vector<1x1x128xf32>
    %454 = vector.shape_cast %453 : vector<1x1x128xf32> to vector<1x128xf32>
    %c1_174 = arith.constant 1 : index
    %c0_175 = arith.constant 0 : index
    %c0_176 = arith.constant 0 : index
    %455 = vector.load %arg7[%c1_174, %c0_175, %c0_176] : memref<2x1x128xf32, #tpu.memory_space<vmem>>, vector<1x1x128xf32>
    %456 = vector.shape_cast %455 : vector<1x1x128xf32> to vector<1x128xf32>
    %cst_177 = arith.constant dense<0.000000e+00> : vector<16xf32>
    %457 = vector.multi_reduction <add>, %452, %cst_177 [1] : vector<16x128xf32> to vector<16xf32>
    %458 = vector.shape_cast %457 : vector<16xf32> to vector<16x1xf32>
    %cst_178 = arith.constant 0.010416667 : f32
    %459 = vector.broadcast %cst_178 : f32 to vector<16x1xf32>
    %460 = arith.mulf %458, %459 : vector<16x1xf32>
    %461 = vector.broadcast %460 : vector<16x1xf32> to vector<16x128xf32>
    %462 = arith.subf %452, %461 : vector<16x128xf32>
    %463 = vector.broadcast %4 : vector<1x128xf32> to vector<16x128xf32>
    %464 = arith.mulf %462, %463 : vector<16x128xf32>
    %465 = arith.mulf %464, %464 : vector<16x128xf32>
    %cst_179 = arith.constant dense<0.000000e+00> : vector<16xf32>
    %466 = vector.multi_reduction <add>, %465, %cst_179 [1] : vector<16x128xf32> to vector<16xf32>
    %467 = vector.shape_cast %466 : vector<16xf32> to vector<16x1xf32>
    %cst_180 = arith.constant 0.010416667 : f32
    %468 = vector.broadcast %cst_180 : f32 to vector<16x1xf32>
    %469 = arith.mulf %467, %468 : vector<16x1xf32>
    %cst_181 = arith.constant 9.99999974E-6 : f32
    %470 = vector.broadcast %cst_181 : f32 to vector<16x1xf32>
    %471 = arith.addf %469, %470 : vector<16x1xf32>
    %472 = math.rsqrt %471 : vector<16x1xf32>
    %473 = vector.broadcast %472 : vector<16x1xf32> to vector<16x128xf32>
    %474 = arith.mulf %464, %473 : vector<16x128xf32>
    %475 = vector.broadcast %454 : vector<1x128xf32> to vector<16x128xf32>
    %476 = arith.mulf %474, %475 : vector<16x128xf32>
    %477 = vector.broadcast %456 : vector<1x128xf32> to vector<16x128xf32>
    %478 = arith.addf %476, %477 : vector<16x128xf32>
    %c0_182 = arith.constant 0 : index
    %c0_183 = arith.constant 0 : index
    %479 = vector.load %arg12[%c0_182, %c0_183] : memref<1x128xf32, #tpu.memory_space<vmem>>, vector<1x128xf32>
    %c0_184 = arith.constant 0 : index
    %c0_185 = arith.constant 0 : index
    %480 = vector.load %arg13[%c0_184, %c0_185] : memref<1x128xf32, #tpu.memory_space<vmem>>, vector<1x128xf32>
    %cst_186 = arith.constant dense<0.000000e+00> : vector<16xf32>
    %481 = vector.multi_reduction <add>, %478, %cst_186 [1] : vector<16x128xf32> to vector<16xf32>
    %482 = vector.shape_cast %481 : vector<16xf32> to vector<16x1xf32>
    %cst_187 = arith.constant 0.010416667 : f32
    %483 = vector.broadcast %cst_187 : f32 to vector<16x1xf32>
    %484 = arith.mulf %482, %483 : vector<16x1xf32>
    %485 = vector.broadcast %484 : vector<16x1xf32> to vector<16x128xf32>
    %486 = arith.subf %478, %485 : vector<16x128xf32>
    %487 = vector.broadcast %4 : vector<1x128xf32> to vector<16x128xf32>
    %488 = arith.mulf %486, %487 : vector<16x128xf32>
    %489 = arith.mulf %488, %488 : vector<16x128xf32>
    %cst_188 = arith.constant dense<0.000000e+00> : vector<16xf32>
    %490 = vector.multi_reduction <add>, %489, %cst_188 [1] : vector<16x128xf32> to vector<16xf32>
    %491 = vector.shape_cast %490 : vector<16xf32> to vector<16x1xf32>
    %cst_189 = arith.constant 0.010416667 : f32
    %492 = vector.broadcast %cst_189 : f32 to vector<16x1xf32>
    %493 = arith.mulf %491, %492 : vector<16x1xf32>
    %cst_190 = arith.constant 9.99999974E-6 : f32
    %494 = vector.broadcast %cst_190 : f32 to vector<16x1xf32>
    %495 = arith.addf %493, %494 : vector<16x1xf32>
    %496 = math.rsqrt %495 : vector<16x1xf32>
    %497 = vector.broadcast %496 : vector<16x1xf32> to vector<16x128xf32>
    %498 = arith.mulf %488, %497 : vector<16x128xf32>
    %499 = vector.broadcast %479 : vector<1x128xf32> to vector<16x128xf32>
    %500 = arith.mulf %498, %499 : vector<16x128xf32>
    %501 = vector.broadcast %480 : vector<1x128xf32> to vector<16x128xf32>
    %502 = arith.addf %500, %501 : vector<16x128xf32>
    %c0_191 = arith.constant 0 : index
    %c0_192 = arith.constant 0 : index
    %c0_193 = arith.constant 0 : index
    %503 = vector.load %arg14[%c0_191, %c0_192, %c0_193] : memref<1x16x128xf32, #tpu.memory_space<vmem>>, vector<1x16x128xf32>
    %504 = vector.shape_cast %503 : vector<1x16x128xf32> to vector<16x128xf32>
    %505 = vector.shape_cast %502 : vector<16x128xf32> to vector<1x16x128xf32>
    tpu.vector_store %arg14[%c0_191, %c0_192, %c0_193], %505 {strides = array<i32>} : memref<1x16x128xf32, #tpu.memory_space<vmem>>, vector<1x16x128xf32>,
    return
  }
  func.func @transform_0(%arg0: i32) -> (i32, i32, i32) {
    %c0_i32 = arith.constant 0 : i32
    %c0_i32_0 = arith.constant 0 : i32
    %c0_i32_1 = arith.constant 0 : i32
    return %arg0, %c0_i32, %c0_i32_0 : i32, i32, i32
  }
  func.func @transform_1(%arg0: i32) -> (i32, i32, i32) {
    %c0_i32 = arith.constant 0 : i32
    %c0_i32_0 = arith.constant 0 : i32
    %c0_i32_1 = arith.constant 0 : i32
    %c0_i32_2 = arith.constant 0 : i32
    return %c0_i32, %c0_i32_0, %c0_i32_1 : i32, i32, i32
  }
  func.func @transform_2(%arg0: i32) -> (i32, i32, i32) {
    %c0_i32 = arith.constant 0 : i32
    %c0_i32_0 = arith.constant 0 : i32
    %c0_i32_1 = arith.constant 0 : i32
    %c0_i32_2 = arith.constant 0 : i32
    return %c0_i32, %c0_i32_0, %c0_i32_1 : i32, i32, i32
  }
  func.func @transform_3(%arg0: i32) -> (i32, i32, i32) {
    %c0_i32 = arith.constant 0 : i32
    %c0_i32_0 = arith.constant 0 : i32
    %c0_i32_1 = arith.constant 0 : i32
    %c0_i32_2 = arith.constant 0 : i32
    return %c0_i32, %c0_i32_0, %c0_i32_1 : i32, i32, i32
  }
  func.func @transform_4(%arg0: i32) -> (i32, i32, i32) {
    %c0_i32 = arith.constant 0 : i32
    %c0_i32_0 = arith.constant 0 : i32
    %c0_i32_1 = arith.constant 0 : i32
    %c0_i32_2 = arith.constant 0 : i32
    return %c0_i32, %c0_i32_0, %c0_i32_1 : i32, i32, i32
  }
  func.func @transform_5(%arg0: i32) -> (i32, i32, i32) {
    %c0_i32 = arith.constant 0 : i32
    %c0_i32_0 = arith.constant 0 : i32
    %c0_i32_1 = arith.constant 0 : i32
    %c0_i32_2 = arith.constant 0 : i32
    return %c0_i32, %c0_i32_0, %c0_i32_1 : i32, i32, i32
  }
  func.func @transform_6(%arg0: i32) -> (i32, i32, i32) {
    %c0_i32 = arith.constant 0 : i32
    %c0_i32_0 = arith.constant 0 : i32
    %c0_i32_1 = arith.constant 0 : i32
    %c0_i32_2 = arith.constant 0 : i32
    return %c0_i32, %c0_i32_0, %c0_i32_1 : i32, i32, i32
  }
  func.func @transform_7(%arg0: i32) -> (i32, i32, i32) {
    %c0_i32 = arith.constant 0 : i32
    %c0_i32_0 = arith.constant 0 : i32
    %c0_i32_1 = arith.constant 0 : i32
    %c0_i32_2 = arith.constant 0 : i32
    return %c0_i32, %c0_i32_0, %c0_i32_1 : i32, i32, i32
  }
  func.func @transform_8(%arg0: i32) -> (i32, i32, i32) {
    %c0_i32 = arith.constant 0 : i32
    %c0_i32_0 = arith.constant 0 : i32
    %c0_i32_1 = arith.constant 0 : i32
    %c0_i32_2 = arith.constant 0 : i32
    return %c0_i32, %c0_i32_0, %c0_i32_1 : i32, i32, i32
  }
  func.func @transform_9(%arg0: i32) -> (i32, i32, i32) {
    %c0_i32 = arith.constant 0 : i32
    %c0_i32_0 = arith.constant 0 : i32
    %c0_i32_1 = arith.constant 0 : i32
    %c0_i32_2 = arith.constant 0 : i32
    return %c0_i32, %c0_i32_0, %c0_i32_1 : i32, i32, i32
  }
  func.func @transform_10(%arg0: i32) -> (i32, i32, i32) {
    %c0_i32 = arith.constant 0 : i32
    %c0_i32_0 = arith.constant 0 : i32
    %c0_i32_1 = arith.constant 0 : i32
    %c0_i32_2 = arith.constant 0 : i32
    return %c0_i32, %c0_i32_0, %c0_i32_1 : i32, i32, i32
  }
  func.func @transform_11(%arg0: i32) -> (i32, i32) {
    %c0_i32 = arith.constant 0 : i32
    %c0_i32_0 = arith.constant 0 : i32
    %c0_i32_1 = arith.constant 0 : i32
    return %c0_i32, %c0_i32_0 : i32, i32
  }
  func.func @transform_12(%arg0: i32) -> (i32, i32) {
    %c0_i32 = arith.constant 0 : i32
    %c0_i32_0 = arith.constant 0 : i32
    %c0_i32_1 = arith.constant 0 : i32
    return %c0_i32, %c0_i32_0 : i32, i32
  }
  func.func @transform_13(%arg0: i32) -> (i32, i32, i32) {
    %c0_i32 = arith.constant 0 : i32
    %c0_i32_0 = arith.constant 0 : i32
    %c0_i32_1 = arith.constant 0 : i32
    return %arg0, %c0_i32, %c0_i32_0 : i32, i32, i32
  }
}

</mosaic_0001>

<llo_original>
// kernel: _lambda_.1
$region0: #{_lambda_.1}
  #allocation0 [shape = 'u32[]', space=smem, size = 0x4, offset = 0x4, fixed_abs, tag = 'smem constant byte address 0x4 - core index']
  #allocation1 [shape = 'u32[144,128]{1,0:T(1,128)}', space=vmem, size = 0x12000, scoped, tag = 'internal scratch']
  %s0 = inlined_call_operand.vmem [shape: f32[2,16,128], index: 0, kind: input, shape index: {}]
  %s1 = inlined_call_operand.hbm [shape: bf16[2,128,384], index: 1, kind: input, shape index: {}]
  %s2 = inlined_call_operand.vmem [shape: f32[2,1,384], index: 2, kind: input, shape index: {}]
  %s3 = inlined_call_operand.vmem [shape: bf16[2,128,128], index: 3, kind: input, shape index: {}]
  %s4 = inlined_call_operand.vmem [shape: f32[2,1,128], index: 4, kind: input, shape index: {}]
  %s5 = inlined_call_operand.vmem [shape: f32[2,1,128], index: 5, kind: input, shape index: {}]
  %s6 = inlined_call_operand.vmem [shape: f32[2,1,128], index: 6, kind: input, shape index: {}]
  %s7 = inlined_call_operand.hbm [shape: bf16[2,128,256], index: 7, kind: input, shape index: {}]
  %s8 = inlined_call_operand.vmem [shape: f32[2,1,256], index: 8, kind: input, shape index: {}]
  %s9 = inlined_call_operand.hbm [shape: bf16[2,256,128], index: 9, kind: input, shape index: {}]
  %s10 = inlined_call_operand.vmem [shape: f32[2,1,128], index: 10, kind: input, shape index: {}]
  %s11 = inlined_call_operand.vmem [shape: f32[1,128], index: 11, kind: input, shape index: {}]
  %s12 = inlined_call_operand.vmem [shape: f32[1,128], index: 12, kind: input, shape index: {}]
  %s13 = inlined_call_operand.hbm [shape: f32[2,16,128], index: 13, kind: output, shape index: {}]
  %s14 = sld [smem:[#allocation0]]
  $region97: #{_lambda_.1} parent=0
    _
  %s16 = ssub.s32 1, %s14
  %s17 = scalar_select 0, %s16, %s14
  $region1: #{_lambda_.1} parent=0
    #allocation2 [shape = 'u8[196608]{0}', space=vmem, size = 0x30000, scoped, tag = 'input window, operand 1, single buffered']
    #allocation3 [shape = 's32[2]{0}', space=sflag, size = 0x8, scoped, tag = 'scoped memory for _lambda_.1']
    #allocation4 [shape = 's32[2]{0}', space=sflag, size = 0x8, scoped, tag = 'scoped memory for _lambda_.1']
    #allocation5 [shape = 'u8[131072]{0}', space=vmem, size = 0x20000, scoped, tag = 'input window, operand 7, single buffered']
    #allocation6 [shape = 's32[1]{0}', space=sflag, size = 0x4, scoped, tag = 'scoped memory for _lambda_.1']
    #allocation7 [shape = 'u8[131072]{0}', space=vmem, size = 0x20000, scoped, tag = 'input window, operand 9, single buffered']
    #allocation8 [shape = 'u8[16384]{0}', space=vmem, size = 0x4000, scoped, tag = 'output window, operand 0']
    %18 = vsyncpa [#allocation3], 0
    %19 = vsyncpa [#allocation6], 0
    %20 = vsyncpa [#allocation4], 0
    %s21 = scalar_lea.sflag [#allocation4], 1
    %22 = vsyncpa %s21, 0
    loop: start=0, step=1, limit=4
    $region2: #{_lambda_.1} parent=1 // loop_pre_header
      _
    $region3: #{_lambda_.1} parent=1 // loop_header
      %s24 = sphi 0, %s28
      %p25 = scmp.ge.s32.totalorder %s24, 4
      %s34 = sphi 0, %s36
      %s37 = sphi 0, %s34
      %s38 = sphi 0, %s37
      %s54 = sphi 0, %s38
      %s58 = sphi 0, %s58
      %s60 = sphi 0, %s58
      %s61 = sphi 0, %s60
      %s75 = sphi 0, %s61
      %s79 = sphi 0, %s79
      %s81 = sphi 0, %s79
      %s82 = sphi 0, %s81
      %s96 = sphi 0, %s82
      %s100 = sphi 0, %s100
      %s102 = sphi 0, %s100
      %s103 = sphi 0, %s102
      %s117 = sphi 0, %s103
      %s121 = sphi 0, %s121
      %s123 = sphi 0, %s121
      %s124 = sphi 0, %s123
      %s138 = sphi 0, %s124
      %s142 = sphi 0, %s142
      %s144 = sphi 0, %s142
      %s145 = sphi 0, %s144
      %s159 = sphi 0, %s145
      %s163 = sphi 0, %s163
      %s165 = sphi 0, %s163
      %s166 = sphi 0, %s165
      %s180 = sphi 0, %s166
      %s184 = sphi 0, %s184
      %s186 = sphi 0, %s184
      %s187 = sphi 0, %s186
      %s201 = sphi 0, %s187
      %s205 = sphi 0, %s205
      %s207 = sphi 0, %s205
      %s208 = sphi 0, %s207
      %s222 = sphi 0, %s208
      %s226 = sphi 0, %s226
      %s228 = sphi 0, %s226
      %s229 = sphi 0, %s228
      %s243 = sphi 0, %s229
      %s247 = sphi 0, %s247
      %s249 = sphi 0, %s247
      %s250 = sphi 0, %s249
      %s264 = sphi 0, %s250
      %s268 = sphi 0, %s268
      %s270 = sphi 0, %s268
      %s271 = sphi 0, %s270
      %s285 = sphi 0, %s271
      %s289 = sphi 0, %s289
      %s291 = sphi 0, %s289
      %s292 = sphi 0, %s291
      %s306 = sphi 0, %s292
      %s312 = sphi 0, %s314
      %s315 = sphi 0, %s312
      %s316 = sphi 0, %s315
      %s332 = sphi 0, %s316
    $region4: #{_lambda_.1} parent=1 // loop_header_branch
      %27 = sbr.rel (%p25) target = $region8
    $region5: #{_lambda_.1} parent=1 // loop_body
      %s29 = ssub.s32 %s24, 1
      %s30 = ssub.s32 %s24, 2
      %s31 = sadd.s32 %s24, 1
      %s32 = ssub.s32 %s24, %s31
      %p33 = scmp.eq.s32.totalorder %s32, 0
      %s35 = sadd.s32 %s34, 1
      %s36 = scalar_select %p33, %s34, %s35
      %p39 = pneg %p33
      %p40 = scmp.eq.s32.totalorder %s24, 1
      %p41 = por %p39, %p40
      %p42 = scmp.ne.s32.totalorder %s34, %s37
      %p43 = scmp.eq.s32.totalorder %s24, 0
      %p44 = por %p42, %p43
      %p45 = scmp.ne.s32.totalorder %s34, %s37
      %p46 = scmp.eq.s32.totalorder %s29, 1
      %p47 = por %p45, %p46
      %p48 = scmp.ne.s32.totalorder %s37, %s38
      %p49 = scmp.eq.s32.totalorder %s29, 0
      %p50 = por %p48, %p49
      %p51 = scmp.ne.s32.totalorder %s37, %s38
      %p52 = scmp.eq.s32.totalorder %s30, 1
      %p53 = por %p51, %p52
      %p55 = scmp.ne.s32.totalorder %s38, %s54
      %p56 = scmp.eq.s32.totalorder %s30, 0
      %p57 = por %p55, %p56
      %s59 = sadd.s32 %s58, 1
      %p62 = scmp.eq.s32.totalorder %s24, 1
      %p63 = scmp.ne.s32.totalorder %s58, %s60
      %p64 = scmp.eq.s32.totalorder %s24, 0
      %p65 = por %p63, %p64
      %p66 = scmp.ne.s32.totalorder %s58, %s60
      %p67 = scmp.eq.s32.totalorder %s29, 1
      %p68 = por %p66, %p67
      %p69 = scmp.ne.s32.totalorder %s60, %s61
      %p70 = scmp.eq.s32.totalorder %s29, 0
      %p71 = por %p69, %p70
      %p72 = scmp.ne.s32.totalorder %s60, %s61
      %p73 = scmp.eq.s32.totalorder %s30, 1
      %p74 = por %p72, %p73
      %p76 = scmp.ne.s32.totalorder %s61, %s75
      %p77 = scmp.eq.s32.totalorder %s30, 0
      %p78 = por %p76, %p77
      %s80 = sadd.s32 %s79, 1
      %p83 = scmp.eq.s32.totalorder %s24, 1
      %p84 = scmp.ne.s32.totalorder %s79, %s81
      %p85 = scmp.eq.s32.totalorder %s24, 0
      %p86 = por %p84, %p85
      %p87 = scmp.ne.s32.totalorder %s79, %s81
      %p88 = scmp.eq.s32.totalorder %s29, 1
      %p89 = por %p87, %p88
      %p90 = scmp.ne.s32.totalorder %s81, %s82
      %p91 = scmp.eq.s32.totalorder %s29, 0
      %p92 = por %p90, %p91
      %p93 = scmp.ne.s32.totalorder %s81, %s82
      %p94 = scmp.eq.s32.totalorder %s30, 1
      %p95 = por %p93, %p94
      %p97 = scmp.ne.s32.totalorder %s82, %s96
      %p98 = scmp.eq.s32.totalorder %s30, 0
      %p99 = por %p97, %p98
      %s101 = sadd.s32 %s100, 1
      %p104 = scmp.eq.s32.totalorder %s24, 1
      %p105 = scmp.ne.s32.totalorder %s100, %s102
      %p106 = scmp.eq.s32.totalorder %s24, 0
      %p107 = por %p105, %p106
      %p108 = scmp.ne.s32.totalorder %s100, %s102
      %p109 = scmp.eq.s32.totalorder %s29, 1
      %p110 = por %p108, %p109
      %p111 = scmp.ne.s32.totalorder %s102, %s103
      %p112 = scmp.eq.s32.totalorder %s29, 0
      %p113 = por %p111, %p112
      %p114 = scmp.ne.s32.totalorder %s102, %s103
      %p115 = scmp.eq.s32.totalorder %s30, 1
      %p116 = por %p114, %p115
      %p118 = scmp.ne.s32.totalorder %s103, %s117
      %p119 = scmp.eq.s32.totalorder %s30, 0
      %p120 = por %p118, %p119
      %s122 = sadd.s32 %s121, 1
      %p125 = scmp.eq.s32.totalorder %s24, 1
      %p126 = scmp.ne.s32.totalorder %s121, %s123
      %p127 = scmp.eq.s32.totalorder %s24, 0
      %p128 = por %p126, %p127
      %p129 = scmp.ne.s32.totalorder %s121, %s123
      %p130 = scmp.eq.s32.totalorder %s29, 1
      %p131 = por %p129, %p130
      %p132 = scmp.ne.s32.totalorder %s123, %s124
      %p133 = scmp.eq.s32.totalorder %s29, 0
      %p134 = por %p132, %p133
      %p135 = scmp.ne.s32.totalorder %s123, %s124
      %p136 = scmp.eq.s32.totalorder %s30, 1
      %p137 = por %p135, %p136
      %p139 = scmp.ne.s32.totalorder %s124, %s138
      %p140 = scmp.eq.s32.totalorder %s30, 0
      %p141 = por %p139, %p140
      %s143 = sadd.s32 %s142, 1
      %p146 = scmp.eq.s32.totalorder %s24, 1
      %p147 = scmp.ne.s32.totalorder %s142, %s144
      %p148 = scmp.eq.s32.totalorder %s24, 0
      %p149 = por %p147, %p148
      %p150 = scmp.ne.s32.totalorder %s142, %s144
      %p151 = scmp.eq.s32.totalorder %s29, 1
      %p152 = por %p150, %p151
      %p153 = scmp.ne.s32.totalorder %s144, %s145
      %p154 = scmp.eq.s32.totalorder %s29, 0
      %p155 = por %p153, %p154
      %p156 = scmp.ne.s32.totalorder %s144, %s145
      %p157 = scmp.eq.s32.totalorder %s30, 1
      %p158 = por %p156, %p157
      %p160 = scmp.ne.s32.totalorder %s145, %s159
      %p161 = scmp.eq.s32.totalorder %s30, 0
      %p162 = por %p160, %p161
      %s164 = sadd.s32 %s163, 1
      %p167 = scmp.eq.s32.totalorder %s24, 1
      %p168 = scmp.ne.s32.totalorder %s163, %s165
      %p169 = scmp.eq.s32.totalorder %s24, 0
      %p170 = por %p168, %p169
      %p171 = scmp.ne.s32.totalorder %s163, %s165
      %p172 = scmp.eq.s32.totalorder %s29, 1
      %p173 = por %p171, %p172
      %p174 = scmp.ne.s32.totalorder %s165, %s166
      %p175 = scmp.eq.s32.totalorder %s29, 0
      %p176 = por %p174, %p175
      %p177 = scmp.ne.s32.totalorder %s165, %s166
      %p178 = scmp.eq.s32.totalorder %s30, 1
      %p179 = por %p177, %p178
      %p181 = scmp.ne.s32.totalorder %s166, %s180
      %p182 = scmp.eq.s32.totalorder %s30, 0
      %p183 = por %p181, %p182
      %s185 = sadd.s32 %s184, 1
      %p188 = scmp.eq.s32.totalorder %s24, 1
      %p189 = scmp.ne.s32.totalorder %s184, %s186
      %p190 = scmp.eq.s32.totalorder %s24, 0
      %p191 = por %p189, %p190
      %p192 = scmp.ne.s32.totalorder %s184, %s186
      %p193 = scmp.eq.s32.totalorder %s29, 1
      %p194 = por %p192, %p193
      %p195 = scmp.ne.s32.totalorder %s186, %s187
      %p196 = scmp.eq.s32.totalorder %s29, 0
      %p197 = por %p195, %p196
      %p198 = scmp.ne.s32.totalorder %s186, %s187
      %p199 = scmp.eq.s32.totalorder %s30, 1
      %p200 = por %p198, %p199
      %p202 = scmp.ne.s32.totalorder %s187, %s201
      %p203 = scmp.eq.s32.totalorder %s30, 0
      %p204 = por %p202, %p203
      %s206 = sadd.s32 %s205, 1
      %p209 = scmp.eq.s32.totalorder %s24, 1
      %p210 = scmp.ne.s32.totalorder %s205, %s207
      %p211 = scmp.eq.s32.totalorder %s24, 0
      %p212 = por %p210, %p211
      %p213 = scmp.ne.s32.totalorder %s205, %s207
      %p214 = scmp.eq.s32.totalorder %s29, 1
      %p215 = por %p213, %p214
      %p216 = scmp.ne.s32.totalorder %s207, %s208
      %p217 = scmp.eq.s32.totalorder %s29, 0
      %p218 = por %p216, %p217
      %p219 = scmp.ne.s32.totalorder %s207, %s208
      %p220 = scmp.eq.s32.totalorder %s30, 1
      %p221 = por %p219, %p220
      %p223 = scmp.ne.s32.totalorder %s208, %s222
      %p224 = scmp.eq.s32.totalorder %s30, 0
      %p225 = por %p223, %p224
      %s227 = sadd.s32 %s226, 1
      %p230 = scmp.eq.s32.totalorder %s24, 1
      %p231 = scmp.ne.s32.totalorder %s226, %s228
      %p232 = scmp.eq.s32.totalorder %s24, 0
      %p233 = por %p231, %p232
      %p234 = scmp.ne.s32.totalorder %s226, %s228
      %p235 = scmp.eq.s32.totalorder %s29, 1
      %p236 = por %p234, %p235
      %p237 = scmp.ne.s32.totalorder %s228, %s229
      %p238 = scmp.eq.s32.totalorder %s29, 0
      %p239 = por %p237, %p238
      %p240 = scmp.ne.s32.totalorder %s228, %s229
      %p241 = scmp.eq.s32.totalorder %s30, 1
      %p242 = por %p240, %p241
      %p244 = scmp.ne.s32.totalorder %s229, %s243
      %p245 = scmp.eq.s32.totalorder %s30, 0
      %p246 = por %p244, %p245
      %s248 = sadd.s32 %s247, 1
      %p251 = scmp.eq.s32.totalorder %s24, 1
      %p252 = scmp.ne.s32.totalorder %s247, %s249
      %p253 = scmp.eq.s32.totalorder %s24, 0
      %p254 = por %p252, %p253
      %p255 = scmp.ne.s32.totalorder %s247, %s249
      %p256 = scmp.eq.s32.totalorder %s29, 1
      %p257 = por %p255, %p256
      %p258 = scmp.ne.s32.totalorder %s249, %s250
      %p259 = scmp.eq.s32.totalorder %s29, 0
      %p260 = por %p258, %p259
      %p261 = scmp.ne.s32.totalorder %s249, %s250
      %p262 = scmp.eq.s32.totalorder %s30, 1
      %p263 = por %p261, %p262
      %p265 = scmp.ne.s32.totalorder %s250, %s264
      %p266 = scmp.eq.s32.totalorder %s30, 0
      %p267 = por %p265, %p266
      %s269 = sadd.s32 %s268, 1
      %p272 = scmp.eq.s32.totalorder %s24, 1
      %p273 = scmp.ne.s32.totalorder %s268, %s270
      %p274 = scmp.eq.s32.totalorder %s24, 0
      %p275 = por %p273, %p274
      %p276 = scmp.ne.s32.totalorder %s268, %s270
      %p277 = scmp.eq.s32.totalorder %s29, 1
      %p278 = por %p276, %p277
      %p279 = scmp.ne.s32.totalorder %s270, %s271
      %p280 = scmp.eq.s32.totalorder %s29, 0
      %p281 = por %p279, %p280
      %p282 = scmp.ne.s32.totalorder %s270, %s271
      %p283 = scmp.eq.s32.totalorder %s30, 1
      %p284 = por %p282, %p283
      %p286 = scmp.ne.s32.totalorder %s271, %s285
      %p287 = scmp.eq.s32.totalorder %s30, 0
      %p288 = por %p286, %p287
      %s290 = sadd.s32 %s289, 1
      %p293 = scmp.eq.s32.totalorder %s24, 1
      %p294 = scmp.ne.s32.totalorder %s289, %s291
      %p295 = scmp.eq.s32.totalorder %s24, 0
      %p296 = por %p294, %p295
      %p297 = scmp.ne.s32.totalorder %s289, %s291
      %p298 = scmp.eq.s32.totalorder %s29, 1
      %p299 = por %p297, %p298
      %p300 = scmp.ne.s32.totalorder %s291, %s292
      %p301 = scmp.eq.s32.totalorder %s29, 0
      %p302 = por %p300, %p301
      %p303 = scmp.ne.s32.totalorder %s291, %s292
      %p304 = scmp.eq.s32.totalorder %s30, 1
      %p305 = por %p303, %p304
      %p307 = scmp.ne.s32.totalorder %s292, %s306
      %p308 = scmp.eq.s32.totalorder %s30, 0
      %p309 = por %p307, %p308
      %s310 = ssub.s32 %s24, %s31
      %p311 = scmp.eq.s32.totalorder %s310, 0
      %s313 = sadd.s32 %s312, 1
      %s314 = scalar_select %p311, %s312, %s313
      %p317 = pneg %p311
      %p318 = scmp.eq.s32.totalorder %s24, 1
      %p319 = por %p317, %p318
      %p320 = scmp.ne.s32.totalorder %s312, %s315
      %p321 = scmp.eq.s32.totalorder %s24, 0
      %p322 = por %p320, %p321
      %p323 = scmp.ne.s32.totalorder %s312, %s315
      %p324 = scmp.eq.s32.totalorder %s29, 1
      %p325 = por %p323, %p324
      %p326 = scmp.ne.s32.totalorder %s315, %s316
      %p327 = scmp.eq.s32.totalorder %s29, 0
      %p328 = por %p326, %p327
      %p329 = scmp.ne.s32.totalorder %s315, %s316
      %p330 = scmp.eq.s32.totalorder %s30, 1
      %p331 = por %p329, %p330
      %p333 = scmp.ne.s32.totalorder %s316, %s332
      %p334 = scmp.eq.s32.totalorder %s30, 0
      %p335 = por %p333, %p334
      %p336 = scmp.le.s32.totalorder 1, %s24
      %p337 = scmp.lt.s32.totalorder %s24, 3
      %p338 = pnand %p336, %p337
      %p339 = pneg %p338
      // Predicated region
      $region9: #{_lambda_.1} parent=5 // pred_check
        _
      $region10: #{_lambda_.1} parent=5 // pred_check_branch
        %341 = sbr.rel (%p338) target = $region12
      $region11: #{_lambda_.1} parent=5 // pred_region
        %s342 = ssub.s32 %s24, 1
        // Predicated region
        $region13: #{_lambda_.1} parent=11 // pred_check
          %p343 = pneg %p71
        $region14: #{_lambda_.1} parent=11 // pred_check_branch
          %345 = sbr.rel (%p343) target = $region16
        $region15: #{_lambda_.1} parent=11 // pred_region
          %s347 = ssub.s32 6144, 6144
          %348 = vsyncadd [#allocation3], %s347
          %s349 = sshll.u32 [#allocation2], 4
          %s350 = int_to_ptr.vmem [resolvable:$true] %s349
          %355 = dma.hbm_to_vmem [thread:$0]  %s1, 6144, %s350, [#allocation3], 192, 192, 12
        $region16: #{_lambda_.1} parent=11 // pred_fallthru
          _
        // Predicated region
        $region17: #{_lambda_.1} parent=11 // pred_check
          %p356 = pneg %p92
        $region18: #{_lambda_.1} parent=11 // pred_check_branch
          %358 = sbr.rel (%p356) target = $region20
        $region19: #{_lambda_.1} parent=11 // pred_region
          _
        $region20: #{_lambda_.1} parent=11 // pred_fallthru
          _
        // Predicated region
        $region21: #{_lambda_.1} parent=11 // pred_check
          %p359 = pneg %p113
        $region22: #{_lambda_.1} parent=11 // pred_check_branch
          %361 = sbr.rel (%p359) target = $region24
        $region23: #{_lambda_.1} parent=11 // pred_region
          _
        $region24: #{_lambda_.1} parent=11 // pred_fallthru
          _
        // Predicated region
        $region25: #{_lambda_.1} parent=11 // pred_check
          %p362 = pneg %p134
        $region26: #{_lambda_.1} parent=11 // pred_check_branch
          %364 = sbr.rel (%p362) target = $region28
        $region27: #{_lambda_.1} parent=11 // pred_region
          _
        $region28: #{_lambda_.1} parent=11 // pred_fallthru
          _
        // Predicated region
        $region29: #{_lambda_.1} parent=11 // pred_check
          %p365 = pneg %p155
        $region30: #{_lambda_.1} parent=11 // pred_check_branch
          %367 = sbr.rel (%p365) target = $region32
        $region31: #{_lambda_.1} parent=11 // pred_region
          _
        $region32: #{_lambda_.1} parent=11 // pred_fallthru
          _
        // Predicated region
        $region33: #{_lambda_.1} parent=11 // pred_check
          %p368 = pneg %p176
        $region34: #{_lambda_.1} parent=11 // pred_check_branch
          %370 = sbr.rel (%p368) target = $region36
        $region35: #{_lambda_.1} parent=11 // pred_region
          _
        $region36: #{_lambda_.1} parent=11 // pred_fallthru
          _
        // Predicated region
        $region37: #{_lambda_.1} parent=11 // pred_check
          %p371 = pneg %p197
        $region38: #{_lambda_.1} parent=11 // pred_check_branch
          %373 = sbr.rel (%p371) target = $region40
        $region39: #{_lambda_.1} parent=11 // pred_region
          %s375 = ssub.s32 4096, 4096
          %376 = vsyncadd [#allocation6], %s375
          %s377 = sshll.u32 [#allocation5], 4
          %s378 = int_to_ptr.vmem [resolvable:$true] %s377
          %383 = dma.hbm_to_vmem [thread:$0]  %s7, 4096, %s378, [#allocation6], 128, 128, 8
        $region40: #{_lambda_.1} parent=11 // pred_fallthru
          _
        // Predicated region
        $region41: #{_lambda_.1} parent=11 // pred_check
          %p384 = pneg %p218
        $region42: #{_lambda_.1} parent=11 // pred_check_branch
          %386 = sbr.rel (%p384) target = $region44
        $region43: #{_lambda_.1} parent=11 // pred_region
          _
        $region44: #{_lambda_.1} parent=11 // pred_fallthru
          _
        // Predicated region
        $region45: #{_lambda_.1} parent=11 // pred_check
          %p387 = pneg %p239
        $region46: #{_lambda_.1} parent=11 // pred_check_branch
          %389 = sbr.rel (%p387) target = $region48
        $region47: #{_lambda_.1} parent=11 // pred_region
          %s391 = ssub.s32 4096, 4096
          %392 = vsyncadd [#allocation6], %s391
          %s393 = sshll.u32 [#allocation7], 4
          %s394 = int_to_ptr.vmem [resolvable:$true] %s393
          %399 = dma.hbm_to_vmem [thread:$0]  %s9, 4096, %s394, [#allocation6], 64, 64, 4
        $region48: #{_lambda_.1} parent=11 // pred_fallthru
          _
        // Predicated region
        $region49: #{_lambda_.1} parent=11 // pred_check
          %p400 = pneg %p260
        $region50: #{_lambda_.1} parent=11 // pred_check_branch
          %402 = sbr.rel (%p400) target = $region52
        $region51: #{_lambda_.1} parent=11 // pred_region
          _
        $region52: #{_lambda_.1} parent=11 // pred_fallthru
          _
        // Predicated region
        $region53: #{_lambda_.1} parent=11 // pred_check
          %p403 = pneg %p281
        $region54: #{_lambda_.1} parent=11 // pred_check_branch
          %405 = sbr.rel (%p403) target = $region56
        $region55: #{_lambda_.1} parent=11 // pred_region
          _
        $region56: #{_lambda_.1} parent=11 // pred_fallthru
          _
        // Predicated region
        $region57: #{_lambda_.1} parent=11 // pred_check
          %p406 = pneg %p302
        $region58: #{_lambda_.1} parent=11 // pred_check_branch
          %408 = sbr.rel (%p406) target = $region60
        $region59: #{_lambda_.1} parent=11 // pred_region
          _
        $region60: #{_lambda_.1} parent=11 // pred_fallthru
          _
      $region12: #{_lambda_.1} parent=5 // pred_fallthru
        _
      %p409 = scmp.lt.s32.totalorder %s24, 2
      // Predicated region
      $region61: #{_lambda_.1} parent=5 // pred_check
        %p410 = pneg %p409
      $region62: #{_lambda_.1} parent=5 // pred_check_branch
        %412 = sbr.rel (%p410) target = $region64
      $region63: #{_lambda_.1} parent=5 // pred_region
        // Predicated region
        $region65: #{_lambda_.1} parent=63 // pred_check
          %p413 = pneg %p44
        $region66: #{_lambda_.1} parent=63 // pred_check_branch
          %415 = sbr.rel (%p413) target = $region68
        $region67: #{_lambda_.1} parent=63 // pred_region
          %p416 = scmp.lt.s32.totalorder %s24, 1
          %s417 = scalar_select %p416, %s24, 1
          %s418 = smul.addr %s417, 2
          %s419 = smul.addr %s418, 8
          %s420 = scalar_lea.vmem %s0, %s419
        $region68: #{_lambda_.1} parent=63 // pred_fallthru
          _
      $region64: #{_lambda_.1} parent=5 // pred_fallthru
        _
      %p421 = scmp.le.s32.totalorder 1, %s24
      %p422 = scmp.lt.s32.totalorder %s24, 3
      %p423 = pnand %p421, %p422
      %p424 = pneg %p423
      // Predicated region
      $region69: #{_lambda_.1} parent=5 // pred_check
        _
      $region70: #{_lambda_.1} parent=5 // pred_check_branch
        %426 = sbr.rel (%p423) target = $region72
      $region71: #{_lambda_.1} parent=5 // pred_region
        %s427 = ssub.s32 %s24, 1
        // Predicated region
        $region73: #{_lambda_.1} parent=71 // pred_check
          %p428 = pneg %p71
        $region74: #{_lambda_.1} parent=71 // pred_check_branch
          %430 = sbr.rel (%p428) target = $region76
        $region75: #{_lambda_.1} parent=71 // pred_region
          %431 = dma.done [#allocation3], 6144
        $region76: #{_lambda_.1} parent=71 // pred_fallthru
          _
        // Predicated region
        $region77: #{_lambda_.1} parent=71 // pred_check
          %p432 = pneg %p197
        $region78: #{_lambda_.1} parent=71 // pred_check_branch
          %434 = sbr.rel (%p432) target = $region80
        $region79: #{_lambda_.1} parent=71 // pred_region
          %435 = dma.done [#allocation6], 4096
        $region80: #{_lambda_.1} parent=71 // pred_fallthru
          _
        // Predicated region
        $region81: #{_lambda_.1} parent=71 // pred_check
          %p436 = pneg %p239
        $region82: #{_lambda_.1} parent=71 // pred_check_branch
          %438 = sbr.rel (%p436) target = $region84
        $region83: #{_lambda_.1} parent=71 // pred_region
          %439 = dma.done [#allocation6], 4096
        $region84: #{_lambda_.1} parent=71 // pred_fallthru
          _
        %p440 = scmp.lt.s32.totalorder %s29, 1
        %s441 = scalar_select %p440, %s29, 1
        %s442 = smul.addr %s441, 2
        %s443 = smul.addr %s442, 8
        %s444 = scalar_lea.vmem %s0, %s443
        %p445 = pneg %p50
        %p446 = pneg %p47
        %p447 = pneg %p71
        %p448 = pneg %p68
        %p449 = pneg %p92
        %p450 = pneg %p89
        %p451 = pneg %p113
        %p452 = pneg %p110
        %p453 = pneg %p134
        %p454 = pneg %p131
        %p455 = pneg %p155
        %p456 = pneg %p152
        %p457 = pneg %p176
        %p458 = pneg %p173
        %p459 = pneg %p197
        %p460 = pneg %p194
        %p461 = pneg %p218
        %p462 = pneg %p215
        %p463 = pneg %p239
        %p464 = pneg %p236
        %p465 = pneg %p260
        %p466 = pneg %p257
        %p467 = pneg %p281
        %p468 = pneg %p278
        %p469 = pneg %p302
        %p470 = pneg %p299
        %p471 = pneg %p328
        %p472 = pneg %p325
        %s473 = sand.u32 %s315, 1
        %s474 = scalar_lea.sflag [#allocation4], %s473
        %s475 = sand.u32 %s315, 1
        %s476 = smul.addr %s475, 16
        %s477 = scalar_lea.vmem [#allocation8], %s476
        %p478 = scmp.lt.s32.totalorder %s29, 1
        %s479 = scalar_select %p478, %s29, 1
        %s480 = smul.addr %s479, 2
        %s481 = smul.addr %s480, 8
        %s482 = scalar_lea.vmem %s0, %s481
        %v484 = vlaneseq
        %v485 = vand.u32 %v484, 127
        %vm486 = vcmp.lt.s32.totalorder %v485, 96
        %v487 = vsel %vm486, 1, 0
        %v488 = vcvt.s32.f32 %v487
        %v489 = vld [vmem:[%s482] sm:$0xff]
        %v490 = vld [vmem:[%s482 + $0x8] sm:$0xff]
        %v491 = vpack.c.bf16 %v490, %v489
        %v492 = vld [vmem:[#allocation2] sm:$0xff]
        %v493 = vld [vmem:[#allocation2 + $0x8] sm:$0xf]
        %v494 = vld [vmem:[#allocation2 + $0xc] sm:$0xff]
        %v495 = vld [vmem:[#allocation2 + $0x14] sm:$0xf]
        %v496 = vld [vmem:[#allocation2 + $0x18] sm:$0xff]
        %v497 = vld [vmem:[#allocation2 + $0x20] sm:$0xf]
        %v498 = vld [vmem:[#allocation2 + $0x24] sm:$0xff]
        %v499 = vld [vmem:[#allocation2 + $0x2c] sm:$0xf]
        %v500 = vld [vmem:[#allocation2 + $0x30] sm:$0xff]
        %v501 = vld [vmem:[#allocation2 + $0x38] sm:$0xf]
        %v502 = vld [vmem:[#allocation2 + $0x3c] sm:$0xff]
        %v503 = vld [vmem:[#allocation2 + $0x44] sm:$0xf]
        %v504 = vld [vmem:[#allocation2 + $0x48] sm:$0xff]
        %v505 = vld [vmem:[#allocation2 + $0x50] sm:$0xf]
        %v506 = vld [vmem:[#allocation2 + $0x54] sm:$0xff]
        %v507 = vld [vmem:[#allocation2 + $0x5c] sm:$0xf]
        %v508 = vld [vmem:[#allocation2 + $0x60] sm:$0xff]
        %v509 = vld [vmem:[#allocation2 + $0x68] sm:$0xf]
        %v510 = vld [vmem:[#allocation2 + $0x6c] sm:$0xff]
        %v511 = vld [vmem:[#allocation2 + $0x74] sm:$0xf]
        %v512 = vld [vmem:[#allocation2 + $0x78] sm:$0xff]
        %v513 = vld [vmem:[#allocation2 + $0x80] sm:$0xf]
        %v514 = vld [vmem:[#allocation2 + $0x84] sm:$0xff]
        %v515 = vld [vmem:[#allocation2 + $0x8c] sm:$0xf]
        %v516 = vld [vmem:[#allocation2 + $0x90] sm:$0xff]
        %v517 = vld [vmem:[#allocation2 + $0x98] sm:$0xf]
        %v518 = vld [vmem:[#allocation2 + $0x9c] sm:$0xff]
        %v519 = vld [vmem:[#allocation2 + $0xa4] sm:$0xf]
        %v520 = vld [vmem:[#allocation2 + $0xa8] sm:$0xff]
        %v521 = vld [vmem:[#allocation2 + $0xb0] sm:$0xf]
        %v522 = vld [vmem:[#allocation2 + $0xb4] sm:$0xff]
        %v523 = vld [vmem:[#allocation2 + $0xbc] sm:$0xf]
        %v524 = vld [vmem:[%s2] sm:$0x7]
        %v526 = vlaneseq
        %v527 = vshrl.u32 %v526, 7
        %v528 = vsub.s32 0, %v527
        %v529 = vrot.slane %v524, %v528
        %v530 = vlaneseq
        %v531 = vshrl.u32 %v530, 7
        %v532 = vsub.s32 1, %v531
        %v533 = vrot.slane %v524, %v532
        %v534 = vlaneseq
        %v535 = vshrl.u32 %v534, 7
        %v536 = vsub.s32 2, %v535
        %v537 = vrot.slane %v524, %v536
        %v573 = vunpack.c.l.b16 %v492
        %v574 = vunpack.c.h.b16 %v492
        %v575 = vunpack.c.l.b16 %v493
        %v576 = vunpack.c.l.b16 %v494
        %v577 = vunpack.c.h.b16 %v494
        %v578 = vunpack.c.l.b16 %v495
        %v579 = vunpack.c.l.b16 %v496
        %v580 = vunpack.c.h.b16 %v496
        %v581 = vunpack.c.l.b16 %v497
        %v582 = vunpack.c.l.b16 %v498
        %v583 = vunpack.c.h.b16 %v498
        %v584 = vunpack.c.l.b16 %v499
        %v585 = vunpack.c.l.b16 %v500
        %v586 = vunpack.c.h.b16 %v500
        %v587 = vunpack.c.l.b16 %v501
        %v588 = vunpack.c.l.b16 %v502
        %v589 = vunpack.c.h.b16 %v502
        %v590 = vunpack.c.l.b16 %v503
        %v591 = vunpack.c.l.b16 %v504
        %v592 = vunpack.c.h.b16 %v504
        %v593 = vunpack.c.l.b16 %v505
        %v594 = vunpack.c.l.b16 %v506
        %v595 = vunpack.c.h.b16 %v506
        %v596 = vunpack.c.l.b16 %v507
        %v597 = vunpack.c.l.b16 %v508
        %v598 = vunpack.c.h.b16 %v508
        %v599 = vunpack.c.l.b16 %v509
        %v600 = vunpack.c.l.b16 %v510
        %v601 = vunpack.c.h.b16 %v510
        %v602 = vunpack.c.l.b16 %v511
        %v603 = vunpack.c.l.b16 %v512
        %v604 = vunpack.c.h.b16 %v512
        %v605 = vunpack.c.l.b16 %v513
        %v606 = vunpack.c.l.b16 %v514
        %v607 = vunpack.c.h.b16 %v514
        %v608 = vunpack.c.l.b16 %v515
        %v609 = vunpack.c.l.b16 %v516
        %v610 = vunpack.c.h.b16 %v516
        %v611 = vunpack.c.l.b16 %v517
        %v612 = vunpack.c.l.b16 %v518
        %v613 = vunpack.c.h.b16 %v518
        %v614 = vunpack.c.l.b16 %v519
        %v615 = vunpack.c.l.b16 %v520
        %v616 = vunpack.c.h.b16 %v520
        %v617 = vunpack.c.l.b16 %v521
        %v618 = vunpack.c.l.b16 %v522
        %v619 = vunpack.c.h.b16 %v522
        %v620 = vunpack.c.l.b16 %v523
        %v621 = vpack.c.b16 %v576, %v573
        %v622 = vpack.c.b16 %v577, %v574
        %v623 = vpack.c.b16 %v578, %v575
        %v624 = vpack.c.b16 %v582, %v579
        %v625 = vpack.c.b16 %v583, %v580
        %v626 = vpack.c.b16 %v584, %v581
        %v627 = vpack.c.b16 %v588, %v585
        %v628 = vpack.c.b16 %v589, %v586
        %v629 = vpack.c.b16 %v590, %v587
        %v630 = vpack.c.b16 %v594, %v591
        %v631 = vpack.c.b16 %v595, %v592
        %v632 = vpack.c.b16 %v596, %v593
        %v633 = vpack.c.b16 %v600, %v597
        %v634 = vpack.c.b16 %v601, %v598
        %v635 = vpack.c.b16 %v602, %v599
        %v636 = vpack.c.b16 %v606, %v603
        %v637 = vpack.c.b16 %v607, %v604
        %v638 = vpack.c.b16 %v608, %v605
        %v639 = vpack.c.b16 %v612, %v609
        %v640 = vpack.c.b16 %v613, %v610
        %v641 = vpack.c.b16 %v614, %v611
        %v642 = vpack.c.b16 %v618, %v615
        %v643 = vpack.c.b16 %v619, %v616
        %v644 = vpack.c.b16 %v620, %v617
        %669 = vmatprep.subr.bf16.mxu0 %v643
        %670 = vmatpush1.bf16.msra.mxu0 %v642
        %671 = vmatprep.subr.bf16.mxu0 %v640
        %672 = vmatpush1.bf16.msra.mxu0 %v639
        %673 = vmatprep.subr.bf16.mxu0 %v637
        %674 = vmatpush1.bf16.msra.mxu0 %v636
        %675 = vmatprep.subr.bf16.mxu0 %v634
        %676 = vmatpush1.bf16.msra.mxu0 %v633
        %677 = vmatprep.subr.bf16.mxu0 %v631
        %678 = vmatpush1.bf16.msra.mxu0 %v630
        %679 = vmatprep.subr.bf16.mxu0 %v628
        %680 = vmatpush1.bf16.msra.mxu0 %v627
        %681 = vmatprep.subr.bf16.mxu0 %v625
        %682 = vmatpush1.bf16.msra.mxu0 %v624
        %683 = vmatprep.subr.bf16.mxu0 %v622
        %684 = vmatpush1.bf16.msra.mxu0 %v621
        %685 = vmatprep.subr.bf16.mxu0 0
        %686 = vmatpush2.bf16.msra.mxu0 0
        %687 = vmatprep.subr.bf16.mxu0 0
        %688 = vmatpush2.bf16.msra.mxu0 0
        %689 = vmatprep.subr.bf16.mxu0 0
        %690 = vmatpush2.bf16.msra.mxu0 0
        %691 = vmatprep.subr.bf16.mxu0 0
        %692 = vmatpush2.bf16.msra.mxu0 0
        %693 = vmatprep.subr.bf16.mxu0 0
        %694 = vmatpush2.bf16.msra.mxu0 0
        %695 = vmatprep.subr.bf16.mxu0 0
        %696 = vmatpush2.bf16.msra.mxu0 0
        %697 = vmatprep.subr.bf16.mxu0 0
        %698 = vmatpush2.bf16.msra.mxu0 0
        %699 = vmatprep.subr.bf16.mxu0 0
        %700 = vmatpush2.bf16.msra.mxu0 0
        %701 = vmatprep.mubr.bf16.mxu0 0
        %702 = vmatmul.mubr.bf16.gmra.mxu0 %v491
        %v703 = vpop.f32.mrf.mxu0
        %v704 = vadd.f32 %v529, %v703
        %v705 = vpop.f32.mrf.mxu0
        %v706 = vadd.f32 %v533, %v705
        %v707 = vpop.f32.mrf.mxu0
        %v708 = vadd.f32 %v529, %v707
        %v709 = vpop.f32.mrf.mxu0
        %v710 = vadd.f32 %v533, %v709
        %711 = vdwg.mxu0
        %712 = vmatprep.subr.bf16.mxu0 0
        %713 = vmatpush1.bf16.msra.mxu0 %v644
        %714 = vmatprep.subr.bf16.mxu0 0
        %715 = vmatpush1.bf16.msra.mxu0 %v641
        %716 = vmatprep.subr.bf16.mxu0 0
        %717 = vmatpush1.bf16.msra.mxu0 %v638
        %718 = vmatprep.subr.bf16.mxu0 0
        %719 = vmatpush1.bf16.msra.mxu0 %v635
        %720 = vmatprep.subr.bf16.mxu0 0
        %721 = vmatpush1.bf16.msra.mxu0 %v632
        %722 = vmatprep.subr.bf16.mxu0 0
        %723 = vmatpush1.bf16.msra.mxu0 %v629
        %724 = vmatprep.subr.bf16.mxu0 0
        %725 = vmatpush1.bf16.msra.mxu0 %v626
        %726 = vmatprep.subr.bf16.mxu0 0
        %727 = vmatpush1.bf16.msra.mxu0 %v623
        %728 = vmatprep.subr.bf16.mxu0 0
        %729 = vmatpush2.bf16.msra.mxu0 0
        %730 = vmatprep.subr.bf16.mxu0 0
        %731 = vmatpush2.bf16.msra.mxu0 0
        %732 = vmatprep.subr.bf16.mxu0 0
        %733 = vmatpush2.bf16.msra.mxu0 0
        %734 = vmatprep.subr.bf16.mxu0 0
        %735 = vmatpush2.bf16.msra.mxu0 0
        %736 = vmatprep.subr.bf16.mxu0 0
        %737 = vmatpush2.bf16.msra.mxu0 0
        %738 = vmatprep.subr.bf16.mxu0 0
        %739 = vmatpush2.bf16.msra.mxu0 0
        %740 = vmatprep.subr.bf16.mxu0 0
        %741 = vmatpush2.bf16.msra.mxu0 0
        %742 = vmatprep.subr.bf16.mxu0 0
        %743 = vmatpush2.bf16.msra.mxu0 0
        %744 = vmatprep.mubr.bf16.mxu0 0
        %745 = vmatmul.mubr.bf16.gmra.mxu0 %v491
        %v746 = vpop.f32.mrf.mxu0
        %v747 = vadd.f32 %v537, %v746
        %v748 = vpop.f32.mrf.mxu0
        %v749 = vpop.f32.mrf.mxu0
        %v750 = vadd.f32 %v537, %v749
        %v751 = vpop.f32.mrf.mxu0
        %752 = vdwg.mxu0
        %vm753 = vcmask 64512
        %v755 = vsel %vm753, %v704, 0
        %v758 = vsel %vm753, %v708, 0
        %v761 = vsel %vm753, %v706, 0
        %v764 = vsel %vm753, %v710, 0
        %766 = vmatprep.subr.mxu0 0.0
        %767 = vmatpush1.xpose.msra.mxu0 0.0
        %768 = vmatprep.subr.mxu0 0.0
        %769 = vmatpush1.xpose.msra.mxu0 0.0
        %770 = vmatprep.subr.mxu0 0.0
        %771 = vmatpush1.xpose.msra.mxu0 0.0
        %772 = vmatprep.subr.mxu0 0.0
        %773 = vmatpush1.xpose.msra.mxu0 0.0
        %774 = vmatprep.subr.mxu0 0.0
        %775 = vmatpush1.xpose.msra.mxu0 0.0
        %776 = vmatprep.subr.mxu0 0.0
        %777 = vmatpush1.xpose.msra.mxu0 0.0
        %778 = vmatprep.subr.mxu0 0.0
        %779 = vmatpush1.xpose.msra.mxu0 0.0
        %780 = vmatprep.subr.mxu0 0.0
        %781 = vmatpush1.xpose.msra.mxu0 0.0
        %782 = vmatprep.subr.mxu0 0.0
        %783 = vmatpush1.xpose.msra.mxu0 0.0
        %784 = vmatprep.subr.mxu0 0.0
        %785 = vmatpush1.xpose.msra.mxu0 0.0
        %786 = vmatprep.subr.mxu0 0.0
        %787 = vmatpush1.xpose.msra.mxu0 0.0
        %788 = vmatprep.subr.mxu0 0.0
        %789 = vmatpush1.xpose.msra.mxu0 0.0
        %790 = vmatprep.subr.mxu0 0.0
        %791 = vmatpush1.xpose.msra.mxu0 0.0
        %792 = vmatprep.subr.mxu0 0.0
        %793 = vmatpush1.xpose.msra.mxu0 0.0
        %794 = vmatprep.subr.mxu0 0.0
        %795 = vmatpush1.xpose.msra.mxu0 %v764
        %796 = vmatprep.subr.mxu0 0.0
        %797 = vmatpush1.xpose.msra.mxu0 %v761
        %798 = vmatprep.subr.mxu0 0.0
        %799 = vmatpush2.xpose.msra.mxu0 0.0
        %800 = vmatprep.subr.mxu0 0.0
        %801 = vmatpush2.xpose.msra.mxu0 0.0
        %802 = vmatprep.subr.mxu0 0.0
        %803 = vmatpush2.xpose.msra.mxu0 0.0
        %804 = vmatprep.subr.mxu0 0.0
        %805 = vmatpush2.xpose.msra.mxu0 0.0
        %806 = vmatprep.subr.mxu0 0.0
        %807 = vmatpush2.xpose.msra.mxu0 0.0
        %808 = vmatprep.subr.mxu0 0.0
        %809 = vmatpush2.xpose.msra.mxu0 0.0
        %810 = vmatprep.subr.mxu0 0.0
        %811 = vmatpush2.xpose.msra.mxu0 0.0
        %812 = vmatprep.subr.mxu0 0.0
        %813 = vmatpush2.xpose.msra.mxu0 0.0
        %814 = vmatprep.subr.mxu0 0.0
        %815 = vmatpush2.xpose.msra.mxu0 0.0
        %816 = vmatprep.subr.mxu0 0.0
        %817 = vmatpush2.xpose.msra.mxu0 0.0
        %818 = vmatprep.subr.mxu0 0.0
        %819 = vmatpush2.xpose.msra.mxu0 0.0
        %820 = vmatprep.subr.mxu0 0.0
        %821 = vmatpush2.xpose.msra.mxu0 0.0
        %822 = vmatprep.subr.mxu0 0.0
        %823 = vmatpush2.xpose.msra.mxu0 0.0
        %824 = vmatprep.subr.mxu0 0.0
        %825 = vmatpush2.xpose.msra.mxu0 0.0
        %826 = vmatprep.subr.mxu0 0.0
        %827 = vmatpush2.xpose.msra.mxu0 0.0
        %828 = vmatprep.subr.mxu0 0.0
        %829 = vmatpush2.xpose.msra.mxu0 0.0
        %830 = vmatprep.mubr.f32.mxu0 0.0
        %831 = vmatmul.mubr.f32.gmra.mxu0 %v755
        %v832 = vpop.f32.mrf.mxu0
        %v833 = vadd.f32 0.0, %v832
        %v834 = vpop.f32.mrf.mxu0
        %835 = vmatprep.mubr.f32.mxu0 0.0
        %836 = vmatmul.mubr.f32.gmra.mxu0 %v758
        %v837 = vpop.f32.mrf.mxu0
        %v838 = vadd.f32 0.0, %v837
        %v839 = vpop.f32.mrf.mxu0
        %840 = vdwg.mxu0
        %vm841 = vcmask 130048
        %v842 = vsel %vm841, %v833, -inf
        %843 = vmax.xlane.f32.xlu0 %v842
        %v844 = vpop.xlane.xlu0 %843
        %v845 = vsel %vm841, %v838, -inf
        %846 = vmax.xlane.f32.xlu0 %v845
        %v847 = vpop.xlane.xlu0 %846
        %v848 = vsub.f32 %v833, %v844
        %v849 = vsub.f32 %v838, %v847
        %v850 = vmul.f32 %v848, 1.442695
        %v851 = vpow.pop %v850
        %v852 = vmul.f32 %v849, 1.442695
        %v853 = vpow.pop %v852
        %v854 = vsel %vm841, %v851, 0.0
        %855 = vadd.xlane.f32.xlu0 %v854
        %v856 = vpop.xlane.xlu0 %855
        %v857 = vsel %vm841, %v853, 0.0
        %858 = vadd.xlane.f32.xlu0 %v857
        %v859 = vpop.xlane.xlu0 %858
        %v861 = vsel %vm841, %v851, 0
        %v864 = vsel %vm841, %v853, 0
        %866 = vmatprep.subr.mxu0 0.0
        %867 = vmatpush1.msra.mxu0 0.0
        %868 = vmatprep.subr.mxu0 0.0
        %869 = vmatpush1.msra.mxu0 0.0
        %870 = vmatprep.subr.mxu0 0.0
        %871 = vmatpush1.msra.mxu0 0.0
        %872 = vmatprep.subr.mxu0 0.0
        %873 = vmatpush1.msra.mxu0 0.0
        %874 = vmatprep.subr.mxu0 0.0
        %875 = vmatpush1.msra.mxu0 0.0
        %876 = vmatprep.subr.mxu0 0.0
        %877 = vmatpush1.msra.mxu0 0.0
        %878 = vmatprep.subr.mxu0 0.0
        %879 = vmatpush1.msra.mxu0 0.0
        %880 = vmatprep.subr.mxu0 0.0
        %881 = vmatpush1.msra.mxu0 0.0
        %882 = vmatprep.subr.mxu0 0.0
        %883 = vmatpush1.msra.mxu0 0.0
        %884 = vmatprep.subr.mxu0 0.0
        %885 = vmatpush1.msra.mxu0 0.0
        %886 = vmatprep.subr.mxu0 0.0
        %887 = vmatpush1.msra.mxu0 0.0
        %888 = vmatprep.subr.mxu0 0.0
        %889 = vmatpush1.msra.mxu0 0.0
        %890 = vmatprep.subr.mxu0 0.0
        %891 = vmatpush1.msra.mxu0 0.0
        %892 = vmatprep.subr.mxu0 0.0
        %893 = vmatpush1.msra.mxu0 0.0
        %894 = vmatprep.subr.mxu0 0.0
        %895 = vmatpush1.msra.mxu0 %v750
        %896 = vmatprep.subr.mxu0 0.0
        %897 = vmatpush1.msra.mxu0 %v747
        %898 = vmatprep.subr.mxu0 0.0
        %899 = vmatpush2.msra.mxu0 0.0
        %900 = vmatprep.subr.mxu0 0.0
        %901 = vmatpush2.msra.mxu0 0.0
        %902 = vmatprep.subr.mxu0 0.0
        %903 = vmatpush2.msra.mxu0 0.0
        %904 = vmatprep.subr.mxu0 0.0
        %905 = vmatpush2.msra.mxu0 0.0
        %906 = vmatprep.subr.mxu0 0.0
        %907 = vmatpush2.msra.mxu0 0.0
        %908 = vmatprep.subr.mxu0 0.0
        %909 = vmatpush2.msra.mxu0 0.0
        %910 = vmatprep.subr.mxu0 0.0
        %911 = vmatpush2.msra.mxu0 0.0
        %912 = vmatprep.subr.mxu0 0.0
        %913 = vmatpush2.msra.mxu0 0.0
        %914 = vmatprep.subr.mxu0 0.0
        %915 = vmatpush2.msra.mxu0 0.0
        %916 = vmatprep.subr.mxu0 0.0
        %917 = vmatpush2.msra.mxu0 0.0
        %918 = vmatprep.subr.mxu0 0.0
        %919 = vmatpush2.msra.mxu0 0.0
        %920 = vmatprep.subr.mxu0 0.0
        %921 = vmatpush2.msra.mxu0 0.0
        %922 = vmatprep.subr.mxu0 0.0
        %923 = vmatpush2.msra.mxu0 0.0
        %924 = vmatprep.subr.mxu0 0.0
        %925 = vmatpush2.msra.mxu0 0.0
        %926 = vmatprep.subr.mxu0 0.0
        %927 = vmatpush2.msra.mxu0 0.0
        %928 = vmatprep.subr.mxu0 0.0
        %929 = vmatpush2.msra.mxu0 0.0
        %930 = vmatprep.mubr.f32.mxu0 0.0
        %931 = vmatmul.mubr.f32.gmra.mxu0 %v861
        %v932 = vpop.f32.mrf.mxu0
        %v933 = vadd.f32 0.0, %v932
        %v934 = vpop.f32.mrf.mxu0
        %935 = vmatprep.mubr.f32.mxu0 0.0
        %936 = vmatmul.mubr.f32.gmra.mxu0 %v864
        %v937 = vpop.f32.mrf.mxu0
        %v938 = vadd.f32 0.0, %v937
        %v939 = vpop.f32.mrf.mxu0
        %940 = vdwg.mxu0
        %v941 = vrcp.pop %v856
        %v942 = vrcp.pop %v859
        %v943 = vmul.f32 %v933, %v941
        %v944 = vmul.f32 %v938, %v942
        %945 = vrot.lane.b32.xlu0 %v704, 120
        %v946 = vpop.permute.xlu0 %945
        %947 = vrot.lane.b32.xlu0 %v708, 120
        %v948 = vpop.permute.xlu0 %947
        %949 = vrot.lane.b32.xlu0 %v706, 120
        %v950 = vpop.permute.xlu0 %949
        %951 = vrot.lane.b32.xlu0 %v710, 120
        %v952 = vpop.permute.xlu0 %951
        %v953 = vsel %vm753, %v946, 0
        %v955 = vsel %vm753, %v948, 0
        %v957 = vsel %vm753, %v950, 0
        %v959 = vsel %vm753, %v952, 0
        %961 = vmatprep.subr.mxu0 0.0
        %962 = vmatpush1.xpose.msra.mxu0 0.0
        %963 = vmatprep.subr.mxu0 0.0
        %964 = vmatpush1.xpose.msra.mxu0 0.0
        %965 = vmatprep.subr.mxu0 0.0
        %966 = vmatpush1.xpose.msra.mxu0 0.0
        %967 = vmatprep.subr.mxu0 0.0
        %968 = vmatpush1.xpose.msra.mxu0 0.0
        %969 = vmatprep.subr.mxu0 0.0
        %970 = vmatpush1.xpose.msra.mxu0 0.0
        %971 = vmatprep.subr.mxu0 0.0
        %972 = vmatpush1.xpose.msra.mxu0 0.0
        %973 = vmatprep.subr.mxu0 0.0
        %974 = vmatpush1.xpose.msra.mxu0 0.0
        %975 = vmatprep.subr.mxu0 0.0
        %976 = vmatpush1.xpose.msra.mxu0 0.0
        %977 = vmatprep.subr.mxu0 0.0
        %978 = vmatpush1.xpose.msra.mxu0 0.0
        %979 = vmatprep.subr.mxu0 0.0
        %980 = vmatpush1.xpose.msra.mxu0 0.0
        %981 = vmatprep.subr.mxu0 0.0
        %982 = vmatpush1.xpose.msra.mxu0 0.0
        %983 = vmatprep.subr.mxu0 0.0
        %984 = vmatpush1.xpose.msra.mxu0 0.0
        %985 = vmatprep.subr.mxu0 0.0
        %986 = vmatpush1.xpose.msra.mxu0 0.0
        %987 = vmatprep.subr.mxu0 0.0
        %988 = vmatpush1.xpose.msra.mxu0 0.0
        %989 = vmatprep.subr.mxu0 0.0
        %990 = vmatpush1.xpose.msra.mxu0 %v959
        %991 = vmatprep.subr.mxu0 0.0
        %992 = vmatpush1.xpose.msra.mxu0 %v957
        %993 = vmatprep.subr.mxu0 0.0
        %994 = vmatpush2.xpose.msra.mxu0 0.0
        %995 = vmatprep.subr.mxu0 0.0
        %996 = vmatpush2.xpose.msra.mxu0 0.0
        %997 = vmatprep.subr.mxu0 0.0
        %998 = vmatpush2.xpose.msra.mxu0 0.0
        %999 = vmatprep.subr.mxu0 0.0
        %1000 = vmatpush2.xpose.msra.mxu0 0.0
        %1001 = vmatprep.subr.mxu0 0.0
        %1002 = vmatpush2.xpose.msra.mxu0 0.0
        %1003 = vmatprep.subr.mxu0 0.0
        %1004 = vmatpush2.xpose.msra.mxu0 0.0
        %1005 = vmatprep.subr.mxu0 0.0
        %1006 = vmatpush2.xpose.msra.mxu0 0.0
        %1007 = vmatprep.subr.mxu0 0.0
        %1008 = vmatpush2.xpose.msra.mxu0 0.0
        %1009 = vmatprep.subr.mxu0 0.0
        %1010 = vmatpush2.xpose.msra.mxu0 0.0
        %1011 = vmatprep.subr.mxu0 0.0
        %1012 = vmatpush2.xpose.msra.mxu0 0.0
        %1013 = vmatprep.subr.mxu0 0.0
        %1014 = vmatpush2.xpose.msra.mxu0 0.0
        %1015 = vmatprep.subr.mxu0 0.0
        %1016 = vmatpush2.xpose.msra.mxu0 0.0
        %1017 = vmatprep.subr.mxu0 0.0
        %1018 = vmatpush2.xpose.msra.mxu0 0.0
        %1019 = vmatprep.subr.mxu0 0.0
        %1020 = vmatpush2.xpose.msra.mxu0 0.0
        %1021 = vmatprep.subr.mxu0 0.0
        %1022 = vmatpush2.xpose.msra.mxu0 0.0
        %1023 = vmatprep.subr.mxu0 0.0
        %1024 = vmatpush2.xpose.msra.mxu0 0.0
        %1025 = vmatprep.mubr.f32.mxu0 0.0
        %1026 = vmatmul.mubr.f32.gmra.mxu0 %v953
        %v1027 = vpop.f32.mrf.mxu0
        %v1028 = vadd.f32 0.0, %v1027
        %v1029 = vpop.f32.mrf.mxu0
        %1030 = vmatprep.mubr.f32.mxu0 0.0
        %1031 = vmatmul.mubr.f32.gmra.mxu0 %v955
        %v1032 = vpop.f32.mrf.mxu0
        %v1033 = vadd.f32 0.0, %v1032
        %v1034 = vpop.f32.mrf.mxu0
        %1035 = vdwg.mxu0
        %v1036 = vsel %vm841, %v1028, -inf
        %1037 = vmax.xlane.f32.xlu0 %v1036
        %v1038 = vpop.xlane.xlu0 %1037
        %v1039 = vsel %vm841, %v1033, -inf
        %1040 = vmax.xlane.f32.xlu0 %v1039
        %v1041 = vpop.xlane.xlu0 %1040
        %v1042 = vsub.f32 %v1028, %v1038
        %v1043 = vsub.f32 %v1033, %v1041
        %v1044 = vmul.f32 %v1042, 1.442695
        %v1045 = vpow.pop %v1044
        %v1046 = vmul.f32 %v1043, 1.442695
        %v1047 = vpow.pop %v1046
        %v1048 = vsel %vm841, %v1045, 0.0
        %1049 = vadd.xlane.f32.xlu0 %v1048
        %v1050 = vpop.xlane.xlu0 %1049
        %v1051 = vsel %vm841, %v1047, 0.0
        %1052 = vadd.xlane.f32.xlu0 %v1051
        %v1053 = vpop.xlane.xlu0 %1052
        %1056 = vrot.lane.b32.xlu0 %v747, 120
        %v1057 = vpop.permute.xlu0 %1056
        %1058 = vrot.lane.b32.xlu0 %v750, 120
        %v1059 = vpop.permute.xlu0 %1058
        %v1063 = vsel %vm841, %v1045, 0
        %v1066 = vsel %vm841, %v1047, 0
        %1068 = vmatprep.subr.mxu0 0.0
        %1069 = vmatpush1.msra.mxu0 0.0
        %1070 = vmatprep.subr.mxu0 0.0
        %1071 = vmatpush1.msra.mxu0 0.0
        %1072 = vmatprep.subr.mxu0 0.0
        %1073 = vmatpush1.msra.mxu0 0.0
        %1074 = vmatprep.subr.mxu0 0.0
        %1075 = vmatpush1.msra.mxu0 0.0
        %1076 = vmatprep.subr.mxu0 0.0
        %1077 = vmatpush1.msra.mxu0 0.0
        %1078 = vmatprep.subr.mxu0 0.0
        %1079 = vmatpush1.msra.mxu0 0.0
        %1080 = vmatprep.subr.mxu0 0.0
        %1081 = vmatpush1.msra.mxu0 0.0
        %1082 = vmatprep.subr.mxu0 0.0
        %1083 = vmatpush1.msra.mxu0 0.0
        %1084 = vmatprep.subr.mxu0 0.0
        %1085 = vmatpush1.msra.mxu0 0.0
        %1086 = vmatprep.subr.mxu0 0.0
        %1087 = vmatpush1.msra.mxu0 0.0
        %1088 = vmatprep.subr.mxu0 0.0
        %1089 = vmatpush1.msra.mxu0 0.0
        %1090 = vmatprep.subr.mxu0 0.0
        %1091 = vmatpush1.msra.mxu0 0.0
        %1092 = vmatprep.subr.mxu0 0.0
        %1093 = vmatpush1.msra.mxu0 0.0
        %1094 = vmatprep.subr.mxu0 0.0
        %1095 = vmatpush1.msra.mxu0 0.0
        %1096 = vmatprep.subr.mxu0 0.0
        %1097 = vmatpush1.msra.mxu0 %v1059
        %1098 = vmatprep.subr.mxu0 0.0
        %1099 = vmatpush1.msra.mxu0 %v1057
        %1100 = vmatprep.subr.mxu0 0.0
        %1101 = vmatpush2.msra.mxu0 0.0
        %1102 = vmatprep.subr.mxu0 0.0
        %1103 = vmatpush2.msra.mxu0 0.0
        %1104 = vmatprep.subr.mxu0 0.0
        %1105 = vmatpush2.msra.mxu0 0.0
        %1106 = vmatprep.subr.mxu0 0.0
        %1107 = vmatpush2.msra.mxu0 0.0
        %1108 = vmatprep.subr.mxu0 0.0
        %1109 = vmatpush2.msra.mxu0 0.0
        %1110 = vmatprep.subr.mxu0 0.0
        %1111 = vmatpush2.msra.mxu0 0.0
        %1112 = vmatprep.subr.mxu0 0.0
        %1113 = vmatpush2.msra.mxu0 0.0
        %1114 = vmatprep.subr.mxu0 0.0
        %1115 = vmatpush2.msra.mxu0 0.0
        %1116 = vmatprep.subr.mxu0 0.0
        %1117 = vmatpush2.msra.mxu0 0.0
        %1118 = vmatprep.subr.mxu0 0.0
        %1119 = vmatpush2.msra.mxu0 0.0
        %1120 = vmatprep.subr.mxu0 0.0
        %1121 = vmatpush2.msra.mxu0 0.0
        %1122 = vmatprep.subr.mxu0 0.0
        %1123 = vmatpush2.msra.mxu0 0.0
        %1124 = vmatprep.subr.mxu0 0.0
        %1125 = vmatpush2.msra.mxu0 0.0
        %1126 = vmatprep.subr.mxu0 0.0
        %1127 = vmatpush2.msra.mxu0 0.0
        %1128 = vmatprep.subr.mxu0 0.0
        %1129 = vmatpush2.msra.mxu0 0.0
        %1130 = vmatprep.subr.mxu0 0.0
        %1131 = vmatpush2.msra.mxu0 0.0
        %1132 = vmatprep.mubr.f32.mxu0 0.0
        %1133 = vmatmul.mubr.f32.gmra.mxu0 %v1063
        %v1134 = vpop.f32.mrf.mxu0
        %v1135 = vadd.f32 0.0, %v1134
        %v1136 = vpop.f32.mrf.mxu0
        %1137 = vmatprep.mubr.f32.mxu0 0.0
        %1138 = vmatmul.mubr.f32.gmra.mxu0 %v1066
        %v1139 = vpop.f32.mrf.mxu0
        %v1140 = vadd.f32 0.0, %v1139
        %v1141 = vpop.f32.mrf.mxu0
        %1142 = vdwg.mxu0
        %v1143 = vrcp.pop %v1050
        %v1144 = vrcp.pop %v1053
        %v1145 = vmul.f32 %v1135, %v1143
        %v1146 = vmul.f32 %v1140, %v1144
        %1147 = vrot.lane.b32.xlu0 %v704, 112
        %v1148 = vpop.permute.xlu0 %1147
        %1149 = vrot.lane.b32.xlu0 %v708, 112
        %v1150 = vpop.permute.xlu0 %1149
        %1151 = vrot.lane.b32.xlu0 %v706, 112
        %v1152 = vpop.permute.xlu0 %1151
        %1153 = vrot.lane.b32.xlu0 %v710, 112
        %v1154 = vpop.permute.xlu0 %1153
        %v1155 = vsel %vm753, %v1148, 0
        %v1157 = vsel %vm753, %v1150, 0
        %v1159 = vsel %vm753, %v1152, 0
        %v1161 = vsel %vm753, %v1154, 0
        %1163 = vmatprep.subr.mxu0 0.0
        %1164 = vmatpush1.xpose.msra.mxu0 0.0
        %1165 = vmatprep.subr.mxu0 0.0
        %1166 = vmatpush1.xpose.msra.mxu0 0.0
        %1167 = vmatprep.subr.mxu0 0.0
        %1168 = vmatpush1.xpose.msra.mxu0 0.0
        %1169 = vmatprep.subr.mxu0 0.0
        %1170 = vmatpush1.xpose.msra.mxu0 0.0
        %1171 = vmatprep.subr.mxu0 0.0
        %1172 = vmatpush1.xpose.msra.mxu0 0.0
        %1173 = vmatprep.subr.mxu0 0.0
        %1174 = vmatpush1.xpose.msra.mxu0 0.0
        %1175 = vmatprep.subr.mxu0 0.0
        %1176 = vmatpush1.xpose.msra.mxu0 0.0
        %1177 = vmatprep.subr.mxu0 0.0
        %1178 = vmatpush1.xpose.msra.mxu0 0.0
        %1179 = vmatprep.subr.mxu0 0.0
        %1180 = vmatpush1.xpose.msra.mxu0 0.0
        %1181 = vmatprep.subr.mxu0 0.0
        %1182 = vmatpush1.xpose.msra.mxu0 0.0
        %1183 = vmatprep.subr.mxu0 0.0
        %1184 = vmatpush1.xpose.msra.mxu0 0.0
        %1185 = vmatprep.subr.mxu0 0.0
        %1186 = vmatpush1.xpose.msra.mxu0 0.0
        %1187 = vmatprep.subr.mxu0 0.0
        %1188 = vmatpush1.xpose.msra.mxu0 0.0
        %1189 = vmatprep.subr.mxu0 0.0
        %1190 = vmatpush1.xpose.msra.mxu0 0.0
        %1191 = vmatprep.subr.mxu0 0.0
        %1192 = vmatpush1.xpose.msra.mxu0 %v1161
        %1193 = vmatprep.subr.mxu0 0.0
        %1194 = vmatpush1.xpose.msra.mxu0 %v1159
        %1195 = vmatprep.subr.mxu0 0.0
        %1196 = vmatpush2.xpose.msra.mxu0 0.0
        %1197 = vmatprep.subr.mxu0 0.0
        %1198 = vmatpush2.xpose.msra.mxu0 0.0
        %1199 = vmatprep.subr.mxu0 0.0
        %1200 = vmatpush2.xpose.msra.mxu0 0.0
        %1201 = vmatprep.subr.mxu0 0.0
        %1202 = vmatpush2.xpose.msra.mxu0 0.0
        %1203 = vmatprep.subr.mxu0 0.0
        %1204 = vmatpush2.xpose.msra.mxu0 0.0
        %1205 = vmatprep.subr.mxu0 0.0
        %1206 = vmatpush2.xpose.msra.mxu0 0.0
        %1207 = vmatprep.subr.mxu0 0.0
        %1208 = vmatpush2.xpose.msra.mxu0 0.0
        %1209 = vmatprep.subr.mxu0 0.0
        %1210 = vmatpush2.xpose.msra.mxu0 0.0
        %1211 = vmatprep.subr.mxu0 0.0
        %1212 = vmatpush2.xpose.msra.mxu0 0.0
        %1213 = vmatprep.subr.mxu0 0.0
        %1214 = vmatpush2.xpose.msra.mxu0 0.0
        %1215 = vmatprep.subr.mxu0 0.0
        %1216 = vmatpush2.xpose.msra.mxu0 0.0
        %1217 = vmatprep.subr.mxu0 0.0
        %1218 = vmatpush2.xpose.msra.mxu0 0.0
        %1219 = vmatprep.subr.mxu0 0.0
        %1220 = vmatpush2.xpose.msra.mxu0 0.0
        %1221 = vmatprep.subr.mxu0 0.0
        %1222 = vmatpush2.xpose.msra.mxu0 0.0
        %1223 = vmatprep.subr.mxu0 0.0
        %1224 = vmatpush2.xpose.msra.mxu0 0.0
        %1225 = vmatprep.subr.mxu0 0.0
        %1226 = vmatpush2.xpose.msra.mxu0 0.0
        %1227 = vmatprep.mubr.f32.mxu0 0.0
        %1228 = vmatmul.mubr.f32.gmra.mxu0 %v1155
        %v1229 = vpop.f32.mrf.mxu0
        %v1230 = vadd.f32 0.0, %v1229
        %v1231 = vpop.f32.mrf.mxu0
        %1232 = vmatprep.mubr.f32.mxu0 0.0
        %1233 = vmatmul.mubr.f32.gmra.mxu0 %v1157
        %v1234 = vpop.f32.mrf.mxu0
        %v1235 = vadd.f32 0.0, %v1234
        %v1236 = vpop.f32.mrf.mxu0
        %1237 = vdwg.mxu0
        %v1238 = vsel %vm841, %v1230, -inf
        %1239 = vmax.xlane.f32.xlu0 %v1238
        %v1240 = vpop.xlane.xlu0 %1239
        %v1241 = vsel %vm841, %v1235, -inf
        %1242 = vmax.xlane.f32.xlu0 %v1241
        %v1243 = vpop.xlane.xlu0 %1242
        %v1244 = vsub.f32 %v1230, %v1240
        %v1245 = vsub.f32 %v1235, %v1243
        %v1246 = vmul.f32 %v1244, 1.442695
        %v1247 = vpow.pop %v1246
        %v1248 = vmul.f32 %v1245, 1.442695
        %v1249 = vpow.pop %v1248
        %v1250 = vsel %vm841, %v1247, 0.0
        %1251 = vadd.xlane.f32.xlu0 %v1250
        %v1252 = vpop.xlane.xlu0 %1251
        %v1253 = vsel %vm841, %v1249, 0.0
        %1254 = vadd.xlane.f32.xlu0 %v1253
        %v1255 = vpop.xlane.xlu0 %1254
        %1256 = vrot.lane.b32.xlu0 %v747, 112
        %v1257 = vpop.permute.xlu0 %1256
        %1258 = vrot.lane.b32.xlu0 %v750, 112
        %v1259 = vpop.permute.xlu0 %1258
        %v1263 = vsel %vm841, %v1247, 0
        %v1266 = vsel %vm841, %v1249, 0
        %1268 = vmatprep.subr.mxu0 0.0
        %1269 = vmatpush1.msra.mxu0 0.0
        %1270 = vmatprep.subr.mxu0 0.0
        %1271 = vmatpush1.msra.mxu0 0.0
        %1272 = vmatprep.subr.mxu0 0.0
        %1273 = vmatpush1.msra.mxu0 0.0
        %1274 = vmatprep.subr.mxu0 0.0
        %1275 = vmatpush1.msra.mxu0 0.0
        %1276 = vmatprep.subr.mxu0 0.0
        %1277 = vmatpush1.msra.mxu0 0.0
        %1278 = vmatprep.subr.mxu0 0.0
        %1279 = vmatpush1.msra.mxu0 0.0
        %1280 = vmatprep.subr.mxu0 0.0
        %1281 = vmatpush1.msra.mxu0 0.0
        %1282 = vmatprep.subr.mxu0 0.0
        %1283 = vmatpush1.msra.mxu0 0.0
        %1284 = vmatprep.subr.mxu0 0.0
        %1285 = vmatpush1.msra.mxu0 0.0
        %1286 = vmatprep.subr.mxu0 0.0
        %1287 = vmatpush1.msra.mxu0 0.0
        %1288 = vmatprep.subr.mxu0 0.0
        %1289 = vmatpush1.msra.mxu0 0.0
        %1290 = vmatprep.subr.mxu0 0.0
        %1291 = vmatpush1.msra.mxu0 0.0
        %1292 = vmatprep.subr.mxu0 0.0
        %1293 = vmatpush1.msra.mxu0 0.0
        %1294 = vmatprep.subr.mxu0 0.0
        %1295 = vmatpush1.msra.mxu0 0.0
        %1296 = vmatprep.subr.mxu0 0.0
        %1297 = vmatpush1.msra.mxu0 %v1259
        %1298 = vmatprep.subr.mxu0 0.0
        %1299 = vmatpush1.msra.mxu0 %v1257
        %1300 = vmatprep.subr.mxu0 0.0
        %1301 = vmatpush2.msra.mxu0 0.0
        %1302 = vmatprep.subr.mxu0 0.0
        %1303 = vmatpush2.msra.mxu0 0.0
        %1304 = vmatprep.subr.mxu0 0.0
        %1305 = vmatpush2.msra.mxu0 0.0
        %1306 = vmatprep.subr.mxu0 0.0
        %1307 = vmatpush2.msra.mxu0 0.0
        %1308 = vmatprep.subr.mxu0 0.0
        %1309 = vmatpush2.msra.mxu0 0.0
        %1310 = vmatprep.subr.mxu0 0.0
        %1311 = vmatpush2.msra.mxu0 0.0
        %1312 = vmatprep.subr.mxu0 0.0
        %1313 = vmatpush2.msra.mxu0 0.0
        %1314 = vmatprep.subr.mxu0 0.0
        %1315 = vmatpush2.msra.mxu0 0.0
        %1316 = vmatprep.subr.mxu0 0.0
        %1317 = vmatpush2.msra.mxu0 0.0
        %1318 = vmatprep.subr.mxu0 0.0
        %1319 = vmatpush2.msra.mxu0 0.0
        %1320 = vmatprep.subr.mxu0 0.0
        %1321 = vmatpush2.msra.mxu0 0.0
        %1322 = vmatprep.subr.mxu0 0.0
        %1323 = vmatpush2.msra.mxu0 0.0
        %1324 = vmatprep.subr.mxu0 0.0
        %1325 = vmatpush2.msra.mxu0 0.0
        %1326 = vmatprep.subr.mxu0 0.0
        %1327 = vmatpush2.msra.mxu0 0.0
        %1328 = vmatprep.subr.mxu0 0.0
        %1329 = vmatpush2.msra.mxu0 0.0
        %1330 = vmatprep.subr.mxu0 0.0
        %1331 = vmatpush2.msra.mxu0 0.0
        %1332 = vmatprep.mubr.f32.mxu0 0.0
        %1333 = vmatmul.mubr.f32.gmra.mxu0 %v1263
        %v1334 = vpop.f32.mrf.mxu0
        %v1335 = vadd.f32 0.0, %v1334
        %v1336 = vpop.f32.mrf.mxu0
        %1337 = vmatprep.mubr.f32.mxu0 0.0
        %1338 = vmatmul.mubr.f32.gmra.mxu0 %v1266
        %v1339 = vpop.f32.mrf.mxu0
        %v1340 = vadd.f32 0.0, %v1339
        %v1341 = vpop.f32.mrf.mxu0
        %1342 = vdwg.mxu0
        %v1343 = vrcp.pop %v1252
        %v1344 = vrcp.pop %v1255
        %v1345 = vmul.f32 %v1335, %v1343
        %v1346 = vmul.f32 %v1340, %v1344
        %1347 = vrot.lane.b32.xlu0 %v704, 104
        %v1348 = vpop.permute.xlu0 %1347
        %1349 = vrot.lane.b32.xlu0 %v708, 104
        %v1350 = vpop.permute.xlu0 %1349
        %1351 = vrot.lane.b32.xlu0 %v706, 104
        %v1352 = vpop.permute.xlu0 %1351
        %1353 = vrot.lane.b32.xlu0 %v710, 104
        %v1354 = vpop.permute.xlu0 %1353
        %v1355 = vsel %vm753, %v1348, 0
        %v1357 = vsel %vm753, %v1350, 0
        %v1359 = vsel %vm753, %v1352, 0
        %v1361 = vsel %vm753, %v1354, 0
        %1363 = vmatprep.subr.mxu0 0.0
        %1364 = vmatpush1.xpose.msra.mxu0 0.0
        %1365 = vmatprep.subr.mxu0 0.0
        %1366 = vmatpush1.xpose.msra.mxu0 0.0
        %1367 = vmatprep.subr.mxu0 0.0
        %1368 = vmatpush1.xpose.msra.mxu0 0.0
        %1369 = vmatprep.subr.mxu0 0.0
        %1370 = vmatpush1.xpose.msra.mxu0 0.0
        %1371 = vmatprep.subr.mxu0 0.0
        %1372 = vmatpush1.xpose.msra.mxu0 0.0
        %1373 = vmatprep.subr.mxu0 0.0
        %1374 = vmatpush1.xpose.msra.mxu0 0.0
        %1375 = vmatprep.subr.mxu0 0.0
        %1376 = vmatpush1.xpose.msra.mxu0 0.0
        %1377 = vmatprep.subr.mxu0 0.0
        %1378 = vmatpush1.xpose.msra.mxu0 0.0
        %1379 = vmatprep.subr.mxu0 0.0
        %1380 = vmatpush1.xpose.msra.mxu0 0.0
        %1381 = vmatprep.subr.mxu0 0.0
        %1382 = vmatpush1.xpose.msra.mxu0 0.0
        %1383 = vmatprep.subr.mxu0 0.0
        %1384 = vmatpush1.xpose.msra.mxu0 0.0
        %1385 = vmatprep.subr.mxu0 0.0
        %1386 = vmatpush1.xpose.msra.mxu0 0.0
        %1387 = vmatprep.subr.mxu0 0.0
        %1388 = vmatpush1.xpose.msra.mxu0 0.0
        %1389 = vmatprep.subr.mxu0 0.0
        %1390 = vmatpush1.xpose.msra.mxu0 0.0
        %1391 = vmatprep.subr.mxu0 0.0
        %1392 = vmatpush1.xpose.msra.mxu0 %v1361
        %1393 = vmatprep.subr.mxu0 0.0
        %1394 = vmatpush1.xpose.msra.mxu0 %v1359
        %1395 = vmatprep.subr.mxu0 0.0
        %1396 = vmatpush2.xpose.msra.mxu0 0.0
        %1397 = vmatprep.subr.mxu0 0.0
        %1398 = vmatpush2.xpose.msra.mxu0 0.0
        %1399 = vmatprep.subr.mxu0 0.0
        %1400 = vmatpush2.xpose.msra.mxu0 0.0
        %1401 = vmatprep.subr.mxu0 0.0
        %1402 = vmatpush2.xpose.msra.mxu0 0.0
        %1403 = vmatprep.subr.mxu0 0.0
        %1404 = vmatpush2.xpose.msra.mxu0 0.0
        %1405 = vmatprep.subr.mxu0 0.0
        %1406 = vmatpush2.xpose.msra.mxu0 0.0
        %1407 = vmatprep.subr.mxu0 0.0
        %1408 = vmatpush2.xpose.msra.mxu0 0.0
        %1409 = vmatprep.subr.mxu0 0.0
        %1410 = vmatpush2.xpose.msra.mxu0 0.0
        %1411 = vmatprep.subr.mxu0 0.0
        %1412 = vmatpush2.xpose.msra.mxu0 0.0
        %1413 = vmatprep.subr.mxu0 0.0
        %1414 = vmatpush2.xpose.msra.mxu0 0.0
        %1415 = vmatprep.subr.mxu0 0.0
        %1416 = vmatpush2.xpose.msra.mxu0 0.0
        %1417 = vmatprep.subr.mxu0 0.0
        %1418 = vmatpush2.xpose.msra.mxu0 0.0
        %1419 = vmatprep.subr.mxu0 0.0
        %1420 = vmatpush2.xpose.msra.mxu0 0.0
        %1421 = vmatprep.subr.mxu0 0.0
        %1422 = vmatpush2.xpose.msra.mxu0 0.0
        %1423 = vmatprep.subr.mxu0 0.0
        %1424 = vmatpush2.xpose.msra.mxu0 0.0
        %1425 = vmatprep.subr.mxu0 0.0
        %1426 = vmatpush2.xpose.msra.mxu0 0.0
        %1427 = vmatprep.mubr.f32.mxu0 0.0
        %1428 = vmatmul.mubr.f32.gmra.mxu0 %v1355
        %v1429 = vpop.f32.mrf.mxu0
        %v1430 = vadd.f32 0.0, %v1429
        %v1431 = vpop.f32.mrf.mxu0
        %1432 = vmatprep.mubr.f32.mxu0 0.0
        %1433 = vmatmul.mubr.f32.gmra.mxu0 %v1357
        %v1434 = vpop.f32.mrf.mxu0
        %v1435 = vadd.f32 0.0, %v1434
        %v1436 = vpop.f32.mrf.mxu0
        %1437 = vdwg.mxu0
        %v1438 = vsel %vm841, %v1430, -inf
        %1439 = vmax.xlane.f32.xlu0 %v1438
        %v1440 = vpop.xlane.xlu0 %1439
        %v1441 = vsel %vm841, %v1435, -inf
        %1442 = vmax.xlane.f32.xlu0 %v1441
        %v1443 = vpop.xlane.xlu0 %1442
        %v1444 = vsub.f32 %v1430, %v1440
        %v1445 = vsub.f32 %v1435, %v1443
        %v1446 = vmul.f32 %v1444, 1.442695
        %v1447 = vpow.pop %v1446
        %v1448 = vmul.f32 %v1445, 1.442695
        %v1449 = vpow.pop %v1448
        %v1450 = vsel %vm841, %v1447, 0.0
        %1451 = vadd.xlane.f32.xlu0 %v1450
        %v1452 = vpop.xlane.xlu0 %1451
        %v1453 = vsel %vm841, %v1449, 0.0
        %1454 = vadd.xlane.f32.xlu0 %v1453
        %v1455 = vpop.xlane.xlu0 %1454
        %1456 = vrot.lane.b32.xlu0 %v747, 104
        %v1457 = vpop.permute.xlu0 %1456
        %1458 = vrot.lane.b32.xlu0 %v750, 104
        %v1459 = vpop.permute.xlu0 %1458
        %v1463 = vsel %vm841, %v1447, 0
        %v1466 = vsel %vm841, %v1449, 0
        %1468 = vmatprep.subr.mxu0 0.0
        %1469 = vmatpush1.msra.mxu0 0.0
        %1470 = vmatprep.subr.mxu0 0.0
        %1471 = vmatpush1.msra.mxu0 0.0
        %1472 = vmatprep.subr.mxu0 0.0
        %1473 = vmatpush1.msra.mxu0 0.0
        %1474 = vmatprep.subr.mxu0 0.0
        %1475 = vmatpush1.msra.mxu0 0.0
        %1476 = vmatprep.subr.mxu0 0.0
        %1477 = vmatpush1.msra.mxu0 0.0
        %1478 = vmatprep.subr.mxu0 0.0
        %1479 = vmatpush1.msra.mxu0 0.0
        %1480 = vmatprep.subr.mxu0 0.0
        %1481 = vmatpush1.msra.mxu0 0.0
        %1482 = vmatprep.subr.mxu0 0.0
        %1483 = vmatpush1.msra.mxu0 0.0
        %1484 = vmatprep.subr.mxu0 0.0
        %1485 = vmatpush1.msra.mxu0 0.0
        %1486 = vmatprep.subr.mxu0 0.0
        %1487 = vmatpush1.msra.mxu0 0.0
        %1488 = vmatprep.subr.mxu0 0.0
        %1489 = vmatpush1.msra.mxu0 0.0
        %1490 = vmatprep.subr.mxu0 0.0
        %1491 = vmatpush1.msra.mxu0 0.0
        %1492 = vmatprep.subr.mxu0 0.0
        %1493 = vmatpush1.msra.mxu0 0.0
        %1494 = vmatprep.subr.mxu0 0.0
        %1495 = vmatpush1.msra.mxu0 0.0
        %1496 = vmatprep.subr.mxu0 0.0
        %1497 = vmatpush1.msra.mxu0 %v1459
        %1498 = vmatprep.subr.mxu0 0.0
        %1499 = vmatpush1.msra.mxu0 %v1457
        %1500 = vmatprep.subr.mxu0 0.0
        %1501 = vmatpush2.msra.mxu0 0.0
        %1502 = vmatprep.subr.mxu0 0.0
        %1503 = vmatpush2.msra.mxu0 0.0
        %1504 = vmatprep.subr.mxu0 0.0
        %1505 = vmatpush2.msra.mxu0 0.0
        %1506 = vmatprep.subr.mxu0 0.0
        %1507 = vmatpush2.msra.mxu0 0.0
        %1508 = vmatprep.subr.mxu0 0.0
        %1509 = vmatpush2.msra.mxu0 0.0
        %1510 = vmatprep.subr.mxu0 0.0
        %1511 = vmatpush2.msra.mxu0 0.0
        %1512 = vmatprep.subr.mxu0 0.0
        %1513 = vmatpush2.msra.mxu0 0.0
        %1514 = vmatprep.subr.mxu0 0.0
        %1515 = vmatpush2.msra.mxu0 0.0
        %1516 = vmatprep.subr.mxu0 0.0
        %1517 = vmatpush2.msra.mxu0 0.0
        %1518 = vmatprep.subr.mxu0 0.0
        %1519 = vmatpush2.msra.mxu0 0.0
        %1520 = vmatprep.subr.mxu0 0.0
        %1521 = vmatpush2.msra.mxu0 0.0
        %1522 = vmatprep.subr.mxu0 0.0
        %1523 = vmatpush2.msra.mxu0 0.0
        %1524 = vmatprep.subr.mxu0 0.0
        %1525 = vmatpush2.msra.mxu0 0.0
        %1526 = vmatprep.subr.mxu0 0.0
        %1527 = vmatpush2.msra.mxu0 0.0
        %1528 = vmatprep.subr.mxu0 0.0
        %1529 = vmatpush2.msra.mxu0 0.0
        %1530 = vmatprep.subr.mxu0 0.0
        %1531 = vmatpush2.msra.mxu0 0.0
        %1532 = vmatprep.mubr.f32.mxu0 0.0
        %1533 = vmatmul.mubr.f32.gmra.mxu0 %v1463
        %v1534 = vpop.f32.mrf.mxu0
        %v1535 = vadd.f32 0.0, %v1534
        %v1536 = vpop.f32.mrf.mxu0
        %1537 = vmatprep.mubr.f32.mxu0 0.0
        %1538 = vmatmul.mubr.f32.gmra.mxu0 %v1466
        %v1539 = vpop.f32.mrf.mxu0
        %v1540 = vadd.f32 0.0, %v1539
        %v1541 = vpop.f32.mrf.mxu0
        %1542 = vdwg.mxu0
        %v1543 = vrcp.pop %v1452
        %v1544 = vrcp.pop %v1455
        %v1545 = vmul.f32 %v1535, %v1543
        %v1546 = vmul.f32 %v1540, %v1544
        %1547 = vrot.lane.b32.xlu0 %v704, 96
        %v1548 = vpop.permute.xlu0 %1547
        %1549 = vrot.lane.b32.xlu0 %v708, 96
        %v1550 = vpop.permute.xlu0 %1549
        %1551 = vrot.lane.b32.xlu0 %v706, 96
        %v1552 = vpop.permute.xlu0 %1551
        %1553 = vrot.lane.b32.xlu0 %v710, 96
        %v1554 = vpop.permute.xlu0 %1553
        %v1555 = vsel %vm753, %v1548, 0
        %v1557 = vsel %vm753, %v1550, 0
        %v1559 = vsel %vm753, %v1552, 0
        %v1561 = vsel %vm753, %v1554, 0
        %1563 = vmatprep.subr.mxu0 0.0
        %1564 = vmatpush1.xpose.msra.mxu0 0.0
        %1565 = vmatprep.subr.mxu0 0.0
        %1566 = vmatpush1.xpose.msra.mxu0 0.0
        %1567 = vmatprep.subr.mxu0 0.0
        %1568 = vmatpush1.xpose.msra.mxu0 0.0
        %1569 = vmatprep.subr.mxu0 0.0
        %1570 = vmatpush1.xpose.msra.mxu0 0.0
        %1571 = vmatprep.subr.mxu0 0.0
        %1572 = vmatpush1.xpose.msra.mxu0 0.0
        %1573 = vmatprep.subr.mxu0 0.0
        %1574 = vmatpush1.xpose.msra.mxu0 0.0
        %1575 = vmatprep.subr.mxu0 0.0
        %1576 = vmatpush1.xpose.msra.mxu0 0.0
        %1577 = vmatprep.subr.mxu0 0.0
        %1578 = vmatpush1.xpose.msra.mxu0 0.0
        %1579 = vmatprep.subr.mxu0 0.0
        %1580 = vmatpush1.xpose.msra.mxu0 0.0
        %1581 = vmatprep.subr.mxu0 0.0
        %1582 = vmatpush1.xpose.msra.mxu0 0.0
        %1583 = vmatprep.subr.mxu0 0.0
        %1584 = vmatpush1.xpose.msra.mxu0 0.0
        %1585 = vmatprep.subr.mxu0 0.0
        %1586 = vmatpush1.xpose.msra.mxu0 0.0
        %1587 = vmatprep.subr.mxu0 0.0
        %1588 = vmatpush1.xpose.msra.mxu0 0.0
        %1589 = vmatprep.subr.mxu0 0.0
        %1590 = vmatpush1.xpose.msra.mxu0 0.0
        %1591 = vmatprep.subr.mxu0 0.0
        %1592 = vmatpush1.xpose.msra.mxu0 %v1561
        %1593 = vmatprep.subr.mxu0 0.0
        %1594 = vmatpush1.xpose.msra.mxu0 %v1559
        %1595 = vmatprep.subr.mxu0 0.0
        %1596 = vmatpush2.xpose.msra.mxu0 0.0
        %1597 = vmatprep.subr.mxu0 0.0
        %1598 = vmatpush2.xpose.msra.mxu0 0.0
        %1599 = vmatprep.subr.mxu0 0.0
        %1600 = vmatpush2.xpose.msra.mxu0 0.0
        %1601 = vmatprep.subr.mxu0 0.0
        %1602 = vmatpush2.xpose.msra.mxu0 0.0
        %1603 = vmatprep.subr.mxu0 0.0
        %1604 = vmatpush2.xpose.msra.mxu0 0.0
        %1605 = vmatprep.subr.mxu0 0.0
        %1606 = vmatpush2.xpose.msra.mxu0 0.0
        %1607 = vmatprep.subr.mxu0 0.0
        %1608 = vmatpush2.xpose.msra.mxu0 0.0
        %1609 = vmatprep.subr.mxu0 0.0
        %1610 = vmatpush2.xpose.msra.mxu0 0.0
        %1611 = vmatprep.subr.mxu0 0.0
        %1612 = vmatpush2.xpose.msra.mxu0 0.0
        %1613 = vmatprep.subr.mxu0 0.0
        %1614 = vmatpush2.xpose.msra.mxu0 0.0
        %1615 = vmatprep.subr.mxu0 0.0
        %1616 = vmatpush2.xpose.msra.mxu0 0.0
        %1617 = vmatprep.subr.mxu0 0.0
        %1618 = vmatpush2.xpose.msra.mxu0 0.0
        %1619 = vmatprep.subr.mxu0 0.0
        %1620 = vmatpush2.xpose.msra.mxu0 0.0
        %1621 = vmatprep.subr.mxu0 0.0
        %1622 = vmatpush2.xpose.msra.mxu0 0.0
        %1623 = vmatprep.subr.mxu0 0.0
        %1624 = vmatpush2.xpose.msra.mxu0 0.0
        %1625 = vmatprep.subr.mxu0 0.0
        %1626 = vmatpush2.xpose.msra.mxu0 0.0
        %1627 = vmatprep.mubr.f32.mxu0 0.0
        %1628 = vmatmul.mubr.f32.gmra.mxu0 %v1555
        %v1629 = vpop.f32.mrf.mxu0
        %v1630 = vadd.f32 0.0, %v1629
        %v1631 = vpop.f32.mrf.mxu0
        %1632 = vmatprep.mubr.f32.mxu0 0.0
        %1633 = vmatmul.mubr.f32.gmra.mxu0 %v1557
        %v1634 = vpop.f32.mrf.mxu0
        %v1635 = vadd.f32 0.0, %v1634
        %v1636 = vpop.f32.mrf.mxu0
        %1637 = vdwg.mxu0
        %v1638 = vsel %vm841, %v1630, -inf
        %1639 = vmax.xlane.f32.xlu0 %v1638
        %v1640 = vpop.xlane.xlu0 %1639
        %v1641 = vsel %vm841, %v1635, -inf
        %1642 = vmax.xlane.f32.xlu0 %v1641
        %v1643 = vpop.xlane.xlu0 %1642
        %v1644 = vsub.f32 %v1630, %v1640
        %v1645 = vsub.f32 %v1635, %v1643
        %v1646 = vmul.f32 %v1644, 1.442695
        %v1647 = vpow.pop %v1646
        %v1648 = vmul.f32 %v1645, 1.442695
        %v1649 = vpow.pop %v1648
        %v1650 = vsel %vm841, %v1647, 0.0
        %1651 = vadd.xlane.f32.xlu0 %v1650
        %v1652 = vpop.xlane.xlu0 %1651
        %v1653 = vsel %vm841, %v1649, 0.0
        %1654 = vadd.xlane.f32.xlu0 %v1653
        %v1655 = vpop.xlane.xlu0 %1654
        %1656 = vrot.lane.b32.xlu0 %v747, 96
        %v1657 = vpop.permute.xlu0 %1656
        %1658 = vrot.lane.b32.xlu0 %v750, 96
        %v1659 = vpop.permute.xlu0 %1658
        %v1663 = vsel %vm841, %v1647, 0
        %v1666 = vsel %vm841, %v1649, 0
        %1668 = vmatprep.subr.mxu0 0.0
        %1669 = vmatpush1.msra.mxu0 0.0
        %1670 = vmatprep.subr.mxu0 0.0
        %1671 = vmatpush1.msra.mxu0 0.0
        %1672 = vmatprep.subr.mxu0 0.0
        %1673 = vmatpush1.msra.mxu0 0.0
        %1674 = vmatprep.subr.mxu0 0.0
        %1675 = vmatpush1.msra.mxu0 0.0
        %1676 = vmatprep.subr.mxu0 0.0
        %1677 = vmatpush1.msra.mxu0 0.0
        %1678 = vmatprep.subr.mxu0 0.0
        %1679 = vmatpush1.msra.mxu0 0.0
        %1680 = vmatprep.subr.mxu0 0.0
        %1681 = vmatpush1.msra.mxu0 0.0
        %1682 = vmatprep.subr.mxu0 0.0
        %1683 = vmatpush1.msra.mxu0 0.0
        %1684 = vmatprep.subr.mxu0 0.0
        %1685 = vmatpush1.msra.mxu0 0.0
        %1686 = vmatprep.subr.mxu0 0.0
        %1687 = vmatpush1.msra.mxu0 0.0
        %1688 = vmatprep.subr.mxu0 0.0
        %1689 = vmatpush1.msra.mxu0 0.0
        %1690 = vmatprep.subr.mxu0 0.0
        %1691 = vmatpush1.msra.mxu0 0.0
        %1692 = vmatprep.subr.mxu0 0.0
        %1693 = vmatpush1.msra.mxu0 0.0
        %1694 = vmatprep.subr.mxu0 0.0
        %1695 = vmatpush1.msra.mxu0 0.0
        %1696 = vmatprep.subr.mxu0 0.0
        %1697 = vmatpush1.msra.mxu0 %v1659
        %1698 = vmatprep.subr.mxu0 0.0
        %1699 = vmatpush1.msra.mxu0 %v1657
        %1700 = vmatprep.subr.mxu0 0.0
        %1701 = vmatpush2.msra.mxu0 0.0
        %1702 = vmatprep.subr.mxu0 0.0
        %1703 = vmatpush2.msra.mxu0 0.0
        %1704 = vmatprep.subr.mxu0 0.0
        %1705 = vmatpush2.msra.mxu0 0.0
        %1706 = vmatprep.subr.mxu0 0.0
        %1707 = vmatpush2.msra.mxu0 0.0
        %1708 = vmatprep.subr.mxu0 0.0
        %1709 = vmatpush2.msra.mxu0 0.0
        %1710 = vmatprep.subr.mxu0 0.0
        %1711 = vmatpush2.msra.mxu0 0.0
        %1712 = vmatprep.subr.mxu0 0.0
        %1713 = vmatpush2.msra.mxu0 0.0
        %1714 = vmatprep.subr.mxu0 0.0
        %1715 = vmatpush2.msra.mxu0 0.0
        %1716 = vmatprep.subr.mxu0 0.0
        %1717 = vmatpush2.msra.mxu0 0.0
        %1718 = vmatprep.subr.mxu0 0.0
        %1719 = vmatpush2.msra.mxu0 0.0
        %1720 = vmatprep.subr.mxu0 0.0
        %1721 = vmatpush2.msra.mxu0 0.0
        %1722 = vmatprep.subr.mxu0 0.0
        %1723 = vmatpush2.msra.mxu0 0.0
        %1724 = vmatprep.subr.mxu0 0.0
        %1725 = vmatpush2.msra.mxu0 0.0
        %1726 = vmatprep.subr.mxu0 0.0
        %1727 = vmatpush2.msra.mxu0 0.0
        %1728 = vmatprep.subr.mxu0 0.0
        %1729 = vmatpush2.msra.mxu0 0.0
        %1730 = vmatprep.subr.mxu0 0.0
        %1731 = vmatpush2.msra.mxu0 0.0
        %1732 = vmatprep.mubr.f32.mxu0 0.0
        %1733 = vmatmul.mubr.f32.gmra.mxu0 %v1663
        %v1734 = vpop.f32.mrf.mxu0
        %v1735 = vadd.f32 0.0, %v1734
        %v1736 = vpop.f32.mrf.mxu0
        %1737 = vmatprep.mubr.f32.mxu0 0.0
        %1738 = vmatmul.mubr.f32.gmra.mxu0 %v1666
        %v1739 = vpop.f32.mrf.mxu0
        %v1740 = vadd.f32 0.0, %v1739
        %v1741 = vpop.f32.mrf.mxu0
        %1742 = vdwg.mxu0
        %v1743 = vrcp.pop %v1652
        %v1744 = vrcp.pop %v1655
        %v1745 = vmul.f32 %v1735, %v1743
        %v1746 = vmul.f32 %v1740, %v1744
        %1747 = vrot.lane.b32.xlu0 %v704, 88
        %v1748 = vpop.permute.xlu0 %1747
        %1749 = vrot.lane.b32.xlu0 %v708, 88
        %v1750 = vpop.permute.xlu0 %1749
        %1751 = vrot.lane.b32.xlu0 %v706, 88
        %v1752 = vpop.permute.xlu0 %1751
        %1753 = vrot.lane.b32.xlu0 %v710, 88
        %v1754 = vpop.permute.xlu0 %1753
        %v1755 = vsel %vm753, %v1748, 0
        %v1757 = vsel %vm753, %v1750, 0
        %v1759 = vsel %vm753, %v1752, 0
        %v1761 = vsel %vm753, %v1754, 0
        %1763 = vmatprep.subr.mxu0 0.0
        %1764 = vmatpush1.xpose.msra.mxu0 0.0
        %1765 = vmatprep.subr.mxu0 0.0
        %1766 = vmatpush1.xpose.msra.mxu0 0.0
        %1767 = vmatprep.subr.mxu0 0.0
        %1768 = vmatpush1.xpose.msra.mxu0 0.0
        %1769 = vmatprep.subr.mxu0 0.0
        %1770 = vmatpush1.xpose.msra.mxu0 0.0
        %1771 = vmatprep.subr.mxu0 0.0
        %1772 = vmatpush1.xpose.msra.mxu0 0.0
        %1773 = vmatprep.subr.mxu0 0.0
        %1774 = vmatpush1.xpose.msra.mxu0 0.0
        %1775 = vmatprep.subr.mxu0 0.0
        %1776 = vmatpush1.xpose.msra.mxu0 0.0
        %1777 = vmatprep.subr.mxu0 0.0
        %1778 = vmatpush1.xpose.msra.mxu0 0.0
        %1779 = vmatprep.subr.mxu0 0.0
        %1780 = vmatpush1.xpose.msra.mxu0 0.0
        %1781 = vmatprep.subr.mxu0 0.0
        %1782 = vmatpush1.xpose.msra.mxu0 0.0
        %1783 = vmatprep.subr.mxu0 0.0
        %1784 = vmatpush1.xpose.msra.mxu0 0.0
        %1785 = vmatprep.subr.mxu0 0.0
        %1786 = vmatpush1.xpose.msra.mxu0 0.0
        %1787 = vmatprep.subr.mxu0 0.0
        %1788 = vmatpush1.xpose.msra.mxu0 0.0
        %1789 = vmatprep.subr.mxu0 0.0
        %1790 = vmatpush1.xpose.msra.mxu0 0.0
        %1791 = vmatprep.subr.mxu0 0.0
        %1792 = vmatpush1.xpose.msra.mxu0 %v1761
        %1793 = vmatprep.subr.mxu0 0.0
        %1794 = vmatpush1.xpose.msra.mxu0 %v1759
        %1795 = vmatprep.subr.mxu0 0.0
        %1796 = vmatpush2.xpose.msra.mxu0 0.0
        %1797 = vmatprep.subr.mxu0 0.0
        %1798 = vmatpush2.xpose.msra.mxu0 0.0
        %1799 = vmatprep.subr.mxu0 0.0
        %1800 = vmatpush2.xpose.msra.mxu0 0.0
        %1801 = vmatprep.subr.mxu0 0.0
        %1802 = vmatpush2.xpose.msra.mxu0 0.0
        %1803 = vmatprep.subr.mxu0 0.0
        %1804 = vmatpush2.xpose.msra.mxu0 0.0
        %1805 = vmatprep.subr.mxu0 0.0
        %1806 = vmatpush2.xpose.msra.mxu0 0.0
        %1807 = vmatprep.subr.mxu0 0.0
        %1808 = vmatpush2.xpose.msra.mxu0 0.0
        %1809 = vmatprep.subr.mxu0 0.0
        %1810 = vmatpush2.xpose.msra.mxu0 0.0
        %1811 = vmatprep.subr.mxu0 0.0
        %1812 = vmatpush2.xpose.msra.mxu0 0.0
        %1813 = vmatprep.subr.mxu0 0.0
        %1814 = vmatpush2.xpose.msra.mxu0 0.0
        %1815 = vmatprep.subr.mxu0 0.0
        %1816 = vmatpush2.xpose.msra.mxu0 0.0
        %1817 = vmatprep.subr.mxu0 0.0
        %1818 = vmatpush2.xpose.msra.mxu0 0.0
        %1819 = vmatprep.subr.mxu0 0.0
        %1820 = vmatpush2.xpose.msra.mxu0 0.0
        %1821 = vmatprep.subr.mxu0 0.0
        %1822 = vmatpush2.xpose.msra.mxu0 0.0
        %1823 = vmatprep.subr.mxu0 0.0
        %1824 = vmatpush2.xpose.msra.mxu0 0.0
        %1825 = vmatprep.subr.mxu0 0.0
        %1826 = vmatpush2.xpose.msra.mxu0 0.0
        %1827 = vmatprep.mubr.f32.mxu0 0.0
        %1828 = vmatmul.mubr.f32.gmra.mxu0 %v1755
        %v1829 = vpop.f32.mrf.mxu0
        %v1830 = vadd.f32 0.0, %v1829
        %v1831 = vpop.f32.mrf.mxu0
        %1832 = vmatprep.mubr.f32.mxu0 0.0
        %1833 = vmatmul.mubr.f32.gmra.mxu0 %v1757
        %v1834 = vpop.f32.mrf.mxu0
        %v1835 = vadd.f32 0.0, %v1834
        %v1836 = vpop.f32.mrf.mxu0
        %1837 = vdwg.mxu0
        %v1838 = vsel %vm841, %v1830, -inf
        %1839 = vmax.xlane.f32.xlu0 %v1838
        %v1840 = vpop.xlane.xlu0 %1839
        %v1841 = vsel %vm841, %v1835, -inf
        %1842 = vmax.xlane.f32.xlu0 %v1841
        %v1843 = vpop.xlane.xlu0 %1842
        %v1844 = vsub.f32 %v1830, %v1840
        %v1845 = vsub.f32 %v1835, %v1843
        %v1846 = vmul.f32 %v1844, 1.442695
        %v1847 = vpow.pop %v1846
        %v1848 = vmul.f32 %v1845, 1.442695
        %v1849 = vpow.pop %v1848
        %v1850 = vsel %vm841, %v1847, 0.0
        %1851 = vadd.xlane.f32.xlu0 %v1850
        %v1852 = vpop.xlane.xlu0 %1851
        %v1853 = vsel %vm841, %v1849, 0.0
        %1854 = vadd.xlane.f32.xlu0 %v1853
        %v1855 = vpop.xlane.xlu0 %1854
        %1856 = vrot.lane.b32.xlu0 %v747, 88
        %v1857 = vpop.permute.xlu0 %1856
        %1858 = vrot.lane.b32.xlu0 %v750, 88
        %v1859 = vpop.permute.xlu0 %1858
        %v1863 = vsel %vm841, %v1847, 0
        %v1866 = vsel %vm841, %v1849, 0
        %1868 = vmatprep.subr.mxu0 0.0
        %1869 = vmatpush1.msra.mxu0 0.0
        %1870 = vmatprep.subr.mxu0 0.0
        %1871 = vmatpush1.msra.mxu0 0.0
        %1872 = vmatprep.subr.mxu0 0.0
        %1873 = vmatpush1.msra.mxu0 0.0
        %1874 = vmatprep.subr.mxu0 0.0
        %1875 = vmatpush1.msra.mxu0 0.0
        %1876 = vmatprep.subr.mxu0 0.0
        %1877 = vmatpush1.msra.mxu0 0.0
        %1878 = vmatprep.subr.mxu0 0.0
        %1879 = vmatpush1.msra.mxu0 0.0
        %1880 = vmatprep.subr.mxu0 0.0
        %1881 = vmatpush1.msra.mxu0 0.0
        %1882 = vmatprep.subr.mxu0 0.0
        %1883 = vmatpush1.msra.mxu0 0.0
        %1884 = vmatprep.subr.mxu0 0.0
        %1885 = vmatpush1.msra.mxu0 0.0
        %1886 = vmatprep.subr.mxu0 0.0
        %1887 = vmatpush1.msra.mxu0 0.0
        %1888 = vmatprep.subr.mxu0 0.0
        %1889 = vmatpush1.msra.mxu0 0.0
        %1890 = vmatprep.subr.mxu0 0.0
        %1891 = vmatpush1.msra.mxu0 0.0
        %1892 = vmatprep.subr.mxu0 0.0
        %1893 = vmatpush1.msra.mxu0 0.0
        %1894 = vmatprep.subr.mxu0 0.0
        %1895 = vmatpush1.msra.mxu0 0.0
        %1896 = vmatprep.subr.mxu0 0.0
        %1897 = vmatpush1.msra.mxu0 %v1859
        %1898 = vmatprep.subr.mxu0 0.0
        %1899 = vmatpush1.msra.mxu0 %v1857
        %1900 = vmatprep.subr.mxu0 0.0
        %1901 = vmatpush2.msra.mxu0 0.0
        %1902 = vmatprep.subr.mxu0 0.0
        %1903 = vmatpush2.msra.mxu0 0.0
        %1904 = vmatprep.subr.mxu0 0.0
        %1905 = vmatpush2.msra.mxu0 0.0
        %1906 = vmatprep.subr.mxu0 0.0
        %1907 = vmatpush2.msra.mxu0 0.0
        %1908 = vmatprep.subr.mxu0 0.0
        %1909 = vmatpush2.msra.mxu0 0.0
        %1910 = vmatprep.subr.mxu0 0.0
        %1911 = vmatpush2.msra.mxu0 0.0
        %1912 = vmatprep.subr.mxu0 0.0
        %1913 = vmatpush2.msra.mxu0 0.0
        %1914 = vmatprep.subr.mxu0 0.0
        %1915 = vmatpush2.msra.mxu0 0.0
        %1916 = vmatprep.subr.mxu0 0.0
        %1917 = vmatpush2.msra.mxu0 0.0
        %1918 = vmatprep.subr.mxu0 0.0
        %1919 = vmatpush2.msra.mxu0 0.0
        %1920 = vmatprep.subr.mxu0 0.0
        %1921 = vmatpush2.msra.mxu0 0.0
        %1922 = vmatprep.subr.mxu0 0.0
        %1923 = vmatpush2.msra.mxu0 0.0
        %1924 = vmatprep.subr.mxu0 0.0
        %1925 = vmatpush2.msra.mxu0 0.0
        %1926 = vmatprep.subr.mxu0 0.0
        %1927 = vmatpush2.msra.mxu0 0.0
        %1928 = vmatprep.subr.mxu0 0.0
        %1929 = vmatpush2.msra.mxu0 0.0
        %1930 = vmatprep.subr.mxu0 0.0
        %1931 = vmatpush2.msra.mxu0 0.0
        %1932 = vmatprep.mubr.f32.mxu0 0.0
        %1933 = vmatmul.mubr.f32.gmra.mxu0 %v1863
        %v1934 = vpop.f32.mrf.mxu0
        %v1935 = vadd.f32 0.0, %v1934
        %v1936 = vpop.f32.mrf.mxu0
        %1937 = vmatprep.mubr.f32.mxu0 0.0
        %1938 = vmatmul.mubr.f32.gmra.mxu0 %v1866
        %v1939 = vpop.f32.mrf.mxu0
        %v1940 = vadd.f32 0.0, %v1939
        %v1941 = vpop.f32.mrf.mxu0
        %1942 = vdwg.mxu0
        %v1943 = vrcp.pop %v1852
        %v1944 = vrcp.pop %v1855
        %v1945 = vmul.f32 %v1935, %v1943
        %v1946 = vmul.f32 %v1940, %v1944
        %1947 = vrot.lane.b32.xlu0 %v704, 80
        %v1948 = vpop.permute.xlu0 %1947
        %1949 = vrot.lane.b32.xlu0 %v708, 80
        %v1950 = vpop.permute.xlu0 %1949
        %1951 = vrot.lane.b32.xlu0 %v706, 80
        %v1952 = vpop.permute.xlu0 %1951
        %1953 = vrot.lane.b32.xlu0 %v710, 80
        %v1954 = vpop.permute.xlu0 %1953
        %v1955 = vsel %vm753, %v1948, 0
        %v1957 = vsel %vm753, %v1950, 0
        %v1959 = vsel %vm753, %v1952, 0
        %v1961 = vsel %vm753, %v1954, 0
        %1963 = vmatprep.subr.mxu0 0.0
        %1964 = vmatpush1.xpose.msra.mxu0 0.0
        %1965 = vmatprep.subr.mxu0 0.0
        %1966 = vmatpush1.xpose.msra.mxu0 0.0
        %1967 = vmatprep.subr.mxu0 0.0
        %1968 = vmatpush1.xpose.msra.mxu0 0.0
        %1969 = vmatprep.subr.mxu0 0.0
        %1970 = vmatpush1.xpose.msra.mxu0 0.0
        %1971 = vmatprep.subr.mxu0 0.0
        %1972 = vmatpush1.xpose.msra.mxu0 0.0
        %1973 = vmatprep.subr.mxu0 0.0
        %1974 = vmatpush1.xpose.msra.mxu0 0.0
        %1975 = vmatprep.subr.mxu0 0.0
        %1976 = vmatpush1.xpose.msra.mxu0 0.0
        %1977 = vmatprep.subr.mxu0 0.0
        %1978 = vmatpush1.xpose.msra.mxu0 0.0
        %1979 = vmatprep.subr.mxu0 0.0
        %1980 = vmatpush1.xpose.msra.mxu0 0.0
        %1981 = vmatprep.subr.mxu0 0.0
        %1982 = vmatpush1.xpose.msra.mxu0 0.0
        %1983 = vmatprep.subr.mxu0 0.0
        %1984 = vmatpush1.xpose.msra.mxu0 0.0
        %1985 = vmatprep.subr.mxu0 0.0
        %1986 = vmatpush1.xpose.msra.mxu0 0.0
        %1987 = vmatprep.subr.mxu0 0.0
        %1988 = vmatpush1.xpose.msra.mxu0 0.0
        %1989 = vmatprep.subr.mxu0 0.0
        %1990 = vmatpush1.xpose.msra.mxu0 0.0
        %1991 = vmatprep.subr.mxu0 0.0
        %1992 = vmatpush1.xpose.msra.mxu0 %v1961
        %1993 = vmatprep.subr.mxu0 0.0
        %1994 = vmatpush1.xpose.msra.mxu0 %v1959
        %1995 = vmatprep.subr.mxu0 0.0
        %1996 = vmatpush2.xpose.msra.mxu0 0.0
        %1997 = vmatprep.subr.mxu0 0.0
        %1998 = vmatpush2.xpose.msra.mxu0 0.0
        %1999 = vmatprep.subr.mxu0 0.0
        %2000 = vmatpush2.xpose.msra.mxu0 0.0
        %2001 = vmatprep.subr.mxu0 0.0
        %2002 = vmatpush2.xpose.msra.mxu0 0.0
        %2003 = vmatprep.subr.mxu0 0.0
        %2004 = vmatpush2.xpose.msra.mxu0 0.0
        %2005 = vmatprep.subr.mxu0 0.0
        %2006 = vmatpush2.xpose.msra.mxu0 0.0
        %2007 = vmatprep.subr.mxu0 0.0
        %2008 = vmatpush2.xpose.msra.mxu0 0.0
        %2009 = vmatprep.subr.mxu0 0.0
        %2010 = vmatpush2.xpose.msra.mxu0 0.0
        %2011 = vmatprep.subr.mxu0 0.0
        %2012 = vmatpush2.xpose.msra.mxu0 0.0
        %2013 = vmatprep.subr.mxu0 0.0
        %2014 = vmatpush2.xpose.msra.mxu0 0.0
        %2015 = vmatprep.subr.mxu0 0.0
        %2016 = vmatpush2.xpose.msra.mxu0 0.0
        %2017 = vmatprep.subr.mxu0 0.0
        %2018 = vmatpush2.xpose.msra.mxu0 0.0
        %2019 = vmatprep.subr.mxu0 0.0
        %2020 = vmatpush2.xpose.msra.mxu0 0.0
        %2021 = vmatprep.subr.mxu0 0.0
        %2022 = vmatpush2.xpose.msra.mxu0 0.0
        %2023 = vmatprep.subr.mxu0 0.0
        %2024 = vmatpush2.xpose.msra.mxu0 0.0
        %2025 = vmatprep.subr.mxu0 0.0
        %2026 = vmatpush2.xpose.msra.mxu0 0.0
        %2027 = vmatprep.mubr.f32.mxu0 0.0
        %2028 = vmatmul.mubr.f32.gmra.mxu0 %v1955
        %v2029 = vpop.f32.mrf.mxu0
        %v2030 = vadd.f32 0.0, %v2029
        %v2031 = vpop.f32.mrf.mxu0
        %2032 = vmatprep.mubr.f32.mxu0 0.0
        %2033 = vmatmul.mubr.f32.gmra.mxu0 %v1957
        %v2034 = vpop.f32.mrf.mxu0
        %v2035 = vadd.f32 0.0, %v2034
        %v2036 = vpop.f32.mrf.mxu0
        %2037 = vdwg.mxu0
        %v2038 = vsel %vm841, %v2030, -inf
        %2039 = vmax.xlane.f32.xlu0 %v2038
        %v2040 = vpop.xlane.xlu0 %2039
        %v2041 = vsel %vm841, %v2035, -inf
        %2042 = vmax.xlane.f32.xlu0 %v2041
        %v2043 = vpop.xlane.xlu0 %2042
        %v2044 = vsub.f32 %v2030, %v2040
        %v2045 = vsub.f32 %v2035, %v2043
        %v2046 = vmul.f32 %v2044, 1.442695
        %v2047 = vpow.pop %v2046
        %v2048 = vmul.f32 %v2045, 1.442695
        %v2049 = vpow.pop %v2048
        %v2050 = vsel %vm841, %v2047, 0.0
        %2051 = vadd.xlane.f32.xlu0 %v2050
        %v2052 = vpop.xlane.xlu0 %2051
        %v2053 = vsel %vm841, %v2049, 0.0
        %2054 = vadd.xlane.f32.xlu0 %v2053
        %v2055 = vpop.xlane.xlu0 %2054
        %2056 = vrot.lane.b32.xlu0 %v747, 80
        %v2057 = vpop.permute.xlu0 %2056
        %2058 = vrot.lane.b32.xlu0 %v750, 80
        %v2059 = vpop.permute.xlu0 %2058
        %v2063 = vsel %vm841, %v2047, 0
        %v2066 = vsel %vm841, %v2049, 0
        %2068 = vmatprep.subr.mxu0 0.0
        %2069 = vmatpush1.msra.mxu0 0.0
        %2070 = vmatprep.subr.mxu0 0.0
        %2071 = vmatpush1.msra.mxu0 0.0
        %2072 = vmatprep.subr.mxu0 0.0
        %2073 = vmatpush1.msra.mxu0 0.0
        %2074 = vmatprep.subr.mxu0 0.0
        %2075 = vmatpush1.msra.mxu0 0.0
        %2076 = vmatprep.subr.mxu0 0.0
        %2077 = vmatpush1.msra.mxu0 0.0
        %2078 = vmatprep.subr.mxu0 0.0
        %2079 = vmatpush1.msra.mxu0 0.0
        %2080 = vmatprep.subr.mxu0 0.0
        %2081 = vmatpush1.msra.mxu0 0.0
        %2082 = vmatprep.subr.mxu0 0.0
        %2083 = vmatpush1.msra.mxu0 0.0
        %2084 = vmatprep.subr.mxu0 0.0
        %2085 = vmatpush1.msra.mxu0 0.0
        %2086 = vmatprep.subr.mxu0 0.0
        %2087 = vmatpush1.msra.mxu0 0.0
        %2088 = vmatprep.subr.mxu0 0.0
        %2089 = vmatpush1.msra.mxu0 0.0
        %2090 = vmatprep.subr.mxu0 0.0
        %2091 = vmatpush1.msra.mxu0 0.0
        %2092 = vmatprep.subr.mxu0 0.0
        %2093 = vmatpush1.msra.mxu0 0.0
        %2094 = vmatprep.subr.mxu0 0.0
        %2095 = vmatpush1.msra.mxu0 0.0
        %2096 = vmatprep.subr.mxu0 0.0
        %2097 = vmatpush1.msra.mxu0 %v2059
        %2098 = vmatprep.subr.mxu0 0.0
        %2099 = vmatpush1.msra.mxu0 %v2057
        %2100 = vmatprep.subr.mxu0 0.0
        %2101 = vmatpush2.msra.mxu0 0.0
        %2102 = vmatprep.subr.mxu0 0.0
        %2103 = vmatpush2.msra.mxu0 0.0
        %2104 = vmatprep.subr.mxu0 0.0
        %2105 = vmatpush2.msra.mxu0 0.0
        %2106 = vmatprep.subr.mxu0 0.0
        %2107 = vmatpush2.msra.mxu0 0.0
        %2108 = vmatprep.subr.mxu0 0.0
        %2109 = vmatpush2.msra.mxu0 0.0
        %2110 = vmatprep.subr.mxu0 0.0
        %2111 = vmatpush2.msra.mxu0 0.0
        %2112 = vmatprep.subr.mxu0 0.0
        %2113 = vmatpush2.msra.mxu0 0.0
        %2114 = vmatprep.subr.mxu0 0.0
        %2115 = vmatpush2.msra.mxu0 0.0
        %2116 = vmatprep.subr.mxu0 0.0
        %2117 = vmatpush2.msra.mxu0 0.0
        %2118 = vmatprep.subr.mxu0 0.0
        %2119 = vmatpush2.msra.mxu0 0.0
        %2120 = vmatprep.subr.mxu0 0.0
        %2121 = vmatpush2.msra.mxu0 0.0
        %2122 = vmatprep.subr.mxu0 0.0
        %2123 = vmatpush2.msra.mxu0 0.0
        %2124 = vmatprep.subr.mxu0 0.0
        %2125 = vmatpush2.msra.mxu0 0.0
        %2126 = vmatprep.subr.mxu0 0.0
        %2127 = vmatpush2.msra.mxu0 0.0
        %2128 = vmatprep.subr.mxu0 0.0
        %2129 = vmatpush2.msra.mxu0 0.0
        %2130 = vmatprep.subr.mxu0 0.0
        %2131 = vmatpush2.msra.mxu0 0.0
        %2132 = vmatprep.mubr.f32.mxu0 0.0
        %2133 = vmatmul.mubr.f32.gmra.mxu0 %v2063
        %v2134 = vpop.f32.mrf.mxu0
        %v2135 = vadd.f32 0.0, %v2134
        %v2136 = vpop.f32.mrf.mxu0
        %2137 = vmatprep.mubr.f32.mxu0 0.0
        %2138 = vmatmul.mubr.f32.gmra.mxu0 %v2066
        %v2139 = vpop.f32.mrf.mxu0
        %v2140 = vadd.f32 0.0, %v2139
        %v2141 = vpop.f32.mrf.mxu0
        %2142 = vdwg.mxu0
        %v2143 = vrcp.pop %v2052
        %v2144 = vrcp.pop %v2055
        %v2145 = vmul.f32 %v2135, %v2143
        %v2146 = vmul.f32 %v2140, %v2144
        %2147 = vrot.lane.b32.xlu0 %v704, 72
        %v2148 = vpop.permute.xlu0 %2147
        %2149 = vrot.lane.b32.xlu0 %v708, 72
        %v2150 = vpop.permute.xlu0 %2149
        %2151 = vrot.lane.b32.xlu0 %v706, 72
        %v2152 = vpop.permute.xlu0 %2151
        %2153 = vrot.lane.b32.xlu0 %v710, 72
        %v2154 = vpop.permute.xlu0 %2153
        %v2155 = vsel %vm753, %v2148, 0
        %v2157 = vsel %vm753, %v2150, 0
        %v2159 = vsel %vm753, %v2152, 0
        %v2161 = vsel %vm753, %v2154, 0
        %2163 = vmatprep.subr.mxu0 0.0
        %2164 = vmatpush1.xpose.msra.mxu0 0.0
        %2165 = vmatprep.subr.mxu0 0.0
        %2166 = vmatpush1.xpose.msra.mxu0 0.0
        %2167 = vmatprep.subr.mxu0 0.0
        %2168 = vmatpush1.xpose.msra.mxu0 0.0
        %2169 = vmatprep.subr.mxu0 0.0
        %2170 = vmatpush1.xpose.msra.mxu0 0.0
        %2171 = vmatprep.subr.mxu0 0.0
        %2172 = vmatpush1.xpose.msra.mxu0 0.0
        %2173 = vmatprep.subr.mxu0 0.0
        %2174 = vmatpush1.xpose.msra.mxu0 0.0
        %2175 = vmatprep.subr.mxu0 0.0
        %2176 = vmatpush1.xpose.msra.mxu0 0.0
        %2177 = vmatprep.subr.mxu0 0.0
        %2178 = vmatpush1.xpose.msra.mxu0 0.0
        %2179 = vmatprep.subr.mxu0 0.0
        %2180 = vmatpush1.xpose.msra.mxu0 0.0
        %2181 = vmatprep.subr.mxu0 0.0
        %2182 = vmatpush1.xpose.msra.mxu0 0.0
        %2183 = vmatprep.subr.mxu0 0.0
        %2184 = vmatpush1.xpose.msra.mxu0 0.0
        %2185 = vmatprep.subr.mxu0 0.0
        %2186 = vmatpush1.xpose.msra.mxu0 0.0
        %2187 = vmatprep.subr.mxu0 0.0
        %2188 = vmatpush1.xpose.msra.mxu0 0.0
        %2189 = vmatprep.subr.mxu0 0.0
        %2190 = vmatpush1.xpose.msra.mxu0 0.0
        %2191 = vmatprep.subr.mxu0 0.0
        %2192 = vmatpush1.xpose.msra.mxu0 %v2161
        %2193 = vmatprep.subr.mxu0 0.0
        %2194 = vmatpush1.xpose.msra.mxu0 %v2159
        %2195 = vmatprep.subr.mxu0 0.0
        %2196 = vmatpush2.xpose.msra.mxu0 0.0
        %2197 = vmatprep.subr.mxu0 0.0
        %2198 = vmatpush2.xpose.msra.mxu0 0.0
        %2199 = vmatprep.subr.mxu0 0.0
        %2200 = vmatpush2.xpose.msra.mxu0 0.0
        %2201 = vmatprep.subr.mxu0 0.0
        %2202 = vmatpush2.xpose.msra.mxu0 0.0
        %2203 = vmatprep.subr.mxu0 0.0
        %2204 = vmatpush2.xpose.msra.mxu0 0.0
        %2205 = vmatprep.subr.mxu0 0.0
        %2206 = vmatpush2.xpose.msra.mxu0 0.0
        %2207 = vmatprep.subr.mxu0 0.0
        %2208 = vmatpush2.xpose.msra.mxu0 0.0
        %2209 = vmatprep.subr.mxu0 0.0
        %2210 = vmatpush2.xpose.msra.mxu0 0.0
        %2211 = vmatprep.subr.mxu0 0.0
        %2212 = vmatpush2.xpose.msra.mxu0 0.0
        %2213 = vmatprep.subr.mxu0 0.0
        %2214 = vmatpush2.xpose.msra.mxu0 0.0
        %2215 = vmatprep.subr.mxu0 0.0
        %2216 = vmatpush2.xpose.msra.mxu0 0.0
        %2217 = vmatprep.subr.mxu0 0.0
        %2218 = vmatpush2.xpose.msra.mxu0 0.0
        %2219 = vmatprep.subr.mxu0 0.0
        %2220 = vmatpush2.xpose.msra.mxu0 0.0
        %2221 = vmatprep.subr.mxu0 0.0
        %2222 = vmatpush2.xpose.msra.mxu0 0.0
        %2223 = vmatprep.subr.mxu0 0.0
        %2224 = vmatpush2.xpose.msra.mxu0 0.0
        %2225 = vmatprep.subr.mxu0 0.0
        %2226 = vmatpush2.xpose.msra.mxu0 0.0
        %2227 = vmatprep.mubr.f32.mxu0 0.0
        %2228 = vmatmul.mubr.f32.gmra.mxu0 %v2155
        %v2229 = vpop.f32.mrf.mxu0
        %v2230 = vadd.f32 0.0, %v2229
        %v2231 = vpop.f32.mrf.mxu0
        %2232 = vmatprep.mubr.f32.mxu0 0.0
        %2233 = vmatmul.mubr.f32.gmra.mxu0 %v2157
        %v2234 = vpop.f32.mrf.mxu0
        %v2235 = vadd.f32 0.0, %v2234
        %v2236 = vpop.f32.mrf.mxu0
        %2237 = vdwg.mxu0
        %v2238 = vsel %vm841, %v2230, -inf
        %2239 = vmax.xlane.f32.xlu0 %v2238
        %v2240 = vpop.xlane.xlu0 %2239
        %v2241 = vsel %vm841, %v2235, -inf
        %2242 = vmax.xlane.f32.xlu0 %v2241
        %v2243 = vpop.xlane.xlu0 %2242
        %v2244 = vsub.f32 %v2230, %v2240
        %v2245 = vsub.f32 %v2235, %v2243
        %v2246 = vmul.f32 %v2244, 1.442695
        %v2247 = vpow.pop %v2246
        %v2248 = vmul.f32 %v2245, 1.442695
        %v2249 = vpow.pop %v2248
        %v2250 = vsel %vm841, %v2247, 0.0
        %2251 = vadd.xlane.f32.xlu0 %v2250
        %v2252 = vpop.xlane.xlu0 %2251
        %v2253 = vsel %vm841, %v2249, 0.0
        %2254 = vadd.xlane.f32.xlu0 %v2253
        %v2255 = vpop.xlane.xlu0 %2254
        %2256 = vrot.lane.b32.xlu0 %v747, 72
        %v2257 = vpop.permute.xlu0 %2256
        %2258 = vrot.lane.b32.xlu0 %v750, 72
        %v2259 = vpop.permute.xlu0 %2258
        %v2263 = vsel %vm841, %v2247, 0
        %v2266 = vsel %vm841, %v2249, 0
        %2268 = vmatprep.subr.mxu0 0.0
        %2269 = vmatpush1.msra.mxu0 0.0
        %2270 = vmatprep.subr.mxu0 0.0
        %2271 = vmatpush1.msra.mxu0 0.0
        %2272 = vmatprep.subr.mxu0 0.0
        %2273 = vmatpush1.msra.mxu0 0.0
        %2274 = vmatprep.subr.mxu0 0.0
        %2275 = vmatpush1.msra.mxu0 0.0
        %2276 = vmatprep.subr.mxu0 0.0
        %2277 = vmatpush1.msra.mxu0 0.0
        %2278 = vmatprep.subr.mxu0 0.0
        %2279 = vmatpush1.msra.mxu0 0.0
        %2280 = vmatprep.subr.mxu0 0.0
        %2281 = vmatpush1.msra.mxu0 0.0
        %2282 = vmatprep.subr.mxu0 0.0
        %2283 = vmatpush1.msra.mxu0 0.0
        %2284 = vmatprep.subr.mxu0 0.0
        %2285 = vmatpush1.msra.mxu0 0.0
        %2286 = vmatprep.subr.mxu0 0.0
        %2287 = vmatpush1.msra.mxu0 0.0
        %2288 = vmatprep.subr.mxu0 0.0
        %2289 = vmatpush1.msra.mxu0 0.0
        %2290 = vmatprep.subr.mxu0 0.0
        %2291 = vmatpush1.msra.mxu0 0.0
        %2292 = vmatprep.subr.mxu0 0.0
        %2293 = vmatpush1.msra.mxu0 0.0
        %2294 = vmatprep.subr.mxu0 0.0
        %2295 = vmatpush1.msra.mxu0 0.0
        %2296 = vmatprep.subr.mxu0 0.0
        %2297 = vmatpush1.msra.mxu0 %v2259
        %2298 = vmatprep.subr.mxu0 0.0
        %2299 = vmatpush1.msra.mxu0 %v2257
        %2300 = vmatprep.subr.mxu0 0.0
        %2301 = vmatpush2.msra.mxu0 0.0
        %2302 = vmatprep.subr.mxu0 0.0
        %2303 = vmatpush2.msra.mxu0 0.0
        %2304 = vmatprep.subr.mxu0 0.0
        %2305 = vmatpush2.msra.mxu0 0.0
        %2306 = vmatprep.subr.mxu0 0.0
        %2307 = vmatpush2.msra.mxu0 0.0
        %2308 = vmatprep.subr.mxu0 0.0
        %2309 = vmatpush2.msra.mxu0 0.0
        %2310 = vmatprep.subr.mxu0 0.0
        %2311 = vmatpush2.msra.mxu0 0.0
        %2312 = vmatprep.subr.mxu0 0.0
        %2313 = vmatpush2.msra.mxu0 0.0
        %2314 = vmatprep.subr.mxu0 0.0
        %2315 = vmatpush2.msra.mxu0 0.0
        %2316 = vmatprep.subr.mxu0 0.0
        %2317 = vmatpush2.msra.mxu0 0.0
        %2318 = vmatprep.subr.mxu0 0.0
        %2319 = vmatpush2.msra.mxu0 0.0
        %2320 = vmatprep.subr.mxu0 0.0
        %2321 = vmatpush2.msra.mxu0 0.0
        %2322 = vmatprep.subr.mxu0 0.0
        %2323 = vmatpush2.msra.mxu0 0.0
        %2324 = vmatprep.subr.mxu0 0.0
        %2325 = vmatpush2.msra.mxu0 0.0
        %2326 = vmatprep.subr.mxu0 0.0
        %2327 = vmatpush2.msra.mxu0 0.0
        %2328 = vmatprep.subr.mxu0 0.0
        %2329 = vmatpush2.msra.mxu0 0.0
        %2330 = vmatprep.subr.mxu0 0.0
        %2331 = vmatpush2.msra.mxu0 0.0
        %2332 = vmatprep.mubr.f32.mxu0 0.0
        %2333 = vmatmul.mubr.f32.gmra.mxu0 %v2263
        %v2334 = vpop.f32.mrf.mxu0
        %v2335 = vadd.f32 0.0, %v2334
        %v2336 = vpop.f32.mrf.mxu0
        %2337 = vmatprep.mubr.f32.mxu0 0.0
        %2338 = vmatmul.mubr.f32.gmra.mxu0 %v2266
        %v2339 = vpop.f32.mrf.mxu0
        %v2340 = vadd.f32 0.0, %v2339
        %v2341 = vpop.f32.mrf.mxu0
        %2342 = vdwg.mxu0
        %v2343 = vrcp.pop %v2252
        %v2344 = vrcp.pop %v2255
        %v2345 = vmul.f32 %v2335, %v2343
        %v2346 = vmul.f32 %v2340, %v2344
        %2347 = vrot.lane.b32.xlu0 %v704, 64
        %v2348 = vpop.permute.xlu0 %2347
        %2349 = vrot.lane.b32.xlu0 %v708, 64
        %v2350 = vpop.permute.xlu0 %2349
        %2351 = vrot.lane.b32.xlu0 %v706, 64
        %v2352 = vpop.permute.xlu0 %2351
        %2353 = vrot.lane.b32.xlu0 %v710, 64
        %v2354 = vpop.permute.xlu0 %2353
        %v2355 = vsel %vm753, %v2348, 0
        %v2357 = vsel %vm753, %v2350, 0
        %v2359 = vsel %vm753, %v2352, 0
        %v2361 = vsel %vm753, %v2354, 0
        %2363 = vmatprep.subr.mxu0 0.0
        %2364 = vmatpush1.xpose.msra.mxu0 0.0
        %2365 = vmatprep.subr.mxu0 0.0
        %2366 = vmatpush1.xpose.msra.mxu0 0.0
        %2367 = vmatprep.subr.mxu0 0.0
        %2368 = vmatpush1.xpose.msra.mxu0 0.0
        %2369 = vmatprep.subr.mxu0 0.0
        %2370 = vmatpush1.xpose.msra.mxu0 0.0
        %2371 = vmatprep.subr.mxu0 0.0
        %2372 = vmatpush1.xpose.msra.mxu0 0.0
        %2373 = vmatprep.subr.mxu0 0.0
        %2374 = vmatpush1.xpose.msra.mxu0 0.0
        %2375 = vmatprep.subr.mxu0 0.0
        %2376 = vmatpush1.xpose.msra.mxu0 0.0
        %2377 = vmatprep.subr.mxu0 0.0
        %2378 = vmatpush1.xpose.msra.mxu0 0.0
        %2379 = vmatprep.subr.mxu0 0.0
        %2380 = vmatpush1.xpose.msra.mxu0 0.0
        %2381 = vmatprep.subr.mxu0 0.0
        %2382 = vmatpush1.xpose.msra.mxu0 0.0
        %2383 = vmatprep.subr.mxu0 0.0
        %2384 = vmatpush1.xpose.msra.mxu0 0.0
        %2385 = vmatprep.subr.mxu0 0.0
        %2386 = vmatpush1.xpose.msra.mxu0 0.0
        %2387 = vmatprep.subr.mxu0 0.0
        %2388 = vmatpush1.xpose.msra.mxu0 0.0
        %2389 = vmatprep.subr.mxu0 0.0
        %2390 = vmatpush1.xpose.msra.mxu0 0.0
        %2391 = vmatprep.subr.mxu0 0.0
        %2392 = vmatpush1.xpose.msra.mxu0 %v2361
        %2393 = vmatprep.subr.mxu0 0.0
        %2394 = vmatpush1.xpose.msra.mxu0 %v2359
        %2395 = vmatprep.subr.mxu0 0.0
        %2396 = vmatpush2.xpose.msra.mxu0 0.0
        %2397 = vmatprep.subr.mxu0 0.0
        %2398 = vmatpush2.xpose.msra.mxu0 0.0
        %2399 = vmatprep.subr.mxu0 0.0
        %2400 = vmatpush2.xpose.msra.mxu0 0.0
        %2401 = vmatprep.subr.mxu0 0.0
        %2402 = vmatpush2.xpose.msra.mxu0 0.0
        %2403 = vmatprep.subr.mxu0 0.0
        %2404 = vmatpush2.xpose.msra.mxu0 0.0
        %2405 = vmatprep.subr.mxu0 0.0
        %2406 = vmatpush2.xpose.msra.mxu0 0.0
        %2407 = vmatprep.subr.mxu0 0.0
        %2408 = vmatpush2.xpose.msra.mxu0 0.0
        %2409 = vmatprep.subr.mxu0 0.0
        %2410 = vmatpush2.xpose.msra.mxu0 0.0
        %2411 = vmatprep.subr.mxu0 0.0
        %2412 = vmatpush2.xpose.msra.mxu0 0.0
        %2413 = vmatprep.subr.mxu0 0.0
        %2414 = vmatpush2.xpose.msra.mxu0 0.0
        %2415 = vmatprep.subr.mxu0 0.0
        %2416 = vmatpush2.xpose.msra.mxu0 0.0
        %2417 = vmatprep.subr.mxu0 0.0
        %2418 = vmatpush2.xpose.msra.mxu0 0.0
        %2419 = vmatprep.subr.mxu0 0.0
        %2420 = vmatpush2.xpose.msra.mxu0 0.0
        %2421 = vmatprep.subr.mxu0 0.0
        %2422 = vmatpush2.xpose.msra.mxu0 0.0
        %2423 = vmatprep.subr.mxu0 0.0
        %2424 = vmatpush2.xpose.msra.mxu0 0.0
        %2425 = vmatprep.subr.mxu0 0.0
        %2426 = vmatpush2.xpose.msra.mxu0 0.0
        %2427 = vmatprep.mubr.f32.mxu0 0.0
        %2428 = vmatmul.mubr.f32.gmra.mxu0 %v2355
        %v2429 = vpop.f32.mrf.mxu0
        %v2430 = vadd.f32 0.0, %v2429
        %v2431 = vpop.f32.mrf.mxu0
        %2432 = vmatprep.mubr.f32.mxu0 0.0
        %2433 = vmatmul.mubr.f32.gmra.mxu0 %v2357
        %v2434 = vpop.f32.mrf.mxu0
        %v2435 = vadd.f32 0.0, %v2434
        %v2436 = vpop.f32.mrf.mxu0
        %2437 = vdwg.mxu0
        %v2438 = vsel %vm841, %v2430, -inf
        %2439 = vmax.xlane.f32.xlu0 %v2438
        %v2440 = vpop.xlane.xlu0 %2439
        %v2441 = vsel %vm841, %v2435, -inf
        %2442 = vmax.xlane.f32.xlu0 %v2441
        %v2443 = vpop.xlane.xlu0 %2442
        %v2444 = vsub.f32 %v2430, %v2440
        %v2445 = vsub.f32 %v2435, %v2443
        %v2446 = vmul.f32 %v2444, 1.442695
        %v2447 = vpow.pop %v2446
        %v2448 = vmul.f32 %v2445, 1.442695
        %v2449 = vpow.pop %v2448
        %v2450 = vsel %vm841, %v2447, 0.0
        %2451 = vadd.xlane.f32.xlu0 %v2450
        %v2452 = vpop.xlane.xlu0 %2451
        %v2453 = vsel %vm841, %v2449, 0.0
        %2454 = vadd.xlane.f32.xlu0 %v2453
        %v2455 = vpop.xlane.xlu0 %2454
        %2456 = vrot.lane.b32.xlu0 %v747, 64
        %v2457 = vpop.permute.xlu0 %2456
        %2458 = vrot.lane.b32.xlu0 %v750, 64
        %v2459 = vpop.permute.xlu0 %2458
        %v2463 = vsel %vm841, %v2447, 0
        %v2466 = vsel %vm841, %v2449, 0
        %2468 = vmatprep.subr.mxu0 0.0
        %2469 = vmatpush1.msra.mxu0 0.0
        %2470 = vmatprep.subr.mxu0 0.0
        %2471 = vmatpush1.msra.mxu0 0.0
        %2472 = vmatprep.subr.mxu0 0.0
        %2473 = vmatpush1.msra.mxu0 0.0
        %2474 = vmatprep.subr.mxu0 0.0
        %2475 = vmatpush1.msra.mxu0 0.0
        %2476 = vmatprep.subr.mxu0 0.0
        %2477 = vmatpush1.msra.mxu0 0.0
        %2478 = vmatprep.subr.mxu0 0.0
        %2479 = vmatpush1.msra.mxu0 0.0
        %2480 = vmatprep.subr.mxu0 0.0
        %2481 = vmatpush1.msra.mxu0 0.0
        %2482 = vmatprep.subr.mxu0 0.0
        %2483 = vmatpush1.msra.mxu0 0.0
        %2484 = vmatprep.subr.mxu0 0.0
        %2485 = vmatpush1.msra.mxu0 0.0
        %2486 = vmatprep.subr.mxu0 0.0
        %2487 = vmatpush1.msra.mxu0 0.0
        %2488 = vmatprep.subr.mxu0 0.0
        %2489 = vmatpush1.msra.mxu0 0.0
        %2490 = vmatprep.subr.mxu0 0.0
        %2491 = vmatpush1.msra.mxu0 0.0
        %2492 = vmatprep.subr.mxu0 0.0
        %2493 = vmatpush1.msra.mxu0 0.0
        %2494 = vmatprep.subr.mxu0 0.0
        %2495 = vmatpush1.msra.mxu0 0.0
        %2496 = vmatprep.subr.mxu0 0.0
        %2497 = vmatpush1.msra.mxu0 %v2459
        %2498 = vmatprep.subr.mxu0 0.0
        %2499 = vmatpush1.msra.mxu0 %v2457
        %2500 = vmatprep.subr.mxu0 0.0
        %2501 = vmatpush2.msra.mxu0 0.0
        %2502 = vmatprep.subr.mxu0 0.0
        %2503 = vmatpush2.msra.mxu0 0.0
        %2504 = vmatprep.subr.mxu0 0.0
        %2505 = vmatpush2.msra.mxu0 0.0
        %2506 = vmatprep.subr.mxu0 0.0
        %2507 = vmatpush2.msra.mxu0 0.0
        %2508 = vmatprep.subr.mxu0 0.0
        %2509 = vmatpush2.msra.mxu0 0.0
        %2510 = vmatprep.subr.mxu0 0.0
        %2511 = vmatpush2.msra.mxu0 0.0
        %2512 = vmatprep.subr.mxu0 0.0
        %2513 = vmatpush2.msra.mxu0 0.0
        %2514 = vmatprep.subr.mxu0 0.0
        %2515 = vmatpush2.msra.mxu0 0.0
        %2516 = vmatprep.subr.mxu0 0.0
        %2517 = vmatpush2.msra.mxu0 0.0
        %2518 = vmatprep.subr.mxu0 0.0
        %2519 = vmatpush2.msra.mxu0 0.0
        %2520 = vmatprep.subr.mxu0 0.0
        %2521 = vmatpush2.msra.mxu0 0.0
        %2522 = vmatprep.subr.mxu0 0.0
        %2523 = vmatpush2.msra.mxu0 0.0
        %2524 = vmatprep.subr.mxu0 0.0
        %2525 = vmatpush2.msra.mxu0 0.0
        %2526 = vmatprep.subr.mxu0 0.0
        %2527 = vmatpush2.msra.mxu0 0.0
        %2528 = vmatprep.subr.mxu0 0.0
        %2529 = vmatpush2.msra.mxu0 0.0
        %2530 = vmatprep.subr.mxu0 0.0
        %2531 = vmatpush2.msra.mxu0 0.0
        %2532 = vmatprep.mubr.f32.mxu0 0.0
        %2533 = vmatmul.mubr.f32.gmra.mxu0 %v2463
        %v2534 = vpop.f32.mrf.mxu0
        %v2535 = vadd.f32 0.0, %v2534
        %v2536 = vpop.f32.mrf.mxu0
        %2537 = vmatprep.mubr.f32.mxu0 0.0
        %2538 = vmatmul.mubr.f32.gmra.mxu0 %v2466
        %v2539 = vpop.f32.mrf.mxu0
        %v2540 = vadd.f32 0.0, %v2539
        %v2541 = vpop.f32.mrf.mxu0
        %2542 = vdwg.mxu0
        %v2543 = vrcp.pop %v2452
        %v2544 = vrcp.pop %v2455
        %v2545 = vmul.f32 %v2535, %v2543
        %v2546 = vmul.f32 %v2540, %v2544
        %2547 = vrot.lane.b32.xlu0 %v704, 56
        %v2548 = vpop.permute.xlu0 %2547
        %2549 = vrot.lane.b32.xlu0 %v708, 56
        %v2550 = vpop.permute.xlu0 %2549
        %2551 = vrot.lane.b32.xlu0 %v706, 56
        %v2552 = vpop.permute.xlu0 %2551
        %2553 = vrot.lane.b32.xlu0 %v710, 56
        %v2554 = vpop.permute.xlu0 %2553
        %v2555 = vsel %vm753, %v2548, 0
        %v2557 = vsel %vm753, %v2550, 0
        %v2559 = vsel %vm753, %v2552, 0
        %v2561 = vsel %vm753, %v2554, 0
        %2563 = vmatprep.subr.mxu0 0.0
        %2564 = vmatpush1.xpose.msra.mxu0 0.0
        %2565 = vmatprep.subr.mxu0 0.0
        %2566 = vmatpush1.xpose.msra.mxu0 0.0
        %2567 = vmatprep.subr.mxu0 0.0
        %2568 = vmatpush1.xpose.msra.mxu0 0.0
        %2569 = vmatprep.subr.mxu0 0.0
        %2570 = vmatpush1.xpose.msra.mxu0 0.0
        %2571 = vmatprep.subr.mxu0 0.0
        %2572 = vmatpush1.xpose.msra.mxu0 0.0
        %2573 = vmatprep.subr.mxu0 0.0
        %2574 = vmatpush1.xpose.msra.mxu0 0.0
        %2575 = vmatprep.subr.mxu0 0.0
        %2576 = vmatpush1.xpose.msra.mxu0 0.0
        %2577 = vmatprep.subr.mxu0 0.0
        %2578 = vmatpush1.xpose.msra.mxu0 0.0
        %2579 = vmatprep.subr.mxu0 0.0
        %2580 = vmatpush1.xpose.msra.mxu0 0.0
        %2581 = vmatprep.subr.mxu0 0.0
        %2582 = vmatpush1.xpose.msra.mxu0 0.0
        %2583 = vmatprep.subr.mxu0 0.0
        %2584 = vmatpush1.xpose.msra.mxu0 0.0
        %2585 = vmatprep.subr.mxu0 0.0
        %2586 = vmatpush1.xpose.msra.mxu0 0.0
        %2587 = vmatprep.subr.mxu0 0.0
        %2588 = vmatpush1.xpose.msra.mxu0 0.0
        %2589 = vmatprep.subr.mxu0 0.0
        %2590 = vmatpush1.xpose.msra.mxu0 0.0
        %2591 = vmatprep.subr.mxu0 0.0
        %2592 = vmatpush1.xpose.msra.mxu0 %v2561
        %2593 = vmatprep.subr.mxu0 0.0
        %2594 = vmatpush1.xpose.msra.mxu0 %v2559
        %2595 = vmatprep.subr.mxu0 0.0
        %2596 = vmatpush2.xpose.msra.mxu0 0.0
        %2597 = vmatprep.subr.mxu0 0.0
        %2598 = vmatpush2.xpose.msra.mxu0 0.0
        %2599 = vmatprep.subr.mxu0 0.0
        %2600 = vmatpush2.xpose.msra.mxu0 0.0
        %2601 = vmatprep.subr.mxu0 0.0
        %2602 = vmatpush2.xpose.msra.mxu0 0.0
        %2603 = vmatprep.subr.mxu0 0.0
        %2604 = vmatpush2.xpose.msra.mxu0 0.0
        %2605 = vmatprep.subr.mxu0 0.0
        %2606 = vmatpush2.xpose.msra.mxu0 0.0
        %2607 = vmatprep.subr.mxu0 0.0
        %2608 = vmatpush2.xpose.msra.mxu0 0.0
        %2609 = vmatprep.subr.mxu0 0.0
        %2610 = vmatpush2.xpose.msra.mxu0 0.0
        %2611 = vmatprep.subr.mxu0 0.0
        %2612 = vmatpush2.xpose.msra.mxu0 0.0
        %2613 = vmatprep.subr.mxu0 0.0
        %2614 = vmatpush2.xpose.msra.mxu0 0.0
        %2615 = vmatprep.subr.mxu0 0.0
        %2616 = vmatpush2.xpose.msra.mxu0 0.0
        %2617 = vmatprep.subr.mxu0 0.0
        %2618 = vmatpush2.xpose.msra.mxu0 0.0
        %2619 = vmatprep.subr.mxu0 0.0
        %2620 = vmatpush2.xpose.msra.mxu0 0.0
        %2621 = vmatprep.subr.mxu0 0.0
        %2622 = vmatpush2.xpose.msra.mxu0 0.0
        %2623 = vmatprep.subr.mxu0 0.0
        %2624 = vmatpush2.xpose.msra.mxu0 0.0
        %2625 = vmatprep.subr.mxu0 0.0
        %2626 = vmatpush2.xpose.msra.mxu0 0.0
        %2627 = vmatprep.mubr.f32.mxu0 0.0
        %2628 = vmatmul.mubr.f32.gmra.mxu0 %v2555
        %v2629 = vpop.f32.mrf.mxu0
        %v2630 = vadd.f32 0.0, %v2629
        %v2631 = vpop.f32.mrf.mxu0
        %2632 = vmatprep.mubr.f32.mxu0 0.0
        %2633 = vmatmul.mubr.f32.gmra.mxu0 %v2557
        %v2634 = vpop.f32.mrf.mxu0
        %v2635 = vadd.f32 0.0, %v2634
        %v2636 = vpop.f32.mrf.mxu0
        %2637 = vdwg.mxu0
        %v2638 = vsel %vm841, %v2630, -inf
        %2639 = vmax.xlane.f32.xlu0 %v2638
        %v2640 = vpop.xlane.xlu0 %2639
        %v2641 = vsel %vm841, %v2635, -inf
        %2642 = vmax.xlane.f32.xlu0 %v2641
        %v2643 = vpop.xlane.xlu0 %2642
        %v2644 = vsub.f32 %v2630, %v2640
        %v2645 = vsub.f32 %v2635, %v2643
        %v2646 = vmul.f32 %v2644, 1.442695
        %v2647 = vpow.pop %v2646
        %v2648 = vmul.f32 %v2645, 1.442695
        %v2649 = vpow.pop %v2648
        %v2650 = vsel %vm841, %v2647, 0.0
        %2651 = vadd.xlane.f32.xlu0 %v2650
        %v2652 = vpop.xlane.xlu0 %2651
        %v2653 = vsel %vm841, %v2649, 0.0
        %2654 = vadd.xlane.f32.xlu0 %v2653
        %v2655 = vpop.xlane.xlu0 %2654
        %2656 = vrot.lane.b32.xlu0 %v747, 56
        %v2657 = vpop.permute.xlu0 %2656
        %2658 = vrot.lane.b32.xlu0 %v750, 56
        %v2659 = vpop.permute.xlu0 %2658
        %v2663 = vsel %vm841, %v2647, 0
        %v2666 = vsel %vm841, %v2649, 0
        %2668 = vmatprep.subr.mxu0 0.0
        %2669 = vmatpush1.msra.mxu0 0.0
        %2670 = vmatprep.subr.mxu0 0.0
        %2671 = vmatpush1.msra.mxu0 0.0
        %2672 = vmatprep.subr.mxu0 0.0
        %2673 = vmatpush1.msra.mxu0 0.0
        %2674 = vmatprep.subr.mxu0 0.0
        %2675 = vmatpush1.msra.mxu0 0.0
        %2676 = vmatprep.subr.mxu0 0.0
        %2677 = vmatpush1.msra.mxu0 0.0
        %2678 = vmatprep.subr.mxu0 0.0
        %2679 = vmatpush1.msra.mxu0 0.0
        %2680 = vmatprep.subr.mxu0 0.0
        %2681 = vmatpush1.msra.mxu0 0.0
        %2682 = vmatprep.subr.mxu0 0.0
        %2683 = vmatpush1.msra.mxu0 0.0
        %2684 = vmatprep.subr.mxu0 0.0
        %2685 = vmatpush1.msra.mxu0 0.0
        %2686 = vmatprep.subr.mxu0 0.0
        %2687 = vmatpush1.msra.mxu0 0.0
        %2688 = vmatprep.subr.mxu0 0.0
        %2689 = vmatpush1.msra.mxu0 0.0
        %2690 = vmatprep.subr.mxu0 0.0
        %2691 = vmatpush1.msra.mxu0 0.0
        %2692 = vmatprep.subr.mxu0 0.0
        %2693 = vmatpush1.msra.mxu0 0.0
        %2694 = vmatprep.subr.mxu0 0.0
        %2695 = vmatpush1.msra.mxu0 0.0
        %2696 = vmatprep.subr.mxu0 0.0
        %2697 = vmatpush1.msra.mxu0 %v2659
        %2698 = vmatprep.subr.mxu0 0.0
        %2699 = vmatpush1.msra.mxu0 %v2657
        %2700 = vmatprep.subr.mxu0 0.0
        %2701 = vmatpush2.msra.mxu0 0.0
        %2702 = vmatprep.subr.mxu0 0.0
        %2703 = vmatpush2.msra.mxu0 0.0
        %2704 = vmatprep.subr.mxu0 0.0
        %2705 = vmatpush2.msra.mxu0 0.0
        %2706 = vmatprep.subr.mxu0 0.0
        %2707 = vmatpush2.msra.mxu0 0.0
        %2708 = vmatprep.subr.mxu0 0.0
        %2709 = vmatpush2.msra.mxu0 0.0
        %2710 = vmatprep.subr.mxu0 0.0
        %2711 = vmatpush2.msra.mxu0 0.0
        %2712 = vmatprep.subr.mxu0 0.0
        %2713 = vmatpush2.msra.mxu0 0.0
        %2714 = vmatprep.subr.mxu0 0.0
        %2715 = vmatpush2.msra.mxu0 0.0
        %2716 = vmatprep.subr.mxu0 0.0
        %2717 = vmatpush2.msra.mxu0 0.0
        %2718 = vmatprep.subr.mxu0 0.0
        %2719 = vmatpush2.msra.mxu0 0.0
        %2720 = vmatprep.subr.mxu0 0.0
        %2721 = vmatpush2.msra.mxu0 0.0
        %2722 = vmatprep.subr.mxu0 0.0
        %2723 = vmatpush2.msra.mxu0 0.0
        %2724 = vmatprep.subr.mxu0 0.0
        %2725 = vmatpush2.msra.mxu0 0.0
        %2726 = vmatprep.subr.mxu0 0.0
        %2727 = vmatpush2.msra.mxu0 0.0
        %2728 = vmatprep.subr.mxu0 0.0
        %2729 = vmatpush2.msra.mxu0 0.0
        %2730 = vmatprep.subr.mxu0 0.0
        %2731 = vmatpush2.msra.mxu0 0.0
        %2732 = vmatprep.mubr.f32.mxu0 0.0
        %2733 = vmatmul.mubr.f32.gmra.mxu0 %v2663
        %v2734 = vpop.f32.mrf.mxu0
        %v2735 = vadd.f32 0.0, %v2734
        %v2736 = vpop.f32.mrf.mxu0
        %2737 = vmatprep.mubr.f32.mxu0 0.0
        %2738 = vmatmul.mubr.f32.gmra.mxu0 %v2666
        %v2739 = vpop.f32.mrf.mxu0
        %v2740 = vadd.f32 0.0, %v2739
        %v2741 = vpop.f32.mrf.mxu0
        %2742 = vdwg.mxu0
        %v2743 = vrcp.pop %v2652
        %v2744 = vrcp.pop %v2655
        %v2745 = vmul.f32 %v2735, %v2743
        %v2746 = vmul.f32 %v2740, %v2744
        %2747 = vrot.lane.b32.xlu0 %v704, 48
        %v2748 = vpop.permute.xlu0 %2747
        %2749 = vrot.lane.b32.xlu0 %v708, 48
        %v2750 = vpop.permute.xlu0 %2749
        %2751 = vrot.lane.b32.xlu0 %v706, 48
        %v2752 = vpop.permute.xlu0 %2751
        %2753 = vrot.lane.b32.xlu0 %v710, 48
        %v2754 = vpop.permute.xlu0 %2753
        %v2755 = vsel %vm753, %v2748, 0
        %v2757 = vsel %vm753, %v2750, 0
        %v2759 = vsel %vm753, %v2752, 0
        %v2761 = vsel %vm753, %v2754, 0
        %2763 = vmatprep.subr.mxu0 0.0
        %2764 = vmatpush1.xpose.msra.mxu0 0.0
        %2765 = vmatprep.subr.mxu0 0.0
        %2766 = vmatpush1.xpose.msra.mxu0 0.0
        %2767 = vmatprep.subr.mxu0 0.0
        %2768 = vmatpush1.xpose.msra.mxu0 0.0
        %2769 = vmatprep.subr.mxu0 0.0
        %2770 = vmatpush1.xpose.msra.mxu0 0.0
        %2771 = vmatprep.subr.mxu0 0.0
        %2772 = vmatpush1.xpose.msra.mxu0 0.0
        %2773 = vmatprep.subr.mxu0 0.0
        %2774 = vmatpush1.xpose.msra.mxu0 0.0
        %2775 = vmatprep.subr.mxu0 0.0
        %2776 = vmatpush1.xpose.msra.mxu0 0.0
        %2777 = vmatprep.subr.mxu0 0.0
        %2778 = vmatpush1.xpose.msra.mxu0 0.0
        %2779 = vmatprep.subr.mxu0 0.0
        %2780 = vmatpush1.xpose.msra.mxu0 0.0
        %2781 = vmatprep.subr.mxu0 0.0
        %2782 = vmatpush1.xpose.msra.mxu0 0.0
        %2783 = vmatprep.subr.mxu0 0.0
        %2784 = vmatpush1.xpose.msra.mxu0 0.0
        %2785 = vmatprep.subr.mxu0 0.0
        %2786 = vmatpush1.xpose.msra.mxu0 0.0
        %2787 = vmatprep.subr.mxu0 0.0
        %2788 = vmatpush1.xpose.msra.mxu0 0.0
        %2789 = vmatprep.subr.mxu0 0.0
        %2790 = vmatpush1.xpose.msra.mxu0 0.0
        %2791 = vmatprep.subr.mxu0 0.0
        %2792 = vmatpush1.xpose.msra.mxu0 %v2761
        %2793 = vmatprep.subr.mxu0 0.0
        %2794 = vmatpush1.xpose.msra.mxu0 %v2759
        %2795 = vmatprep.subr.mxu0 0.0
        %2796 = vmatpush2.xpose.msra.mxu0 0.0
        %2797 = vmatprep.subr.mxu0 0.0
        %2798 = vmatpush2.xpose.msra.mxu0 0.0
        %2799 = vmatprep.subr.mxu0 0.0
        %2800 = vmatpush2.xpose.msra.mxu0 0.0
        %2801 = vmatprep.subr.mxu0 0.0
        %2802 = vmatpush2.xpose.msra.mxu0 0.0
        %2803 = vmatprep.subr.mxu0 0.0
        %2804 = vmatpush2.xpose.msra.mxu0 0.0
        %2805 = vmatprep.subr.mxu0 0.0
        %2806 = vmatpush2.xpose.msra.mxu0 0.0
        %2807 = vmatprep.subr.mxu0 0.0
        %2808 = vmatpush2.xpose.msra.mxu0 0.0
        %2809 = vmatprep.subr.mxu0 0.0
        %2810 = vmatpush2.xpose.msra.mxu0 0.0
        %2811 = vmatprep.subr.mxu0 0.0
        %2812 = vmatpush2.xpose.msra.mxu0 0.0
        %2813 = vmatprep.subr.mxu0 0.0
        %2814 = vmatpush2.xpose.msra.mxu0 0.0
        %2815 = vmatprep.subr.mxu0 0.0
        %2816 = vmatpush2.xpose.msra.mxu0 0.0
        %2817 = vmatprep.subr.mxu0 0.0
        %2818 = vmatpush2.xpose.msra.mxu0 0.0
        %2819 = vmatprep.subr.mxu0 0.0
        %2820 = vmatpush2.xpose.msra.mxu0 0.0
        %2821 = vmatprep.subr.mxu0 0.0
        %2822 = vmatpush2.xpose.msra.mxu0 0.0
        %2823 = vmatprep.subr.mxu0 0.0
        %2824 = vmatpush2.xpose.msra.mxu0 0.0
        %2825 = vmatprep.subr.mxu0 0.0
        %2826 = vmatpush2.xpose.msra.mxu0 0.0
        %2827 = vmatprep.mubr.f32.mxu0 0.0
        %2828 = vmatmul.mubr.f32.gmra.mxu0 %v2755
        %v2829 = vpop.f32.mrf.mxu0
        %v2830 = vadd.f32 0.0, %v2829
        %v2831 = vpop.f32.mrf.mxu0
        %2832 = vmatprep.mubr.f32.mxu0 0.0
        %2833 = vmatmul.mubr.f32.gmra.mxu0 %v2757
        %v2834 = vpop.f32.mrf.mxu0
        %v2835 = vadd.f32 0.0, %v2834
        %v2836 = vpop.f32.mrf.mxu0
        %2837 = vdwg.mxu0
        %v2838 = vsel %vm841, %v2830, -inf
        %2839 = vmax.xlane.f32.xlu0 %v2838
        %v2840 = vpop.xlane.xlu0 %2839
        %v2841 = vsel %vm841, %v2835, -inf
        %2842 = vmax.xlane.f32.xlu0 %v2841
        %v2843 = vpop.xlane.xlu0 %2842
        %v2844 = vsub.f32 %v2830, %v2840
        %v2845 = vsub.f32 %v2835, %v2843
        %v2846 = vmul.f32 %v2844, 1.442695
        %v2847 = vpow.pop %v2846
        %v2848 = vmul.f32 %v2845, 1.442695
        %v2849 = vpow.pop %v2848
        %v2850 = vsel %vm841, %v2847, 0.0
        %2851 = vadd.xlane.f32.xlu0 %v2850
        %v2852 = vpop.xlane.xlu0 %2851
        %v2853 = vsel %vm841, %v2849, 0.0
        %2854 = vadd.xlane.f32.xlu0 %v2853
        %v2855 = vpop.xlane.xlu0 %2854
        %2856 = vrot.lane.b32.xlu0 %v747, 48
        %v2857 = vpop.permute.xlu0 %2856
        %2858 = vrot.lane.b32.xlu0 %v750, 48
        %v2859 = vpop.permute.xlu0 %2858
        %v2863 = vsel %vm841, %v2847, 0
        %v2866 = vsel %vm841, %v2849, 0
        %2868 = vmatprep.subr.mxu0 0.0
        %2869 = vmatpush1.msra.mxu0 0.0
        %2870 = vmatprep.subr.mxu0 0.0
        %2871 = vmatpush1.msra.mxu0 0.0
        %2872 = vmatprep.subr.mxu0 0.0
        %2873 = vmatpush1.msra.mxu0 0.0
        %2874 = vmatprep.subr.mxu0 0.0
        %2875 = vmatpush1.msra.mxu0 0.0
        %2876 = vmatprep.subr.mxu0 0.0
        %2877 = vmatpush1.msra.mxu0 0.0
        %2878 = vmatprep.subr.mxu0 0.0
        %2879 = vmatpush1.msra.mxu0 0.0
        %2880 = vmatprep.subr.mxu0 0.0
        %2881 = vmatpush1.msra.mxu0 0.0
        %2882 = vmatprep.subr.mxu0 0.0
        %2883 = vmatpush1.msra.mxu0 0.0
        %2884 = vmatprep.subr.mxu0 0.0
        %2885 = vmatpush1.msra.mxu0 0.0
        %2886 = vmatprep.subr.mxu0 0.0
        %2887 = vmatpush1.msra.mxu0 0.0
        %2888 = vmatprep.subr.mxu0 0.0
        %2889 = vmatpush1.msra.mxu0 0.0
        %2890 = vmatprep.subr.mxu0 0.0
        %2891 = vmatpush1.msra.mxu0 0.0
        %2892 = vmatprep.subr.mxu0 0.0
        %2893 = vmatpush1.msra.mxu0 0.0
        %2894 = vmatprep.subr.mxu0 0.0
        %2895 = vmatpush1.msra.mxu0 0.0
        %2896 = vmatprep.subr.mxu0 0.0
        %2897 = vmatpush1.msra.mxu0 %v2859
        %2898 = vmatprep.subr.mxu0 0.0
        %2899 = vmatpush1.msra.mxu0 %v2857
        %2900 = vmatprep.subr.mxu0 0.0
        %2901 = vmatpush2.msra.mxu0 0.0
        %2902 = vmatprep.subr.mxu0 0.0
        %2903 = vmatpush2.msra.mxu0 0.0
        %2904 = vmatprep.subr.mxu0 0.0
        %2905 = vmatpush2.msra.mxu0 0.0
        %2906 = vmatprep.subr.mxu0 0.0
        %2907 = vmatpush2.msra.mxu0 0.0
        %2908 = vmatprep.subr.mxu0 0.0
        %2909 = vmatpush2.msra.mxu0 0.0
        %2910 = vmatprep.subr.mxu0 0.0
        %2911 = vmatpush2.msra.mxu0 0.0
        %2912 = vmatprep.subr.mxu0 0.0
        %2913 = vmatpush2.msra.mxu0 0.0
        %2914 = vmatprep.subr.mxu0 0.0
        %2915 = vmatpush2.msra.mxu0 0.0
        %2916 = vmatprep.subr.mxu0 0.0
        %2917 = vmatpush2.msra.mxu0 0.0
        %2918 = vmatprep.subr.mxu0 0.0
        %2919 = vmatpush2.msra.mxu0 0.0
        %2920 = vmatprep.subr.mxu0 0.0
        %2921 = vmatpush2.msra.mxu0 0.0
        %2922 = vmatprep.subr.mxu0 0.0
        %2923 = vmatpush2.msra.mxu0 0.0
        %2924 = vmatprep.subr.mxu0 0.0
        %2925 = vmatpush2.msra.mxu0 0.0
        %2926 = vmatprep.subr.mxu0 0.0
        %2927 = vmatpush2.msra.mxu0 0.0
        %2928 = vmatprep.subr.mxu0 0.0
        %2929 = vmatpush2.msra.mxu0 0.0
        %2930 = vmatprep.subr.mxu0 0.0
        %2931 = vmatpush2.msra.mxu0 0.0
        %2932 = vmatprep.mubr.f32.mxu0 0.0
        %2933 = vmatmul.mubr.f32.gmra.mxu0 %v2863
        %v2934 = vpop.f32.mrf.mxu0
        %v2935 = vadd.f32 0.0, %v2934
        %v2936 = vpop.f32.mrf.mxu0
        %2937 = vmatprep.mubr.f32.mxu0 0.0
        %2938 = vmatmul.mubr.f32.gmra.mxu0 %v2866
        %v2939 = vpop.f32.mrf.mxu0
        %v2940 = vadd.f32 0.0, %v2939
        %v2941 = vpop.f32.mrf.mxu0
        %2942 = vdwg.mxu0
        %v2943 = vrcp.pop %v2852
        %v2944 = vrcp.pop %v2855
        %v2945 = vmul.f32 %v2935, %v2943
        %v2946 = vmul.f32 %v2940, %v2944
        %2947 = vrot.lane.b32.xlu0 %v704, 40
        %v2948 = vpop.permute.xlu0 %2947
        %2949 = vrot.lane.b32.xlu0 %v708, 40
        %v2950 = vpop.permute.xlu0 %2949
        %2951 = vrot.lane.b32.xlu0 %v706, 40
        %v2952 = vpop.permute.xlu0 %2951
        %2953 = vrot.lane.b32.xlu0 %v710, 40
        %v2954 = vpop.permute.xlu0 %2953
        %v2955 = vsel %vm753, %v2948, 0
        %v2957 = vsel %vm753, %v2950, 0
        %v2959 = vsel %vm753, %v2952, 0
        %v2961 = vsel %vm753, %v2954, 0
        %2963 = vmatprep.subr.mxu0 0.0
        %2964 = vmatpush1.xpose.msra.mxu0 0.0
        %2965 = vmatprep.subr.mxu0 0.0
        %2966 = vmatpush1.xpose.msra.mxu0 0.0
        %2967 = vmatprep.subr.mxu0 0.0
        %2968 = vmatpush1.xpose.msra.mxu0 0.0
        %2969 = vmatprep.subr.mxu0 0.0
        %2970 = vmatpush1.xpose.msra.mxu0 0.0
        %2971 = vmatprep.subr.mxu0 0.0
        %2972 = vmatpush1.xpose.msra.mxu0 0.0
        %2973 = vmatprep.subr.mxu0 0.0
        %2974 = vmatpush1.xpose.msra.mxu0 0.0
        %2975 = vmatprep.subr.mxu0 0.0
        %2976 = vmatpush1.xpose.msra.mxu0 0.0
        %2977 = vmatprep.subr.mxu0 0.0
        %2978 = vmatpush1.xpose.msra.mxu0 0.0
        %2979 = vmatprep.subr.mxu0 0.0
        %2980 = vmatpush1.xpose.msra.mxu0 0.0
        %2981 = vmatprep.subr.mxu0 0.0
        %2982 = vmatpush1.xpose.msra.mxu0 0.0
        %2983 = vmatprep.subr.mxu0 0.0
        %2984 = vmatpush1.xpose.msra.mxu0 0.0
        %2985 = vmatprep.subr.mxu0 0.0
        %2986 = vmatpush1.xpose.msra.mxu0 0.0
        %2987 = vmatprep.subr.mxu0 0.0
        %2988 = vmatpush1.xpose.msra.mxu0 0.0
        %2989 = vmatprep.subr.mxu0 0.0
        %2990 = vmatpush1.xpose.msra.mxu0 0.0
        %2991 = vmatprep.subr.mxu0 0.0
        %2992 = vmatpush1.xpose.msra.mxu0 %v2961
        %2993 = vmatprep.subr.mxu0 0.0
        %2994 = vmatpush1.xpose.msra.mxu0 %v2959
        %2995 = vmatprep.subr.mxu0 0.0
        %2996 = vmatpush2.xpose.msra.mxu0 0.0
        %2997 = vmatprep.subr.mxu0 0.0
        %2998 = vmatpush2.xpose.msra.mxu0 0.0
        %2999 = vmatprep.subr.mxu0 0.0
        %3000 = vmatpush2.xpose.msra.mxu0 0.0
        %3001 = vmatprep.subr.mxu0 0.0
        %3002 = vmatpush2.xpose.msra.mxu0 0.0
        %3003 = vmatprep.subr.mxu0 0.0
        %3004 = vmatpush2.xpose.msra.mxu0 0.0
        %3005 = vmatprep.subr.mxu0 0.0
        %3006 = vmatpush2.xpose.msra.mxu0 0.0
        %3007 = vmatprep.subr.mxu0 0.0
        %3008 = vmatpush2.xpose.msra.mxu0 0.0
        %3009 = vmatprep.subr.mxu0 0.0
        %3010 = vmatpush2.xpose.msra.mxu0 0.0
        %3011 = vmatprep.subr.mxu0 0.0
        %3012 = vmatpush2.xpose.msra.mxu0 0.0
        %3013 = vmatprep.subr.mxu0 0.0
        %3014 = vmatpush2.xpose.msra.mxu0 0.0
        %3015 = vmatprep.subr.mxu0 0.0
        %3016 = vmatpush2.xpose.msra.mxu0 0.0
        %3017 = vmatprep.subr.mxu0 0.0
        %3018 = vmatpush2.xpose.msra.mxu0 0.0
        %3019 = vmatprep.subr.mxu0 0.0
        %3020 = vmatpush2.xpose.msra.mxu0 0.0
        %3021 = vmatprep.subr.mxu0 0.0
        %3022 = vmatpush2.xpose.msra.mxu0 0.0
        %3023 = vmatprep.subr.mxu0 0.0
        %3024 = vmatpush2.xpose.msra.mxu0 0.0
        %3025 = vmatprep.subr.mxu0 0.0
        %3026 = vmatpush2.xpose.msra.mxu0 0.0
        %3027 = vmatprep.mubr.f32.mxu0 0.0
        %3028 = vmatmul.mubr.f32.gmra.mxu0 %v2955
        %v3029 = vpop.f32.mrf.mxu0
        %v3030 = vadd.f32 0.0, %v3029
        %v3031 = vpop.f32.mrf.mxu0
        %3032 = vmatprep.mubr.f32.mxu0 0.0
        %3033 = vmatmul.mubr.f32.gmra.mxu0 %v2957
        %v3034 = vpop.f32.mrf.mxu0
        %v3035 = vadd.f32 0.0, %v3034
        %v3036 = vpop.f32.mrf.mxu0
        %3037 = vdwg.mxu0
        %v3038 = vsel %vm841, %v3030, -inf
        %3039 = vmax.xlane.f32.xlu0 %v3038
        %v3040 = vpop.xlane.xlu0 %3039
        %v3041 = vsel %vm841, %v3035, -inf
        %3042 = vmax.xlane.f32.xlu0 %v3041
        %v3043 = vpop.xlane.xlu0 %3042
        %v3044 = vsub.f32 %v3030, %v3040
        %v3045 = vsub.f32 %v3035, %v3043
        %v3046 = vmul.f32 %v3044, 1.442695
        %v3047 = vpow.pop %v3046
        %v3048 = vmul.f32 %v3045, 1.442695
        %v3049 = vpow.pop %v3048
        %v3050 = vsel %vm841, %v3047, 0.0
        %3051 = vadd.xlane.f32.xlu0 %v3050
        %v3052 = vpop.xlane.xlu0 %3051
        %v3053 = vsel %vm841, %v3049, 0.0
        %3054 = vadd.xlane.f32.xlu0 %v3053
        %v3055 = vpop.xlane.xlu0 %3054
        %3056 = vrot.lane.b32.xlu0 %v747, 40
        %v3057 = vpop.permute.xlu0 %3056
        %3058 = vrot.lane.b32.xlu0 %v750, 40
        %v3059 = vpop.permute.xlu0 %3058
        %v3063 = vsel %vm841, %v3047, 0
        %v3066 = vsel %vm841, %v3049, 0
        %3068 = vmatprep.subr.mxu0 0.0
        %3069 = vmatpush1.msra.mxu0 0.0
        %3070 = vmatprep.subr.mxu0 0.0
        %3071 = vmatpush1.msra.mxu0 0.0
        %3072 = vmatprep.subr.mxu0 0.0
        %3073 = vmatpush1.msra.mxu0 0.0
        %3074 = vmatprep.subr.mxu0 0.0
        %3075 = vmatpush1.msra.mxu0 0.0
        %3076 = vmatprep.subr.mxu0 0.0
        %3077 = vmatpush1.msra.mxu0 0.0
        %3078 = vmatprep.subr.mxu0 0.0
        %3079 = vmatpush1.msra.mxu0 0.0
        %3080 = vmatprep.subr.mxu0 0.0
        %3081 = vmatpush1.msra.mxu0 0.0
        %3082 = vmatprep.subr.mxu0 0.0
        %3083 = vmatpush1.msra.mxu0 0.0
        %3084 = vmatprep.subr.mxu0 0.0
        %3085 = vmatpush1.msra.mxu0 0.0
        %3086 = vmatprep.subr.mxu0 0.0
        %3087 = vmatpush1.msra.mxu0 0.0
        %3088 = vmatprep.subr.mxu0 0.0
        %3089 = vmatpush1.msra.mxu0 0.0
        %3090 = vmatprep.subr.mxu0 0.0
        %3091 = vmatpush1.msra.mxu0 0.0
        %3092 = vmatprep.subr.mxu0 0.0
        %3093 = vmatpush1.msra.mxu0 0.0
        %3094 = vmatprep.subr.mxu0 0.0
        %3095 = vmatpush1.msra.mxu0 0.0
        %3096 = vmatprep.subr.mxu0 0.0
        %3097 = vmatpush1.msra.mxu0 %v3059
        %3098 = vmatprep.subr.mxu0 0.0
        %3099 = vmatpush1.msra.mxu0 %v3057
        %3100 = vmatprep.subr.mxu0 0.0
        %3101 = vmatpush2.msra.mxu0 0.0
        %3102 = vmatprep.subr.mxu0 0.0
        %3103 = vmatpush2.msra.mxu0 0.0
        %3104 = vmatprep.subr.mxu0 0.0
        %3105 = vmatpush2.msra.mxu0 0.0
        %3106 = vmatprep.subr.mxu0 0.0
        %3107 = vmatpush2.msra.mxu0 0.0
        %3108 = vmatprep.subr.mxu0 0.0
        %3109 = vmatpush2.msra.mxu0 0.0
        %3110 = vmatprep.subr.mxu0 0.0
        %3111 = vmatpush2.msra.mxu0 0.0
        %3112 = vmatprep.subr.mxu0 0.0
        %3113 = vmatpush2.msra.mxu0 0.0
        %3114 = vmatprep.subr.mxu0 0.0
        %3115 = vmatpush2.msra.mxu0 0.0
        %3116 = vmatprep.subr.mxu0 0.0
        %3117 = vmatpush2.msra.mxu0 0.0
        %3118 = vmatprep.subr.mxu0 0.0
        %3119 = vmatpush2.msra.mxu0 0.0
        %3120 = vmatprep.subr.mxu0 0.0
        %3121 = vmatpush2.msra.mxu0 0.0
        %3122 = vmatprep.subr.mxu0 0.0
        %3123 = vmatpush2.msra.mxu0 0.0
        %3124 = vmatprep.subr.mxu0 0.0
        %3125 = vmatpush2.msra.mxu0 0.0
        %3126 = vmatprep.subr.mxu0 0.0
        %3127 = vmatpush2.msra.mxu0 0.0
        %3128 = vmatprep.subr.mxu0 0.0
        %3129 = vmatpush2.msra.mxu0 0.0
        %3130 = vmatprep.subr.mxu0 0.0
        %3131 = vmatpush2.msra.mxu0 0.0
        %3132 = vmatprep.mubr.f32.mxu0 0.0
        %3133 = vmatmul.mubr.f32.gmra.mxu0 %v3063
        %v3134 = vpop.f32.mrf.mxu0
        %v3135 = vadd.f32 0.0, %v3134
        %v3136 = vpop.f32.mrf.mxu0
        %3137 = vmatprep.mubr.f32.mxu0 0.0
        %3138 = vmatmul.mubr.f32.gmra.mxu0 %v3066
        %v3139 = vpop.f32.mrf.mxu0
        %v3140 = vadd.f32 0.0, %v3139
        %v3141 = vpop.f32.mrf.mxu0
        %3142 = vdwg.mxu0
        %v3143 = vrcp.pop %v3052
        %v3144 = vrcp.pop %v3055
        %v3145 = vmul.f32 %v3135, %v3143
        %v3146 = vmul.f32 %v3140, %v3144
        %3149 = vrot.lane.b32.xlu0 %v1145, 8
        %v3150 = vpop.permute.xlu0 %3149
        %3151 = vrot.lane.b32.xlu0 %v1146, 8
        %v3152 = vpop.permute.xlu0 %3151
        %3157 = vrot.lane.b32.xlu0 %v1345, 16
        %v3158 = vpop.permute.xlu0 %3157
        %3159 = vrot.lane.b32.xlu0 %v1346, 16
        %v3160 = vpop.permute.xlu0 %3159
        %3165 = vrot.lane.b32.xlu0 %v1545, 24
        %v3166 = vpop.permute.xlu0 %3165
        %3167 = vrot.lane.b32.xlu0 %v1546, 24
        %v3168 = vpop.permute.xlu0 %3167
        %3173 = vrot.lane.b32.xlu0 %v1745, 32
        %v3174 = vpop.permute.xlu0 %3173
        %3175 = vrot.lane.b32.xlu0 %v1746, 32
        %v3176 = vpop.permute.xlu0 %3175
        %3181 = vrot.lane.b32.xlu0 %v1945, 40
        %v3182 = vpop.permute.xlu0 %3181
        %3183 = vrot.lane.b32.xlu0 %v1946, 40
        %v3184 = vpop.permute.xlu0 %3183
        %3189 = vrot.lane.b32.xlu0 %v2145, 48
        %v3190 = vpop.permute.xlu0 %3189
        %3191 = vrot.lane.b32.xlu0 %v2146, 48
        %v3192 = vpop.permute.xlu0 %3191
        %3197 = vrot.lane.b32.xlu0 %v2345, 56
        %v3198 = vpop.permute.xlu0 %3197
        %3199 = vrot.lane.b32.xlu0 %v2346, 56
        %v3200 = vpop.permute.xlu0 %3199
        %3205 = vrot.lane.b32.xlu0 %v2545, 64
        %v3206 = vpop.permute.xlu0 %3205
        %3207 = vrot.lane.b32.xlu0 %v2546, 64
        %v3208 = vpop.permute.xlu0 %3207
        %3213 = vrot.lane.b32.xlu0 %v2745, 72
        %v3214 = vpop.permute.xlu0 %3213
        %3215 = vrot.lane.b32.xlu0 %v2746, 72
        %v3216 = vpop.permute.xlu0 %3215
        %3221 = vrot.lane.b32.xlu0 %v2945, 80
        %v3222 = vpop.permute.xlu0 %3221
        %3223 = vrot.lane.b32.xlu0 %v2946, 80
        %v3224 = vpop.permute.xlu0 %3223
        %3229 = vrot.lane.b32.xlu0 %v3145, 88
        %v3230 = vpop.permute.xlu0 %3229
        %3231 = vrot.lane.b32.xlu0 %v3146, 88
        %v3232 = vpop.permute.xlu0 %3231
        %v3235 = vsel %vm753, %v943, %v3150
        %v3236 = vsel %vm753, %v944, %v3152
        %v3237 = vsel %vm841, %v3235, %v3158
        %v3238 = vsel %vm841, %v3236, %v3160
        %vm3239 = vcmask 195584
        %v3240 = vsel %vm3239, %v3237, %v3166
        %v3241 = vsel %vm3239, %v3238, %v3168
        %vm3242 = vcmask 261120
        %v3243 = vsel %vm3242, %v3240, %v3174
        %v3244 = vsel %vm3242, %v3241, %v3176
        %vm3245 = vcmask 326656
        %v3246 = vsel %vm3245, %v3243, %v3182
        %v3247 = vsel %vm3245, %v3244, %v3184
        %vm3248 = vcmask 392192
        %v3249 = vsel %vm3248, %v3246, %v3190
        %v3250 = vsel %vm3248, %v3247, %v3192
        %vm3251 = vcmask 457728
        %v3252 = vsel %vm3251, %v3249, %v3198
        %v3253 = vsel %vm3251, %v3250, %v3200
        %vm3254 = vcmask 523264
        %v3255 = vsel %vm3254, %v3252, %v3206
        %v3256 = vsel %vm3254, %v3253, %v3208
        %vm3257 = vcmask 588800
        %v3258 = vsel %vm3257, %v3255, %v3214
        %v3259 = vsel %vm3257, %v3256, %v3216
        %vm3260 = vcmask 654336
        %v3261 = vsel %vm3260, %v3258, %v3222
        %v3262 = vsel %vm3260, %v3259, %v3224
        %vm3263 = vcmask 719872
        %v3264 = vsel %vm3263, %v3261, %v3230
        %v3265 = vsel %vm3263, %v3262, %v3232
        %vm3266 = vcmask 785408
        %v3267 = vsel %vm3266, %v3264, 0.0
        %v3268 = vsel %vm3266, %v3265, 0.0
        %v3269 = vpack.c.bf16 %v3268, %v3267
        %v3270 = vld [vmem:[%s3] sm:$0xf]
        %v3271 = vld [vmem:[%s3 + $0x4] sm:$0xf]
        %v3272 = vld [vmem:[%s3 + $0x8] sm:$0xf]
        %v3273 = vld [vmem:[%s3 + $0xc] sm:$0xf]
        %v3274 = vld [vmem:[%s3 + $0x10] sm:$0xf]
        %v3275 = vld [vmem:[%s3 + $0x14] sm:$0xf]
        %v3276 = vld [vmem:[%s3 + $0x18] sm:$0xf]
        %v3277 = vld [vmem:[%s3 + $0x1c] sm:$0xf]
        %v3278 = vld [vmem:[%s3 + $0x20] sm:$0xf]
        %v3279 = vld [vmem:[%s3 + $0x24] sm:$0xf]
        %v3280 = vld [vmem:[%s3 + $0x28] sm:$0xf]
        %v3281 = vld [vmem:[%s3 + $0x2c] sm:$0xf]
        %v3282 = vld [vmem:[%s3 + $0x30] sm:$0xf]
        %v3283 = vld [vmem:[%s3 + $0x34] sm:$0xf]
        %v3284 = vld [vmem:[%s3 + $0x38] sm:$0xf]
        %v3285 = vld [vmem:[%s3 + $0x3c] sm:$0xf]
        %v3286 = vld [vmem:[%s4] sm:$0x1]
        %v3288 = vlaneseq
        %v3289 = vshrl.u32 %v3288, 7
        %v3290 = vsub.s32 0, %v3289
        %v3291 = vrot.slane %v3286, %v3290
        %v3309 = vunpack.c.l.b16 %v3270
        %v3310 = vunpack.c.l.b16 %v3271
        %v3311 = vunpack.c.l.b16 %v3272
        %v3312 = vunpack.c.l.b16 %v3273
        %v3313 = vunpack.c.l.b16 %v3274
        %v3314 = vunpack.c.l.b16 %v3275
        %v3315 = vunpack.c.l.b16 %v3276
        %v3316 = vunpack.c.l.b16 %v3277
        %v3317 = vunpack.c.l.b16 %v3278
        %v3318 = vunpack.c.l.b16 %v3279
        %v3319 = vunpack.c.l.b16 %v3280
        %v3320 = vunpack.c.l.b16 %v3281
        %v3321 = vunpack.c.l.b16 %v3282
        %v3322 = vunpack.c.l.b16 %v3283
        %v3323 = vunpack.c.l.b16 %v3284
        %v3324 = vunpack.c.l.b16 %v3285
        %v3325 = vpack.c.b16 %v3310, %v3309
        %v3326 = vpack.c.b16 %v3312, %v3311
        %v3327 = vpack.c.b16 %v3314, %v3313
        %v3328 = vpack.c.b16 %v3316, %v3315
        %v3329 = vpack.c.b16 %v3318, %v3317
        %v3330 = vpack.c.b16 %v3320, %v3319
        %v3331 = vpack.c.b16 %v3322, %v3321
        %v3332 = vpack.c.b16 %v3324, %v3323
        %3341 = vmatprep.subr.bf16.mxu0 0
        %3342 = vmatpush1.bf16.msra.mxu0 %v3332
        %3343 = vmatprep.subr.bf16.mxu0 0
        %3344 = vmatpush1.bf16.msra.mxu0 %v3331
        %3345 = vmatprep.subr.bf16.mxu0 0
        %3346 = vmatpush1.bf16.msra.mxu0 %v3330
        %3347 = vmatprep.subr.bf16.mxu0 0
        %3348 = vmatpush1.bf16.msra.mxu0 %v3329
        %3349 = vmatprep.subr.bf16.mxu0 0
        %3350 = vmatpush1.bf16.msra.mxu0 %v3328
        %3351 = vmatprep.subr.bf16.mxu0 0
        %3352 = vmatpush1.bf16.msra.mxu0 %v3327
        %3353 = vmatprep.subr.bf16.mxu0 0
        %3354 = vmatpush1.bf16.msra.mxu0 %v3326
        %3355 = vmatprep.subr.bf16.mxu0 0
        %3356 = vmatpush1.bf16.msra.mxu0 %v3325
        %3357 = vmatprep.subr.bf16.mxu0 0
        %3358 = vmatpush2.bf16.msra.mxu0 0
        %3359 = vmatprep.subr.bf16.mxu0 0
        %3360 = vmatpush2.bf16.msra.mxu0 0
        %3361 = vmatprep.subr.bf16.mxu0 0
        %3362 = vmatpush2.bf16.msra.mxu0 0
        %3363 = vmatprep.subr.bf16.mxu0 0
        %3364 = vmatpush2.bf16.msra.mxu0 0
        %3365 = vmatprep.subr.bf16.mxu0 0
        %3366 = vmatpush2.bf16.msra.mxu0 0
        %3367 = vmatprep.subr.bf16.mxu0 0
        %3368 = vmatpush2.bf16.msra.mxu0 0
        %3369 = vmatprep.subr.bf16.mxu0 0
        %3370 = vmatpush2.bf16.msra.mxu0 0
        %3371 = vmatprep.subr.bf16.mxu0 0
        %3372 = vmatpush2.bf16.msra.mxu0 0
        %3373 = vmatprep.mubr.bf16.mxu0 0
        %3374 = vmatmul.mubr.bf16.gmra.mxu0 %v3269
        %v3375 = vpop.f32.mrf.mxu0
        %v3376 = vadd.f32 %v3291, %v3375
        %v3377 = vpop.f32.mrf.mxu0
        %v3378 = vpop.f32.mrf.mxu0
        %v3379 = vadd.f32 %v3291, %v3378
        %v3380 = vpop.f32.mrf.mxu0
        %3381 = vdwg.mxu0
        %v3382 = vadd.f32 %v489, %v3376
        %v3383 = vadd.f32 %v490, %v3379
        %v3384 = vld [vmem:[%s5] sm:$0x1]
        %v3385 = vld [vmem:[%s6] sm:$0x1]
        %3386 = vadd.xlane.f32.xlu0 %v3382
        %v3387 = vpop.xlane.xlu0 %3386
        %3388 = vadd.xlane.f32.xlu0 %v3383
        %v3389 = vpop.xlane.xlu0 %3388
        %v3390 = vmul.f32 %v3387, 0.010416667
        %v3391 = vmul.f32 %v3389, 0.010416667
        %v3392 = vsub.f32 %v3382, %v3390
        %v3393 = vsub.f32 %v3383, %v3391
        %v3394 = vmul.f32 %v3392, %v488
        %v3395 = vmul.f32 %v3393, %v488
        %v3396 = vmul.f32 %v3394, %v3394
        %v3397 = vmul.f32 %v3395, %v3395
        %3398 = vadd.xlane.f32.xlu0 %v3396
        %v3399 = vpop.xlane.xlu0 %3398
        %3400 = vadd.xlane.f32.xlu0 %v3397
        %v3401 = vpop.xlane.xlu0 %3400
        %v3402 = vmul.f32 %v3399, 0.010416667
        %v3403 = vmul.f32 %v3401, 0.010416667
        %v3404 = vadd.f32 %v3402, 1e-05
        %v3405 = vadd.f32 %v3403, 1e-05
        %v3406 = vrsqrt.pop %v3404
        %v3407 = vrsqrt.pop %v3405
        %v3408 = vmul.f32 %v3394, %v3406
        %v3409 = vmul.f32 %v3395, %v3407
        %v3411 = vlaneseq
        %v3412 = vshrl.u32 %v3411, 7
        %v3413 = vsub.s32 0, %v3412
        %v3414 = vrot.slane %v3384, %v3413
        %v3416 = vmul.f32 %v3408, %v3414
        %v3417 = vmul.f32 %v3409, %v3414
        %v3419 = vlaneseq
        %v3420 = vshrl.u32 %v3419, 7
        %v3421 = vsub.s32 0, %v3420
        %v3422 = vrot.slane %v3385, %v3421
        %v3424 = vadd.f32 %v3416, %v3422
        %v3425 = vadd.f32 %v3417, %v3422
        %v3426 = vpack.c.bf16 %v3425, %v3424
        %v3427 = vld [vmem:[#allocation5] sm:$0xff]
        %v3428 = vld [vmem:[#allocation5 + $0x8] sm:$0xff]
        %v3429 = vld [vmem:[#allocation5 + $0x10] sm:$0xff]
        %v3430 = vld [vmem:[#allocation5 + $0x18] sm:$0xff]
        %v3431 = vld [vmem:[#allocation5 + $0x20] sm:$0xff]
        %v3432 = vld [vmem:[#allocation5 + $0x28] sm:$0xff]
        %v3433 = vld [vmem:[#allocation5 + $0x30] sm:$0xff]
        %v3434 = vld [vmem:[#allocation5 + $0x38] sm:$0xff]
        %v3435 = vld [vmem:[#allocation5 + $0x40] sm:$0xff]
        %v3436 = vld [vmem:[#allocation5 + $0x48] sm:$0xff]
        %v3437 = vld [vmem:[#allocation5 + $0x50] sm:$0xff]
        %v3438 = vld [vmem:[#allocation5 + $0x58] sm:$0xff]
        %v3439 = vld [vmem:[#allocation5 + $0x60] sm:$0xff]
        %v3440 = vld [vmem:[#allocation5 + $0x68] sm:$0xff]
        %v3441 = vld [vmem:[#allocation5 + $0x70] sm:$0xff]
        %v3442 = vld [vmem:[#allocation5 + $0x78] sm:$0xff]
        %v3443 = vld [vmem:[%s8] sm:$0x3]
        %v3445 = vlaneseq
        %v3446 = vshrl.u32 %v3445, 7
        %v3447 = vsub.s32 0, %v3446
        %v3448 = vrot.slane %v3443, %v3447
        %v3449 = vlaneseq
        %v3450 = vshrl.u32 %v3449, 7
        %v3451 = vsub.s32 1, %v3450
        %v3452 = vrot.slane %v3443, %v3451
        %v3471 = vunpack.c.l.b16 %v3427
        %v3472 = vunpack.c.h.b16 %v3427
        %v3473 = vunpack.c.l.b16 %v3428
        %v3474 = vunpack.c.h.b16 %v3428
        %v3475 = vunpack.c.l.b16 %v3429
        %v3476 = vunpack.c.h.b16 %v3429
        %v3477 = vunpack.c.l.b16 %v3430
        %v3478 = vunpack.c.h.b16 %v3430
        %v3479 = vunpack.c.l.b16 %v3431
        %v3480 = vunpack.c.h.b16 %v3431
        %v3481 = vunpack.c.l.b16 %v3432
        %v3482 = vunpack.c.h.b16 %v3432
        %v3483 = vunpack.c.l.b16 %v3433
        %v3484 = vunpack.c.h.b16 %v3433
        %v3485 = vunpack.c.l.b16 %v3434
        %v3486 = vunpack.c.h.b16 %v3434
        %v3487 = vunpack.c.l.b16 %v3435
        %v3488 = vunpack.c.h.b16 %v3435
        %v3489 = vunpack.c.l.b16 %v3436
        %v3490 = vunpack.c.h.b16 %v3436
        %v3491 = vunpack.c.l.b16 %v3437
        %v3492 = vunpack.c.h.b16 %v3437
        %v3493 = vunpack.c.l.b16 %v3438
        %v3494 = vunpack.c.h.b16 %v3438
        %v3495 = vunpack.c.l.b16 %v3439
        %v3496 = vunpack.c.h.b16 %v3439
        %v3497 = vunpack.c.l.b16 %v3440
        %v3498 = vunpack.c.h.b16 %v3440
        %v3499 = vunpack.c.l.b16 %v3441
        %v3500 = vunpack.c.h.b16 %v3441
        %v3501 = vunpack.c.l.b16 %v3442
        %v3502 = vunpack.c.h.b16 %v3442
        %v3503 = vpack.c.b16 %v3473, %v3471
        %v3504 = vpack.c.b16 %v3474, %v3472
        %v3505 = vpack.c.b16 %v3477, %v3475
        %v3506 = vpack.c.b16 %v3478, %v3476
        %v3507 = vpack.c.b16 %v3481, %v3479
        %v3508 = vpack.c.b16 %v3482, %v3480
        %v3509 = vpack.c.b16 %v3485, %v3483
        %v3510 = vpack.c.b16 %v3486, %v3484
        %v3511 = vpack.c.b16 %v3489, %v3487
        %v3512 = vpack.c.b16 %v3490, %v3488
        %v3513 = vpack.c.b16 %v3493, %v3491
        %v3514 = vpack.c.b16 %v3494, %v3492
        %v3515 = vpack.c.b16 %v3497, %v3495
        %v3516 = vpack.c.b16 %v3498, %v3496
        %v3517 = vpack.c.b16 %v3501, %v3499
        %v3518 = vpack.c.b16 %v3502, %v3500
        %3535 = vmatprep.subr.bf16.mxu0 %v3518
        %3536 = vmatpush1.bf16.msra.mxu0 %v3517
        %3537 = vmatprep.subr.bf16.mxu0 %v3516
        %3538 = vmatpush1.bf16.msra.mxu0 %v3515
        %3539 = vmatprep.subr.bf16.mxu0 %v3514
        %3540 = vmatpush1.bf16.msra.mxu0 %v3513
        %3541 = vmatprep.subr.bf16.mxu0 %v3512
        %3542 = vmatpush1.bf16.msra.mxu0 %v3511
        %3543 = vmatprep.subr.bf16.mxu0 %v3510
        %3544 = vmatpush1.bf16.msra.mxu0 %v3509
        %3545 = vmatprep.subr.bf16.mxu0 %v3508
        %3546 = vmatpush1.bf16.msra.mxu0 %v3507
        %3547 = vmatprep.subr.bf16.mxu0 %v3506
        %3548 = vmatpush1.bf16.msra.mxu0 %v3505
        %3549 = vmatprep.subr.bf16.mxu0 %v3504
        %3550 = vmatpush1.bf16.msra.mxu0 %v3503
        %3551 = vmatprep.subr.bf16.mxu0 0
        %3552 = vmatpush2.bf16.msra.mxu0 0
        %3553 = vmatprep.subr.bf16.mxu0 0
        %3554 = vmatpush2.bf16.msra.mxu0 0
        %3555 = vmatprep.subr.bf16.mxu0 0
        %3556 = vmatpush2.bf16.msra.mxu0 0
        %3557 = vmatprep.subr.bf16.mxu0 0
        %3558 = vmatpush2.bf16.msra.mxu0 0
        %3559 = vmatprep.subr.bf16.mxu0 0
        %3560 = vmatpush2.bf16.msra.mxu0 0
        %3561 = vmatprep.subr.bf16.mxu0 0
        %3562 = vmatpush2.bf16.msra.mxu0 0
        %3563 = vmatprep.subr.bf16.mxu0 0
        %3564 = vmatpush2.bf16.msra.mxu0 0
        %3565 = vmatprep.subr.bf16.mxu0 0
        %3566 = vmatpush2.bf16.msra.mxu0 0
        %3567 = vmatprep.mubr.bf16.mxu0 0
        %3568 = vmatmul.mubr.bf16.gmra.mxu0 %v3426
        %v3569 = vpop.f32.mrf.mxu0
        %v3570 = vadd.f32 %v3448, %v3569
        %v3571 = vpop.f32.mrf.mxu0
        %v3572 = vadd.f32 %v3452, %v3571
        %v3573 = vpop.f32.mrf.mxu0
        %v3574 = vadd.f32 %v3448, %v3573
        %v3575 = vpop.f32.mrf.mxu0
        %v3576 = vadd.f32 %v3452, %v3575
        %3577 = vdwg.mxu0
        %v3578 = vmul.f32 %v3570, 0.5
        %v3579 = vmul.f32 %v3572, 0.5
        %v3580 = vmul.f32 %v3574, 0.5
        %v3581 = vmul.f32 %v3576, 0.5
        %v3582 = vmul.f32 %v3570, 0.044715
        %v3583 = vmul.f32 %v3572, 0.044715
        %v3584 = vmul.f32 %v3574, 0.044715
        %v3585 = vmul.f32 %v3576, 0.044715
        %v3586 = vmul.f32 %v3582, %v3570
        %v3587 = vmul.f32 %v3583, %v3572
        %v3588 = vmul.f32 %v3584, %v3574
        %v3589 = vmul.f32 %v3585, %v3576
        %v3590 = vmul.f32 %v3586, %v3570
        %v3591 = vmul.f32 %v3587, %v3572
        %v3592 = vmul.f32 %v3588, %v3574
        %v3593 = vmul.f32 %v3589, %v3576
        %v3594 = vadd.f32 %v3570, %v3590
        %v3595 = vadd.f32 %v3572, %v3591
        %v3596 = vadd.f32 %v3574, %v3592
        %v3597 = vadd.f32 %v3576, %v3593
        %v3598 = vmul.f32 %v3594, 0.7978846
        %v3599 = vmul.f32 %v3595, 0.7978846
        %v3600 = vmul.f32 %v3596, 0.7978846
        %v3601 = vmul.f32 %v3597, 0.7978846
        %v3602 = vtanh.pop %v3598
        %v3603 = vtanh.pop %v3599
        %v3604 = vtanh.pop %v3600
        %v3605 = vtanh.pop %v3601
        %v3606 = vadd.f32 %v3602, 1.0
        %v3607 = vadd.f32 %v3603, 1.0
        %v3608 = vadd.f32 %v3604, 1.0
        %v3609 = vadd.f32 %v3605, 1.0
        %v3610 = vmul.f32 %v3578, %v3606
        %v3611 = vmul.f32 %v3579, %v3607
        %v3612 = vmul.f32 %v3580, %v3608
        %v3613 = vmul.f32 %v3581, %v3609
        %v3614 = vpack.c.bf16 %v3612, %v3610
        %v3615 = vpack.c.bf16 %v3613, %v3611
        %v3616 = vld [vmem:[#allocation7] sm:$0xf]
        %v3617 = vld [vmem:[#allocation7 + $0x4] sm:$0xf]
        %v3618 = vld [vmem:[#allocation7 + $0x8] sm:$0xf]
        %v3619 = vld [vmem:[#allocation7 + $0xc] sm:$0xf]
        %v3620 = vld [vmem:[#allocation7 + $0x10] sm:$0xf]
        %v3621 = vld [vmem:[#allocation7 + $0x14] sm:$0xf]
        %v3622 = vld [vmem:[#allocation7 + $0x18] sm:$0xf]
        %v3623 = vld [vmem:[#allocation7 + $0x1c] sm:$0xf]
        %v3624 = vld [vmem:[#allocation7 + $0x20] sm:$0xf]
        %v3625 = vld [vmem:[#allocation7 + $0x24] sm:$0xf]
        %v3626 = vld [vmem:[#allocation7 + $0x28] sm:$0xf]
        %v3627 = vld [vmem:[#allocation7 + $0x2c] sm:$0xf]
        %v3628 = vld [vmem:[#allocation7 + $0x30] sm:$0xf]
        %v3629 = vld [vmem:[#allocation7 + $0x34] sm:$0xf]
        %v3630 = vld [vmem:[#allocation7 + $0x38] sm:$0xf]
        %v3631 = vld [vmem:[#allocation7 + $0x3c] sm:$0xf]
        %v3632 = vld [vmem:[#allocation7 + $0x40] sm:$0xf]
        %v3633 = vld [vmem:[#allocation7 + $0x44] sm:$0xf]
        %v3634 = vld [vmem:[#allocation7 + $0x48] sm:$0xf]
        %v3635 = vld [vmem:[#allocation7 + $0x4c] sm:$0xf]
        %v3636 = vld [vmem:[#allocation7 + $0x50] sm:$0xf]
        %v3637 = vld [vmem:[#allocation7 + $0x54] sm:$0xf]
        %v3638 = vld [vmem:[#allocation7 + $0x58] sm:$0xf]
        %v3639 = vld [vmem:[#allocation7 + $0x5c] sm:$0xf]
        %v3640 = vld [vmem:[#allocation7 + $0x60] sm:$0xf]
        %v3641 = vld [vmem:[#allocation7 + $0x64] sm:$0xf]
        %v3642 = vld [vmem:[#allocation7 + $0x68] sm:$0xf]
        %v3643 = vld [vmem:[#allocation7 + $0x6c] sm:$0xf]
        %v3644 = vld [vmem:[#allocation7 + $0x70] sm:$0xf]
        %v3645 = vld [vmem:[#allocation7 + $0x74] sm:$0xf]
        %v3646 = vld [vmem:[#allocation7 + $0x78] sm:$0xf]
        %v3647 = vld [vmem:[#allocation7 + $0x7c] sm:$0xf]
        %v3648 = vld [vmem:[%s10] sm:$0x1]
        %v3650 = vlaneseq
        %v3651 = vshrl.u32 %v3650, 7
        %v3652 = vsub.s32 0, %v3651
        %v3653 = vrot.slane %v3648, %v3652
        %v3687 = vunpack.c.l.b16 %v3616
        %v3688 = vunpack.c.l.b16 %v3617
        %v3689 = vunpack.c.l.b16 %v3618
        %v3690 = vunpack.c.l.b16 %v3619
        %v3691 = vunpack.c.l.b16 %v3620
        %v3692 = vunpack.c.l.b16 %v3621
        %v3693 = vunpack.c.l.b16 %v3622
        %v3694 = vunpack.c.l.b16 %v3623
        %v3695 = vunpack.c.l.b16 %v3624
        %v3696 = vunpack.c.l.b16 %v3625
        %v3697 = vunpack.c.l.b16 %v3626
        %v3698 = vunpack.c.l.b16 %v3627
        %v3699 = vunpack.c.l.b16 %v3628
        %v3700 = vunpack.c.l.b16 %v3629
        %v3701 = vunpack.c.l.b16 %v3630
        %v3702 = vunpack.c.l.b16 %v3631
        %v3703 = vunpack.c.l.b16 %v3632
        %v3704 = vunpack.c.l.b16 %v3633
        %v3705 = vunpack.c.l.b16 %v3634
        %v3706 = vunpack.c.l.b16 %v3635
        %v3707 = vunpack.c.l.b16 %v3636
        %v3708 = vunpack.c.l.b16 %v3637
        %v3709 = vunpack.c.l.b16 %v3638
        %v3710 = vunpack.c.l.b16 %v3639
        %v3711 = vunpack.c.l.b16 %v3640
        %v3712 = vunpack.c.l.b16 %v3641
        %v3713 = vunpack.c.l.b16 %v3642
        %v3714 = vunpack.c.l.b16 %v3643
        %v3715 = vunpack.c.l.b16 %v3644
        %v3716 = vunpack.c.l.b16 %v3645
        %v3717 = vunpack.c.l.b16 %v3646
        %v3718 = vunpack.c.l.b16 %v3647
        %v3719 = vpack.c.b16 %v3688, %v3687
        %v3720 = vpack.c.b16 %v3690, %v3689
        %v3721 = vpack.c.b16 %v3692, %v3691
        %v3722 = vpack.c.b16 %v3694, %v3693
        %v3723 = vpack.c.b16 %v3696, %v3695
        %v3724 = vpack.c.b16 %v3698, %v3697
        %v3725 = vpack.c.b16 %v3700, %v3699
        %v3726 = vpack.c.b16 %v3702, %v3701
        %v3727 = vpack.c.b16 %v3704, %v3703
        %v3728 = vpack.c.b16 %v3706, %v3705
        %v3729 = vpack.c.b16 %v3708, %v3707
        %v3730 = vpack.c.b16 %v3710, %v3709
        %v3731 = vpack.c.b16 %v3712, %v3711
        %v3732 = vpack.c.b16 %v3714, %v3713
        %v3733 = vpack.c.b16 %v3716, %v3715
        %v3734 = vpack.c.b16 %v3718, %v3717
        %3751 = vmatprep.subr.bf16.mxu0 0
        %3752 = vmatpush1.bf16.msra.mxu0 %v3726
        %3753 = vmatprep.subr.bf16.mxu0 0
        %3754 = vmatpush1.bf16.msra.mxu0 %v3725
        %3755 = vmatprep.subr.bf16.mxu0 0
        %3756 = vmatpush1.bf16.msra.mxu0 %v3724
        %3757 = vmatprep.subr.bf16.mxu0 0
        %3758 = vmatpush1.bf16.msra.mxu0 %v3723
        %3759 = vmatprep.subr.bf16.mxu0 0
        %3760 = vmatpush1.bf16.msra.mxu0 %v3722
        %3761 = vmatprep.subr.bf16.mxu0 0
        %3762 = vmatpush1.bf16.msra.mxu0 %v3721
        %3763 = vmatprep.subr.bf16.mxu0 0
        %3764 = vmatpush1.bf16.msra.mxu0 %v3720
        %3765 = vmatprep.subr.bf16.mxu0 0
        %3766 = vmatpush1.bf16.msra.mxu0 %v3719
        %3767 = vmatprep.subr.bf16.mxu0 0
        %3768 = vmatpush2.bf16.msra.mxu0 %v3734
        %3769 = vmatprep.subr.bf16.mxu0 0
        %3770 = vmatpush2.bf16.msra.mxu0 %v3733
        %3771 = vmatprep.subr.bf16.mxu0 0
        %3772 = vmatpush2.bf16.msra.mxu0 %v3732
        %3773 = vmatprep.subr.bf16.mxu0 0
        %3774 = vmatpush2.bf16.msra.mxu0 %v3731
        %3775 = vmatprep.subr.bf16.mxu0 0
        %3776 = vmatpush2.bf16.msra.mxu0 %v3730
        %3777 = vmatprep.subr.bf16.mxu0 0
        %3778 = vmatpush2.bf16.msra.mxu0 %v3729
        %3779 = vmatprep.subr.bf16.mxu0 0
        %3780 = vmatpush2.bf16.msra.mxu0 %v3728
        %3781 = vmatprep.subr.bf16.mxu0 0
        %3782 = vmatpush2.bf16.msra.mxu0 %v3727
        %3783 = vmatprep.mubr.bf16.mxu0 %v3615
        %3784 = vmatmul.mubr.bf16.gmra.mxu0 %v3614
        %v3785 = vpop.f32.mrf.mxu0
        %v3786 = vadd.f32 %v3653, %v3785
        %v3787 = vpop.f32.mrf.mxu0
        %v3788 = vpop.f32.mrf.mxu0
        %v3789 = vadd.f32 %v3653, %v3788
        %v3790 = vpop.f32.mrf.mxu0
        %3791 = vdwg.mxu0
        %v3792 = vadd.f32 %v3424, %v3786
        %v3793 = vadd.f32 %v3425, %v3789
        %3794 = vadd.xlane.f32.xlu0 %v3792
        %v3795 = vpop.xlane.xlu0 %3794
        %3796 = vadd.xlane.f32.xlu0 %v3793
        %v3797 = vpop.xlane.xlu0 %3796
        %v3798 = vmul.f32 %v3795, 0.010416667
        %v3799 = vmul.f32 %v3797, 0.010416667
        %v3800 = vsub.f32 %v3792, %v3798
        %v3801 = vsub.f32 %v3793, %v3799
        %v3802 = vmul.f32 %v3800, %v488
        %v3803 = vmul.f32 %v3801, %v488
        %v3804 = vmul.f32 %v3802, %v3802
        %v3805 = vmul.f32 %v3803, %v3803
        %3806 = vadd.xlane.f32.xlu0 %v3804
        %v3807 = vpop.xlane.xlu0 %3806
        %3808 = vadd.xlane.f32.xlu0 %v3805
        %v3809 = vpop.xlane.xlu0 %3808
        %v3810 = vmul.f32 %v3807, 0.010416667
        %v3811 = vmul.f32 %v3809, 0.010416667
        %v3812 = vadd.f32 %v3810, 1e-05
        %v3813 = vadd.f32 %v3811, 1e-05
        %v3814 = vrsqrt.pop %v3812
        %v3815 = vrsqrt.pop %v3813
        %v3816 = vmul.f32 %v3802, %v3814
        %v3817 = vmul.f32 %v3803, %v3815
        %v3818 = vmul.f32 %v3816, %v3414
        %v3819 = vmul.f32 %v3817, %v3414
        %v3820 = vadd.f32 %v3818, %v3422
        %v3821 = vadd.f32 %v3819, %v3422
        %v3822 = vpack.c.bf16 %v3821, %v3820
        %s3823 = scalar_lea.vmem [#allocation2], 192
        %v3824 = vld [vmem:[%s3823] sm:$0xff]
        %v3825 = vld [vmem:[%s3823 + $0x8] sm:$0xf]
        %v3826 = vld [vmem:[%s3823 + $0xc] sm:$0xff]
        %v3827 = vld [vmem:[%s3823 + $0x14] sm:$0xf]
        %v3828 = vld [vmem:[%s3823 + $0x18] sm:$0xff]
        %v3829 = vld [vmem:[%s3823 + $0x20] sm:$0xf]
        %v3830 = vld [vmem:[%s3823 + $0x24] sm:$0xff]
        %v3831 = vld [vmem:[%s3823 + $0x2c] sm:$0xf]
        %v3832 = vld [vmem:[%s3823 + $0x30] sm:$0xff]
        %v3833 = vld [vmem:[%s3823 + $0x38] sm:$0xf]
        %v3834 = vld [vmem:[%s3823 + $0x3c] sm:$0xff]
        %v3835 = vld [vmem:[%s3823 + $0x44] sm:$0xf]
        %v3836 = vld [vmem:[%s3823 + $0x48] sm:$0xff]
        %v3837 = vld [vmem:[%s3823 + $0x50] sm:$0xf]
        %v3838 = vld [vmem:[%s3823 + $0x54] sm:$0xff]
        %v3839 = vld [vmem:[%s3823 + $0x5c] sm:$0xf]
        %v3840 = vld [vmem:[%s3823 + $0x60] sm:$0xff]
        %v3841 = vld [vmem:[%s3823 + $0x68] sm:$0xf]
        %v3842 = vld [vmem:[%s3823 + $0x6c] sm:$0xff]
        %v3843 = vld [vmem:[%s3823 + $0x74] sm:$0xf]
        %v3844 = vld [vmem:[%s3823 + $0x78] sm:$0xff]
        %v3845 = vld [vmem:[%s3823 + $0x80] sm:$0xf]
        %v3846 = vld [vmem:[%s3823 + $0x84] sm:$0xff]
        %v3847 = vld [vmem:[%s3823 + $0x8c] sm:$0xf]
        %v3848 = vld [vmem:[%s3823 + $0x90] sm:$0xff]
        %v3849 = vld [vmem:[%s3823 + $0x98] sm:$0xf]
        %v3850 = vld [vmem:[%s3823 + $0x9c] sm:$0xff]
        %v3851 = vld [vmem:[%s3823 + $0xa4] sm:$0xf]
        %v3852 = vld [vmem:[%s3823 + $0xa8] sm:$0xff]
        %v3853 = vld [vmem:[%s3823 + $0xb0] sm:$0xf]
        %v3854 = vld [vmem:[%s3823 + $0xb4] sm:$0xff]
        %v3855 = vld [vmem:[%s3823 + $0xbc] sm:$0xf]
        %s3856 = scalar_lea.vmem %s2, 3
        %v3857 = vld [vmem:[%s3856] sm:$0x7]
        %v3859 = vlaneseq
        %v3860 = vshrl.u32 %v3859, 7
        %v3861 = vsub.s32 0, %v3860
        %v3862 = vrot.slane %v3857, %v3861
        %v3863 = vlaneseq
        %v3864 = vshrl.u32 %v3863, 7
        %v3865 = vsub.s32 1, %v3864
        %v3866 = vrot.slane %v3857, %v3865
        %v3867 = vlaneseq
        %v3868 = vshrl.u32 %v3867, 7
        %v3869 = vsub.s32 2, %v3868
        %v3870 = vrot.slane %v3857, %v3869
        %v3906 = vunpack.c.l.b16 %v3824
        %v3907 = vunpack.c.h.b16 %v3824
        %v3908 = vunpack.c.l.b16 %v3825
        %v3909 = vunpack.c.l.b16 %v3826
        %v3910 = vunpack.c.h.b16 %v3826
        %v3911 = vunpack.c.l.b16 %v3827
        %v3912 = vunpack.c.l.b16 %v3828
        %v3913 = vunpack.c.h.b16 %v3828
        %v3914 = vunpack.c.l.b16 %v3829
        %v3915 = vunpack.c.l.b16 %v3830
        %v3916 = vunpack.c.h.b16 %v3830
        %v3917 = vunpack.c.l.b16 %v3831
        %v3918 = vunpack.c.l.b16 %v3832
        %v3919 = vunpack.c.h.b16 %v3832
        %v3920 = vunpack.c.l.b16 %v3833
        %v3921 = vunpack.c.l.b16 %v3834
        %v3922 = vunpack.c.h.b16 %v3834
        %v3923 = vunpack.c.l.b16 %v3835
        %v3924 = vunpack.c.l.b16 %v3836
        %v3925 = vunpack.c.h.b16 %v3836
        %v3926 = vunpack.c.l.b16 %v3837
        %v3927 = vunpack.c.l.b16 %v3838
        %v3928 = vunpack.c.h.b16 %v3838
        %v3929 = vunpack.c.l.b16 %v3839
        %v3930 = vunpack.c.l.b16 %v3840
        %v3931 = vunpack.c.h.b16 %v3840
        %v3932 = vunpack.c.l.b16 %v3841
        %v3933 = vunpack.c.l.b16 %v3842
        %v3934 = vunpack.c.h.b16 %v3842
        %v3935 = vunpack.c.l.b16 %v3843
        %v3936 = vunpack.c.l.b16 %v3844
        %v3937 = vunpack.c.h.b16 %v3844
        %v3938 = vunpack.c.l.b16 %v3845
        %v3939 = vunpack.c.l.b16 %v3846
        %v3940 = vunpack.c.h.b16 %v3846
        %v3941 = vunpack.c.l.b16 %v3847
        %v3942 = vunpack.c.l.b16 %v3848
        %v3943 = vunpack.c.h.b16 %v3848
        %v3944 = vunpack.c.l.b16 %v3849
        %v3945 = vunpack.c.l.b16 %v3850
        %v3946 = vunpack.c.h.b16 %v3850
        %v3947 = vunpack.c.l.b16 %v3851
        %v3948 = vunpack.c.l.b16 %v3852
        %v3949 = vunpack.c.h.b16 %v3852
        %v3950 = vunpack.c.l.b16 %v3853
        %v3951 = vunpack.c.l.b16 %v3854
        %v3952 = vunpack.c.h.b16 %v3854
        %v3953 = vunpack.c.l.b16 %v3855
        %v3954 = vpack.c.b16 %v3909, %v3906
        %v3955 = vpack.c.b16 %v3910, %v3907
        %v3956 = vpack.c.b16 %v3911, %v3908
        %v3957 = vpack.c.b16 %v3915, %v3912
        %v3958 = vpack.c.b16 %v3916, %v3913
        %v3959 = vpack.c.b16 %v3917, %v3914
        %v3960 = vpack.c.b16 %v3921, %v3918
        %v3961 = vpack.c.b16 %v3922, %v3919
        %v3962 = vpack.c.b16 %v3923, %v3920
        %v3963 = vpack.c.b16 %v3927, %v3924
        %v3964 = vpack.c.b16 %v3928, %v3925
        %v3965 = vpack.c.b16 %v3929, %v3926
        %v3966 = vpack.c.b16 %v3933, %v3930
        %v3967 = vpack.c.b16 %v3934, %v3931
        %v3968 = vpack.c.b16 %v3935, %v3932
        %v3969 = vpack.c.b16 %v3939, %v3936
        %v3970 = vpack.c.b16 %v3940, %v3937
        %v3971 = vpack.c.b16 %v3941, %v3938
        %v3972 = vpack.c.b16 %v3945, %v3942
        %v3973 = vpack.c.b16 %v3946, %v3943
        %v3974 = vpack.c.b16 %v3947, %v3944
        %v3975 = vpack.c.b16 %v3951, %v3948
        %v3976 = vpack.c.b16 %v3952, %v3949
        %v3977 = vpack.c.b16 %v3953, %v3950
        %4002 = vmatprep.subr.bf16.mxu0 %v3976
        %4003 = vmatpush1.bf16.msra.mxu0 %v3975
        %4004 = vmatprep.subr.bf16.mxu0 %v3973
        %4005 = vmatpush1.bf16.msra.mxu0 %v3972
        %4006 = vmatprep.subr.bf16.mxu0 %v3970
        %4007 = vmatpush1.bf16.msra.mxu0 %v3969
        %4008 = vmatprep.subr.bf16.mxu0 %v3967
        %4009 = vmatpush1.bf16.msra.mxu0 %v3966
        %4010 = vmatprep.subr.bf16.mxu0 %v3964
        %4011 = vmatpush1.bf16.msra.mxu0 %v3963
        %4012 = vmatprep.subr.bf16.mxu0 %v3961
        %4013 = vmatpush1.bf16.msra.mxu0 %v3960
        %4014 = vmatprep.subr.bf16.mxu0 %v3958
        %4015 = vmatpush1.bf16.msra.mxu0 %v3957
        %4016 = vmatprep.subr.bf16.mxu0 %v3955
        %4017 = vmatpush1.bf16.msra.mxu0 %v3954
        %4018 = vmatprep.subr.bf16.mxu0 0
        %4019 = vmatpush2.bf16.msra.mxu0 0
        %4020 = vmatprep.subr.bf16.mxu0 0
        %4021 = vmatpush2.bf16.msra.mxu0 0
        %4022 = vmatprep.subr.bf16.mxu0 0
        %4023 = vmatpush2.bf16.msra.mxu0 0
        %4024 = vmatprep.subr.bf16.mxu0 0
        %4025 = vmatpush2.bf16.msra.mxu0 0
        %4026 = vmatprep.subr.bf16.mxu0 0
        %4027 = vmatpush2.bf16.msra.mxu0 0
        %4028 = vmatprep.subr.bf16.mxu0 0
        %4029 = vmatpush2.bf16.msra.mxu0 0
        %4030 = vmatprep.subr.bf16.mxu0 0
        %4031 = vmatpush2.bf16.msra.mxu0 0
        %4032 = vmatprep.subr.bf16.mxu0 0
        %4033 = vmatpush2.bf16.msra.mxu0 0
        %4034 = vmatprep.mubr.bf16.mxu0 0
        %4035 = vmatmul.mubr.bf16.gmra.mxu0 %v3822
        %v4036 = vpop.f32.mrf.mxu0
        %v4037 = vadd.f32 %v3862, %v4036
        %v4038 = vpop.f32.mrf.mxu0
        %v4039 = vadd.f32 %v3866, %v4038
        %v4040 = vpop.f32.mrf.mxu0
        %v4041 = vadd.f32 %v3862, %v4040
        %v4042 = vpop.f32.mrf.mxu0
        %v4043 = vadd.f32 %v3866, %v4042
        %4044 = vdwg.mxu0
        %4045 = vmatprep.subr.bf16.mxu0 0
        %4046 = vmatpush1.bf16.msra.mxu0 %v3977
        %4047 = vmatprep.subr.bf16.mxu0 0
        %4048 = vmatpush1.bf16.msra.mxu0 %v3974
        %4049 = vmatprep.subr.bf16.mxu0 0
        %4050 = vmatpush1.bf16.msra.mxu0 %v3971
        %4051 = vmatprep.subr.bf16.mxu0 0
        %4052 = vmatpush1.bf16.msra.mxu0 %v3968
        %4053 = vmatprep.subr.bf16.mxu0 0
        %4054 = vmatpush1.bf16.msra.mxu0 %v3965
        %4055 = vmatprep.subr.bf16.mxu0 0
        %4056 = vmatpush1.bf16.msra.mxu0 %v3962
        %4057 = vmatprep.subr.bf16.mxu0 0
        %4058 = vmatpush1.bf16.msra.mxu0 %v3959
        %4059 = vmatprep.subr.bf16.mxu0 0
        %4060 = vmatpush1.bf16.msra.mxu0 %v3956
        %4061 = vmatprep.subr.bf16.mxu0 0
        %4062 = vmatpush2.bf16.msra.mxu0 0
        %4063 = vmatprep.subr.bf16.mxu0 0
        %4064 = vmatpush2.bf16.msra.mxu0 0
        %4065 = vmatprep.subr.bf16.mxu0 0
        %4066 = vmatpush2.bf16.msra.mxu0 0
        %4067 = vmatprep.subr.bf16.mxu0 0
        %4068 = vmatpush2.bf16.msra.mxu0 0
        %4069 = vmatprep.subr.bf16.mxu0 0
        %4070 = vmatpush2.bf16.msra.mxu0 0
        %4071 = vmatprep.subr.bf16.mxu0 0
        %4072 = vmatpush2.bf16.msra.mxu0 0
        %4073 = vmatprep.subr.bf16.mxu0 0
        %4074 = vmatpush2.bf16.msra.mxu0 0
        %4075 = vmatprep.subr.bf16.mxu0 0
        %4076 = vmatpush2.bf16.msra.mxu0 0
        %4077 = vmatprep.mubr.bf16.mxu0 0
        %4078 = vmatmul.mubr.bf16.gmra.mxu0 %v3822
        %v4079 = vpop.f32.mrf.mxu0
        %v4080 = vadd.f32 %v3870, %v4079
        %v4081 = vpop.f32.mrf.mxu0
        %v4082 = vpop.f32.mrf.mxu0
        %v4083 = vadd.f32 %v3870, %v4082
        %v4084 = vpop.f32.mrf.mxu0
        %4085 = vdwg.mxu0
        %v4087 = vsel %vm753, %v4037, 0
        %v4090 = vsel %vm753, %v4041, 0
        %v4093 = vsel %vm753, %v4039, 0
        %v4096 = vsel %vm753, %v4043, 0
        %4098 = vmatprep.subr.mxu0 0.0
        %4099 = vmatpush1.xpose.msra.mxu0 0.0
        %4100 = vmatprep.subr.mxu0 0.0
        %4101 = vmatpush1.xpose.msra.mxu0 0.0
        %4102 = vmatprep.subr.mxu0 0.0
        %4103 = vmatpush1.xpose.msra.mxu0 0.0
        %4104 = vmatprep.subr.mxu0 0.0
        %4105 = vmatpush1.xpose.msra.mxu0 0.0
        %4106 = vmatprep.subr.mxu0 0.0
        %4107 = vmatpush1.xpose.msra.mxu0 0.0
        %4108 = vmatprep.subr.mxu0 0.0
        %4109 = vmatpush1.xpose.msra.mxu0 0.0
        %4110 = vmatprep.subr.mxu0 0.0
        %4111 = vmatpush1.xpose.msra.mxu0 0.0
        %4112 = vmatprep.subr.mxu0 0.0
        %4113 = vmatpush1.xpose.msra.mxu0 0.0
        %4114 = vmatprep.subr.mxu0 0.0
        %4115 = vmatpush1.xpose.msra.mxu0 0.0
        %4116 = vmatprep.subr.mxu0 0.0
        %4117 = vmatpush1.xpose.msra.mxu0 0.0
        %4118 = vmatprep.subr.mxu0 0.0
        %4119 = vmatpush1.xpose.msra.mxu0 0.0
        %4120 = vmatprep.subr.mxu0 0.0
        %4121 = vmatpush1.xpose.msra.mxu0 0.0
        %4122 = vmatprep.subr.mxu0 0.0
        %4123 = vmatpush1.xpose.msra.mxu0 0.0
        %4124 = vmatprep.subr.mxu0 0.0
        %4125 = vmatpush1.xpose.msra.mxu0 0.0
        %4126 = vmatprep.subr.mxu0 0.0
        %4127 = vmatpush1.xpose.msra.mxu0 %v4096
        %4128 = vmatprep.subr.mxu0 0.0
        %4129 = vmatpush1.xpose.msra.mxu0 %v4093
        %4130 = vmatprep.subr.mxu0 0.0
        %4131 = vmatpush2.xpose.msra.mxu0 0.0
        %4132 = vmatprep.subr.mxu0 0.0
        %4133 = vmatpush2.xpose.msra.mxu0 0.0
        %4134 = vmatprep.subr.mxu0 0.0
        %4135 = vmatpush2.xpose.msra.mxu0 0.0
        %4136 = vmatprep.subr.mxu0 0.0
        %4137 = vmatpush2.xpose.msra.mxu0 0.0
        %4138 = vmatprep.subr.mxu0 0.0
        %4139 = vmatpush2.xpose.msra.mxu0 0.0
        %4140 = vmatprep.subr.mxu0 0.0
        %4141 = vmatpush2.xpose.msra.mxu0 0.0
        %4142 = vmatprep.subr.mxu0 0.0
        %4143 = vmatpush2.xpose.msra.mxu0 0.0
        %4144 = vmatprep.subr.mxu0 0.0
        %4145 = vmatpush2.xpose.msra.mxu0 0.0
        %4146 = vmatprep.subr.mxu0 0.0
        %4147 = vmatpush2.xpose.msra.mxu0 0.0
        %4148 = vmatprep.subr.mxu0 0.0
        %4149 = vmatpush2.xpose.msra.mxu0 0.0
        %4150 = vmatprep.subr.mxu0 0.0
        %4151 = vmatpush2.xpose.msra.mxu0 0.0
        %4152 = vmatprep.subr.mxu0 0.0
        %4153 = vmatpush2.xpose.msra.mxu0 0.0
        %4154 = vmatprep.subr.mxu0 0.0
        %4155 = vmatpush2.xpose.msra.mxu0 0.0
        %4156 = vmatprep.subr.mxu0 0.0
        %4157 = vmatpush2.xpose.msra.mxu0 0.0
        %4158 = vmatprep.subr.mxu0 0.0
        %4159 = vmatpush2.xpose.msra.mxu0 0.0
        %4160 = vmatprep.subr.mxu0 0.0
        %4161 = vmatpush2.xpose.msra.mxu0 0.0
        %4162 = vmatprep.mubr.f32.mxu0 0.0
        %4163 = vmatmul.mubr.f32.gmra.mxu0 %v4087
        %v4164 = vpop.f32.mrf.mxu0
        %v4165 = vadd.f32 0.0, %v4164
        %v4166 = vpop.f32.mrf.mxu0
        %4167 = vmatprep.mubr.f32.mxu0 0.0
        %4168 = vmatmul.mubr.f32.gmra.mxu0 %v4090
        %v4169 = vpop.f32.mrf.mxu0
        %v4170 = vadd.f32 0.0, %v4169
        %v4171 = vpop.f32.mrf.mxu0
        %4172 = vdwg.mxu0
        %v4173 = vsel %vm841, %v4165, -inf
        %4174 = vmax.xlane.f32.xlu0 %v4173
        %v4175 = vpop.xlane.xlu0 %4174
        %v4176 = vsel %vm841, %v4170, -inf
        %4177 = vmax.xlane.f32.xlu0 %v4176
        %v4178 = vpop.xlane.xlu0 %4177
        %v4179 = vsub.f32 %v4165, %v4175
        %v4180 = vsub.f32 %v4170, %v4178
        %v4181 = vmul.f32 %v4179, 1.442695
        %v4182 = vpow.pop %v4181
        %v4183 = vmul.f32 %v4180, 1.442695
        %v4184 = vpow.pop %v4183
        %v4185 = vsel %vm841, %v4182, 0.0
        %4186 = vadd.xlane.f32.xlu0 %v4185
        %v4187 = vpop.xlane.xlu0 %4186
        %v4188 = vsel %vm841, %v4184, 0.0
        %4189 = vadd.xlane.f32.xlu0 %v4188
        %v4190 = vpop.xlane.xlu0 %4189
        %v4192 = vsel %vm841, %v4182, 0
        %v4195 = vsel %vm841, %v4184, 0
        %4197 = vmatprep.subr.mxu0 0.0
        %4198 = vmatpush1.msra.mxu0 0.0
        %4199 = vmatprep.subr.mxu0 0.0
        %4200 = vmatpush1.msra.mxu0 0.0
        %4201 = vmatprep.subr.mxu0 0.0
        %4202 = vmatpush1.msra.mxu0 0.0
        %4203 = vmatprep.subr.mxu0 0.0
        %4204 = vmatpush1.msra.mxu0 0.0
        %4205 = vmatprep.subr.mxu0 0.0
        %4206 = vmatpush1.msra.mxu0 0.0
        %4207 = vmatprep.subr.mxu0 0.0
        %4208 = vmatpush1.msra.mxu0 0.0
        %4209 = vmatprep.subr.mxu0 0.0
        %4210 = vmatpush1.msra.mxu0 0.0
        %4211 = vmatprep.subr.mxu0 0.0
        %4212 = vmatpush1.msra.mxu0 0.0
        %4213 = vmatprep.subr.mxu0 0.0
        %4214 = vmatpush1.msra.mxu0 0.0
        %4215 = vmatprep.subr.mxu0 0.0
        %4216 = vmatpush1.msra.mxu0 0.0
        %4217 = vmatprep.subr.mxu0 0.0
        %4218 = vmatpush1.msra.mxu0 0.0
        %4219 = vmatprep.subr.mxu0 0.0
        %4220 = vmatpush1.msra.mxu0 0.0
        %4221 = vmatprep.subr.mxu0 0.0
        %4222 = vmatpush1.msra.mxu0 0.0
        %4223 = vmatprep.subr.mxu0 0.0
        %4224 = vmatpush1.msra.mxu0 0.0
        %4225 = vmatprep.subr.mxu0 0.0
        %4226 = vmatpush1.msra.mxu0 %v4083
        %4227 = vmatprep.subr.mxu0 0.0
        %4228 = vmatpush1.msra.mxu0 %v4080
        %4229 = vmatprep.subr.mxu0 0.0
        %4230 = vmatpush2.msra.mxu0 0.0
        %4231 = vmatprep.subr.mxu0 0.0
        %4232 = vmatpush2.msra.mxu0 0.0
        %4233 = vmatprep.subr.mxu0 0.0
        %4234 = vmatpush2.msra.mxu0 0.0
        %4235 = vmatprep.subr.mxu0 0.0
        %4236 = vmatpush2.msra.mxu0 0.0
        %4237 = vmatprep.subr.mxu0 0.0
        %4238 = vmatpush2.msra.mxu0 0.0
        %4239 = vmatprep.subr.mxu0 0.0
        %4240 = vmatpush2.msra.mxu0 0.0
        %4241 = vmatprep.subr.mxu0 0.0
        %4242 = vmatpush2.msra.mxu0 0.0
        %4243 = vmatprep.subr.mxu0 0.0
        %4244 = vmatpush2.msra.mxu0 0.0
        %4245 = vmatprep.subr.mxu0 0.0
        %4246 = vmatpush2.msra.mxu0 0.0
        %4247 = vmatprep.subr.mxu0 0.0
        %4248 = vmatpush2.msra.mxu0 0.0
        %4249 = vmatprep.subr.mxu0 0.0
        %4250 = vmatpush2.msra.mxu0 0.0
        %4251 = vmatprep.subr.mxu0 0.0
        %4252 = vmatpush2.msra.mxu0 0.0
        %4253 = vmatprep.subr.mxu0 0.0
        %4254 = vmatpush2.msra.mxu0 0.0
        %4255 = vmatprep.subr.mxu0 0.0
        %4256 = vmatpush2.msra.mxu0 0.0
        %4257 = vmatprep.subr.mxu0 0.0
        %4258 = vmatpush2.msra.mxu0 0.0
        %4259 = vmatprep.subr.mxu0 0.0
        %4260 = vmatpush2.msra.mxu0 0.0
        %4261 = vmatprep.mubr.f32.mxu0 0.0
        %4262 = vmatmul.mubr.f32.gmra.mxu0 %v4192
        %v4263 = vpop.f32.mrf.mxu0
        %v4264 = vadd.f32 0.0, %v4263
        %v4265 = vpop.f32.mrf.mxu0
        %4266 = vmatprep.mubr.f32.mxu0 0.0
        %4267 = vmatmul.mubr.f32.gmra.mxu0 %v4195
        %v4268 = vpop.f32.mrf.mxu0
        %v4269 = vadd.f32 0.0, %v4268
        %v4270 = vpop.f32.mrf.mxu0
        %4271 = vdwg.mxu0
        %v4272 = vrcp.pop %v4187
        %v4273 = vrcp.pop %v4190
        %v4274 = vmul.f32 %v4264, %v4272
        %v4275 = vmul.f32 %v4269, %v4273
        %4276 = vrot.lane.b32.xlu0 %v4037, 120
        %v4277 = vpop.permute.xlu0 %4276
        %4278 = vrot.lane.b32.xlu0 %v4041, 120
        %v4279 = vpop.permute.xlu0 %4278
        %4280 = vrot.lane.b32.xlu0 %v4039, 120
        %v4281 = vpop.permute.xlu0 %4280
        %4282 = vrot.lane.b32.xlu0 %v4043, 120
        %v4283 = vpop.permute.xlu0 %4282
        %v4284 = vsel %vm753, %v4277, 0
        %v4286 = vsel %vm753, %v4279, 0
        %v4288 = vsel %vm753, %v4281, 0
        %v4290 = vsel %vm753, %v4283, 0
        %4292 = vmatprep.subr.mxu0 0.0
        %4293 = vmatpush1.xpose.msra.mxu0 0.0
        %4294 = vmatprep.subr.mxu0 0.0
        %4295 = vmatpush1.xpose.msra.mxu0 0.0
        %4296 = vmatprep.subr.mxu0 0.0
        %4297 = vmatpush1.xpose.msra.mxu0 0.0
        %4298 = vmatprep.subr.mxu0 0.0
        %4299 = vmatpush1.xpose.msra.mxu0 0.0
        %4300 = vmatprep.subr.mxu0 0.0
        %4301 = vmatpush1.xpose.msra.mxu0 0.0
        %4302 = vmatprep.subr.mxu0 0.0
        %4303 = vmatpush1.xpose.msra.mxu0 0.0
        %4304 = vmatprep.subr.mxu0 0.0
        %4305 = vmatpush1.xpose.msra.mxu0 0.0
        %4306 = vmatprep.subr.mxu0 0.0
        %4307 = vmatpush1.xpose.msra.mxu0 0.0
        %4308 = vmatprep.subr.mxu0 0.0
        %4309 = vmatpush1.xpose.msra.mxu0 0.0
        %4310 = vmatprep.subr.mxu0 0.0
        %4311 = vmatpush1.xpose.msra.mxu0 0.0
        %4312 = vmatprep.subr.mxu0 0.0
        %4313 = vmatpush1.xpose.msra.mxu0 0.0
        %4314 = vmatprep.subr.mxu0 0.0
        %4315 = vmatpush1.xpose.msra.mxu0 0.0
        %4316 = vmatprep.subr.mxu0 0.0
        %4317 = vmatpush1.xpose.msra.mxu0 0.0
        %4318 = vmatprep.subr.mxu0 0.0
        %4319 = vmatpush1.xpose.msra.mxu0 0.0
        %4320 = vmatprep.subr.mxu0 0.0
        %4321 = vmatpush1.xpose.msra.mxu0 %v4290
        %4322 = vmatprep.subr.mxu0 0.0
        %4323 = vmatpush1.xpose.msra.mxu0 %v4288
        %4324 = vmatprep.subr.mxu0 0.0
        %4325 = vmatpush2.xpose.msra.mxu0 0.0
        %4326 = vmatprep.subr.mxu0 0.0
        %4327 = vmatpush2.xpose.msra.mxu0 0.0
        %4328 = vmatprep.subr.mxu0 0.0
        %4329 = vmatpush2.xpose.msra.mxu0 0.0
        %4330 = vmatprep.subr.mxu0 0.0
        %4331 = vmatpush2.xpose.msra.mxu0 0.0
        %4332 = vmatprep.subr.mxu0 0.0
        %4333 = vmatpush2.xpose.msra.mxu0 0.0
        %4334 = vmatprep.subr.mxu0 0.0
        %4335 = vmatpush2.xpose.msra.mxu0 0.0
        %4336 = vmatprep.subr.mxu0 0.0
        %4337 = vmatpush2.xpose.msra.mxu0 0.0
        %4338 = vmatprep.subr.mxu0 0.0
        %4339 = vmatpush2.xpose.msra.mxu0 0.0
        %4340 = vmatprep.subr.mxu0 0.0
        %4341 = vmatpush2.xpose.msra.mxu0 0.0
        %4342 = vmatprep.subr.mxu0 0.0
        %4343 = vmatpush2.xpose.msra.mxu0 0.0
        %4344 = vmatprep.subr.mxu0 0.0
        %4345 = vmatpush2.xpose.msra.mxu0 0.0
        %4346 = vmatprep.subr.mxu0 0.0
        %4347 = vmatpush2.xpose.msra.mxu0 0.0
        %4348 = vmatprep.subr.mxu0 0.0
        %4349 = vmatpush2.xpose.msra.mxu0 0.0
        %4350 = vmatprep.subr.mxu0 0.0
        %4351 = vmatpush2.xpose.msra.mxu0 0.0
        %4352 = vmatprep.subr.mxu0 0.0
        %4353 = vmatpush2.xpose.msra.mxu0 0.0
        %4354 = vmatprep.subr.mxu0 0.0
        %4355 = vmatpush2.xpose.msra.mxu0 0.0
        %4356 = vmatprep.mubr.f32.mxu0 0.0
        %4357 = vmatmul.mubr.f32.gmra.mxu0 %v4284
        %v4358 = vpop.f32.mrf.mxu0
        %v4359 = vadd.f32 0.0, %v4358
        %v4360 = vpop.f32.mrf.mxu0
        %4361 = vmatprep.mubr.f32.mxu0 0.0
        %4362 = vmatmul.mubr.f32.gmra.mxu0 %v4286
        %v4363 = vpop.f32.mrf.mxu0
        %v4364 = vadd.f32 0.0, %v4363
        %v4365 = vpop.f32.mrf.mxu0
        %4366 = vdwg.mxu0
        %v4367 = vsel %vm841, %v4359, -inf
        %4368 = vmax.xlane.f32.xlu0 %v4367
        %v4369 = vpop.xlane.xlu0 %4368
        %v4370 = vsel %vm841, %v4364, -inf
        %4371 = vmax.xlane.f32.xlu0 %v4370
        %v4372 = vpop.xlane.xlu0 %4371
        %v4373 = vsub.f32 %v4359, %v4369
        %v4374 = vsub.f32 %v4364, %v4372
        %v4375 = vmul.f32 %v4373, 1.442695
        %v4376 = vpow.pop %v4375
        %v4377 = vmul.f32 %v4374, 1.442695
        %v4378 = vpow.pop %v4377
        %v4379 = vsel %vm841, %v4376, 0.0
        %4380 = vadd.xlane.f32.xlu0 %v4379
        %v4381 = vpop.xlane.xlu0 %4380
        %v4382 = vsel %vm841, %v4378, 0.0
        %4383 = vadd.xlane.f32.xlu0 %v4382
        %v4384 = vpop.xlane.xlu0 %4383
        %4387 = vrot.lane.b32.xlu0 %v4080, 120
        %v4388 = vpop.permute.xlu0 %4387
        %4389 = vrot.lane.b32.xlu0 %v4083, 120
        %v4390 = vpop.permute.xlu0 %4389
        %v4394 = vsel %vm841, %v4376, 0
        %v4397 = vsel %vm841, %v4378, 0
        %4399 = vmatprep.subr.mxu0 0.0
        %4400 = vmatpush1.msra.mxu0 0.0
        %4401 = vmatprep.subr.mxu0 0.0
        %4402 = vmatpush1.msra.mxu0 0.0
        %4403 = vmatprep.subr.mxu0 0.0
        %4404 = vmatpush1.msra.mxu0 0.0
        %4405 = vmatprep.subr.mxu0 0.0
        %4406 = vmatpush1.msra.mxu0 0.0
        %4407 = vmatprep.subr.mxu0 0.0
        %4408 = vmatpush1.msra.mxu0 0.0
        %4409 = vmatprep.subr.mxu0 0.0
        %4410 = vmatpush1.msra.mxu0 0.0
        %4411 = vmatprep.subr.mxu0 0.0
        %4412 = vmatpush1.msra.mxu0 0.0
        %4413 = vmatprep.subr.mxu0 0.0
        %4414 = vmatpush1.msra.mxu0 0.0
        %4415 = vmatprep.subr.mxu0 0.0
        %4416 = vmatpush1.msra.mxu0 0.0
        %4417 = vmatprep.subr.mxu0 0.0
        %4418 = vmatpush1.msra.mxu0 0.0
        %4419 = vmatprep.subr.mxu0 0.0
        %4420 = vmatpush1.msra.mxu0 0.0
        %4421 = vmatprep.subr.mxu0 0.0
        %4422 = vmatpush1.msra.mxu0 0.0
        %4423 = vmatprep.subr.mxu0 0.0
        %4424 = vmatpush1.msra.mxu0 0.0
        %4425 = vmatprep.subr.mxu0 0.0
        %4426 = vmatpush1.msra.mxu0 0.0
        %4427 = vmatprep.subr.mxu0 0.0
        %4428 = vmatpush1.msra.mxu0 %v4390
        %4429 = vmatprep.subr.mxu0 0.0
        %4430 = vmatpush1.msra.mxu0 %v4388
        %4431 = vmatprep.subr.mxu0 0.0
        %4432 = vmatpush2.msra.mxu0 0.0
        %4433 = vmatprep.subr.mxu0 0.0
        %4434 = vmatpush2.msra.mxu0 0.0
        %4435 = vmatprep.subr.mxu0 0.0
        %4436 = vmatpush2.msra.mxu0 0.0
        %4437 = vmatprep.subr.mxu0 0.0
        %4438 = vmatpush2.msra.mxu0 0.0
        %4439 = vmatprep.subr.mxu0 0.0
        %4440 = vmatpush2.msra.mxu0 0.0
        %4441 = vmatprep.subr.mxu0 0.0
        %4442 = vmatpush2.msra.mxu0 0.0
        %4443 = vmatprep.subr.mxu0 0.0
        %4444 = vmatpush2.msra.mxu0 0.0
        %4445 = vmatprep.subr.mxu0 0.0
        %4446 = vmatpush2.msra.mxu0 0.0
        %4447 = vmatprep.subr.mxu0 0.0
        %4448 = vmatpush2.msra.mxu0 0.0
        %4449 = vmatprep.subr.mxu0 0.0
        %4450 = vmatpush2.msra.mxu0 0.0
        %4451 = vmatprep.subr.mxu0 0.0
        %4452 = vmatpush2.msra.mxu0 0.0
        %4453 = vmatprep.subr.mxu0 0.0
        %4454 = vmatpush2.msra.mxu0 0.0
        %4455 = vmatprep.subr.mxu0 0.0
        %4456 = vmatpush2.msra.mxu0 0.0
        %4457 = vmatprep.subr.mxu0 0.0
        %4458 = vmatpush2.msra.mxu0 0.0
        %4459 = vmatprep.subr.mxu0 0.0
        %4460 = vmatpush2.msra.mxu0 0.0
        %4461 = vmatprep.subr.mxu0 0.0
        %4462 = vmatpush2.msra.mxu0 0.0
        %4463 = vmatprep.mubr.f32.mxu0 0.0
        %4464 = vmatmul.mubr.f32.gmra.mxu0 %v4394
        %v4465 = vpop.f32.mrf.mxu0
        %v4466 = vadd.f32 0.0, %v4465
        %v4467 = vpop.f32.mrf.mxu0
        %4468 = vmatprep.mubr.f32.mxu0 0.0
        %4469 = vmatmul.mubr.f32.gmra.mxu0 %v4397
        %v4470 = vpop.f32.mrf.mxu0
        %v4471 = vadd.f32 0.0, %v4470
        %v4472 = vpop.f32.mrf.mxu0
        %4473 = vdwg.mxu0
        %v4474 = vrcp.pop %v4381
        %v4475 = vrcp.pop %v4384
        %v4476 = vmul.f32 %v4466, %v4474
        %v4477 = vmul.f32 %v4471, %v4475
        %4478 = vrot.lane.b32.xlu0 %v4037, 112
        %v4479 = vpop.permute.xlu0 %4478
        %4480 = vrot.lane.b32.xlu0 %v4041, 112
        %v4481 = vpop.permute.xlu0 %4480
        %4482 = vrot.lane.b32.xlu0 %v4039, 112
        %v4483 = vpop.permute.xlu0 %4482
        %4484 = vrot.lane.b32.xlu0 %v4043, 112
        %v4485 = vpop.permute.xlu0 %4484
        %v4486 = vsel %vm753, %v4479, 0
        %v4488 = vsel %vm753, %v4481, 0
        %v4490 = vsel %vm753, %v4483, 0
        %v4492 = vsel %vm753, %v4485, 0
        %4494 = vmatprep.subr.mxu0 0.0
        %4495 = vmatpush1.xpose.msra.mxu0 0.0
        %4496 = vmatprep.subr.mxu0 0.0
        %4497 = vmatpush1.xpose.msra.mxu0 0.0
        %4498 = vmatprep.subr.mxu0 0.0
        %4499 = vmatpush1.xpose.msra.mxu0 0.0
        %4500 = vmatprep.subr.mxu0 0.0
        %4501 = vmatpush1.xpose.msra.mxu0 0.0
        %4502 = vmatprep.subr.mxu0 0.0
        %4503 = vmatpush1.xpose.msra.mxu0 0.0
        %4504 = vmatprep.subr.mxu0 0.0
        %4505 = vmatpush1.xpose.msra.mxu0 0.0
        %4506 = vmatprep.subr.mxu0 0.0
        %4507 = vmatpush1.xpose.msra.mxu0 0.0
        %4508 = vmatprep.subr.mxu0 0.0
        %4509 = vmatpush1.xpose.msra.mxu0 0.0
        %4510 = vmatprep.subr.mxu0 0.0
        %4511 = vmatpush1.xpose.msra.mxu0 0.0
        %4512 = vmatprep.subr.mxu0 0.0
        %4513 = vmatpush1.xpose.msra.mxu0 0.0
        %4514 = vmatprep.subr.mxu0 0.0
        %4515 = vmatpush1.xpose.msra.mxu0 0.0
        %4516 = vmatprep.subr.mxu0 0.0
        %4517 = vmatpush1.xpose.msra.mxu0 0.0
        %4518 = vmatprep.subr.mxu0 0.0
        %4519 = vmatpush1.xpose.msra.mxu0 0.0
        %4520 = vmatprep.subr.mxu0 0.0
        %4521 = vmatpush1.xpose.msra.mxu0 0.0
        %4522 = vmatprep.subr.mxu0 0.0
        %4523 = vmatpush1.xpose.msra.mxu0 %v4492
        %4524 = vmatprep.subr.mxu0 0.0
        %4525 = vmatpush1.xpose.msra.mxu0 %v4490
        %4526 = vmatprep.subr.mxu0 0.0
        %4527 = vmatpush2.xpose.msra.mxu0 0.0
        %4528 = vmatprep.subr.mxu0 0.0
        %4529 = vmatpush2.xpose.msra.mxu0 0.0
        %4530 = vmatprep.subr.mxu0 0.0
        %4531 = vmatpush2.xpose.msra.mxu0 0.0
        %4532 = vmatprep.subr.mxu0 0.0
        %4533 = vmatpush2.xpose.msra.mxu0 0.0
        %4534 = vmatprep.subr.mxu0 0.0
        %4535 = vmatpush2.xpose.msra.mxu0 0.0
        %4536 = vmatprep.subr.mxu0 0.0
        %4537 = vmatpush2.xpose.msra.mxu0 0.0
        %4538 = vmatprep.subr.mxu0 0.0
        %4539 = vmatpush2.xpose.msra.mxu0 0.0
        %4540 = vmatprep.subr.mxu0 0.0
        %4541 = vmatpush2.xpose.msra.mxu0 0.0
        %4542 = vmatprep.subr.mxu0 0.0
        %4543 = vmatpush2.xpose.msra.mxu0 0.0
        %4544 = vmatprep.subr.mxu0 0.0
        %4545 = vmatpush2.xpose.msra.mxu0 0.0
        %4546 = vmatprep.subr.mxu0 0.0
        %4547 = vmatpush2.xpose.msra.mxu0 0.0
        %4548 = vmatprep.subr.mxu0 0.0
        %4549 = vmatpush2.xpose.msra.mxu0 0.0
        %4550 = vmatprep.subr.mxu0 0.0
        %4551 = vmatpush2.xpose.msra.mxu0 0.0
        %4552 = vmatprep.subr.mxu0 0.0
        %4553 = vmatpush2.xpose.msra.mxu0 0.0
        %4554 = vmatprep.subr.mxu0 0.0
        %4555 = vmatpush2.xpose.msra.mxu0 0.0
        %4556 = vmatprep.subr.mxu0 0.0
        %4557 = vmatpush2.xpose.msra.mxu0 0.0
        %4558 = vmatprep.mubr.f32.mxu0 0.0
        %4559 = vmatmul.mubr.f32.gmra.mxu0 %v4486
        %v4560 = vpop.f32.mrf.mxu0
        %v4561 = vadd.f32 0.0, %v4560
        %v4562 = vpop.f32.mrf.mxu0
        %4563 = vmatprep.mubr.f32.mxu0 0.0
        %4564 = vmatmul.mubr.f32.gmra.mxu0 %v4488
        %v4565 = vpop.f32.mrf.mxu0
        %v4566 = vadd.f32 0.0, %v4565
        %v4567 = vpop.f32.mrf.mxu0
        %4568 = vdwg.mxu0
        %v4569 = vsel %vm841, %v4561, -inf
        %4570 = vmax.xlane.f32.xlu0 %v4569
        %v4571 = vpop.xlane.xlu0 %4570
        %v4572 = vsel %vm841, %v4566, -inf
        %4573 = vmax.xlane.f32.xlu0 %v4572
        %v4574 = vpop.xlane.xlu0 %4573
        %v4575 = vsub.f32 %v4561, %v4571
        %v4576 = vsub.f32 %v4566, %v4574
        %v4577 = vmul.f32 %v4575, 1.442695
        %v4578 = vpow.pop %v4577
        %v4579 = vmul.f32 %v4576, 1.442695
        %v4580 = vpow.pop %v4579
        %v4581 = vsel %vm841, %v4578, 0.0
        %4582 = vadd.xlane.f32.xlu0 %v4581
        %v4583 = vpop.xlane.xlu0 %4582
        %v4584 = vsel %vm841, %v4580, 0.0
        %4585 = vadd.xlane.f32.xlu0 %v4584
        %v4586 = vpop.xlane.xlu0 %4585
        %4587 = vrot.lane.b32.xlu0 %v4080, 112
        %v4588 = vpop.permute.xlu0 %4587
        %4589 = vrot.lane.b32.xlu0 %v4083, 112
        %v4590 = vpop.permute.xlu0 %4589
        %v4594 = vsel %vm841, %v4578, 0
        %v4597 = vsel %vm841, %v4580, 0
        %4599 = vmatprep.subr.mxu0 0.0
        %4600 = vmatpush1.msra.mxu0 0.0
        %4601 = vmatprep.subr.mxu0 0.0
        %4602 = vmatpush1.msra.mxu0 0.0
        %4603 = vmatprep.subr.mxu0 0.0
        %4604 = vmatpush1.msra.mxu0 0.0
        %4605 = vmatprep.subr.mxu0 0.0
        %4606 = vmatpush1.msra.mxu0 0.0
        %4607 = vmatprep.subr.mxu0 0.0
        %4608 = vmatpush1.msra.mxu0 0.0
        %4609 = vmatprep.subr.mxu0 0.0
        %4610 = vmatpush1.msra.mxu0 0.0
        %4611 = vmatprep.subr.mxu0 0.0
        %4612 = vmatpush1.msra.mxu0 0.0
        %4613 = vmatprep.subr.mxu0 0.0
        %4614 = vmatpush1.msra.mxu0 0.0
        %4615 = vmatprep.subr.mxu0 0.0
        %4616 = vmatpush1.msra.mxu0 0.0
        %4617 = vmatprep.subr.mxu0 0.0
        %4618 = vmatpush1.msra.mxu0 0.0
        %4619 = vmatprep.subr.mxu0 0.0
        %4620 = vmatpush1.msra.mxu0 0.0
        %4621 = vmatprep.subr.mxu0 0.0
        %4622 = vmatpush1.msra.mxu0 0.0
        %4623 = vmatprep.subr.mxu0 0.0
        %4624 = vmatpush1.msra.mxu0 0.0
        %4625 = vmatprep.subr.mxu0 0.0
        %4626 = vmatpush1.msra.mxu0 0.0
        %4627 = vmatprep.subr.mxu0 0.0
        %4628 = vmatpush1.msra.mxu0 %v4590
        %4629 = vmatprep.subr.mxu0 0.0
        %4630 = vmatpush1.msra.mxu0 %v4588
        %4631 = vmatprep.subr.mxu0 0.0
        %4632 = vmatpush2.msra.mxu0 0.0
        %4633 = vmatprep.subr.mxu0 0.0
        %4634 = vmatpush2.msra.mxu0 0.0
        %4635 = vmatprep.subr.mxu0 0.0
        %4636 = vmatpush2.msra.mxu0 0.0
        %4637 = vmatprep.subr.mxu0 0.0
        %4638 = vmatpush2.msra.mxu0 0.0
        %4639 = vmatprep.subr.mxu0 0.0
        %4640 = vmatpush2.msra.mxu0 0.0
        %4641 = vmatprep.subr.mxu0 0.0
        %4642 = vmatpush2.msra.mxu0 0.0
        %4643 = vmatprep.subr.mxu0 0.0
        %4644 = vmatpush2.msra.mxu0 0.0
        %4645 = vmatprep.subr.mxu0 0.0
        %4646 = vmatpush2.msra.mxu0 0.0
        %4647 = vmatprep.subr.mxu0 0.0
        %4648 = vmatpush2.msra.mxu0 0.0
        %4649 = vmatprep.subr.mxu0 0.0
        %4650 = vmatpush2.msra.mxu0 0.0
        %4651 = vmatprep.subr.mxu0 0.0
        %4652 = vmatpush2.msra.mxu0 0.0
        %4653 = vmatprep.subr.mxu0 0.0
        %4654 = vmatpush2.msra.mxu0 0.0
        %4655 = vmatprep.subr.mxu0 0.0
        %4656 = vmatpush2.msra.mxu0 0.0
        %4657 = vmatprep.subr.mxu0 0.0
        %4658 = vmatpush2.msra.mxu0 0.0
        %4659 = vmatprep.subr.mxu0 0.0
        %4660 = vmatpush2.msra.mxu0 0.0
        %4661 = vmatprep.subr.mxu0 0.0
        %4662 = vmatpush2.msra.mxu0 0.0
        %4663 = vmatprep.mubr.f32.mxu0 0.0
        %4664 = vmatmul.mubr.f32.gmra.mxu0 %v4594
        %v4665 = vpop.f32.mrf.mxu0
        %v4666 = vadd.f32 0.0, %v4665
        %v4667 = vpop.f32.mrf.mxu0
        %4668 = vmatprep.mubr.f32.mxu0 0.0
        %4669 = vmatmul.mubr.f32.gmra.mxu0 %v4597
        %v4670 = vpop.f32.mrf.mxu0
        %v4671 = vadd.f32 0.0, %v4670
        %v4672 = vpop.f32.mrf.mxu0
        %4673 = vdwg.mxu0
        %v4674 = vrcp.pop %v4583
        %v4675 = vrcp.pop %v4586
        %v4676 = vmul.f32 %v4666, %v4674
        %v4677 = vmul.f32 %v4671, %v4675
        %4678 = vrot.lane.b32.xlu0 %v4037, 104
        %v4679 = vpop.permute.xlu0 %4678
        %4680 = vrot.lane.b32.xlu0 %v4041, 104
        %v4681 = vpop.permute.xlu0 %4680
        %4682 = vrot.lane.b32.xlu0 %v4039, 104
        %v4683 = vpop.permute.xlu0 %4682
        %4684 = vrot.lane.b32.xlu0 %v4043, 104
        %v4685 = vpop.permute.xlu0 %4684
        %v4686 = vsel %vm753, %v4679, 0
        %v4688 = vsel %vm753, %v4681, 0
        %v4690 = vsel %vm753, %v4683, 0
        %v4692 = vsel %vm753, %v4685, 0
        %4694 = vmatprep.subr.mxu0 0.0
        %4695 = vmatpush1.xpose.msra.mxu0 0.0
        %4696 = vmatprep.subr.mxu0 0.0
        %4697 = vmatpush1.xpose.msra.mxu0 0.0
        %4698 = vmatprep.subr.mxu0 0.0
        %4699 = vmatpush1.xpose.msra.mxu0 0.0
        %4700 = vmatprep.subr.mxu0 0.0
        %4701 = vmatpush1.xpose.msra.mxu0 0.0
        %4702 = vmatprep.subr.mxu0 0.0
        %4703 = vmatpush1.xpose.msra.mxu0 0.0
        %4704 = vmatprep.subr.mxu0 0.0
        %4705 = vmatpush1.xpose.msra.mxu0 0.0
        %4706 = vmatprep.subr.mxu0 0.0
        %4707 = vmatpush1.xpose.msra.mxu0 0.0
        %4708 = vmatprep.subr.mxu0 0.0
        %4709 = vmatpush1.xpose.msra.mxu0 0.0
        %4710 = vmatprep.subr.mxu0 0.0
        %4711 = vmatpush1.xpose.msra.mxu0 0.0
        %4712 = vmatprep.subr.mxu0 0.0
        %4713 = vmatpush1.xpose.msra.mxu0 0.0
        %4714 = vmatprep.subr.mxu0 0.0
        %4715 = vmatpush1.xpose.msra.mxu0 0.0
        %4716 = vmatprep.subr.mxu0 0.0
        %4717 = vmatpush1.xpose.msra.mxu0 0.0
        %4718 = vmatprep.subr.mxu0 0.0
        %4719 = vmatpush1.xpose.msra.mxu0 0.0
        %4720 = vmatprep.subr.mxu0 0.0
        %4721 = vmatpush1.xpose.msra.mxu0 0.0
        %4722 = vmatprep.subr.mxu0 0.0
        %4723 = vmatpush1.xpose.msra.mxu0 %v4692
        %4724 = vmatprep.subr.mxu0 0.0
        %4725 = vmatpush1.xpose.msra.mxu0 %v4690
        %4726 = vmatprep.subr.mxu0 0.0
        %4727 = vmatpush2.xpose.msra.mxu0 0.0
        %4728 = vmatprep.subr.mxu0 0.0
        %4729 = vmatpush2.xpose.msra.mxu0 0.0
        %4730 = vmatprep.subr.mxu0 0.0
        %4731 = vmatpush2.xpose.msra.mxu0 0.0
        %4732 = vmatprep.subr.mxu0 0.0
        %4733 = vmatpush2.xpose.msra.mxu0 0.0
        %4734 = vmatprep.subr.mxu0 0.0
        %4735 = vmatpush2.xpose.msra.mxu0 0.0
        %4736 = vmatprep.subr.mxu0 0.0
        %4737 = vmatpush2.xpose.msra.mxu0 0.0
        %4738 = vmatprep.subr.mxu0 0.0
        %4739 = vmatpush2.xpose.msra.mxu0 0.0
        %4740 = vmatprep.subr.mxu0 0.0
        %4741 = vmatpush2.xpose.msra.mxu0 0.0
        %4742 = vmatprep.subr.mxu0 0.0
        %4743 = vmatpush2.xpose.msra.mxu0 0.0
        %4744 = vmatprep.subr.mxu0 0.0
        %4745 = vmatpush2.xpose.msra.mxu0 0.0
        %4746 = vmatprep.subr.mxu0 0.0
        %4747 = vmatpush2.xpose.msra.mxu0 0.0
        %4748 = vmatprep.subr.mxu0 0.0
        %4749 = vmatpush2.xpose.msra.mxu0 0.0
        %4750 = vmatprep.subr.mxu0 0.0
        %4751 = vmatpush2.xpose.msra.mxu0 0.0
        %4752 = vmatprep.subr.mxu0 0.0
        %4753 = vmatpush2.xpose.msra.mxu0 0.0
        %4754 = vmatprep.subr.mxu0 0.0
        %4755 = vmatpush2.xpose.msra.mxu0 0.0
        %4756 = vmatprep.subr.mxu0 0.0
        %4757 = vmatpush2.xpose.msra.mxu0 0.0
        %4758 = vmatprep.mubr.f32.mxu0 0.0
        %4759 = vmatmul.mubr.f32.gmra.mxu0 %v4686
        %v4760 = vpop.f32.mrf.mxu0
        %v4761 = vadd.f32 0.0, %v4760
        %v4762 = vpop.f32.mrf.mxu0
        %4763 = vmatprep.mubr.f32.mxu0 0.0
        %4764 = vmatmul.mubr.f32.gmra.mxu0 %v4688
        %v4765 = vpop.f32.mrf.mxu0
        %v4766 = vadd.f32 0.0, %v4765
        %v4767 = vpop.f32.mrf.mxu0
        %4768 = vdwg.mxu0
        %v4769 = vsel %vm841, %v4761, -inf
        %4770 = vmax.xlane.f32.xlu0 %v4769
        %v4771 = vpop.xlane.xlu0 %4770
        %v4772 = vsel %vm841, %v4766, -inf
        %4773 = vmax.xlane.f32.xlu0 %v4772
        %v4774 = vpop.xlane.xlu0 %4773
        %v4775 = vsub.f32 %v4761, %v4771
        %v4776 = vsub.f32 %v4766, %v4774
        %v4777 = vmul.f32 %v4775, 1.442695
        %v4778 = vpow.pop %v4777
        %v4779 = vmul.f32 %v4776, 1.442695
        %v4780 = vpow.pop %v4779
        %v4781 = vsel %vm841, %v4778, 0.0
        %4782 = vadd.xlane.f32.xlu0 %v4781
        %v4783 = vpop.xlane.xlu0 %4782
        %v4784 = vsel %vm841, %v4780, 0.0
        %4785 = vadd.xlane.f32.xlu0 %v4784
        %v4786 = vpop.xlane.xlu0 %4785
        %4787 = vrot.lane.b32.xlu0 %v4080, 104
        %v4788 = vpop.permute.xlu0 %4787
        %4789 = vrot.lane.b32.xlu0 %v4083, 104
        %v4790 = vpop.permute.xlu0 %4789
        %v4794 = vsel %vm841, %v4778, 0
        %v4797 = vsel %vm841, %v4780, 0
        %4799 = vmatprep.subr.mxu0 0.0
        %4800 = vmatpush1.msra.mxu0 0.0
        %4801 = vmatprep.subr.mxu0 0.0
        %4802 = vmatpush1.msra.mxu0 0.0
        %4803 = vmatprep.subr.mxu0 0.0
        %4804 = vmatpush1.msra.mxu0 0.0
        %4805 = vmatprep.subr.mxu0 0.0
        %4806 = vmatpush1.msra.mxu0 0.0
        %4807 = vmatprep.subr.mxu0 0.0
        %4808 = vmatpush1.msra.mxu0 0.0
        %4809 = vmatprep.subr.mxu0 0.0
        %4810 = vmatpush1.msra.mxu0 0.0
        %4811 = vmatprep.subr.mxu0 0.0
        %4812 = vmatpush1.msra.mxu0 0.0
        %4813 = vmatprep.subr.mxu0 0.0
        %4814 = vmatpush1.msra.mxu0 0.0
        %4815 = vmatprep.subr.mxu0 0.0
        %4816 = vmatpush1.msra.mxu0 0.0
        %4817 = vmatprep.subr.mxu0 0.0
        %4818 = vmatpush1.msra.mxu0 0.0
        %4819 = vmatprep.subr.mxu0 0.0
        %4820 = vmatpush1.msra.mxu0 0.0
        %4821 = vmatprep.subr.mxu0 0.0
        %4822 = vmatpush1.msra.mxu0 0.0
        %4823 = vmatprep.subr.mxu0 0.0
        %4824 = vmatpush1.msra.mxu0 0.0
        %4825 = vmatprep.subr.mxu0 0.0
        %4826 = vmatpush1.msra.mxu0 0.0
        %4827 = vmatprep.subr.mxu0 0.0
        %4828 = vmatpush1.msra.mxu0 %v4790
        %4829 = vmatprep.subr.mxu0 0.0
        %4830 = vmatpush1.msra.mxu0 %v4788
        %4831 = vmatprep.subr.mxu0 0.0
        %4832 = vmatpush2.msra.mxu0 0.0
        %4833 = vmatprep.subr.mxu0 0.0
        %4834 = vmatpush2.msra.mxu0 0.0
        %4835 = vmatprep.subr.mxu0 0.0
        %4836 = vmatpush2.msra.mxu0 0.0
        %4837 = vmatprep.subr.mxu0 0.0
        %4838 = vmatpush2.msra.mxu0 0.0
        %4839 = vmatprep.subr.mxu0 0.0
        %4840 = vmatpush2.msra.mxu0 0.0
        %4841 = vmatprep.subr.mxu0 0.0
        %4842 = vmatpush2.msra.mxu0 0.0
        %4843 = vmatprep.subr.mxu0 0.0
        %4844 = vmatpush2.msra.mxu0 0.0
        %4845 = vmatprep.subr.mxu0 0.0
        %4846 = vmatpush2.msra.mxu0 0.0
        %4847 = vmatprep.subr.mxu0 0.0
        %4848 = vmatpush2.msra.mxu0 0.0
        %4849 = vmatprep.subr.mxu0 0.0
        %4850 = vmatpush2.msra.mxu0 0.0
        %4851 = vmatprep.subr.mxu0 0.0
        %4852 = vmatpush2.msra.mxu0 0.0
        %4853 = vmatprep.subr.mxu0 0.0
        %4854 = vmatpush2.msra.mxu0 0.0
        %4855 = vmatprep.subr.mxu0 0.0
        %4856 = vmatpush2.msra.mxu0 0.0
        %4857 = vmatprep.subr.mxu0 0.0
        %4858 = vmatpush2.msra.mxu0 0.0
        %4859 = vmatprep.subr.mxu0 0.0
        %4860 = vmatpush2.msra.mxu0 0.0
        %4861 = vmatprep.subr.mxu0 0.0
        %4862 = vmatpush2.msra.mxu0 0.0
        %4863 = vmatprep.mubr.f32.mxu0 0.0
        %4864 = vmatmul.mubr.f32.gmra.mxu0 %v4794
        %v4865 = vpop.f32.mrf.mxu0
        %v4866 = vadd.f32 0.0, %v4865
        %v4867 = vpop.f32.mrf.mxu0
        %4868 = vmatprep.mubr.f32.mxu0 0.0
        %4869 = vmatmul.mubr.f32.gmra.mxu0 %v4797
        %v4870 = vpop.f32.mrf.mxu0
        %v4871 = vadd.f32 0.0, %v4870
        %v4872 = vpop.f32.mrf.mxu0
        %4873 = vdwg.mxu0
        %v4874 = vrcp.pop %v4783
        %v4875 = vrcp.pop %v4786
        %v4876 = vmul.f32 %v4866, %v4874
        %v4877 = vmul.f32 %v4871, %v4875
        %4878 = vrot.lane.b32.xlu0 %v4037, 96
        %v4879 = vpop.permute.xlu0 %4878
        %4880 = vrot.lane.b32.xlu0 %v4041, 96
        %v4881 = vpop.permute.xlu0 %4880
        %4882 = vrot.lane.b32.xlu0 %v4039, 96
        %v4883 = vpop.permute.xlu0 %4882
        %4884 = vrot.lane.b32.xlu0 %v4043, 96
        %v4885 = vpop.permute.xlu0 %4884
        %v4886 = vsel %vm753, %v4879, 0
        %v4888 = vsel %vm753, %v4881, 0
        %v4890 = vsel %vm753, %v4883, 0
        %v4892 = vsel %vm753, %v4885, 0
        %4894 = vmatprep.subr.mxu0 0.0
        %4895 = vmatpush1.xpose.msra.mxu0 0.0
        %4896 = vmatprep.subr.mxu0 0.0
        %4897 = vmatpush1.xpose.msra.mxu0 0.0
        %4898 = vmatprep.subr.mxu0 0.0
        %4899 = vmatpush1.xpose.msra.mxu0 0.0
        %4900 = vmatprep.subr.mxu0 0.0
        %4901 = vmatpush1.xpose.msra.mxu0 0.0
        %4902 = vmatprep.subr.mxu0 0.0
        %4903 = vmatpush1.xpose.msra.mxu0 0.0
        %4904 = vmatprep.subr.mxu0 0.0
        %4905 = vmatpush1.xpose.msra.mxu0 0.0
        %4906 = vmatprep.subr.mxu0 0.0
        %4907 = vmatpush1.xpose.msra.mxu0 0.0
        %4908 = vmatprep.subr.mxu0 0.0
        %4909 = vmatpush1.xpose.msra.mxu0 0.0
        %4910 = vmatprep.subr.mxu0 0.0
        %4911 = vmatpush1.xpose.msra.mxu0 0.0
        %4912 = vmatprep.subr.mxu0 0.0
        %4913 = vmatpush1.xpose.msra.mxu0 0.0
        %4914 = vmatprep.subr.mxu0 0.0
        %4915 = vmatpush1.xpose.msra.mxu0 0.0
        %4916 = vmatprep.subr.mxu0 0.0
        %4917 = vmatpush1.xpose.msra.mxu0 0.0
        %4918 = vmatprep.subr.mxu0 0.0
        %4919 = vmatpush1.xpose.msra.mxu0 0.0
        %4920 = vmatprep.subr.mxu0 0.0
        %4921 = vmatpush1.xpose.msra.mxu0 0.0
        %4922 = vmatprep.subr.mxu0 0.0
        %4923 = vmatpush1.xpose.msra.mxu0 %v4892
        %4924 = vmatprep.subr.mxu0 0.0
        %4925 = vmatpush1.xpose.msra.mxu0 %v4890
        %4926 = vmatprep.subr.mxu0 0.0
        %4927 = vmatpush2.xpose.msra.mxu0 0.0
        %4928 = vmatprep.subr.mxu0 0.0
        %4929 = vmatpush2.xpose.msra.mxu0 0.0
        %4930 = vmatprep.subr.mxu0 0.0
        %4931 = vmatpush2.xpose.msra.mxu0 0.0
        %4932 = vmatprep.subr.mxu0 0.0
        %4933 = vmatpush2.xpose.msra.mxu0 0.0
        %4934 = vmatprep.subr.mxu0 0.0
        %4935 = vmatpush2.xpose.msra.mxu0 0.0
        %4936 = vmatprep.subr.mxu0 0.0
        %4937 = vmatpush2.xpose.msra.mxu0 0.0
        %4938 = vmatprep.subr.mxu0 0.0
        %4939 = vmatpush2.xpose.msra.mxu0 0.0
        %4940 = vmatprep.subr.mxu0 0.0
        %4941 = vmatpush2.xpose.msra.mxu0 0.0
        %4942 = vmatprep.subr.mxu0 0.0
        %4943 = vmatpush2.xpose.msra.mxu0 0.0
        %4944 = vmatprep.subr.mxu0 0.0
        %4945 = vmatpush2.xpose.msra.mxu0 0.0
        %4946 = vmatprep.subr.mxu0 0.0
        %4947 = vmatpush2.xpose.msra.mxu0 0.0
        %4948 = vmatprep.subr.mxu0 0.0
        %4949 = vmatpush2.xpose.msra.mxu0 0.0
        %4950 = vmatprep.subr.mxu0 0.0
        %4951 = vmatpush2.xpose.msra.mxu0 0.0
        %4952 = vmatprep.subr.mxu0 0.0
        %4953 = vmatpush2.xpose.msra.mxu0 0.0
        %4954 = vmatprep.subr.mxu0 0.0
        %4955 = vmatpush2.xpose.msra.mxu0 0.0
        %4956 = vmatprep.subr.mxu0 0.0
        %4957 = vmatpush2.xpose.msra.mxu0 0.0
        %4958 = vmatprep.mubr.f32.mxu0 0.0
        %4959 = vmatmul.mubr.f32.gmra.mxu0 %v4886
        %v4960 = vpop.f32.mrf.mxu0
        %v4961 = vadd.f32 0.0, %v4960
        %v4962 = vpop.f32.mrf.mxu0
        %4963 = vmatprep.mubr.f32.mxu0 0.0
        %4964 = vmatmul.mubr.f32.gmra.mxu0 %v4888
        %v4965 = vpop.f32.mrf.mxu0
        %v4966 = vadd.f32 0.0, %v4965
        %v4967 = vpop.f32.mrf.mxu0
        %4968 = vdwg.mxu0
        %v4969 = vsel %vm841, %v4961, -inf
        %4970 = vmax.xlane.f32.xlu0 %v4969
        %v4971 = vpop.xlane.xlu0 %4970
        %v4972 = vsel %vm841, %v4966, -inf
        %4973 = vmax.xlane.f32.xlu0 %v4972
        %v4974 = vpop.xlane.xlu0 %4973
        %v4975 = vsub.f32 %v4961, %v4971
        %v4976 = vsub.f32 %v4966, %v4974
        %v4977 = vmul.f32 %v4975, 1.442695
        %v4978 = vpow.pop %v4977
        %v4979 = vmul.f32 %v4976, 1.442695
        %v4980 = vpow.pop %v4979
        %v4981 = vsel %vm841, %v4978, 0.0
        %4982 = vadd.xlane.f32.xlu0 %v4981
        %v4983 = vpop.xlane.xlu0 %4982
        %v4984 = vsel %vm841, %v4980, 0.0
        %4985 = vadd.xlane.f32.xlu0 %v4984
        %v4986 = vpop.xlane.xlu0 %4985
        %4987 = vrot.lane.b32.xlu0 %v4080, 96
        %v4988 = vpop.permute.xlu0 %4987
        %4989 = vrot.lane.b32.xlu0 %v4083, 96
        %v4990 = vpop.permute.xlu0 %4989
        %v4994 = vsel %vm841, %v4978, 0
        %v4997 = vsel %vm841, %v4980, 0
        %4999 = vmatprep.subr.mxu0 0.0
        %5000 = vmatpush1.msra.mxu0 0.0
        %5001 = vmatprep.subr.mxu0 0.0
        %5002 = vmatpush1.msra.mxu0 0.0
        %5003 = vmatprep.subr.mxu0 0.0
        %5004 = vmatpush1.msra.mxu0 0.0
        %5005 = vmatprep.subr.mxu0 0.0
        %5006 = vmatpush1.msra.mxu0 0.0
        %5007 = vmatprep.subr.mxu0 0.0
        %5008 = vmatpush1.msra.mxu0 0.0
        %5009 = vmatprep.subr.mxu0 0.0
        %5010 = vmatpush1.msra.mxu0 0.0
        %5011 = vmatprep.subr.mxu0 0.0
        %5012 = vmatpush1.msra.mxu0 0.0
        %5013 = vmatprep.subr.mxu0 0.0
        %5014 = vmatpush1.msra.mxu0 0.0
        %5015 = vmatprep.subr.mxu0 0.0
        %5016 = vmatpush1.msra.mxu0 0.0
        %5017 = vmatprep.subr.mxu0 0.0
        %5018 = vmatpush1.msra.mxu0 0.0
        %5019 = vmatprep.subr.mxu0 0.0
        %5020 = vmatpush1.msra.mxu0 0.0
        %5021 = vmatprep.subr.mxu0 0.0
        %5022 = vmatpush1.msra.mxu0 0.0
        %5023 = vmatprep.subr.mxu0 0.0
        %5024 = vmatpush1.msra.mxu0 0.0
        %5025 = vmatprep.subr.mxu0 0.0
        %5026 = vmatpush1.msra.mxu0 0.0
        %5027 = vmatprep.subr.mxu0 0.0
        %5028 = vmatpush1.msra.mxu0 %v4990
        %5029 = vmatprep.subr.mxu0 0.0
        %5030 = vmatpush1.msra.mxu0 %v4988
        %5031 = vmatprep.subr.mxu0 0.0
        %5032 = vmatpush2.msra.mxu0 0.0
        %5033 = vmatprep.subr.mxu0 0.0
        %5034 = vmatpush2.msra.mxu0 0.0
        %5035 = vmatprep.subr.mxu0 0.0
        %5036 = vmatpush2.msra.mxu0 0.0
        %5037 = vmatprep.subr.mxu0 0.0
        %5038 = vmatpush2.msra.mxu0 0.0
        %5039 = vmatprep.subr.mxu0 0.0
        %5040 = vmatpush2.msra.mxu0 0.0
        %5041 = vmatprep.subr.mxu0 0.0
        %5042 = vmatpush2.msra.mxu0 0.0
        %5043 = vmatprep.subr.mxu0 0.0
        %5044 = vmatpush2.msra.mxu0 0.0
        %5045 = vmatprep.subr.mxu0 0.0
        %5046 = vmatpush2.msra.mxu0 0.0
        %5047 = vmatprep.subr.mxu0 0.0
        %5048 = vmatpush2.msra.mxu0 0.0
        %5049 = vmatprep.subr.mxu0 0.0
        %5050 = vmatpush2.msra.mxu0 0.0
        %5051 = vmatprep.subr.mxu0 0.0
        %5052 = vmatpush2.msra.mxu0 0.0
        %5053 = vmatprep.subr.mxu0 0.0
        %5054 = vmatpush2.msra.mxu0 0.0
        %5055 = vmatprep.subr.mxu0 0.0
        %5056 = vmatpush2.msra.mxu0 0.0
        %5057 = vmatprep.subr.mxu0 0.0
        %5058 = vmatpush2.msra.mxu0 0.0
        %5059 = vmatprep.subr.mxu0 0.0
        %5060 = vmatpush2.msra.mxu0 0.0
        %5061 = vmatprep.subr.mxu0 0.0
        %5062 = vmatpush2.msra.mxu0 0.0
        %5063 = vmatprep.mubr.f32.mxu0 0.0
        %5064 = vmatmul.mubr.f32.gmra.mxu0 %v4994
        %v5065 = vpop.f32.mrf.mxu0
        %v5066 = vadd.f32 0.0, %v5065
        %v5067 = vpop.f32.mrf.mxu0
        %5068 = vmatprep.mubr.f32.mxu0 0.0
        %5069 = vmatmul.mubr.f32.gmra.mxu0 %v4997
        %v5070 = vpop.f32.mrf.mxu0
        %v5071 = vadd.f32 0.0, %v5070
        %v5072 = vpop.f32.mrf.mxu0
        %5073 = vdwg.mxu0
        %v5074 = vrcp.pop %v4983
        %v5075 = vrcp.pop %v4986
        %v5076 = vmul.f32 %v5066, %v5074
        %v5077 = vmul.f32 %v5071, %v5075
        %5078 = vrot.lane.b32.xlu0 %v4037, 88
        %v5079 = vpop.permute.xlu0 %5078
        %5080 = vrot.lane.b32.xlu0 %v4041, 88
        %v5081 = vpop.permute.xlu0 %5080
        %5082 = vrot.lane.b32.xlu0 %v4039, 88
        %v5083 = vpop.permute.xlu0 %5082
        %5084 = vrot.lane.b32.xlu0 %v4043, 88
        %v5085 = vpop.permute.xlu0 %5084
        %v5086 = vsel %vm753, %v5079, 0
        %v5088 = vsel %vm753, %v5081, 0
        %v5090 = vsel %vm753, %v5083, 0
        %v5092 = vsel %vm753, %v5085, 0
        %5094 = vmatprep.subr.mxu0 0.0
        %5095 = vmatpush1.xpose.msra.mxu0 0.0
        %5096 = vmatprep.subr.mxu0 0.0
        %5097 = vmatpush1.xpose.msra.mxu0 0.0
        %5098 = vmatprep.subr.mxu0 0.0
        %5099 = vmatpush1.xpose.msra.mxu0 0.0
        %5100 = vmatprep.subr.mxu0 0.0
        %5101 = vmatpush1.xpose.msra.mxu0 0.0
        %5102 = vmatprep.subr.mxu0 0.0
        %5103 = vmatpush1.xpose.msra.mxu0 0.0
        %5104 = vmatprep.subr.mxu0 0.0
        %5105 = vmatpush1.xpose.msra.mxu0 0.0
        %5106 = vmatprep.subr.mxu0 0.0
        %5107 = vmatpush1.xpose.msra.mxu0 0.0
        %5108 = vmatprep.subr.mxu0 0.0
        %5109 = vmatpush1.xpose.msra.mxu0 0.0
        %5110 = vmatprep.subr.mxu0 0.0
        %5111 = vmatpush1.xpose.msra.mxu0 0.0
        %5112 = vmatprep.subr.mxu0 0.0
        %5113 = vmatpush1.xpose.msra.mxu0 0.0
        %5114 = vmatprep.subr.mxu0 0.0
        %5115 = vmatpush1.xpose.msra.mxu0 0.0
        %5116 = vmatprep.subr.mxu0 0.0
        %5117 = vmatpush1.xpose.msra.mxu0 0.0
        %5118 = vmatprep.subr.mxu0 0.0
        %5119 = vmatpush1.xpose.msra.mxu0 0.0
        %5120 = vmatprep.subr.mxu0 0.0
        %5121 = vmatpush1.xpose.msra.mxu0 0.0
        %5122 = vmatprep.subr.mxu0 0.0
        %5123 = vmatpush1.xpose.msra.mxu0 %v5092
        %5124 = vmatprep.subr.mxu0 0.0
        %5125 = vmatpush1.xpose.msra.mxu0 %v5090
        %5126 = vmatprep.subr.mxu0 0.0
        %5127 = vmatpush2.xpose.msra.mxu0 0.0
        %5128 = vmatprep.subr.mxu0 0.0
        %5129 = vmatpush2.xpose.msra.mxu0 0.0
        %5130 = vmatprep.subr.mxu0 0.0
        %5131 = vmatpush2.xpose.msra.mxu0 0.0
        %5132 = vmatprep.subr.mxu0 0.0
        %5133 = vmatpush2.xpose.msra.mxu0 0.0
        %5134 = vmatprep.subr.mxu0 0.0
        %5135 = vmatpush2.xpose.msra.mxu0 0.0
        %5136 = vmatprep.subr.mxu0 0.0
        %5137 = vmatpush2.xpose.msra.mxu0 0.0
        %5138 = vmatprep.subr.mxu0 0.0
        %5139 = vmatpush2.xpose.msra.mxu0 0.0
        %5140 = vmatprep.subr.mxu0 0.0
        %5141 = vmatpush2.xpose.msra.mxu0 0.0
        %5142 = vmatprep.subr.mxu0 0.0
        %5143 = vmatpush2.xpose.msra.mxu0 0.0
        %5144 = vmatprep.subr.mxu0 0.0
        %5145 = vmatpush2.xpose.msra.mxu0 0.0
        %5146 = vmatprep.subr.mxu0 0.0
        %5147 = vmatpush2.xpose.msra.mxu0 0.0
        %5148 = vmatprep.subr.mxu0 0.0
        %5149 = vmatpush2.xpose.msra.mxu0 0.0
        %5150 = vmatprep.subr.mxu0 0.0
        %5151 = vmatpush2.xpose.msra.mxu0 0.0
        %5152 = vmatprep.subr.mxu0 0.0
        %5153 = vmatpush2.xpose.msra.mxu0 0.0
        %5154 = vmatprep.subr.mxu0 0.0
        %5155 = vmatpush2.xpose.msra.mxu0 0.0
        %5156 = vmatprep.subr.mxu0 0.0
        %5157 = vmatpush2.xpose.msra.mxu0 0.0
        %5158 = vmatprep.mubr.f32.mxu0 0.0
        %5159 = vmatmul.mubr.f32.gmra.mxu0 %v5086
        %v5160 = vpop.f32.mrf.mxu0
        %v5161 = vadd.f32 0.0, %v5160
        %v5162 = vpop.f32.mrf.mxu0
        %5163 = vmatprep.mubr.f32.mxu0 0.0
        %5164 = vmatmul.mubr.f32.gmra.mxu0 %v5088
        %v5165 = vpop.f32.mrf.mxu0
        %v5166 = vadd.f32 0.0, %v5165
        %v5167 = vpop.f32.mrf.mxu0
        %5168 = vdwg.mxu0
        %v5169 = vsel %vm841, %v5161, -inf
        %5170 = vmax.xlane.f32.xlu0 %v5169
        %v5171 = vpop.xlane.xlu0 %5170
        %v5172 = vsel %vm841, %v5166, -inf
        %5173 = vmax.xlane.f32.xlu0 %v5172
        %v5174 = vpop.xlane.xlu0 %5173
        %v5175 = vsub.f32 %v5161, %v5171
        %v5176 = vsub.f32 %v5166, %v5174
        %v5177 = vmul.f32 %v5175, 1.442695
        %v5178 = vpow.pop %v5177
        %v5179 = vmul.f32 %v5176, 1.442695
        %v5180 = vpow.pop %v5179
        %v5181 = vsel %vm841, %v5178, 0.0
        %5182 = vadd.xlane.f32.xlu0 %v5181
        %v5183 = vpop.xlane.xlu0 %5182
        %v5184 = vsel %vm841, %v5180, 0.0
        %5185 = vadd.xlane.f32.xlu0 %v5184
        %v5186 = vpop.xlane.xlu0 %5185
        %5187 = vrot.lane.b32.xlu0 %v4080, 88
        %v5188 = vpop.permute.xlu0 %5187
        %5189 = vrot.lane.b32.xlu0 %v4083, 88
        %v5190 = vpop.permute.xlu0 %5189
        %v5194 = vsel %vm841, %v5178, 0
        %v5197 = vsel %vm841, %v5180, 0
        %5199 = vmatprep.subr.mxu0 0.0
        %5200 = vmatpush1.msra.mxu0 0.0
        %5201 = vmatprep.subr.mxu0 0.0
        %5202 = vmatpush1.msra.mxu0 0.0
        %5203 = vmatprep.subr.mxu0 0.0
        %5204 = vmatpush1.msra.mxu0 0.0
        %5205 = vmatprep.subr.mxu0 0.0
        %5206 = vmatpush1.msra.mxu0 0.0
        %5207 = vmatprep.subr.mxu0 0.0
        %5208 = vmatpush1.msra.mxu0 0.0
        %5209 = vmatprep.subr.mxu0 0.0
        %5210 = vmatpush1.msra.mxu0 0.0
        %5211 = vmatprep.subr.mxu0 0.0
        %5212 = vmatpush1.msra.mxu0 0.0
        %5213 = vmatprep.subr.mxu0 0.0
        %5214 = vmatpush1.msra.mxu0 0.0
        %5215 = vmatprep.subr.mxu0 0.0
        %5216 = vmatpush1.msra.mxu0 0.0
        %5217 = vmatprep.subr.mxu0 0.0
        %5218 = vmatpush1.msra.mxu0 0.0
        %5219 = vmatprep.subr.mxu0 0.0
        %5220 = vmatpush1.msra.mxu0 0.0
        %5221 = vmatprep.subr.mxu0 0.0
        %5222 = vmatpush1.msra.mxu0 0.0
        %5223 = vmatprep.subr.mxu0 0.0
        %5224 = vmatpush1.msra.mxu0 0.0
        %5225 = vmatprep.subr.mxu0 0.0
        %5226 = vmatpush1.msra.mxu0 0.0
        %5227 = vmatprep.subr.mxu0 0.0
        %5228 = vmatpush1.msra.mxu0 %v5190
        %5229 = vmatprep.subr.mxu0 0.0
        %5230 = vmatpush1.msra.mxu0 %v5188
        %5231 = vmatprep.subr.mxu0 0.0
        %5232 = vmatpush2.msra.mxu0 0.0
        %5233 = vmatprep.subr.mxu0 0.0
        %5234 = vmatpush2.msra.mxu0 0.0
        %5235 = vmatprep.subr.mxu0 0.0
        %5236 = vmatpush2.msra.mxu0 0.0
        %5237 = vmatprep.subr.mxu0 0.0
        %5238 = vmatpush2.msra.mxu0 0.0
        %5239 = vmatprep.subr.mxu0 0.0
        %5240 = vmatpush2.msra.mxu0 0.0
        %5241 = vmatprep.subr.mxu0 0.0
        %5242 = vmatpush2.msra.mxu0 0.0
        %5243 = vmatprep.subr.mxu0 0.0
        %5244 = vmatpush2.msra.mxu0 0.0
        %5245 = vmatprep.subr.mxu0 0.0
        %5246 = vmatpush2.msra.mxu0 0.0
        %5247 = vmatprep.subr.mxu0 0.0
        %5248 = vmatpush2.msra.mxu0 0.0
        %5249 = vmatprep.subr.mxu0 0.0
        %5250 = vmatpush2.msra.mxu0 0.0
        %5251 = vmatprep.subr.mxu0 0.0
        %5252 = vmatpush2.msra.mxu0 0.0
        %5253 = vmatprep.subr.mxu0 0.0
        %5254 = vmatpush2.msra.mxu0 0.0
        %5255 = vmatprep.subr.mxu0 0.0
        %5256 = vmatpush2.msra.mxu0 0.0
        %5257 = vmatprep.subr.mxu0 0.0
        %5258 = vmatpush2.msra.mxu0 0.0
        %5259 = vmatprep.subr.mxu0 0.0
        %5260 = vmatpush2.msra.mxu0 0.0
        %5261 = vmatprep.subr.mxu0 0.0
        %5262 = vmatpush2.msra.mxu0 0.0
        %5263 = vmatprep.mubr.f32.mxu0 0.0
        %5264 = vmatmul.mubr.f32.gmra.mxu0 %v5194
        %v5265 = vpop.f32.mrf.mxu0
        %v5266 = vadd.f32 0.0, %v5265
        %v5267 = vpop.f32.mrf.mxu0
        %5268 = vmatprep.mubr.f32.mxu0 0.0
        %5269 = vmatmul.mubr.f32.gmra.mxu0 %v5197
        %v5270 = vpop.f32.mrf.mxu0
        %v5271 = vadd.f32 0.0, %v5270
        %v5272 = vpop.f32.mrf.mxu0
        %5273 = vdwg.mxu0
        %v5274 = vrcp.pop %v5183
        %v5275 = vrcp.pop %v5186
        %v5276 = vmul.f32 %v5266, %v5274
        %v5277 = vmul.f32 %v5271, %v5275
        %5280 = vrot.lane.b32.xlu0 %v4476, 8
        %v5281 = vpop.permute.xlu0 %5280
        %5282 = vrot.lane.b32.xlu0 %v4477, 8
        %v5283 = vpop.permute.xlu0 %5282
        %5288 = vrot.lane.b32.xlu0 %v4676, 16
        %v5289 = vpop.permute.xlu0 %5288
        %5290 = vrot.lane.b32.xlu0 %v4677, 16
        %v5291 = vpop.permute.xlu0 %5290
        %5296 = vrot.lane.b32.xlu0 %v4876, 24
        %v5297 = vpop.permute.xlu0 %5296
        %5298 = vrot.lane.b32.xlu0 %v4877, 24
        %v5299 = vpop.permute.xlu0 %5298
        %5304 = vrot.lane.b32.xlu0 %v5076, 32
        %v5305 = vpop.permute.xlu0 %5304
        %5306 = vrot.lane.b32.xlu0 %v5077, 32
        %v5307 = vpop.permute.xlu0 %5306
        %5312 = vrot.lane.b32.xlu0 %v5276, 40
        %v5313 = vpop.permute.xlu0 %5312
        %5314 = vrot.lane.b32.xlu0 %v5277, 40
        %v5315 = vpop.permute.xlu0 %5314
        %v5318 = vsel %vm753, %v4274, %v5281
        %v5319 = vsel %vm753, %v4275, %v5283
        %v5320 = vsel %vm841, %v5318, %v5289
        %v5321 = vsel %vm841, %v5319, %v5291
        %v5322 = vsel %vm3239, %v5320, %v5297
        %v5323 = vsel %vm3239, %v5321, %v5299
        %v5324 = vsel %vm3242, %v5322, %v5305
        %v5325 = vsel %vm3242, %v5323, %v5307
        %v5326 = vsel %vm3245, %v5324, %v5313
        %v5327 = vsel %vm3245, %v5325, %v5315
        %v5328 = vsel %vm3248, %v5326, 0.0
        %v5329 = vsel %vm3248, %v5327, 0.0
        %v5330 = vpack.c.bf16 %v5329, %v5328
        %s5331 = scalar_lea.vmem %s3, 64
        %v5332 = vld [vmem:[%s5331] sm:$0xf]
        %v5333 = vld [vmem:[%s5331 + $0x4] sm:$0xf]
        %v5334 = vld [vmem:[%s5331 + $0x8] sm:$0xf]
        %v5335 = vld [vmem:[%s5331 + $0xc] sm:$0xf]
        %v5336 = vld [vmem:[%s5331 + $0x10] sm:$0xf]
        %v5337 = vld [vmem:[%s5331 + $0x14] sm:$0xf]
        %v5338 = vld [vmem:[%s5331 + $0x18] sm:$0xf]
        %v5339 = vld [vmem:[%s5331 + $0x1c] sm:$0xf]
        %v5340 = vld [vmem:[%s5331 + $0x20] sm:$0xf]
        %v5341 = vld [vmem:[%s5331 + $0x24] sm:$0xf]
        %v5342 = vld [vmem:[%s5331 + $0x28] sm:$0xf]
        %v5343 = vld [vmem:[%s5331 + $0x2c] sm:$0xf]
        %v5344 = vld [vmem:[%s5331 + $0x30] sm:$0xf]
        %v5345 = vld [vmem:[%s5331 + $0x34] sm:$0xf]
        %v5346 = vld [vmem:[%s5331 + $0x38] sm:$0xf]
        %v5347 = vld [vmem:[%s5331 + $0x3c] sm:$0xf]
        %s5348 = scalar_lea.vmem %s4, 1
        %v5349 = vld [vmem:[%s5348] sm:$0x1]
        %v5351 = vlaneseq
        %v5352 = vshrl.u32 %v5351, 7
        %v5353 = vsub.s32 0, %v5352
        %v5354 = vrot.slane %v5349, %v5353
        %v5372 = vunpack.c.l.b16 %v5332
        %v5373 = vunpack.c.l.b16 %v5333
        %v5374 = vunpack.c.l.b16 %v5334
        %v5375 = vunpack.c.l.b16 %v5335
        %v5376 = vunpack.c.l.b16 %v5336
        %v5377 = vunpack.c.l.b16 %v5337
        %v5378 = vunpack.c.l.b16 %v5338
        %v5379 = vunpack.c.l.b16 %v5339
        %v5380 = vunpack.c.l.b16 %v5340
        %v5381 = vunpack.c.l.b16 %v5341
        %v5382 = vunpack.c.l.b16 %v5342
        %v5383 = vunpack.c.l.b16 %v5343
        %v5384 = vunpack.c.l.b16 %v5344
        %v5385 = vunpack.c.l.b16 %v5345
        %v5386 = vunpack.c.l.b16 %v5346
        %v5387 = vunpack.c.l.b16 %v5347
        %v5388 = vpack.c.b16 %v5373, %v5372
        %v5389 = vpack.c.b16 %v5375, %v5374
        %v5390 = vpack.c.b16 %v5377, %v5376
        %v5391 = vpack.c.b16 %v5379, %v5378
        %v5392 = vpack.c.b16 %v5381, %v5380
        %v5393 = vpack.c.b16 %v5383, %v5382
        %v5394 = vpack.c.b16 %v5385, %v5384
        %v5395 = vpack.c.b16 %v5387, %v5386
        %5404 = vmatprep.subr.bf16.mxu0 0
        %5405 = vmatpush1.bf16.msra.mxu0 %v5395
        %5406 = vmatprep.subr.bf16.mxu0 0
        %5407 = vmatpush1.bf16.msra.mxu0 %v5394
        %5408 = vmatprep.subr.bf16.mxu0 0
        %5409 = vmatpush1.bf16.msra.mxu0 %v5393
        %5410 = vmatprep.subr.bf16.mxu0 0
        %5411 = vmatpush1.bf16.msra.mxu0 %v5392
        %5412 = vmatprep.subr.bf16.mxu0 0
        %5413 = vmatpush1.bf16.msra.mxu0 %v5391
        %5414 = vmatprep.subr.bf16.mxu0 0
        %5415 = vmatpush1.bf16.msra.mxu0 %v5390
        %5416 = vmatprep.subr.bf16.mxu0 0
        %5417 = vmatpush1.bf16.msra.mxu0 %v5389
        %5418 = vmatprep.subr.bf16.mxu0 0
        %5419 = vmatpush1.bf16.msra.mxu0 %v5388
        %5420 = vmatprep.subr.bf16.mxu0 0
        %5421 = vmatpush2.bf16.msra.mxu0 0
        %5422 = vmatprep.subr.bf16.mxu0 0
        %5423 = vmatpush2.bf16.msra.mxu0 0
        %5424 = vmatprep.subr.bf16.mxu0 0
        %5425 = vmatpush2.bf16.msra.mxu0 0
        %5426 = vmatprep.subr.bf16.mxu0 0
        %5427 = vmatpush2.bf16.msra.mxu0 0
        %5428 = vmatprep.subr.bf16.mxu0 0
        %5429 = vmatpush2.bf16.msra.mxu0 0
        %5430 = vmatprep.subr.bf16.mxu0 0
        %5431 = vmatpush2.bf16.msra.mxu0 0
        %5432 = vmatprep.subr.bf16.mxu0 0
        %5433 = vmatpush2.bf16.msra.mxu0 0
        %5434 = vmatprep.subr.bf16.mxu0 0
        %5435 = vmatpush2.bf16.msra.mxu0 0
        %5436 = vmatprep.mubr.bf16.mxu0 0
        %5437 = vmatmul.mubr.bf16.gmra.mxu0 %v5330
        %v5438 = vpop.f32.mrf.mxu0
        %v5439 = vadd.f32 %v5354, %v5438
        %v5440 = vpop.f32.mrf.mxu0
        %v5441 = vpop.f32.mrf.mxu0
        %v5442 = vadd.f32 %v5354, %v5441
        %v5443 = vpop.f32.mrf.mxu0
        %5444 = vdwg.mxu0
        %v5445 = vadd.f32 %v3820, %v5439
        %v5446 = vadd.f32 %v3821, %v5442
        %s5447 = scalar_lea.vmem %s5, 1
        %v5448 = vld [vmem:[%s5447] sm:$0x1]
        %s5449 = scalar_lea.vmem %s6, 1
        %v5450 = vld [vmem:[%s5449] sm:$0x1]
        %5451 = vadd.xlane.f32.xlu0 %v5445
        %v5452 = vpop.xlane.xlu0 %5451
        %5453 = vadd.xlane.f32.xlu0 %v5446
        %v5454 = vpop.xlane.xlu0 %5453
        %v5455 = vmul.f32 %v5452, 0.010416667
        %v5456 = vmul.f32 %v5454, 0.010416667
        %v5457 = vsub.f32 %v5445, %v5455
        %v5458 = vsub.f32 %v5446, %v5456
        %v5459 = vmul.f32 %v5457, %v488
        %v5460 = vmul.f32 %v5458, %v488
        %v5461 = vmul.f32 %v5459, %v5459
        %v5462 = vmul.f32 %v5460, %v5460
        %5463 = vadd.xlane.f32.xlu0 %v5461
        %v5464 = vpop.xlane.xlu0 %5463
        %5465 = vadd.xlane.f32.xlu0 %v5462
        %v5466 = vpop.xlane.xlu0 %5465
        %v5467 = vmul.f32 %v5464, 0.010416667
        %v5468 = vmul.f32 %v5466, 0.010416667
        %v5469 = vadd.f32 %v5467, 1e-05
        %v5470 = vadd.f32 %v5468, 1e-05
        %v5471 = vrsqrt.pop %v5469
        %v5472 = vrsqrt.pop %v5470
        %v5473 = vmul.f32 %v5459, %v5471
        %v5474 = vmul.f32 %v5460, %v5472
        %v5476 = vlaneseq
        %v5477 = vshrl.u32 %v5476, 7
        %v5478 = vsub.s32 0, %v5477
        %v5479 = vrot.slane %v5448, %v5478
        %v5481 = vmul.f32 %v5473, %v5479
        %v5482 = vmul.f32 %v5474, %v5479
        %v5484 = vlaneseq
        %v5485 = vshrl.u32 %v5484, 7
        %v5486 = vsub.s32 0, %v5485
        %v5487 = vrot.slane %v5450, %v5486
        %v5489 = vadd.f32 %v5481, %v5487
        %v5490 = vadd.f32 %v5482, %v5487
        %v5491 = vpack.c.bf16 %v5490, %v5489
        %s5492 = scalar_lea.vmem [#allocation5], 128
        %v5493 = vld [vmem:[%s5492] sm:$0xff]
        %v5494 = vld [vmem:[%s5492 + $0x8] sm:$0xff]
        %v5495 = vld [vmem:[%s5492 + $0x10] sm:$0xff]
        %v5496 = vld [vmem:[%s5492 + $0x18] sm:$0xff]
        %v5497 = vld [vmem:[%s5492 + $0x20] sm:$0xff]
        %v5498 = vld [vmem:[%s5492 + $0x28] sm:$0xff]
        %v5499 = vld [vmem:[%s5492 + $0x30] sm:$0xff]
        %v5500 = vld [vmem:[%s5492 + $0x38] sm:$0xff]
        %v5501 = vld [vmem:[%s5492 + $0x40] sm:$0xff]
        %v5502 = vld [vmem:[%s5492 + $0x48] sm:$0xff]
        %v5503 = vld [vmem:[%s5492 + $0x50] sm:$0xff]
        %v5504 = vld [vmem:[%s5492 + $0x58] sm:$0xff]
        %v5505 = vld [vmem:[%s5492 + $0x60] sm:$0xff]
        %v5506 = vld [vmem:[%s5492 + $0x68] sm:$0xff]
        %v5507 = vld [vmem:[%s5492 + $0x70] sm:$0xff]
        %v5508 = vld [vmem:[%s5492 + $0x78] sm:$0xff]
        %s5509 = scalar_lea.vmem %s8, 2
        %v5510 = vld [vmem:[%s5509] sm:$0x3]
        %v5512 = vlaneseq
        %v5513 = vshrl.u32 %v5512, 7
        %v5514 = vsub.s32 0, %v5513
        %v5515 = vrot.slane %v5510, %v5514
        %v5516 = vlaneseq
        %v5517 = vshrl.u32 %v5516, 7
        %v5518 = vsub.s32 1, %v5517
        %v5519 = vrot.slane %v5510, %v5518
        %v5538 = vunpack.c.l.b16 %v5493
        %v5539 = vunpack.c.h.b16 %v5493
        %v5540 = vunpack.c.l.b16 %v5494
        %v5541 = vunpack.c.h.b16 %v5494
        %v5542 = vunpack.c.l.b16 %v5495
        %v5543 = vunpack.c.h.b16 %v5495
        %v5544 = vunpack.c.l.b16 %v5496
        %v5545 = vunpack.c.h.b16 %v5496
        %v5546 = vunpack.c.l.b16 %v5497
        %v5547 = vunpack.c.h.b16 %v5497
        %v5548 = vunpack.c.l.b16 %v5498
        %v5549 = vunpack.c.h.b16 %v5498
        %v5550 = vunpack.c.l.b16 %v5499
        %v5551 = vunpack.c.h.b16 %v5499
        %v5552 = vunpack.c.l.b16 %v5500
        %v5553 = vunpack.c.h.b16 %v5500
        %v5554 = vunpack.c.l.b16 %v5501
        %v5555 = vunpack.c.h.b16 %v5501
        %v5556 = vunpack.c.l.b16 %v5502
        %v5557 = vunpack.c.h.b16 %v5502
        %v5558 = vunpack.c.l.b16 %v5503
        %v5559 = vunpack.c.h.b16 %v5503
        %v5560 = vunpack.c.l.b16 %v5504
        %v5561 = vunpack.c.h.b16 %v5504
        %v5562 = vunpack.c.l.b16 %v5505
        %v5563 = vunpack.c.h.b16 %v5505
        %v5564 = vunpack.c.l.b16 %v5506
        %v5565 = vunpack.c.h.b16 %v5506
        %v5566 = vunpack.c.l.b16 %v5507
        %v5567 = vunpack.c.h.b16 %v5507
        %v5568 = vunpack.c.l.b16 %v5508
        %v5569 = vunpack.c.h.b16 %v5508
        %v5570 = vpack.c.b16 %v5540, %v5538
        %v5571 = vpack.c.b16 %v5541, %v5539
        %v5572 = vpack.c.b16 %v5544, %v5542
        %v5573 = vpack.c.b16 %v5545, %v5543
        %v5574 = vpack.c.b16 %v5548, %v5546
        %v5575 = vpack.c.b16 %v5549, %v5547
        %v5576 = vpack.c.b16 %v5552, %v5550
        %v5577 = vpack.c.b16 %v5553, %v5551
        %v5578 = vpack.c.b16 %v5556, %v5554
        %v5579 = vpack.c.b16 %v5557, %v5555
        %v5580 = vpack.c.b16 %v5560, %v5558
        %v5581 = vpack.c.b16 %v5561, %v5559
        %v5582 = vpack.c.b16 %v5564, %v5562
        %v5583 = vpack.c.b16 %v5565, %v5563
        %v5584 = vpack.c.b16 %v5568, %v5566
        %v5585 = vpack.c.b16 %v5569, %v5567
        %5602 = vmatprep.subr.bf16.mxu0 %v5585
        %5603 = vmatpush1.bf16.msra.mxu0 %v5584
        %5604 = vmatprep.subr.bf16.mxu0 %v5583
        %5605 = vmatpush1.bf16.msra.mxu0 %v5582
        %5606 = vmatprep.subr.bf16.mxu0 %v5581
        %5607 = vmatpush1.bf16.msra.mxu0 %v5580
        %5608 = vmatprep.subr.bf16.mxu0 %v5579
        %5609 = vmatpush1.bf16.msra.mxu0 %v5578
        %5610 = vmatprep.subr.bf16.mxu0 %v5577
        %5611 = vmatpush1.bf16.msra.mxu0 %v5576
        %5612 = vmatprep.subr.bf16.mxu0 %v5575
        %5613 = vmatpush1.bf16.msra.mxu0 %v5574
        %5614 = vmatprep.subr.bf16.mxu0 %v5573
        %5615 = vmatpush1.bf16.msra.mxu0 %v5572
        %5616 = vmatprep.subr.bf16.mxu0 %v5571
        %5617 = vmatpush1.bf16.msra.mxu0 %v5570
        %5618 = vmatprep.subr.bf16.mxu0 0
        %5619 = vmatpush2.bf16.msra.mxu0 0
        %5620 = vmatprep.subr.bf16.mxu0 0
        %5621 = vmatpush2.bf16.msra.mxu0 0
        %5622 = vmatprep.subr.bf16.mxu0 0
        %5623 = vmatpush2.bf16.msra.mxu0 0
        %5624 = vmatprep.subr.bf16.mxu0 0
        %5625 = vmatpush2.bf16.msra.mxu0 0
        %5626 = vmatprep.subr.bf16.mxu0 0
        %5627 = vmatpush2.bf16.msra.mxu0 0
        %5628 = vmatprep.subr.bf16.mxu0 0
        %5629 = vmatpush2.bf16.msra.mxu0 0
        %5630 = vmatprep.subr.bf16.mxu0 0
        %5631 = vmatpush2.bf16.msra.mxu0 0
        %5632 = vmatprep.subr.bf16.mxu0 0
        %5633 = vmatpush2.bf16.msra.mxu0 0
        %5634 = vmatprep.mubr.bf16.mxu0 0
        %5635 = vmatmul.mubr.bf16.gmra.mxu0 %v5491
        %v5636 = vpop.f32.mrf.mxu0
        %v5637 = vadd.f32 %v5515, %v5636
        %v5638 = vpop.f32.mrf.mxu0
        %v5639 = vadd.f32 %v5519, %v5638
        %v5640 = vpop.f32.mrf.mxu0
        %v5641 = vadd.f32 %v5515, %v5640
        %v5642 = vpop.f32.mrf.mxu0
        %v5643 = vadd.f32 %v5519, %v5642
        %5644 = vdwg.mxu0
        %v5645 = vmul.f32 %v5637, 0.5
        %v5646 = vmul.f32 %v5639, 0.5
        %v5647 = vmul.f32 %v5641, 0.5
        %v5648 = vmul.f32 %v5643, 0.5
        %v5649 = vmul.f32 %v5637, 0.044715
        %v5650 = vmul.f32 %v5639, 0.044715
        %v5651 = vmul.f32 %v5641, 0.044715
        %v5652 = vmul.f32 %v5643, 0.044715
        %v5653 = vmul.f32 %v5649, %v5637
        %v5654 = vmul.f32 %v5650, %v5639
        %v5655 = vmul.f32 %v5651, %v5641
        %v5656 = vmul.f32 %v5652, %v5643
        %v5657 = vmul.f32 %v5653, %v5637
        %v5658 = vmul.f32 %v5654, %v5639
        %v5659 = vmul.f32 %v5655, %v5641
        %v5660 = vmul.f32 %v5656, %v5643
        %v5661 = vadd.f32 %v5637, %v5657
        %v5662 = vadd.f32 %v5639, %v5658
        %v5663 = vadd.f32 %v5641, %v5659
        %v5664 = vadd.f32 %v5643, %v5660
        %v5665 = vmul.f32 %v5661, 0.7978846
        %v5666 = vmul.f32 %v5662, 0.7978846
        %v5667 = vmul.f32 %v5663, 0.7978846
        %v5668 = vmul.f32 %v5664, 0.7978846
        %v5669 = vtanh.pop %v5665
        %v5670 = vtanh.pop %v5666
        %v5671 = vtanh.pop %v5667
        %v5672 = vtanh.pop %v5668
        %v5673 = vadd.f32 %v5669, 1.0
        %v5674 = vadd.f32 %v5670, 1.0
        %v5675 = vadd.f32 %v5671, 1.0
        %v5676 = vadd.f32 %v5672, 1.0
        %v5677 = vmul.f32 %v5645, %v5673
        %v5678 = vmul.f32 %v5646, %v5674
        %v5679 = vmul.f32 %v5647, %v5675
        %v5680 = vmul.f32 %v5648, %v5676
        %v5681 = vpack.c.bf16 %v5679, %v5677
        %v5682 = vpack.c.bf16 %v5680, %v5678
        %s5683 = scalar_lea.vmem [#allocation7], 128
        %v5684 = vld [vmem:[%s5683] sm:$0xf]
        %v5685 = vld [vmem:[%s5683 + $0x4] sm:$0xf]
        %v5686 = vld [vmem:[%s5683 + $0x8] sm:$0xf]
        %v5687 = vld [vmem:[%s5683 + $0xc] sm:$0xf]
        %v5688 = vld [vmem:[%s5683 + $0x10] sm:$0xf]
        %v5689 = vld [vmem:[%s5683 + $0x14] sm:$0xf]
        %v5690 = vld [vmem:[%s5683 + $0x18] sm:$0xf]
        %v5691 = vld [vmem:[%s5683 + $0x1c] sm:$0xf]
        %v5692 = vld [vmem:[%s5683 + $0x20] sm:$0xf]
        %v5693 = vld [vmem:[%s5683 + $0x24] sm:$0xf]
        %v5694 = vld [vmem:[%s5683 + $0x28] sm:$0xf]
        %v5695 = vld [vmem:[%s5683 + $0x2c] sm:$0xf]
        %v5696 = vld [vmem:[%s5683 + $0x30] sm:$0xf]
        %v5697 = vld [vmem:[%s5683 + $0x34] sm:$0xf]
        %v5698 = vld [vmem:[%s5683 + $0x38] sm:$0xf]
        %v5699 = vld [vmem:[%s5683 + $0x3c] sm:$0xf]
        %v5700 = vld [vmem:[%s5683 + $0x40] sm:$0xf]
        %v5701 = vld [vmem:[%s5683 + $0x44] sm:$0xf]
        %v5702 = vld [vmem:[%s5683 + $0x48] sm:$0xf]
        %v5703 = vld [vmem:[%s5683 + $0x4c] sm:$0xf]
        %v5704 = vld [vmem:[%s5683 + $0x50] sm:$0xf]
        %v5705 = vld [vmem:[%s5683 + $0x54] sm:$0xf]
        %v5706 = vld [vmem:[%s5683 + $0x58] sm:$0xf]
        %v5707 = vld [vmem:[%s5683 + $0x5c] sm:$0xf]
        %v5708 = vld [vmem:[%s5683 + $0x60] sm:$0xf]
        %v5709 = vld [vmem:[%s5683 + $0x64] sm:$0xf]
        %v5710 = vld [vmem:[%s5683 + $0x68] sm:$0xf]
        %v5711 = vld [vmem:[%s5683 + $0x6c] sm:$0xf]
        %v5712 = vld [vmem:[%s5683 + $0x70] sm:$0xf]
        %v5713 = vld [vmem:[%s5683 + $0x74] sm:$0xf]
        %v5714 = vld [vmem:[%s5683 + $0x78] sm:$0xf]
        %v5715 = vld [vmem:[%s5683 + $0x7c] sm:$0xf]
        %s5716 = scalar_lea.vmem %s10, 1
        %v5717 = vld [vmem:[%s5716] sm:$0x1]
        %v5719 = vlaneseq
        %v5720 = vshrl.u32 %v5719, 7
        %v5721 = vsub.s32 0, %v5720
        %v5722 = vrot.slane %v5717, %v5721
        %v5756 = vunpack.c.l.b16 %v5684
        %v5757 = vunpack.c.l.b16 %v5685
        %v5758 = vunpack.c.l.b16 %v5686
        %v5759 = vunpack.c.l.b16 %v5687
        %v5760 = vunpack.c.l.b16 %v5688
        %v5761 = vunpack.c.l.b16 %v5689
        %v5762 = vunpack.c.l.b16 %v5690
        %v5763 = vunpack.c.l.b16 %v5691
        %v5764 = vunpack.c.l.b16 %v5692
        %v5765 = vunpack.c.l.b16 %v5693
        %v5766 = vunpack.c.l.b16 %v5694
        %v5767 = vunpack.c.l.b16 %v5695
        %v5768 = vunpack.c.l.b16 %v5696
        %v5769 = vunpack.c.l.b16 %v5697
        %v5770 = vunpack.c.l.b16 %v5698
        %v5771 = vunpack.c.l.b16 %v5699
        %v5772 = vunpack.c.l.b16 %v5700
        %v5773 = vunpack.c.l.b16 %v5701
        %v5774 = vunpack.c.l.b16 %v5702
        %v5775 = vunpack.c.l.b16 %v5703
        %v5776 = vunpack.c.l.b16 %v5704
        %v5777 = vunpack.c.l.b16 %v5705
        %v5778 = vunpack.c.l.b16 %v5706
        %v5779 = vunpack.c.l.b16 %v5707
        %v5780 = vunpack.c.l.b16 %v5708
        %v5781 = vunpack.c.l.b16 %v5709
        %v5782 = vunpack.c.l.b16 %v5710
        %v5783 = vunpack.c.l.b16 %v5711
        %v5784 = vunpack.c.l.b16 %v5712
        %v5785 = vunpack.c.l.b16 %v5713
        %v5786 = vunpack.c.l.b16 %v5714
        %v5787 = vunpack.c.l.b16 %v5715
        %v5788 = vpack.c.b16 %v5757, %v5756
        %v5789 = vpack.c.b16 %v5759, %v5758
        %v5790 = vpack.c.b16 %v5761, %v5760
        %v5791 = vpack.c.b16 %v5763, %v5762
        %v5792 = vpack.c.b16 %v5765, %v5764
        %v5793 = vpack.c.b16 %v5767, %v5766
        %v5794 = vpack.c.b16 %v5769, %v5768
        %v5795 = vpack.c.b16 %v5771, %v5770
        %v5796 = vpack.c.b16 %v5773, %v5772
        %v5797 = vpack.c.b16 %v5775, %v5774
        %v5798 = vpack.c.b16 %v5777, %v5776
        %v5799 = vpack.c.b16 %v5779, %v5778
        %v5800 = vpack.c.b16 %v5781, %v5780
        %v5801 = vpack.c.b16 %v5783, %v5782
        %v5802 = vpack.c.b16 %v5785, %v5784
        %v5803 = vpack.c.b16 %v5787, %v5786
        %5820 = vmatprep.subr.bf16.mxu0 0
        %5821 = vmatpush1.bf16.msra.mxu0 %v5795
        %5822 = vmatprep.subr.bf16.mxu0 0
        %5823 = vmatpush1.bf16.msra.mxu0 %v5794
        %5824 = vmatprep.subr.bf16.mxu0 0
        %5825 = vmatpush1.bf16.msra.mxu0 %v5793
        %5826 = vmatprep.subr.bf16.mxu0 0
        %5827 = vmatpush1.bf16.msra.mxu0 %v5792
        %5828 = vmatprep.subr.bf16.mxu0 0
        %5829 = vmatpush1.bf16.msra.mxu0 %v5791
        %5830 = vmatprep.subr.bf16.mxu0 0
        %5831 = vmatpush1.bf16.msra.mxu0 %v5790
        %5832 = vmatprep.subr.bf16.mxu0 0
        %5833 = vmatpush1.bf16.msra.mxu0 %v5789
        %5834 = vmatprep.subr.bf16.mxu0 0
        %5835 = vmatpush1.bf16.msra.mxu0 %v5788
        %5836 = vmatprep.subr.bf16.mxu0 0
        %5837 = vmatpush2.bf16.msra.mxu0 %v5803
        %5838 = vmatprep.subr.bf16.mxu0 0
        %5839 = vmatpush2.bf16.msra.mxu0 %v5802
        %5840 = vmatprep.subr.bf16.mxu0 0
        %5841 = vmatpush2.bf16.msra.mxu0 %v5801
        %5842 = vmatprep.subr.bf16.mxu0 0
        %5843 = vmatpush2.bf16.msra.mxu0 %v5800
        %5844 = vmatprep.subr.bf16.mxu0 0
        %5845 = vmatpush2.bf16.msra.mxu0 %v5799
        %5846 = vmatprep.subr.bf16.mxu0 0
        %5847 = vmatpush2.bf16.msra.mxu0 %v5798
        %5848 = vmatprep.subr.bf16.mxu0 0
        %5849 = vmatpush2.bf16.msra.mxu0 %v5797
        %5850 = vmatprep.subr.bf16.mxu0 0
        %5851 = vmatpush2.bf16.msra.mxu0 %v5796
        %5852 = vmatprep.mubr.bf16.mxu0 %v5682
        %5853 = vmatmul.mubr.bf16.gmra.mxu0 %v5681
        %v5854 = vpop.f32.mrf.mxu0
        %v5855 = vadd.f32 %v5722, %v5854
        %v5856 = vpop.f32.mrf.mxu0
        %v5857 = vpop.f32.mrf.mxu0
        %v5858 = vadd.f32 %v5722, %v5857
        %v5859 = vpop.f32.mrf.mxu0
        %5860 = vdwg.mxu0
        %v5861 = vadd.f32 %v5489, %v5855
        %v5862 = vadd.f32 %v5490, %v5858
        %5863 = vadd.xlane.f32.xlu0 %v5861
        %v5864 = vpop.xlane.xlu0 %5863
        %5865 = vadd.xlane.f32.xlu0 %v5862
        %v5866 = vpop.xlane.xlu0 %5865
        %v5867 = vmul.f32 %v5864, 0.010416667
        %v5868 = vmul.f32 %v5866, 0.010416667
        %v5869 = vsub.f32 %v5861, %v5867
        %v5870 = vsub.f32 %v5862, %v5868
        %v5871 = vmul.f32 %v5869, %v488
        %v5872 = vmul.f32 %v5870, %v488
        %v5873 = vmul.f32 %v5871, %v5871
        %v5874 = vmul.f32 %v5872, %v5872
        %5875 = vadd.xlane.f32.xlu0 %v5873
        %v5876 = vpop.xlane.xlu0 %5875
        %5877 = vadd.xlane.f32.xlu0 %v5874
        %v5878 = vpop.xlane.xlu0 %5877
        %v5879 = vmul.f32 %v5876, 0.010416667
        %v5880 = vmul.f32 %v5878, 0.010416667
        %v5881 = vadd.f32 %v5879, 1e-05
        %v5882 = vadd.f32 %v5880, 1e-05
        %v5883 = vrsqrt.pop %v5881
        %v5884 = vrsqrt.pop %v5882
        %v5885 = vmul.f32 %v5871, %v5883
        %v5886 = vmul.f32 %v5872, %v5884
        %v5887 = vmul.f32 %v5885, %v5479
        %v5888 = vmul.f32 %v5886, %v5479
        %v5889 = vadd.f32 %v5887, %v5487
        %v5890 = vadd.f32 %v5888, %v5487
        %v5891 = vld [vmem:[%s11] sm:$0x1]
        %v5892 = vld [vmem:[%s12] sm:$0x1]
        %5893 = vadd.xlane.f32.xlu0 %v5889
        %v5894 = vpop.xlane.xlu0 %5893
        %5895 = vadd.xlane.f32.xlu0 %v5890
        %v5896 = vpop.xlane.xlu0 %5895
        %v5897 = vmul.f32 %v5894, 0.010416667
        %v5898 = vmul.f32 %v5896, 0.010416667
        %v5899 = vsub.f32 %v5889, %v5897
        %v5900 = vsub.f32 %v5890, %v5898
        %v5901 = vmul.f32 %v5899, %v488
        %v5902 = vmul.f32 %v5900, %v488
        %v5903 = vmul.f32 %v5901, %v5901
        %v5904 = vmul.f32 %v5902, %v5902
        %5905 = vadd.xlane.f32.xlu0 %v5903
        %v5906 = vpop.xlane.xlu0 %5905
        %5907 = vadd.xlane.f32.xlu0 %v5904
        %v5908 = vpop.xlane.xlu0 %5907
        %v5909 = vmul.f32 %v5906, 0.010416667
        %v5910 = vmul.f32 %v5908, 0.010416667
        %v5911 = vadd.f32 %v5909, 1e-05
        %v5912 = vadd.f32 %v5910, 1e-05
        %v5913 = vrsqrt.pop %v5911
        %v5914 = vrsqrt.pop %v5912
        %v5915 = vmul.f32 %v5901, %v5913
        %v5916 = vmul.f32 %v5902, %v5914
        %v5918 = vlaneseq
        %v5919 = vshrl.u32 %v5918, 7
        %v5920 = vsub.s32 0, %v5919
        %v5921 = vrot.slane %v5891, %v5920
        %v5923 = vmul.f32 %v5915, %v5921
        %v5924 = vmul.f32 %v5916, %v5921
        %v5926 = vlaneseq
        %v5927 = vshrl.u32 %v5926, 7
        %v5928 = vsub.s32 0, %v5927
        %v5929 = vrot.slane %v5892, %v5928
        %v5931 = vadd.f32 %v5923, %v5929
        %v5932 = vadd.f32 %v5924, %v5929
        %5933 = vst [vmem:[%s477] sm:$0xff] %v5931
        %5934 = vst [vmem:[%s477 + $0x8] sm:$0xff] %v5932
        %s5935 = sand.u32 %s315, 1
        %s5936 = scalar_lea.sflag [#allocation4], %s5935
        %s5937 = sand.u32 %s315, 1
        %s5938 = smul.addr %s5937, 16
        %s5939 = scalar_lea.vmem [#allocation8], %s5938
        // Predicated region
        $region85: #{_lambda_.1} parent=71 // pred_check
          %p5940 = pneg %p325
        $region86: #{_lambda_.1} parent=71 // pred_check_branch
          %5942 = sbr.rel (%p5940) target = $region88
        $region87: #{_lambda_.1} parent=71 // pred_region
          %s5944 = ssub.s32 256, 256
          %5945 = vsyncadd %s5936, %s5944
          %s5946 = smul.addr %s29, 2
          %s5947 = smul.addr %s5946, 128
          %s5948 = scalar_lea.hbm %s13, %s5947
          %s5949 = sshll.u32 %s5939, 4
          %s5950 = int_to_ptr.vmem [resolvable:$true] %s5949
          %5955 = dma.vmem_to_hbm [thread:$0]  %s5950, 256, %s5948, %s5936, 128, 128, 8
        $region88: #{_lambda_.1} parent=71 // pred_fallthru
          _
      $region72: #{_lambda_.1} parent=5 // pred_fallthru
        _
      %p5956 = scmp.le.s32.totalorder 2, %s24
      // Predicated region
      $region89: #{_lambda_.1} parent=5 // pred_check
        %p5957 = pneg %p5956
      $region90: #{_lambda_.1} parent=5 // pred_check_branch
        %5959 = sbr.rel (%p5957) target = $region92
      $region91: #{_lambda_.1} parent=5 // pred_region
        %s5960 = ssub.s32 %s24, 2
        // Predicated region
        $region93: #{_lambda_.1} parent=91 // pred_check
          %p5961 = pneg %p331
        $region94: #{_lambda_.1} parent=91 // pred_check_branch
          %5963 = sbr.rel (%p5961) target = $region96
        $region95: #{_lambda_.1} parent=91 // pred_region
          %s5964 = sand.u32 %s316, 1
          %s5965 = scalar_lea.sflag [#allocation4], %s5964
          %s5966 = sand.u32 %s316, 1
          %s5967 = smul.addr %s5966, 16
          %s5968 = scalar_lea.vmem [#allocation8], %s5967
          %5969 = dma.done %s5965, 256
        $region96: #{_lambda_.1} parent=91 // pred_fallthru
          _
      $region92: #{_lambda_.1} parent=5 // pred_fallthru
        _
    $region6: #{_lambda_.1} parent=1 // loop_footer
      %s28 = sadd.s32 1, %s24
    $region7: #{_lambda_.1} parent=1 // loop_footer_branch
      %23 = sbr.rel target = $region3
    $region8: #{_lambda_.1} parent=1 // loop_exit
      _
    %5970 = vsyncpa [#allocation3], 1
    %s5971 = scalar_lea.sflag [#allocation3], 1
    %5972 = vsyncpa %s5971, 1
    %5973 = vsyncpa [#allocation6], 1
    %5974 = vsyncpa [#allocation4], 1
    %s5975 = scalar_lea.sflag [#allocation4], 1
    %5976 = vsyncpa %s5975, 1

</llo_original>
